<compile_context>
chip_gen: v7x
topology: tpu7x:2x2x1
jax: 0.10.0
libtpu: 0.0.40
codegen_flags: <defaults>
</compile_context>

<pallas_src>
import functools

import jax
import jax.numpy as jnp
import numpy as np
from jax.experimental import pallas as pl
from jax.experimental.pallas import tpu as pltpu

NEG_SLOPE = 0.01        # F.leaky_relu default
NEG_INF = -1e30         # folded into padded b4 lanes to mask padded softmax classes
LANES = 128             # TPU lane width; all feature dims padded to this


def _leaky_relu(x):
    return jnp.where(x > 0, x, NEG_SLOPE * x)


def gnn_coloring_kernel(a_ref, xw_ref, w_ref, b_ref, out_ref):
    """One grid step = one block-diagonal pack of graphs.

    a_ref:  (P, P)        block-diagonal normalized adjacency (pack graphs of N nodes)
    xw_ref: (P, 128)      x @ W1 tiled per graph, zero-padded beyond H lanes (shared)
    w_ref:  (3, 128, 128) [W2; W3; W4], zero-padded (rows beyond H, cols beyond H/C)
    b_ref:  (4, 128)      [b1; b2; b3; b4]; b4 pad lanes hold NEG_INF (class mask)
    out_ref:(P, 128)      softmax probabilities, padded classes are exactly 0
    """
    dot = functools.partial(jnp.dot, preferred_element_type=jnp.float32,
                            precision=jax.lax.Precision.HIGHEST)
    a = a_ref[...]

    # --- Layer 1: GCNConv(1 -> H); x @ W1 precomputed lane-dense in the wrapper.
    h = _leaky_relu(dot(a, xw_ref[...]) + b_ref[0:1, :])

    # --- Layer 2: GCNConv(H -> H)
    h = _leaky_relu(dot(a, dot(h, w_ref[0])) + b_ref[1:2, :])

    # --- Layer 3: GCNConv(H -> H)
    h = _leaky_relu(dot(a, dot(h, w_ref[1])) + b_ref[2:3, :])

    # --- Layer 4: GCNConv(H -> C) + softmax. Padded lanes of a@hw are exactly 0, so the
    # NEG_INF pad in b4 masks them without any iota/where in the kernel.
    logits = dot(a, dot(h, w_ref[2])) + b_ref[3:4, :]
    m = jnp.max(logits, axis=-1, keepdims=True)
    e = jnp.exp(logits - m)                     # padded lanes -> exp(-1e30 - m) == 0
    out_ref[...] = e / jnp.sum(e, axis=-1, keepdims=True)   # exact normalization


def _pad_w(w):
    out = jnp.zeros((LANES, LANES), jnp.float32)
    return out.at[:w.shape[0], :w.shape[1]].set(w)


def _pad_b(b, fill=0.0):
    out = jnp.full((LANES,), fill, jnp.float32)
    return out.at[:b.shape[-1]].set(b.reshape(-1))


def gnn_graph_coloring(a_hat_batch, params, *, pack_rows=128):
    """Batched GCN forward.

    a_hat_batch: (B, N, N) normalized adjacencies (B graphs with N nodes each).
    params:      (W1, b1, W2, b2, W3, b3, W4, b4) with W1 (1,H), W2/W3 (H,H), W4 (H,C).
    Returns:     (B, N, C) softmax class probabilities per node per graph.
    """
    B, N, _ = a_hat_batch.shape
    H = params[0].shape[1]
    C = params[6].shape[1]

    # --- Block-diagonal packing: `pack` graphs per grid step -> full MXU tiles, fewer steps.
    pack = max(1, min(B, pack_rows // max(N, 1)))
    b_pad = ((B + pack - 1) // pack) * pack
    if b_pad != B:           # pad the batch with empty graphs; their outputs are discarded
        a_hat_batch = jnp.concatenate(
            [a_hat_batch, jnp.zeros((b_pad - B, N, N), a_hat_batch.dtype)], axis=0)
    num_blocks = b_pad // pack
    P = pack * N

    a = a_hat_batch.reshape(num_blocks, pack, N, N)
    eye = jnp.eye(pack, dtype=jnp.float32)
    # out[g, p, i, q, j] = a[g, p, i, j] * eye[p, q] -> block-diagonal (P, P) per super-graph.
    a_packed = jnp.einsum('gpij,pq->gpiqj', a, eye).reshape(num_blocks, P, P)

    # Node-index features (arange(N), identical per graph) folded into layer 1 and tiled.
    x = jnp.arange(N, dtype=jnp.float32)[:, None]                        # (N, 1)
    xw_single = jnp.zeros((N, LANES), jnp.float32).at[:, :H].set(x @ params[0])
    xw = jnp.tile(xw_single, (pack, 1))                                  # (P, 128)

    # Pack remaining weights / biases into two lane-dense slabs (resident across the grid).
    w_slab = jnp.stack([_pad_w(params[2]), _pad_w(params[4]), _pad_w(params[6])])
    b_slab = jnp.stack([_pad_b(params[1]), _pad_b(params[3]), _pad_b(params[5]),
                        _pad_b(params[7], fill=NEG_INF)])                # mask folded into b4

    out_packed = pl.pallas_call(
        gnn_coloring_kernel,
        out_shape=jax.ShapeDtypeStruct((num_blocks, P, LANES), jnp.float32),
        grid=(num_blocks,),
        in_specs=[
            # Per-step packed adjacency block.
            pl.BlockSpec((None, P, P), lambda g: (g, 0, 0)),
            # Shared operands: constant block index -> DMA'd once, stay resident in VMEM.
            pl.BlockSpec((P, LANES), lambda g: (0, 0)),
            pl.BlockSpec((3, LANES, LANES), lambda g: (0, 0, 0)),
            pl.BlockSpec((4, LANES), lambda g: (0, 0)),
        ],
        out_specs=pl.BlockSpec((None, P, LANES), lambda g: (g, 0, 0)),
        compiler_params=pltpu.CompilerParams(
            dimension_semantics=("parallel",)),   # lets v7x shard packed blocks across TCs
    )(a_packed, xw, w_slab, b_slab)

    return out_packed.reshape(b_pad, N, LANES)[:B, :, :C]


def build_normalized_adjacency(edge_index, num_nodes):
    """Dense GCN-normalized adjacency: D^{-1/2} (A + I) D^{-1/2}. Plain-JAX glue."""
    src, dst = edge_index[0], edge_index[1]
    a = jnp.zeros((num_nodes, num_nodes), jnp.float32)
    # message j -> i is stored at A[i, j] so that out = A @ X aggregates neighbors.
    a = a.at[dst, src].add(1.0)
    a = a + jnp.eye(num_nodes, dtype=jnp.float32)          # add self loops
    deg = jnp.sum(a, axis=1)
    dinv = jnp.where(deg > 0, 1.0 / jnp.sqrt(deg), 0.0)
    return dinv[:, None] * a * dinv[None, :]


def init_params(key, hidden_channels, num_classes):
    dims = [(1, hidden_channels),
            (hidden_channels, hidden_channels),
            (hidden_channels, hidden_channels),
            (hidden_channels, num_classes)]
    params = []
    for fan_in, fan_out in dims:
        key, wk, bk = jax.random.split(key, 3)
        scale = 1.0 / np.sqrt(max(fan_in, 1))
        w = jax.random.normal(wk, (fan_in, fan_out), jnp.float32) * scale
        b = jax.random.normal(bk, (1, fan_out), jnp.float32) * 0.1
        params += [w, b]
    return tuple(params)


def reference_forward(a_hat, x, params):
    dot = functools.partial(jnp.dot, precision=jax.lax.Precision.HIGHEST)
    w1, b1, w2, b2, w3, b3, w4, b4 = params
    h = jax.nn.leaky_relu(dot(a_hat, dot(x, w1)) + b1, NEG_SLOPE)
    h = jax.nn.leaky_relu(dot(a_hat, dot(h, w2)) + b2, NEG_SLOPE)
    h = jax.nn.leaky_relu(dot(a_hat, dot(h, w3)) + b3, NEG_SLOPE)
    return jax.nn.softmax(dot(a_hat, dot(h, w4)) + b4, axis=-1)


if __name__ == "__main__":
    B = 16              # batch of graphs; packed 8-per-step -> grid=(2,)
    N = 16              # nodes per graph (data.x.shape[0])
    NUM_FEATURES = 4    # unused by forward (features replaced with arange), kept for parity
    HIDDEN = 32
    NUM_CLASSES = 4

    key = jax.random.PRNGKey(0)

    # Deterministic batch of circulant graphs: graph g connects node i <-> node (i + g + 1) % N.
    a_hats = []
    for g in range(B):
        shift = (g % (N - 1)) + 1
        src = np.arange(N)
        dst = (np.arange(N) + shift) % N
        edge_index = jnp.asarray(
            np.stack([np.concatenate([src, dst]), np.concatenate([dst, src])]), jnp.int32)
        a_hats.append(build_normalized_adjacency(edge_index, N))
    a_hat_batch = jnp.stack(a_hats)                               # (B, N, N)

    # data.x only contributes its node count; forward rebuilds features as arange(N).
    _data_x = jax.random.normal(key, (N, NUM_FEATURES), jnp.float32)
    x = jnp.arange(0, N, dtype=jnp.float32)[:, None]              # (N, 1)

    params = init_params(key, HIDDEN, NUM_CLASSES)

    out = gnn_graph_coloring(a_hat_batch, params)
    out = jax.block_until_ready(out)

    ref = jax.vmap(lambda a: reference_forward(a, x, params))(a_hat_batch)
    np.testing.assert_allclose(np.asarray(out), np.asarray(ref), rtol=1e-3, atol=1e-6)

    print("KERNEL_OK")
</pallas_src>

<mosaic_0001>
module attributes {stable_mosaic.version = 11 : i64} {
  func.func @gnn_coloring_kernel(%arg0: i32, %arg1: memref<1x128x128xf32, #tpu.memory_space<vmem>>, %arg2: memref<128x128xf32, #tpu.memory_space<vmem>>, %arg3: memref<3x128x128xf32, #tpu.memory_space<vmem>>, %arg4: memref<4x128xf32, #tpu.memory_space<vmem>>, %arg5: memref<1x128x128xf32, #tpu.memory_space<vmem>>) attributes {dimension_semantics = [#tpu.dimension_semantics<parallel>], iteration_bounds = array<i64: 2>, scalar_prefetch = 0 : i64, scratch_operands = 0 : i64, tpu.core_type = #tpu.core_type<tc>, window_params = [{transform_indices = @transform_0, window_bounds = array<i64: 1, 128, 128>}, {pipeline_mode = #tpu.pipeline_mode<synchronous>, transform_indices = @transform_1, window_bounds = array<i64: 128, 128>}, {pipeline_mode = #tpu.pipeline_mode<synchronous>, transform_indices = @transform_2, window_bounds = array<i64: 3, 128, 128>}, {pipeline_mode = #tpu.pipeline_mode<synchronous>, transform_indices = @transform_3, window_bounds = array<i64: 4, 128>}, {transform_indices = @transform_4, window_bounds = array<i64: 1, 128, 128>}]} {
    %c0 = arith.constant 0 : index
    %c0_0 = arith.constant 0 : index
    %c0_1 = arith.constant 0 : index
    %0 = vector.load %arg1[%c0, %c0_0, %c0_1] : memref<1x128x128xf32, #tpu.memory_space<vmem>>, vector<1x128x128xf32>
    %1 = vector.shape_cast %0 : vector<1x128x128xf32> to vector<128x128xf32>
    %c0_2 = arith.constant 0 : index
    %c0_3 = arith.constant 0 : index
    %2 = vector.load %arg2[%c0_2, %c0_3] : memref<128x128xf32, #tpu.memory_space<vmem>>, vector<128x128xf32>
    %cst = arith.constant dense<0.000000e+00> : vector<128x128xf32>
    %3 = tpu.matmul %1, %2, %cst {dimension_numbers = #tpu.dot_dimension_numbers<[1], [0], [0], [1], [0, 0, 1, 1], [], []>, precision = #tpu.contract_precision<fp32>} : vector<128x128xf32>, vector<128x128xf32>, vector<128x128xf32> -> vector<128x128xf32>
    %c0_4 = arith.constant 0 : index
    %c0_5 = arith.constant 0 : index
    %4 = vector.load %arg4[%c0_4, %c0_5] : memref<4x128xf32, #tpu.memory_space<vmem>>, vector<1x128xf32>
    %5 = vector.broadcast %4 : vector<1x128xf32> to vector<128x128xf32>
    %6 = arith.addf %3, %5 : vector<128x128xf32>
    %cst_6 = arith.constant 0.000000e+00 : f32
    %7 = vector.broadcast %cst_6 : f32 to vector<128x128xf32>
    %8 = arith.cmpf ogt, %6, %7 : vector<128x128xf32>
    %cst_7 = arith.constant 0.00999999977 : f32
    %9 = vector.broadcast %cst_7 : f32 to vector<128x128xf32>
    %10 = arith.mulf %9, %6 : vector<128x128xf32>
    %11 = arith.select %8, %6, %10 : vector<128x128xi1>, vector<128x128xf32>
    %c0_8 = arith.constant 0 : index
    %c0_9 = arith.constant 0 : index
    %c0_10 = arith.constant 0 : index
    %12 = vector.load %arg3[%c0_8, %c0_9, %c0_10] : memref<3x128x128xf32, #tpu.memory_space<vmem>>, vector<1x128x128xf32>
    %13 = vector.shape_cast %12 : vector<1x128x128xf32> to vector<128x128xf32>
    %cst_11 = arith.constant dense<0.000000e+00> : vector<128x128xf32>
    %14 = tpu.matmul %11, %13, %cst_11 {dimension_numbers = #tpu.dot_dimension_numbers<[1], [0], [0], [1], [0, 0, 1, 1], [], []>, precision = #tpu.contract_precision<fp32>} : vector<128x128xf32>, vector<128x128xf32>, vector<128x128xf32> -> vector<128x128xf32>
    %cst_12 = arith.constant dense<0.000000e+00> : vector<128x128xf32>
    %15 = tpu.matmul %1, %14, %cst_12 {dimension_numbers = #tpu.dot_dimension_numbers<[1], [0], [0], [1], [0, 0, 1, 1], [], []>, precision = #tpu.contract_precision<fp32>} : vector<128x128xf32>, vector<128x128xf32>, vector<128x128xf32> -> vector<128x128xf32>
    %c1 = arith.constant 1 : index
    %c0_13 = arith.constant 0 : index
    %16 = vector.load %arg4[%c1, %c0_13] : memref<4x128xf32, #tpu.memory_space<vmem>>, vector<1x128xf32>
    %17 = vector.broadcast %16 : vector<1x128xf32> to vector<128x128xf32>
    %18 = arith.addf %15, %17 : vector<128x128xf32>
    %cst_14 = arith.constant 0.000000e+00 : f32
    %19 = vector.broadcast %cst_14 : f32 to vector<128x128xf32>
    %20 = arith.cmpf ogt, %18, %19 : vector<128x128xf32>
    %cst_15 = arith.constant 0.00999999977 : f32
    %21 = vector.broadcast %cst_15 : f32 to vector<128x128xf32>
    %22 = arith.mulf %21, %18 : vector<128x128xf32>
    %23 = arith.select %20, %18, %22 : vector<128x128xi1>, vector<128x128xf32>
    %c1_16 = arith.constant 1 : index
    %c0_17 = arith.constant 0 : index
    %c0_18 = arith.constant 0 : index
    %24 = vector.load %arg3[%c1_16, %c0_17, %c0_18] : memref<3x128x128xf32, #tpu.memory_space<vmem>>, vector<1x128x128xf32>
    %25 = vector.shape_cast %24 : vector<1x128x128xf32> to vector<128x128xf32>
    %cst_19 = arith.constant dense<0.000000e+00> : vector<128x128xf32>
    %26 = tpu.matmul %23, %25, %cst_19 {dimension_numbers = #tpu.dot_dimension_numbers<[1], [0], [0], [1], [0, 0, 1, 1], [], []>, precision = #tpu.contract_precision<fp32>} : vector<128x128xf32>, vector<128x128xf32>, vector<128x128xf32> -> vector<128x128xf32>
    %cst_20 = arith.constant dense<0.000000e+00> : vector<128x128xf32>
    %27 = tpu.matmul %1, %26, %cst_20 {dimension_numbers = #tpu.dot_dimension_numbers<[1], [0], [0], [1], [0, 0, 1, 1], [], []>, precision = #tpu.contract_precision<fp32>} : vector<128x128xf32>, vector<128x128xf32>, vector<128x128xf32> -> vector<128x128xf32>
    %c2 = arith.constant 2 : index
    %c0_21 = arith.constant 0 : index
    %28 = vector.load %arg4[%c2, %c0_21] : memref<4x128xf32, #tpu.memory_space<vmem>>, vector<1x128xf32>
    %29 = vector.broadcast %28 : vector<1x128xf32> to vector<128x128xf32>
    %30 = arith.addf %27, %29 : vector<128x128xf32>
    %cst_22 = arith.constant 0.000000e+00 : f32
    %31 = vector.broadcast %cst_22 : f32 to vector<128x128xf32>
    %32 = arith.cmpf ogt, %30, %31 : vector<128x128xf32>
    %cst_23 = arith.constant 0.00999999977 : f32
    %33 = vector.broadcast %cst_23 : f32 to vector<128x128xf32>
    %34 = arith.mulf %33, %30 : vector<128x128xf32>
    %35 = arith.select %32, %30, %34 : vector<128x128xi1>, vector<128x128xf32>
    %c2_24 = arith.constant 2 : index
    %c0_25 = arith.constant 0 : index
    %c0_26 = arith.constant 0 : index
    %36 = vector.load %arg3[%c2_24, %c0_25, %c0_26] : memref<3x128x128xf32, #tpu.memory_space<vmem>>, vector<1x128x128xf32>
    %37 = vector.shape_cast %36 : vector<1x128x128xf32> to vector<128x128xf32>
    %cst_27 = arith.constant dense<0.000000e+00> : vector<128x128xf32>
    %38 = tpu.matmul %35, %37, %cst_27 {dimension_numbers = #tpu.dot_dimension_numbers<[1], [0], [0], [1], [0, 0, 1, 1], [], []>, precision = #tpu.contract_precision<fp32>} : vector<128x128xf32>, vector<128x128xf32>, vector<128x128xf32> -> vector<128x128xf32>
    %cst_28 = arith.constant dense<0.000000e+00> : vector<128x128xf32>
    %39 = tpu.matmul %1, %38, %cst_28 {dimension_numbers = #tpu.dot_dimension_numbers<[1], [0], [0], [1], [0, 0, 1, 1], [], []>, precision = #tpu.contract_precision<fp32>} : vector<128x128xf32>, vector<128x128xf32>, vector<128x128xf32> -> vector<128x128xf32>
    %c3 = arith.constant 3 : index
    %c0_29 = arith.constant 0 : index
    %40 = vector.load %arg4[%c3, %c0_29] : memref<4x128xf32, #tpu.memory_space<vmem>>, vector<1x128xf32>
    %41 = vector.broadcast %40 : vector<1x128xf32> to vector<128x128xf32>
    %42 = arith.addf %39, %41 : vector<128x128xf32>
    %cst_30 = arith.constant dense<0xFF800000> : vector<128xf32>
    %43 = vector.multi_reduction <maximumf>, %42, %cst_30 [1] : vector<128x128xf32> to vector<128xf32>
    %44 = vector.shape_cast %43 : vector<128xf32> to vector<128x1xf32>
    %45 = vector.broadcast %44 : vector<128x1xf32> to vector<128x128xf32>
    %46 = arith.subf %42, %45 : vector<128x128xf32>
    %47 = math.exp %46 : vector<128x128xf32>
    %cst_31 = arith.constant dense<0.000000e+00> : vector<128xf32>
    %48 = vector.multi_reduction <add>, %47, %cst_31 [1] : vector<128x128xf32> to vector<128xf32>
    %49 = vector.shape_cast %48 : vector<128xf32> to vector<128x1xf32>
    %50 = vector.broadcast %49 : vector<128x1xf32> to vector<128x128xf32>
    %51 = arith.divf %47, %50 : vector<128x128xf32>
    %c0_32 = arith.constant 0 : index
    %c0_33 = arith.constant 0 : index
    %c0_34 = arith.constant 0 : index
    %52 = vector.load %arg5[%c0_32, %c0_33, %c0_34] : memref<1x128x128xf32, #tpu.memory_space<vmem>>, vector<1x128x128xf32>
    %53 = vector.shape_cast %52 : vector<1x128x128xf32> to vector<128x128xf32>
    %54 = vector.shape_cast %51 : vector<128x128xf32> to vector<1x128x128xf32>
    tpu.vector_store %arg5[%c0_32, %c0_33, %c0_34], %54 {strides = array<i32>} : memref<1x128x128xf32, #tpu.memory_space<vmem>>, vector<1x128x128xf32>,
    return
  }
  func.func @transform_0(%arg0: i32) -> (i32, i32, i32) {
    %c0_i32 = arith.constant 0 : i32
    %c0_i32_0 = arith.constant 0 : i32
    %c0_i32_1 = arith.constant 0 : i32
    return %arg0, %c0_i32, %c0_i32_0 : i32, i32, i32
  }
  func.func @transform_1(%arg0: i32) -> (i32, i32) {
    %c0_i32 = arith.constant 0 : i32
    %c0_i32_0 = arith.constant 0 : i32
    %c0_i32_1 = arith.constant 0 : i32
    return %c0_i32, %c0_i32_0 : i32, i32
  }
  func.func @transform_2(%arg0: i32) -> (i32, i32, i32) {
    %c0_i32 = arith.constant 0 : i32
    %c0_i32_0 = arith.constant 0 : i32
    %c0_i32_1 = arith.constant 0 : i32
    %c0_i32_2 = arith.constant 0 : i32
    return %c0_i32, %c0_i32_0, %c0_i32_1 : i32, i32, i32
  }
  func.func @transform_3(%arg0: i32) -> (i32, i32) {
    %c0_i32 = arith.constant 0 : i32
    %c0_i32_0 = arith.constant 0 : i32
    %c0_i32_1 = arith.constant 0 : i32
    return %c0_i32, %c0_i32_0 : i32, i32
  }
  func.func @transform_4(%arg0: i32) -> (i32, i32, i32) {
    %c0_i32 = arith.constant 0 : i32
    %c0_i32_0 = arith.constant 0 : i32
    %c0_i32_1 = arith.constant 0 : i32
    return %arg0, %c0_i32, %c0_i32_0 : i32, i32, i32
  }
}

</mosaic_0001>

<llo_original>
// kernel: tpu_custom_call.1
$region0: #{tpu_custom_call.1}
  #allocation0 [shape = 'u32[]', space=smem, size = 0x4, offset = 0x4, fixed_abs, tag = 'smem constant byte address 0x4 - core index']
  #allocation1 [shape = 'u32[144,128]{1,0:T(1,128)}', space=vmem, size = 0x12000, scoped, tag = 'internal scratch']
  %s0 = inlined_call_operand.hbm [shape: f32[2,128,128], index: 0, kind: input, shape index: {}]
  %s1 = inlined_call_operand.hbm [shape: f32[128,128], index: 1, kind: input, shape index: {}]
  %s2 = inlined_call_operand.hbm [shape: f32[3,128,128], index: 2, kind: input, shape index: {}]
  %s3 = inlined_call_operand.vmem [shape: f32[4,128], index: 3, kind: input, shape index: {}]
  %s4 = inlined_call_operand.hbm [shape: f32[2,128,128], index: 4, kind: output, shape index: {}]
  %s5 = sld [smem:[#allocation0]]
  $region61: #{tpu_custom_call.1} parent=0
    _
  %s7 = ssub.s32 1, %s5
  %s8 = scalar_select 0, %s7, %s5
  $region1: #{tpu_custom_call.1} parent=0
    #allocation2 [shape = 'u8[131072]{0}', space=vmem, size = 0x20000, scoped, tag = 'input window, operand 0']
    #allocation3 [shape = 's32[2]{0}', space=sflag, size = 0x8, scoped, tag = 'scoped memory for tpu_custom_call.1']
    #allocation4 [shape = 's32[2]{0}', space=sflag, size = 0x8, scoped, tag = 'scoped memory for tpu_custom_call.1']
    #allocation5 [shape = 'u8[65536]{0}', space=vmem, size = 0x10000, scoped, tag = 'input window, operand 1, single buffered']
    #allocation6 [shape = 's32[1]{0}', space=sflag, size = 0x4, scoped, tag = 'scoped memory for tpu_custom_call.1']
    #allocation7 [shape = 'u8[196608]{0}', space=vmem, size = 0x30000, scoped, tag = 'input window, operand 2, single buffered']
    #allocation8 [shape = 'u8[131072]{0}', space=vmem, size = 0x20000, scoped, tag = 'output window, operand 0']
    %9 = vsyncpa [#allocation3], 0
    %s10 = scalar_lea.sflag [#allocation3], 1
    %11 = vsyncpa %s10, 0
    %12 = vsyncpa [#allocation6], 0
    %13 = vsyncpa [#allocation4], 0
    %s14 = scalar_lea.sflag [#allocation4], 1
    %15 = vsyncpa %s14, 0
    loop: start=0, step=1, limit=4
    $region2: #{tpu_custom_call.1} parent=1 // loop_pre_header
      _
    $region3: #{tpu_custom_call.1} parent=1 // loop_header
      %s17 = sphi 0, %s21
      %p18 = scmp.ge.s32.totalorder %s17, 4
      %s27 = sphi 0, %s29
      %s30 = sphi 0, %s27
      %s31 = sphi 0, %s30
      %s47 = sphi 0, %s31
      %s51 = sphi 0, %s51
      %s53 = sphi 0, %s51
      %s54 = sphi 0, %s53
      %s68 = sphi 0, %s54
      %s72 = sphi 0, %s72
      %s74 = sphi 0, %s72
      %s75 = sphi 0, %s74
      %s89 = sphi 0, %s75
      %s93 = sphi 0, %s93
      %s95 = sphi 0, %s93
      %s96 = sphi 0, %s95
      %s110 = sphi 0, %s96
      %s116 = sphi 0, %s118
      %s119 = sphi 0, %s116
      %s120 = sphi 0, %s119
      %s136 = sphi 0, %s120
    $region4: #{tpu_custom_call.1} parent=1 // loop_header_branch
      %20 = sbr.rel (%p18) target = $region8
    $region5: #{tpu_custom_call.1} parent=1 // loop_body
      %s22 = ssub.s32 %s17, 1
      %s23 = ssub.s32 %s17, 2
      %s24 = sadd.s32 %s17, 1
      %s25 = ssub.s32 %s17, %s24
      %p26 = scmp.eq.s32.totalorder %s25, 0
      %s28 = sadd.s32 %s27, 1
      %s29 = scalar_select %p26, %s27, %s28
      %p32 = pneg %p26
      %p33 = scmp.eq.s32.totalorder %s17, 1
      %p34 = por %p32, %p33
      %p35 = scmp.ne.s32.totalorder %s27, %s30
      %p36 = scmp.eq.s32.totalorder %s17, 0
      %p37 = por %p35, %p36
      %p38 = scmp.ne.s32.totalorder %s27, %s30
      %p39 = scmp.eq.s32.totalorder %s22, 1
      %p40 = por %p38, %p39
      %p41 = scmp.ne.s32.totalorder %s30, %s31
      %p42 = scmp.eq.s32.totalorder %s22, 0
      %p43 = por %p41, %p42
      %p44 = scmp.ne.s32.totalorder %s30, %s31
      %p45 = scmp.eq.s32.totalorder %s23, 1
      %p46 = por %p44, %p45
      %p48 = scmp.ne.s32.totalorder %s31, %s47
      %p49 = scmp.eq.s32.totalorder %s23, 0
      %p50 = por %p48, %p49
      %s52 = sadd.s32 %s51, 1
      %p55 = scmp.eq.s32.totalorder %s17, 1
      %p56 = scmp.ne.s32.totalorder %s51, %s53
      %p57 = scmp.eq.s32.totalorder %s17, 0
      %p58 = por %p56, %p57
      %p59 = scmp.ne.s32.totalorder %s51, %s53
      %p60 = scmp.eq.s32.totalorder %s22, 1
      %p61 = por %p59, %p60
      %p62 = scmp.ne.s32.totalorder %s53, %s54
      %p63 = scmp.eq.s32.totalorder %s22, 0
      %p64 = por %p62, %p63
      %p65 = scmp.ne.s32.totalorder %s53, %s54
      %p66 = scmp.eq.s32.totalorder %s23, 1
      %p67 = por %p65, %p66
      %p69 = scmp.ne.s32.totalorder %s54, %s68
      %p70 = scmp.eq.s32.totalorder %s23, 0
      %p71 = por %p69, %p70
      %s73 = sadd.s32 %s72, 1
      %p76 = scmp.eq.s32.totalorder %s17, 1
      %p77 = scmp.ne.s32.totalorder %s72, %s74
      %p78 = scmp.eq.s32.totalorder %s17, 0
      %p79 = por %p77, %p78
      %p80 = scmp.ne.s32.totalorder %s72, %s74
      %p81 = scmp.eq.s32.totalorder %s22, 1
      %p82 = por %p80, %p81
      %p83 = scmp.ne.s32.totalorder %s74, %s75
      %p84 = scmp.eq.s32.totalorder %s22, 0
      %p85 = por %p83, %p84
      %p86 = scmp.ne.s32.totalorder %s74, %s75
      %p87 = scmp.eq.s32.totalorder %s23, 1
      %p88 = por %p86, %p87
      %p90 = scmp.ne.s32.totalorder %s75, %s89
      %p91 = scmp.eq.s32.totalorder %s23, 0
      %p92 = por %p90, %p91
      %s94 = sadd.s32 %s93, 1
      %p97 = scmp.eq.s32.totalorder %s17, 1
      %p98 = scmp.ne.s32.totalorder %s93, %s95
      %p99 = scmp.eq.s32.totalorder %s17, 0
      %p100 = por %p98, %p99
      %p101 = scmp.ne.s32.totalorder %s93, %s95
      %p102 = scmp.eq.s32.totalorder %s22, 1
      %p103 = por %p101, %p102
      %p104 = scmp.ne.s32.totalorder %s95, %s96
      %p105 = scmp.eq.s32.totalorder %s22, 0
      %p106 = por %p104, %p105
      %p107 = scmp.ne.s32.totalorder %s95, %s96
      %p108 = scmp.eq.s32.totalorder %s23, 1
      %p109 = por %p107, %p108
      %p111 = scmp.ne.s32.totalorder %s96, %s110
      %p112 = scmp.eq.s32.totalorder %s23, 0
      %p113 = por %p111, %p112
      %s114 = ssub.s32 %s17, %s24
      %p115 = scmp.eq.s32.totalorder %s114, 0
      %s117 = sadd.s32 %s116, 1
      %s118 = scalar_select %p115, %s116, %s117
      %p121 = pneg %p115
      %p122 = scmp.eq.s32.totalorder %s17, 1
      %p123 = por %p121, %p122
      %p124 = scmp.ne.s32.totalorder %s116, %s119
      %p125 = scmp.eq.s32.totalorder %s17, 0
      %p126 = por %p124, %p125
      %p127 = scmp.ne.s32.totalorder %s116, %s119
      %p128 = scmp.eq.s32.totalorder %s22, 1
      %p129 = por %p127, %p128
      %p130 = scmp.ne.s32.totalorder %s119, %s120
      %p131 = scmp.eq.s32.totalorder %s22, 0
      %p132 = por %p130, %p131
      %p133 = scmp.ne.s32.totalorder %s119, %s120
      %p134 = scmp.eq.s32.totalorder %s23, 1
      %p135 = por %p133, %p134
      %p137 = scmp.ne.s32.totalorder %s120, %s136
      %p138 = scmp.eq.s32.totalorder %s23, 0
      %p139 = por %p137, %p138
      %p140 = scmp.le.s32.totalorder 1, %s17
      %p141 = scmp.lt.s32.totalorder %s17, 3
      %p142 = pnand %p140, %p141
      %p143 = pneg %p142
      // Predicated region
      $region9: #{tpu_custom_call.1} parent=5 // pred_check
        _
      $region10: #{tpu_custom_call.1} parent=5 // pred_check_branch
        %145 = sbr.rel (%p142) target = $region12
      $region11: #{tpu_custom_call.1} parent=5 // pred_region
        %s146 = ssub.s32 %s17, 1
        // Predicated region
        $region13: #{tpu_custom_call.1} parent=11 // pred_check
          %p147 = pneg %p64
        $region14: #{tpu_custom_call.1} parent=11 // pred_check_branch
          %149 = sbr.rel (%p147) target = $region16
        $region15: #{tpu_custom_call.1} parent=11 // pred_region
          %s151 = ssub.s32 2048, 2048
          %152 = vsyncadd [#allocation6], %s151
          %s153 = sshll.u32 [#allocation5], 4
          %s154 = int_to_ptr.vmem [resolvable:$true] %s153
          %159 = dma.hbm_to_vmem [thread:$0]  %s1, 2048, %s154, [#allocation6], 128, 128, 8
        $region16: #{tpu_custom_call.1} parent=11 // pred_fallthru
          _
        // Predicated region
        $region17: #{tpu_custom_call.1} parent=11 // pred_check
          %p160 = pneg %p85
        $region18: #{tpu_custom_call.1} parent=11 // pred_check_branch
          %162 = sbr.rel (%p160) target = $region20
        $region19: #{tpu_custom_call.1} parent=11 // pred_region
          %s164 = ssub.s32 6144, 6144
          %165 = vsyncadd [#allocation6], %s164
          %s166 = sshll.u32 [#allocation7], 4
          %s167 = int_to_ptr.vmem [resolvable:$true] %s166
          %172 = dma.hbm_to_vmem [thread:$0]  %s2, 6144, %s167, [#allocation6], 128, 128, 8
        $region20: #{tpu_custom_call.1} parent=11 // pred_fallthru
          _
        // Predicated region
        $region21: #{tpu_custom_call.1} parent=11 // pred_check
          %p173 = pneg %p106
        $region22: #{tpu_custom_call.1} parent=11 // pred_check_branch
          %175 = sbr.rel (%p173) target = $region24
        $region23: #{tpu_custom_call.1} parent=11 // pred_region
          _
        $region24: #{tpu_custom_call.1} parent=11 // pred_fallthru
          _
      $region12: #{tpu_custom_call.1} parent=5 // pred_fallthru
        _
      %p176 = scmp.lt.s32.totalorder %s17, 2
      // Predicated region
      $region25: #{tpu_custom_call.1} parent=5 // pred_check
        %p177 = pneg %p176
      $region26: #{tpu_custom_call.1} parent=5 // pred_check_branch
        %179 = sbr.rel (%p177) target = $region28
      $region27: #{tpu_custom_call.1} parent=5 // pred_region
        // Predicated region
        $region29: #{tpu_custom_call.1} parent=27 // pred_check
          %p180 = pneg %p37
        $region30: #{tpu_custom_call.1} parent=27 // pred_check_branch
          %182 = sbr.rel (%p180) target = $region32
        $region31: #{tpu_custom_call.1} parent=27 // pred_region
          %s183 = sand.u32 %s27, 1
          %s184 = scalar_lea.sflag [#allocation3], %s183
          %s185 = sand.u32 %s27, 1
          %s186 = smul.addr %s185, 128
          %s187 = scalar_lea.vmem [#allocation2], %s186
          %s189 = ssub.s32 2048, 2048
          %190 = vsyncadd %s184, %s189
          %s191 = smul.addr %s17, 16
          %s192 = smul.addr %s191, 128
          %s193 = scalar_lea.hbm %s0, %s192
          %s194 = sshll.u32 %s187, 4
          %s195 = int_to_ptr.vmem [resolvable:$true] %s194
          %200 = dma.hbm_to_vmem [thread:$0]  %s193, 2048, %s195, %s184, 128, 128, 8
        $region32: #{tpu_custom_call.1} parent=27 // pred_fallthru
          _
      $region28: #{tpu_custom_call.1} parent=5 // pred_fallthru
        _
      %p201 = scmp.le.s32.totalorder 1, %s17
      %p202 = scmp.lt.s32.totalorder %s17, 3
      %p203 = pnand %p201, %p202
      %p204 = pneg %p203
      // Predicated region
      $region33: #{tpu_custom_call.1} parent=5 // pred_check
        _
      $region34: #{tpu_custom_call.1} parent=5 // pred_check_branch
        %206 = sbr.rel (%p203) target = $region36
      $region35: #{tpu_custom_call.1} parent=5 // pred_region
        %s207 = ssub.s32 %s17, 1
        %s208 = sand.u32 %s30, 1
        %s209 = scalar_lea.sflag [#allocation3], %s208
        %s210 = sand.u32 %s30, 1
        %s211 = smul.addr %s210, 128
        %s212 = scalar_lea.vmem [#allocation2], %s211
        // Predicated region
        $region37: #{tpu_custom_call.1} parent=35 // pred_check
          %p213 = pneg %p43
        $region38: #{tpu_custom_call.1} parent=35 // pred_check_branch
          %215 = sbr.rel (%p213) target = $region40
        $region39: #{tpu_custom_call.1} parent=35 // pred_region
          %216 = dma.done %s209, 2048
        $region40: #{tpu_custom_call.1} parent=35 // pred_fallthru
          _
        // Predicated region
        $region41: #{tpu_custom_call.1} parent=35 // pred_check
          %p217 = pneg %p64
        $region42: #{tpu_custom_call.1} parent=35 // pred_check_branch
          %219 = sbr.rel (%p217) target = $region44
        $region43: #{tpu_custom_call.1} parent=35 // pred_region
          %220 = dma.done [#allocation6], 2048
        $region44: #{tpu_custom_call.1} parent=35 // pred_fallthru
          _
        // Predicated region
        $region45: #{tpu_custom_call.1} parent=35 // pred_check
          %p221 = pneg %p85
        $region46: #{tpu_custom_call.1} parent=35 // pred_check_branch
          %223 = sbr.rel (%p221) target = $region48
        $region47: #{tpu_custom_call.1} parent=35 // pred_region
          %224 = dma.done [#allocation6], 6144
        $region48: #{tpu_custom_call.1} parent=35 // pred_fallthru
          _
        %s225 = sand.u32 %s30, 1
        %s226 = scalar_lea.sflag [#allocation3], %s225
        %s227 = sand.u32 %s30, 1
        %s228 = smul.addr %s227, 128
        %s229 = scalar_lea.vmem [#allocation2], %s228
        %p230 = pneg %p43
        %p231 = pneg %p40
        %p232 = pneg %p64
        %p233 = pneg %p61
        %p234 = pneg %p85
        %p235 = pneg %p82
        %p236 = pneg %p106
        %p237 = pneg %p103
        %p238 = pneg %p132
        %p239 = pneg %p129
        %s240 = sand.u32 %s119, 1
        %s241 = scalar_lea.sflag [#allocation4], %s240
        %s242 = sand.u32 %s119, 1
        %s243 = smul.addr %s242, 128
        %s244 = scalar_lea.vmem [#allocation8], %s243
        %v245 = vld [vmem:[%s212] sm:$0xff]
        %v246 = vld [vmem:[%s212 + $0x8] sm:$0xff]
        %v247 = vld [vmem:[%s212 + $0x10] sm:$0xff]
        %v248 = vld [vmem:[%s212 + $0x18] sm:$0xff]
        %v249 = vld [vmem:[%s212 + $0x20] sm:$0xff]
        %v250 = vld [vmem:[%s212 + $0x28] sm:$0xff]
        %v251 = vld [vmem:[%s212 + $0x30] sm:$0xff]
        %v252 = vld [vmem:[%s212 + $0x38] sm:$0xff]
        %v253 = vld [vmem:[%s212 + $0x40] sm:$0xff]
        %v254 = vld [vmem:[%s212 + $0x48] sm:$0xff]
        %v255 = vld [vmem:[%s212 + $0x50] sm:$0xff]
        %v256 = vld [vmem:[%s212 + $0x58] sm:$0xff]
        %v257 = vld [vmem:[%s212 + $0x60] sm:$0xff]
        %v258 = vld [vmem:[%s212 + $0x68] sm:$0xff]
        %v259 = vld [vmem:[%s212 + $0x70] sm:$0xff]
        %v260 = vld [vmem:[%s212 + $0x78] sm:$0xff]
        %v261 = vld [vmem:[#allocation5] sm:$0xff]
        %v262 = vld [vmem:[#allocation5 + $0x8] sm:$0xff]
        %v263 = vld [vmem:[#allocation5 + $0x10] sm:$0xff]
        %v264 = vld [vmem:[#allocation5 + $0x18] sm:$0xff]
        %v265 = vld [vmem:[#allocation5 + $0x20] sm:$0xff]
        %v266 = vld [vmem:[#allocation5 + $0x28] sm:$0xff]
        %v267 = vld [vmem:[#allocation5 + $0x30] sm:$0xff]
        %v268 = vld [vmem:[#allocation5 + $0x38] sm:$0xff]
        %v269 = vld [vmem:[#allocation5 + $0x40] sm:$0xff]
        %v270 = vld [vmem:[#allocation5 + $0x48] sm:$0xff]
        %v271 = vld [vmem:[#allocation5 + $0x50] sm:$0xff]
        %v272 = vld [vmem:[#allocation5 + $0x58] sm:$0xff]
        %v273 = vld [vmem:[#allocation5 + $0x60] sm:$0xff]
        %v274 = vld [vmem:[#allocation5 + $0x68] sm:$0xff]
        %v275 = vld [vmem:[#allocation5 + $0x70] sm:$0xff]
        %v276 = vld [vmem:[#allocation5 + $0x78] sm:$0xff]
        %v277 = vld [vmem:[%s3] sm:$0x1]
        %v278 = vlaneseq
        %v279 = vshrl.u32 %v278, 7
        %v280 = vsub.s32 0, %v279
        %v281 = vrot.slane %v277, %v280
        %282 = vmatprep.subr.mxu0 0.0
        %v283 = vand.u32 %v261, 4294901760
        %284 = vmatpush1.msra.mxu0 %v283
        %285 = vmatprep.subr.mxu0 0.0
        %v286 = vand.u32 %v262, 4294901760
        %287 = vmatpush1.msra.mxu0 %v286
        %288 = vmatprep.subr.mxu0 0.0
        %v289 = vand.u32 %v263, 4294901760
        %290 = vmatpush1.msra.mxu0 %v289
        %291 = vmatprep.subr.mxu0 0.0
        %v292 = vand.u32 %v264, 4294901760
        %293 = vmatpush1.msra.mxu0 %v292
        %294 = vmatprep.subr.mxu0 0.0
        %v295 = vand.u32 %v265, 4294901760
        %296 = vmatpush1.msra.mxu0 %v295
        %297 = vmatprep.subr.mxu0 0.0
        %v298 = vand.u32 %v266, 4294901760
        %299 = vmatpush1.msra.mxu0 %v298
        %300 = vmatprep.subr.mxu0 0.0
        %v301 = vand.u32 %v267, 4294901760
        %302 = vmatpush1.msra.mxu0 %v301
        %303 = vmatprep.subr.mxu0 0.0
        %v304 = vand.u32 %v268, 4294901760
        %305 = vmatpush1.msra.mxu0 %v304
        %306 = vmatprep.subr.mxu0 0.0
        %v307 = vand.u32 %v269, 4294901760
        %308 = vmatpush1.msra.mxu0 %v307
        %309 = vmatprep.subr.mxu0 0.0
        %v310 = vand.u32 %v270, 4294901760
        %311 = vmatpush1.msra.mxu0 %v310
        %312 = vmatprep.subr.mxu0 0.0
        %v313 = vand.u32 %v271, 4294901760
        %314 = vmatpush1.msra.mxu0 %v313
        %315 = vmatprep.subr.mxu0 0.0
        %v316 = vand.u32 %v272, 4294901760
        %317 = vmatpush1.msra.mxu0 %v316
        %318 = vmatprep.subr.mxu0 0.0
        %v319 = vand.u32 %v273, 4294901760
        %320 = vmatpush1.msra.mxu0 %v319
        %321 = vmatprep.subr.mxu0 0.0
        %v322 = vand.u32 %v274, 4294901760
        %323 = vmatpush1.msra.mxu0 %v322
        %324 = vmatprep.subr.mxu0 0.0
        %v325 = vand.u32 %v275, 4294901760
        %326 = vmatpush1.msra.mxu0 %v325
        %327 = vmatprep.subr.mxu0 0.0
        %v328 = vand.u32 %v276, 4294901760
        %329 = vmatpush1.msra.mxu0 %v328
        %330 = vmatprep.subr.mxu0 0.0
        %331 = vmatpush1.msra.mxu0 0.0
        %332 = vmatprep.subr.mxu0 0.0
        %333 = vmatpush1.msra.mxu0 0.0
        %334 = vmatprep.subr.mxu0 0.0
        %335 = vmatpush1.msra.mxu0 0.0
        %336 = vmatprep.subr.mxu0 0.0
        %337 = vmatpush1.msra.mxu0 0.0
        %338 = vmatprep.subr.mxu0 0.0
        %339 = vmatpush1.msra.mxu0 0.0
        %340 = vmatprep.subr.mxu0 0.0
        %341 = vmatpush1.msra.mxu0 0.0
        %342 = vmatprep.subr.mxu0 0.0
        %343 = vmatpush1.msra.mxu0 0.0
        %344 = vmatprep.subr.mxu0 0.0
        %345 = vmatpush1.msra.mxu0 0.0
        %346 = vmatprep.subr.mxu0 0.0
        %347 = vmatpush1.msra.mxu0 0.0
        %348 = vmatprep.subr.mxu0 0.0
        %349 = vmatpush1.msra.mxu0 0.0
        %350 = vmatprep.subr.mxu0 0.0
        %351 = vmatpush1.msra.mxu0 0.0
        %352 = vmatprep.subr.mxu0 0.0
        %353 = vmatpush1.msra.mxu0 0.0
        %354 = vmatprep.subr.mxu0 0.0
        %355 = vmatpush1.msra.mxu0 0.0
        %356 = vmatprep.subr.mxu0 0.0
        %357 = vmatpush1.msra.mxu0 0.0
        %358 = vmatprep.subr.mxu0 0.0
        %359 = vmatpush1.msra.mxu0 0.0
        %360 = vmatprep.subr.mxu0 0.0
        %361 = vmatpush1.msra.mxu0 0.0
        %362 = vmatprep.mubr.f32.mxu0 0.0
        %v363 = vand.u32 %v245, 4294901760
        %v364 = vsub.f32 %v245, %v363
        %v365 = vand.u32 %v364, 4294901760
        %v366 = vsub.f32 %v364, %v365
        %v367 = vand.u32 %v366, 4294901760
        %368 = vmatmul.mubr.f32.gmra.mrb[0].mxu0 %v367
        %v369 = vpop.f32.mrb[0].mxu0
        %v370 = vadd.f32 %v281, %v369
        %v371 = vpop.f32.mrb[0].mxu0
        %372 = vmatprep.mubr.f32.mxu0 0.0
        %v373 = vand.u32 %v246, 4294901760
        %v374 = vsub.f32 %v246, %v373
        %v375 = vand.u32 %v374, 4294901760
        %v376 = vsub.f32 %v374, %v375
        %v377 = vand.u32 %v376, 4294901760
        %378 = vmatmul.mubr.f32.gmra.mrb[0].mxu0 %v377
        %v379 = vpop.f32.mrb[0].mxu0
        %v380 = vadd.f32 %v281, %v379
        %v381 = vpop.f32.mrb[0].mxu0
        %382 = vmatprep.mubr.f32.mxu0 0.0
        %v383 = vand.u32 %v247, 4294901760
        %v384 = vsub.f32 %v247, %v383
        %v385 = vand.u32 %v384, 4294901760
        %v386 = vsub.f32 %v384, %v385
        %v387 = vand.u32 %v386, 4294901760
        %388 = vmatmul.mubr.f32.gmra.mrb[0].mxu0 %v387
        %v389 = vpop.f32.mrb[0].mxu0
        %v390 = vadd.f32 %v281, %v389
        %v391 = vpop.f32.mrb[0].mxu0
        %392 = vmatprep.mubr.f32.mxu0 0.0
        %v393 = vand.u32 %v248, 4294901760
        %v394 = vsub.f32 %v248, %v393
        %v395 = vand.u32 %v394, 4294901760
        %v396 = vsub.f32 %v394, %v395
        %v397 = vand.u32 %v396, 4294901760
        %398 = vmatmul.mubr.f32.gmra.mrb[0].mxu0 %v397
        %v399 = vpop.f32.mrb[0].mxu0
        %v400 = vadd.f32 %v281, %v399
        %v401 = vpop.f32.mrb[0].mxu0
        %402 = vmatprep.mubr.f32.mxu0 0.0
        %v403 = vand.u32 %v249, 4294901760
        %v404 = vsub.f32 %v249, %v403
        %v405 = vand.u32 %v404, 4294901760
        %v406 = vsub.f32 %v404, %v405
        %v407 = vand.u32 %v406, 4294901760
        %408 = vmatmul.mubr.f32.gmra.mrb[0].mxu0 %v407
        %v409 = vpop.f32.mrb[0].mxu0
        %v410 = vadd.f32 %v281, %v409
        %v411 = vpop.f32.mrb[0].mxu0
        %412 = vmatprep.mubr.f32.mxu0 0.0
        %v413 = vand.u32 %v250, 4294901760
        %v414 = vsub.f32 %v250, %v413
        %v415 = vand.u32 %v414, 4294901760
        %v416 = vsub.f32 %v414, %v415
        %v417 = vand.u32 %v416, 4294901760
        %418 = vmatmul.mubr.f32.gmra.mrb[0].mxu0 %v417
        %v419 = vpop.f32.mrb[0].mxu0
        %v420 = vadd.f32 %v281, %v419
        %v421 = vpop.f32.mrb[0].mxu0
        %422 = vmatprep.mubr.f32.mxu0 0.0
        %v423 = vand.u32 %v251, 4294901760
        %v424 = vsub.f32 %v251, %v423
        %v425 = vand.u32 %v424, 4294901760
        %v426 = vsub.f32 %v424, %v425
        %v427 = vand.u32 %v426, 4294901760
        %428 = vmatmul.mubr.f32.gmra.mrb[0].mxu0 %v427
        %v429 = vpop.f32.mrb[0].mxu0
        %v430 = vadd.f32 %v281, %v429
        %v431 = vpop.f32.mrb[0].mxu0
        %432 = vmatprep.mubr.f32.mxu0 0.0
        %v433 = vand.u32 %v252, 4294901760
        %v434 = vsub.f32 %v252, %v433
        %v435 = vand.u32 %v434, 4294901760
        %v436 = vsub.f32 %v434, %v435
        %v437 = vand.u32 %v436, 4294901760
        %438 = vmatmul.mubr.f32.gmra.mrb[0].mxu0 %v437
        %v439 = vpop.f32.mrb[0].mxu0
        %v440 = vadd.f32 %v281, %v439
        %v441 = vpop.f32.mrb[0].mxu0
        %442 = vmatprep.mubr.f32.mxu0 0.0
        %v443 = vand.u32 %v253, 4294901760
        %v444 = vsub.f32 %v253, %v443
        %v445 = vand.u32 %v444, 4294901760
        %v446 = vsub.f32 %v444, %v445
        %v447 = vand.u32 %v446, 4294901760
        %448 = vmatmul.mubr.f32.gmra.mrb[0].mxu0 %v447
        %v449 = vpop.f32.mrb[0].mxu0
        %v450 = vadd.f32 %v281, %v449
        %v451 = vpop.f32.mrb[0].mxu0
        %452 = vmatprep.mubr.f32.mxu0 0.0
        %v453 = vand.u32 %v254, 4294901760
        %v454 = vsub.f32 %v254, %v453
        %v455 = vand.u32 %v454, 4294901760
        %v456 = vsub.f32 %v454, %v455
        %v457 = vand.u32 %v456, 4294901760
        %458 = vmatmul.mubr.f32.gmra.mrb[0].mxu0 %v457
        %v459 = vpop.f32.mrb[0].mxu0
        %v460 = vadd.f32 %v281, %v459
        %v461 = vpop.f32.mrb[0].mxu0
        %462 = vmatprep.mubr.f32.mxu0 0.0
        %v463 = vand.u32 %v255, 4294901760
        %v464 = vsub.f32 %v255, %v463
        %v465 = vand.u32 %v464, 4294901760
        %v466 = vsub.f32 %v464, %v465
        %v467 = vand.u32 %v466, 4294901760
        %468 = vmatmul.mubr.f32.gmra.mrb[0].mxu0 %v467
        %v469 = vpop.f32.mrb[0].mxu0
        %v470 = vadd.f32 %v281, %v469
        %v471 = vpop.f32.mrb[0].mxu0
        %472 = vmatprep.mubr.f32.mxu0 0.0
        %v473 = vand.u32 %v256, 4294901760
        %v474 = vsub.f32 %v256, %v473
        %v475 = vand.u32 %v474, 4294901760
        %v476 = vsub.f32 %v474, %v475
        %v477 = vand.u32 %v476, 4294901760
        %478 = vmatmul.mubr.f32.gmra.mrb[0].mxu0 %v477
        %v479 = vpop.f32.mrb[0].mxu0
        %v480 = vadd.f32 %v281, %v479
        %v481 = vpop.f32.mrb[0].mxu0
        %482 = vmatprep.mubr.f32.mxu0 0.0
        %v483 = vand.u32 %v257, 4294901760
        %v484 = vsub.f32 %v257, %v483
        %v485 = vand.u32 %v484, 4294901760
        %v486 = vsub.f32 %v484, %v485
        %v487 = vand.u32 %v486, 4294901760
        %488 = vmatmul.mubr.f32.gmra.mrb[0].mxu0 %v487
        %v489 = vpop.f32.mrb[0].mxu0
        %v490 = vadd.f32 %v281, %v489
        %v491 = vpop.f32.mrb[0].mxu0
        %492 = vmatprep.mubr.f32.mxu0 0.0
        %v493 = vand.u32 %v258, 4294901760
        %v494 = vsub.f32 %v258, %v493
        %v495 = vand.u32 %v494, 4294901760
        %v496 = vsub.f32 %v494, %v495
        %v497 = vand.u32 %v496, 4294901760
        %498 = vmatmul.mubr.f32.gmra.mrb[0].mxu0 %v497
        %v499 = vpop.f32.mrb[0].mxu0
        %v500 = vadd.f32 %v281, %v499
        %v501 = vpop.f32.mrb[0].mxu0
        %502 = vmatprep.mubr.f32.mxu0 0.0
        %v503 = vand.u32 %v259, 4294901760
        %v504 = vsub.f32 %v259, %v503
        %v505 = vand.u32 %v504, 4294901760
        %v506 = vsub.f32 %v504, %v505
        %v507 = vand.u32 %v506, 4294901760
        %508 = vmatmul.mubr.f32.gmra.mrb[0].mxu0 %v507
        %v509 = vpop.f32.mrb[0].mxu0
        %v510 = vadd.f32 %v281, %v509
        %v511 = vpop.f32.mrb[0].mxu0
        %512 = vmatprep.mubr.f32.mxu0 0.0
        %v513 = vand.u32 %v260, 4294901760
        %v514 = vsub.f32 %v260, %v513
        %v515 = vand.u32 %v514, 4294901760
        %v516 = vsub.f32 %v514, %v515
        %v517 = vand.u32 %v516, 4294901760
        %518 = vmatmul.mubr.f32.gmra.mrb[0].mxu0 %v517
        %v519 = vpop.f32.mrb[0].mxu0
        %v520 = vadd.f32 %v281, %v519
        %v521 = vpop.f32.mrb[0].mxu0
        %522 = vdwg.mxu0
        %523 = vmatprep.subr.mxu0 0.0
        %v524 = vand.u32 %v261, 4294901760
        %v525 = vsub.f32 %v261, %v524
        %v526 = vand.u32 %v525, 4294901760
        %v527 = vsub.f32 %v525, %v526
        %v528 = vand.u32 %v527, 4294901760
        %529 = vmatpush1.msra.mxu0 %v528
        %530 = vmatprep.subr.mxu0 0.0
        %v531 = vand.u32 %v262, 4294901760
        %v532 = vsub.f32 %v262, %v531
        %v533 = vand.u32 %v532, 4294901760
        %v534 = vsub.f32 %v532, %v533
        %v535 = vand.u32 %v534, 4294901760
        %536 = vmatpush1.msra.mxu0 %v535
        %537 = vmatprep.subr.mxu0 0.0
        %v538 = vand.u32 %v263, 4294901760
        %v539 = vsub.f32 %v263, %v538
        %v540 = vand.u32 %v539, 4294901760
        %v541 = vsub.f32 %v539, %v540
        %v542 = vand.u32 %v541, 4294901760
        %543 = vmatpush1.msra.mxu0 %v542
        %544 = vmatprep.subr.mxu0 0.0
        %v545 = vand.u32 %v264, 4294901760
        %v546 = vsub.f32 %v264, %v545
        %v547 = vand.u32 %v546, 4294901760
        %v548 = vsub.f32 %v546, %v547
        %v549 = vand.u32 %v548, 4294901760
        %550 = vmatpush1.msra.mxu0 %v549
        %551 = vmatprep.subr.mxu0 0.0
        %v552 = vand.u32 %v265, 4294901760
        %v553 = vsub.f32 %v265, %v552
        %v554 = vand.u32 %v553, 4294901760
        %v555 = vsub.f32 %v553, %v554
        %v556 = vand.u32 %v555, 4294901760
        %557 = vmatpush1.msra.mxu0 %v556
        %558 = vmatprep.subr.mxu0 0.0
        %v559 = vand.u32 %v266, 4294901760
        %v560 = vsub.f32 %v266, %v559
        %v561 = vand.u32 %v560, 4294901760
        %v562 = vsub.f32 %v560, %v561
        %v563 = vand.u32 %v562, 4294901760
        %564 = vmatpush1.msra.mxu0 %v563
        %565 = vmatprep.subr.mxu0 0.0
        %v566 = vand.u32 %v267, 4294901760
        %v567 = vsub.f32 %v267, %v566
        %v568 = vand.u32 %v567, 4294901760
        %v569 = vsub.f32 %v567, %v568
        %v570 = vand.u32 %v569, 4294901760
        %571 = vmatpush1.msra.mxu0 %v570
        %572 = vmatprep.subr.mxu0 0.0
        %v573 = vand.u32 %v268, 4294901760
        %v574 = vsub.f32 %v268, %v573
        %v575 = vand.u32 %v574, 4294901760
        %v576 = vsub.f32 %v574, %v575
        %v577 = vand.u32 %v576, 4294901760
        %578 = vmatpush1.msra.mxu0 %v577
        %579 = vmatprep.subr.mxu0 0.0
        %v580 = vand.u32 %v269, 4294901760
        %v581 = vsub.f32 %v269, %v580
        %v582 = vand.u32 %v581, 4294901760
        %v583 = vsub.f32 %v581, %v582
        %v584 = vand.u32 %v583, 4294901760
        %585 = vmatpush1.msra.mxu0 %v584
        %586 = vmatprep.subr.mxu0 0.0
        %v587 = vand.u32 %v270, 4294901760
        %v588 = vsub.f32 %v270, %v587
        %v589 = vand.u32 %v588, 4294901760
        %v590 = vsub.f32 %v588, %v589
        %v591 = vand.u32 %v590, 4294901760
        %592 = vmatpush1.msra.mxu0 %v591
        %593 = vmatprep.subr.mxu0 0.0
        %v594 = vand.u32 %v271, 4294901760
        %v595 = vsub.f32 %v271, %v594
        %v596 = vand.u32 %v595, 4294901760
        %v597 = vsub.f32 %v595, %v596
        %v598 = vand.u32 %v597, 4294901760
        %599 = vmatpush1.msra.mxu0 %v598
        %600 = vmatprep.subr.mxu0 0.0
        %v601 = vand.u32 %v272, 4294901760
        %v602 = vsub.f32 %v272, %v601
        %v603 = vand.u32 %v602, 4294901760
        %v604 = vsub.f32 %v602, %v603
        %v605 = vand.u32 %v604, 4294901760
        %606 = vmatpush1.msra.mxu0 %v605
        %607 = vmatprep.subr.mxu0 0.0
        %v608 = vand.u32 %v273, 4294901760
        %v609 = vsub.f32 %v273, %v608
        %v610 = vand.u32 %v609, 4294901760
        %v611 = vsub.f32 %v609, %v610
        %v612 = vand.u32 %v611, 4294901760
        %613 = vmatpush1.msra.mxu0 %v612
        %614 = vmatprep.subr.mxu0 0.0
        %v615 = vand.u32 %v274, 4294901760
        %v616 = vsub.f32 %v274, %v615
        %v617 = vand.u32 %v616, 4294901760
        %v618 = vsub.f32 %v616, %v617
        %v619 = vand.u32 %v618, 4294901760
        %620 = vmatpush1.msra.mxu0 %v619
        %621 = vmatprep.subr.mxu0 0.0
        %v622 = vand.u32 %v275, 4294901760
        %v623 = vsub.f32 %v275, %v622
        %v624 = vand.u32 %v623, 4294901760
        %v625 = vsub.f32 %v623, %v624
        %v626 = vand.u32 %v625, 4294901760
        %627 = vmatpush1.msra.mxu0 %v626
        %628 = vmatprep.subr.mxu0 0.0
        %v629 = vand.u32 %v276, 4294901760
        %v630 = vsub.f32 %v276, %v629
        %v631 = vand.u32 %v630, 4294901760
        %v632 = vsub.f32 %v630, %v631
        %v633 = vand.u32 %v632, 4294901760
        %634 = vmatpush1.msra.mxu0 %v633
        %635 = vmatprep.subr.mxu0 0.0
        %636 = vmatpush1.msra.mxu0 0.0
        %637 = vmatprep.subr.mxu0 0.0
        %638 = vmatpush1.msra.mxu0 0.0
        %639 = vmatprep.subr.mxu0 0.0
        %640 = vmatpush1.msra.mxu0 0.0
        %641 = vmatprep.subr.mxu0 0.0
        %642 = vmatpush1.msra.mxu0 0.0
        %643 = vmatprep.subr.mxu0 0.0
        %644 = vmatpush1.msra.mxu0 0.0
        %645 = vmatprep.subr.mxu0 0.0
        %646 = vmatpush1.msra.mxu0 0.0
        %647 = vmatprep.subr.mxu0 0.0
        %648 = vmatpush1.msra.mxu0 0.0
        %649 = vmatprep.subr.mxu0 0.0
        %650 = vmatpush1.msra.mxu0 0.0
        %651 = vmatprep.subr.mxu0 0.0
        %652 = vmatpush1.msra.mxu0 0.0
        %653 = vmatprep.subr.mxu0 0.0
        %654 = vmatpush1.msra.mxu0 0.0
        %655 = vmatprep.subr.mxu0 0.0
        %656 = vmatpush1.msra.mxu0 0.0
        %657 = vmatprep.subr.mxu0 0.0
        %658 = vmatpush1.msra.mxu0 0.0
        %659 = vmatprep.subr.mxu0 0.0
        %660 = vmatpush1.msra.mxu0 0.0
        %661 = vmatprep.subr.mxu0 0.0
        %662 = vmatpush1.msra.mxu0 0.0
        %663 = vmatprep.subr.mxu0 0.0
        %664 = vmatpush1.msra.mxu0 0.0
        %665 = vmatprep.subr.mxu0 0.0
        %666 = vmatpush1.msra.mxu0 0.0
        %667 = vmatprep.mubr.f32.mxu0 0.0
        %v668 = vand.u32 %v245, 4294901760
        %669 = vmatmul.mubr.f32.gmra.mrb[0].mxu0 %v668
        %v670 = vpop.f32.mrb[0].mxu0
        %v671 = vadd.f32 %v370, %v670
        %v672 = vpop.f32.mrb[0].mxu0
        %673 = vmatprep.mubr.f32.mxu0 0.0
        %v674 = vand.u32 %v246, 4294901760
        %675 = vmatmul.mubr.f32.gmra.mrb[0].mxu0 %v674
        %v676 = vpop.f32.mrb[0].mxu0
        %v677 = vadd.f32 %v380, %v676
        %v678 = vpop.f32.mrb[0].mxu0
        %679 = vmatprep.mubr.f32.mxu0 0.0
        %v680 = vand.u32 %v247, 4294901760
        %681 = vmatmul.mubr.f32.gmra.mrb[0].mxu0 %v680
        %v682 = vpop.f32.mrb[0].mxu0
        %v683 = vadd.f32 %v390, %v682
        %v684 = vpop.f32.mrb[0].mxu0
        %685 = vmatprep.mubr.f32.mxu0 0.0
        %v686 = vand.u32 %v248, 4294901760
        %687 = vmatmul.mubr.f32.gmra.mrb[0].mxu0 %v686
        %v688 = vpop.f32.mrb[0].mxu0
        %v689 = vadd.f32 %v400, %v688
        %v690 = vpop.f32.mrb[0].mxu0
        %691 = vmatprep.mubr.f32.mxu0 0.0
        %v692 = vand.u32 %v249, 4294901760
        %693 = vmatmul.mubr.f32.gmra.mrb[0].mxu0 %v692
        %v694 = vpop.f32.mrb[0].mxu0
        %v695 = vadd.f32 %v410, %v694
        %v696 = vpop.f32.mrb[0].mxu0
        %697 = vmatprep.mubr.f32.mxu0 0.0
        %v698 = vand.u32 %v250, 4294901760
        %699 = vmatmul.mubr.f32.gmra.mrb[0].mxu0 %v698
        %v700 = vpop.f32.mrb[0].mxu0
        %v701 = vadd.f32 %v420, %v700
        %v702 = vpop.f32.mrb[0].mxu0
        %703 = vmatprep.mubr.f32.mxu0 0.0
        %v704 = vand.u32 %v251, 4294901760
        %705 = vmatmul.mubr.f32.gmra.mrb[0].mxu0 %v704
        %v706 = vpop.f32.mrb[0].mxu0
        %v707 = vadd.f32 %v430, %v706
        %v708 = vpop.f32.mrb[0].mxu0
        %709 = vmatprep.mubr.f32.mxu0 0.0
        %v710 = vand.u32 %v252, 4294901760
        %711 = vmatmul.mubr.f32.gmra.mrb[0].mxu0 %v710
        %v712 = vpop.f32.mrb[0].mxu0
        %v713 = vadd.f32 %v440, %v712
        %v714 = vpop.f32.mrb[0].mxu0
        %715 = vmatprep.mubr.f32.mxu0 0.0
        %v716 = vand.u32 %v253, 4294901760
        %717 = vmatmul.mubr.f32.gmra.mrb[0].mxu0 %v716
        %v718 = vpop.f32.mrb[0].mxu0
        %v719 = vadd.f32 %v450, %v718
        %v720 = vpop.f32.mrb[0].mxu0
        %721 = vmatprep.mubr.f32.mxu0 0.0
        %v722 = vand.u32 %v254, 4294901760
        %723 = vmatmul.mubr.f32.gmra.mrb[0].mxu0 %v722
        %v724 = vpop.f32.mrb[0].mxu0
        %v725 = vadd.f32 %v460, %v724
        %v726 = vpop.f32.mrb[0].mxu0
        %727 = vmatprep.mubr.f32.mxu0 0.0
        %v728 = vand.u32 %v255, 4294901760
        %729 = vmatmul.mubr.f32.gmra.mrb[0].mxu0 %v728
        %v730 = vpop.f32.mrb[0].mxu0
        %v731 = vadd.f32 %v470, %v730
        %v732 = vpop.f32.mrb[0].mxu0
        %733 = vmatprep.mubr.f32.mxu0 0.0
        %v734 = vand.u32 %v256, 4294901760
        %735 = vmatmul.mubr.f32.gmra.mrb[0].mxu0 %v734
        %v736 = vpop.f32.mrb[0].mxu0
        %v737 = vadd.f32 %v480, %v736
        %v738 = vpop.f32.mrb[0].mxu0
        %739 = vmatprep.mubr.f32.mxu0 0.0
        %v740 = vand.u32 %v257, 4294901760
        %741 = vmatmul.mubr.f32.gmra.mrb[0].mxu0 %v740
        %v742 = vpop.f32.mrb[0].mxu0
        %v743 = vadd.f32 %v490, %v742
        %v744 = vpop.f32.mrb[0].mxu0
        %745 = vmatprep.mubr.f32.mxu0 0.0
        %v746 = vand.u32 %v258, 4294901760
        %747 = vmatmul.mubr.f32.gmra.mrb[0].mxu0 %v746
        %v748 = vpop.f32.mrb[0].mxu0
        %v749 = vadd.f32 %v500, %v748
        %v750 = vpop.f32.mrb[0].mxu0
        %751 = vmatprep.mubr.f32.mxu0 0.0
        %v752 = vand.u32 %v259, 4294901760
        %753 = vmatmul.mubr.f32.gmra.mrb[0].mxu0 %v752
        %v754 = vpop.f32.mrb[0].mxu0
        %v755 = vadd.f32 %v510, %v754
        %v756 = vpop.f32.mrb[0].mxu0
        %757 = vmatprep.mubr.f32.mxu0 0.0
        %v758 = vand.u32 %v260, 4294901760
        %759 = vmatmul.mubr.f32.gmra.mrb[0].mxu0 %v758
        %v760 = vpop.f32.mrb[0].mxu0
        %v761 = vadd.f32 %v520, %v760
        %v762 = vpop.f32.mrb[0].mxu0
        %763 = vdwg.mxu0
        %764 = vmatprep.subr.mxu0 0.0
        %v765 = vand.u32 %v261, 4294901760
        %v766 = vsub.f32 %v261, %v765
        %767 = vmatpush1.msra.mxu0 %v766
        %768 = vmatprep.subr.mxu0 0.0
        %v769 = vand.u32 %v262, 4294901760
        %v770 = vsub.f32 %v262, %v769
        %771 = vmatpush1.msra.mxu0 %v770
        %772 = vmatprep.subr.mxu0 0.0
        %v773 = vand.u32 %v263, 4294901760
        %v774 = vsub.f32 %v263, %v773
        %775 = vmatpush1.msra.mxu0 %v774
        %776 = vmatprep.subr.mxu0 0.0
        %v777 = vand.u32 %v264, 4294901760
        %v778 = vsub.f32 %v264, %v777
        %779 = vmatpush1.msra.mxu0 %v778
        %780 = vmatprep.subr.mxu0 0.0
        %v781 = vand.u32 %v265, 4294901760
        %v782 = vsub.f32 %v265, %v781
        %783 = vmatpush1.msra.mxu0 %v782
        %784 = vmatprep.subr.mxu0 0.0
        %v785 = vand.u32 %v266, 4294901760
        %v786 = vsub.f32 %v266, %v785
        %787 = vmatpush1.msra.mxu0 %v786
        %788 = vmatprep.subr.mxu0 0.0
        %v789 = vand.u32 %v267, 4294901760
        %v790 = vsub.f32 %v267, %v789
        %791 = vmatpush1.msra.mxu0 %v790
        %792 = vmatprep.subr.mxu0 0.0
        %v793 = vand.u32 %v268, 4294901760
        %v794 = vsub.f32 %v268, %v793
        %795 = vmatpush1.msra.mxu0 %v794
        %796 = vmatprep.subr.mxu0 0.0
        %v797 = vand.u32 %v269, 4294901760
        %v798 = vsub.f32 %v269, %v797
        %799 = vmatpush1.msra.mxu0 %v798
        %800 = vmatprep.subr.mxu0 0.0
        %v801 = vand.u32 %v270, 4294901760
        %v802 = vsub.f32 %v270, %v801
        %803 = vmatpush1.msra.mxu0 %v802
        %804 = vmatprep.subr.mxu0 0.0
        %v805 = vand.u32 %v271, 4294901760
        %v806 = vsub.f32 %v271, %v805
        %807 = vmatpush1.msra.mxu0 %v806
        %808 = vmatprep.subr.mxu0 0.0
        %v809 = vand.u32 %v272, 4294901760
        %v810 = vsub.f32 %v272, %v809
        %811 = vmatpush1.msra.mxu0 %v810
        %812 = vmatprep.subr.mxu0 0.0
        %v813 = vand.u32 %v273, 4294901760
        %v814 = vsub.f32 %v273, %v813
        %815 = vmatpush1.msra.mxu0 %v814
        %816 = vmatprep.subr.mxu0 0.0
        %v817 = vand.u32 %v274, 4294901760
        %v818 = vsub.f32 %v274, %v817
        %819 = vmatpush1.msra.mxu0 %v818
        %820 = vmatprep.subr.mxu0 0.0
        %v821 = vand.u32 %v275, 4294901760
        %v822 = vsub.f32 %v275, %v821
        %823 = vmatpush1.msra.mxu0 %v822
        %824 = vmatprep.subr.mxu0 0.0
        %v825 = vand.u32 %v276, 4294901760
        %v826 = vsub.f32 %v276, %v825
        %827 = vmatpush1.msra.mxu0 %v826
        %828 = vmatprep.subr.mxu0 0.0
        %829 = vmatpush1.msra.mxu0 0.0
        %830 = vmatprep.subr.mxu0 0.0
        %831 = vmatpush1.msra.mxu0 0.0
        %832 = vmatprep.subr.mxu0 0.0
        %833 = vmatpush1.msra.mxu0 0.0
        %834 = vmatprep.subr.mxu0 0.0
        %835 = vmatpush1.msra.mxu0 0.0
        %836 = vmatprep.subr.mxu0 0.0
        %837 = vmatpush1.msra.mxu0 0.0
        %838 = vmatprep.subr.mxu0 0.0
        %839 = vmatpush1.msra.mxu0 0.0
        %840 = vmatprep.subr.mxu0 0.0
        %841 = vmatpush1.msra.mxu0 0.0
        %842 = vmatprep.subr.mxu0 0.0
        %843 = vmatpush1.msra.mxu0 0.0
        %844 = vmatprep.subr.mxu0 0.0
        %845 = vmatpush1.msra.mxu0 0.0
        %846 = vmatprep.subr.mxu0 0.0
        %847 = vmatpush1.msra.mxu0 0.0
        %848 = vmatprep.subr.mxu0 0.0
        %849 = vmatpush1.msra.mxu0 0.0
        %850 = vmatprep.subr.mxu0 0.0
        %851 = vmatpush1.msra.mxu0 0.0
        %852 = vmatprep.subr.mxu0 0.0
        %853 = vmatpush1.msra.mxu0 0.0
        %854 = vmatprep.subr.mxu0 0.0
        %855 = vmatpush1.msra.mxu0 0.0
        %856 = vmatprep.subr.mxu0 0.0
        %857 = vmatpush1.msra.mxu0 0.0
        %858 = vmatprep.subr.mxu0 0.0
        %859 = vmatpush1.msra.mxu0 0.0
        %860 = vmatprep.mubr.f32.mxu0 0.0
        %v861 = vand.u32 %v245, 4294901760
        %v862 = vsub.f32 %v245, %v861
        %863 = vmatmul.mubr.f32.gmra.mrb[0].mxu0 %v862
        %v864 = vpop.f32.mrb[0].mxu0
        %v865 = vadd.f32 %v671, %v864
        %v866 = vpop.f32.mrb[0].mxu0
        %867 = vmatprep.mubr.f32.mxu0 0.0
        %v868 = vand.u32 %v246, 4294901760
        %v869 = vsub.f32 %v246, %v868
        %870 = vmatmul.mubr.f32.gmra.mrb[0].mxu0 %v869
        %v871 = vpop.f32.mrb[0].mxu0
        %v872 = vadd.f32 %v677, %v871
        %v873 = vpop.f32.mrb[0].mxu0
        %874 = vmatprep.mubr.f32.mxu0 0.0
        %v875 = vand.u32 %v247, 4294901760
        %v876 = vsub.f32 %v247, %v875
        %877 = vmatmul.mubr.f32.gmra.mrb[0].mxu0 %v876
        %v878 = vpop.f32.mrb[0].mxu0
        %v879 = vadd.f32 %v683, %v878
        %v880 = vpop.f32.mrb[0].mxu0
        %881 = vmatprep.mubr.f32.mxu0 0.0
        %v882 = vand.u32 %v248, 4294901760
        %v883 = vsub.f32 %v248, %v882
        %884 = vmatmul.mubr.f32.gmra.mrb[0].mxu0 %v883
        %v885 = vpop.f32.mrb[0].mxu0
        %v886 = vadd.f32 %v689, %v885
        %v887 = vpop.f32.mrb[0].mxu0
        %888 = vmatprep.mubr.f32.mxu0 0.0
        %v889 = vand.u32 %v249, 4294901760
        %v890 = vsub.f32 %v249, %v889
        %891 = vmatmul.mubr.f32.gmra.mrb[0].mxu0 %v890
        %v892 = vpop.f32.mrb[0].mxu0
        %v893 = vadd.f32 %v695, %v892
        %v894 = vpop.f32.mrb[0].mxu0
        %895 = vmatprep.mubr.f32.mxu0 0.0
        %v896 = vand.u32 %v250, 4294901760
        %v897 = vsub.f32 %v250, %v896
        %898 = vmatmul.mubr.f32.gmra.mrb[0].mxu0 %v897
        %v899 = vpop.f32.mrb[0].mxu0
        %v900 = vadd.f32 %v701, %v899
        %v901 = vpop.f32.mrb[0].mxu0
        %902 = vmatprep.mubr.f32.mxu0 0.0
        %v903 = vand.u32 %v251, 4294901760
        %v904 = vsub.f32 %v251, %v903
        %905 = vmatmul.mubr.f32.gmra.mrb[0].mxu0 %v904
        %v906 = vpop.f32.mrb[0].mxu0
        %v907 = vadd.f32 %v707, %v906
        %v908 = vpop.f32.mrb[0].mxu0
        %909 = vmatprep.mubr.f32.mxu0 0.0
        %v910 = vand.u32 %v252, 4294901760
        %v911 = vsub.f32 %v252, %v910
        %912 = vmatmul.mubr.f32.gmra.mrb[0].mxu0 %v911
        %v913 = vpop.f32.mrb[0].mxu0
        %v914 = vadd.f32 %v713, %v913
        %v915 = vpop.f32.mrb[0].mxu0
        %916 = vmatprep.mubr.f32.mxu0 0.0
        %v917 = vand.u32 %v253, 4294901760
        %v918 = vsub.f32 %v253, %v917
        %919 = vmatmul.mubr.f32.gmra.mrb[0].mxu0 %v918
        %v920 = vpop.f32.mrb[0].mxu0
        %v921 = vadd.f32 %v719, %v920
        %v922 = vpop.f32.mrb[0].mxu0
        %923 = vmatprep.mubr.f32.mxu0 0.0
        %v924 = vand.u32 %v254, 4294901760
        %v925 = vsub.f32 %v254, %v924
        %926 = vmatmul.mubr.f32.gmra.mrb[0].mxu0 %v925
        %v927 = vpop.f32.mrb[0].mxu0
        %v928 = vadd.f32 %v725, %v927
        %v929 = vpop.f32.mrb[0].mxu0
        %930 = vmatprep.mubr.f32.mxu0 0.0
        %v931 = vand.u32 %v255, 4294901760
        %v932 = vsub.f32 %v255, %v931
        %933 = vmatmul.mubr.f32.gmra.mrb[0].mxu0 %v932
        %v934 = vpop.f32.mrb[0].mxu0
        %v935 = vadd.f32 %v731, %v934
        %v936 = vpop.f32.mrb[0].mxu0
        %937 = vmatprep.mubr.f32.mxu0 0.0
        %v938 = vand.u32 %v256, 4294901760
        %v939 = vsub.f32 %v256, %v938
        %940 = vmatmul.mubr.f32.gmra.mrb[0].mxu0 %v939
        %v941 = vpop.f32.mrb[0].mxu0
        %v942 = vadd.f32 %v737, %v941
        %v943 = vpop.f32.mrb[0].mxu0
        %944 = vmatprep.mubr.f32.mxu0 0.0
        %v945 = vand.u32 %v257, 4294901760
        %v946 = vsub.f32 %v257, %v945
        %947 = vmatmul.mubr.f32.gmra.mrb[0].mxu0 %v946
        %v948 = vpop.f32.mrb[0].mxu0
        %v949 = vadd.f32 %v743, %v948
        %v950 = vpop.f32.mrb[0].mxu0
        %951 = vmatprep.mubr.f32.mxu0 0.0
        %v952 = vand.u32 %v258, 4294901760
        %v953 = vsub.f32 %v258, %v952
        %954 = vmatmul.mubr.f32.gmra.mrb[0].mxu0 %v953
        %v955 = vpop.f32.mrb[0].mxu0
        %v956 = vadd.f32 %v749, %v955
        %v957 = vpop.f32.mrb[0].mxu0
        %958 = vmatprep.mubr.f32.mxu0 0.0
        %v959 = vand.u32 %v259, 4294901760
        %v960 = vsub.f32 %v259, %v959
        %961 = vmatmul.mubr.f32.gmra.mrb[0].mxu0 %v960
        %v962 = vpop.f32.mrb[0].mxu0
        %v963 = vadd.f32 %v755, %v962
        %v964 = vpop.f32.mrb[0].mxu0
        %965 = vmatprep.mubr.f32.mxu0 0.0
        %v966 = vand.u32 %v260, 4294901760
        %v967 = vsub.f32 %v260, %v966
        %968 = vmatmul.mubr.f32.gmra.mrb[0].mxu0 %v967
        %v969 = vpop.f32.mrb[0].mxu0
        %v970 = vadd.f32 %v761, %v969
        %v971 = vpop.f32.mrb[0].mxu0
        %972 = vdwg.mxu0
        %973 = vmatprep.subr.mxu0 0.0
        %v974 = vand.u32 %v261, 4294901760
        %975 = vmatpush1.msra.mxu0 %v974
        %976 = vmatprep.subr.mxu0 0.0
        %v977 = vand.u32 %v262, 4294901760
        %978 = vmatpush1.msra.mxu0 %v977
        %979 = vmatprep.subr.mxu0 0.0
        %v980 = vand.u32 %v263, 4294901760
        %981 = vmatpush1.msra.mxu0 %v980
        %982 = vmatprep.subr.mxu0 0.0
        %v983 = vand.u32 %v264, 4294901760
        %984 = vmatpush1.msra.mxu0 %v983
        %985 = vmatprep.subr.mxu0 0.0
        %v986 = vand.u32 %v265, 4294901760
        %987 = vmatpush1.msra.mxu0 %v986
        %988 = vmatprep.subr.mxu0 0.0
        %v989 = vand.u32 %v266, 4294901760
        %990 = vmatpush1.msra.mxu0 %v989
        %991 = vmatprep.subr.mxu0 0.0
        %v992 = vand.u32 %v267, 4294901760
        %993 = vmatpush1.msra.mxu0 %v992
        %994 = vmatprep.subr.mxu0 0.0
        %v995 = vand.u32 %v268, 4294901760
        %996 = vmatpush1.msra.mxu0 %v995
        %997 = vmatprep.subr.mxu0 0.0
        %v998 = vand.u32 %v269, 4294901760
        %999 = vmatpush1.msra.mxu0 %v998
        %1000 = vmatprep.subr.mxu0 0.0
        %v1001 = vand.u32 %v270, 4294901760
        %1002 = vmatpush1.msra.mxu0 %v1001
        %1003 = vmatprep.subr.mxu0 0.0
        %v1004 = vand.u32 %v271, 4294901760
        %1005 = vmatpush1.msra.mxu0 %v1004
        %1006 = vmatprep.subr.mxu0 0.0
        %v1007 = vand.u32 %v272, 4294901760
        %1008 = vmatpush1.msra.mxu0 %v1007
        %1009 = vmatprep.subr.mxu0 0.0
        %v1010 = vand.u32 %v273, 4294901760
        %1011 = vmatpush1.msra.mxu0 %v1010
        %1012 = vmatprep.subr.mxu0 0.0
        %v1013 = vand.u32 %v274, 4294901760
        %1014 = vmatpush1.msra.mxu0 %v1013
        %1015 = vmatprep.subr.mxu0 0.0
        %v1016 = vand.u32 %v275, 4294901760
        %1017 = vmatpush1.msra.mxu0 %v1016
        %1018 = vmatprep.subr.mxu0 0.0
        %v1019 = vand.u32 %v276, 4294901760
        %1020 = vmatpush1.msra.mxu0 %v1019
        %1021 = vmatprep.subr.mxu0 0.0
        %1022 = vmatpush1.msra.mxu0 0.0
        %1023 = vmatprep.subr.mxu0 0.0
        %1024 = vmatpush1.msra.mxu0 0.0
        %1025 = vmatprep.subr.mxu0 0.0
        %1026 = vmatpush1.msra.mxu0 0.0
        %1027 = vmatprep.subr.mxu0 0.0
        %1028 = vmatpush1.msra.mxu0 0.0
        %1029 = vmatprep.subr.mxu0 0.0
        %1030 = vmatpush1.msra.mxu0 0.0
        %1031 = vmatprep.subr.mxu0 0.0
        %1032 = vmatpush1.msra.mxu0 0.0
        %1033 = vmatprep.subr.mxu0 0.0
        %1034 = vmatpush1.msra.mxu0 0.0
        %1035 = vmatprep.subr.mxu0 0.0
        %1036 = vmatpush1.msra.mxu0 0.0
        %1037 = vmatprep.subr.mxu0 0.0
        %1038 = vmatpush1.msra.mxu0 0.0
        %1039 = vmatprep.subr.mxu0 0.0
        %1040 = vmatpush1.msra.mxu0 0.0
        %1041 = vmatprep.subr.mxu0 0.0
        %1042 = vmatpush1.msra.mxu0 0.0
        %1043 = vmatprep.subr.mxu0 0.0
        %1044 = vmatpush1.msra.mxu0 0.0
        %1045 = vmatprep.subr.mxu0 0.0
        %1046 = vmatpush1.msra.mxu0 0.0
        %1047 = vmatprep.subr.mxu0 0.0
        %1048 = vmatpush1.msra.mxu0 0.0
        %1049 = vmatprep.subr.mxu0 0.0
        %1050 = vmatpush1.msra.mxu0 0.0
        %1051 = vmatprep.subr.mxu0 0.0
        %1052 = vmatpush1.msra.mxu0 0.0
        %1053 = vmatprep.mubr.f32.mxu0 0.0
        %v1054 = vand.u32 %v245, 4294901760
        %v1055 = vsub.f32 %v245, %v1054
        %v1056 = vand.u32 %v1055, 4294901760
        %1057 = vmatmul.mubr.f32.gmra.mrb[0].mxu0 %v1056
        %v1058 = vpop.f32.mrb[0].mxu0
        %v1059 = vadd.f32 %v865, %v1058
        %v1060 = vpop.f32.mrb[0].mxu0
        %1061 = vmatprep.mubr.f32.mxu0 0.0
        %v1062 = vand.u32 %v246, 4294901760
        %v1063 = vsub.f32 %v246, %v1062
        %v1064 = vand.u32 %v1063, 4294901760
        %1065 = vmatmul.mubr.f32.gmra.mrb[0].mxu0 %v1064
        %v1066 = vpop.f32.mrb[0].mxu0
        %v1067 = vadd.f32 %v872, %v1066
        %v1068 = vpop.f32.mrb[0].mxu0
        %1069 = vmatprep.mubr.f32.mxu0 0.0
        %v1070 = vand.u32 %v247, 4294901760
        %v1071 = vsub.f32 %v247, %v1070
        %v1072 = vand.u32 %v1071, 4294901760
        %1073 = vmatmul.mubr.f32.gmra.mrb[0].mxu0 %v1072
        %v1074 = vpop.f32.mrb[0].mxu0
        %v1075 = vadd.f32 %v879, %v1074
        %v1076 = vpop.f32.mrb[0].mxu0
        %1077 = vmatprep.mubr.f32.mxu0 0.0
        %v1078 = vand.u32 %v248, 4294901760
        %v1079 = vsub.f32 %v248, %v1078
        %v1080 = vand.u32 %v1079, 4294901760
        %1081 = vmatmul.mubr.f32.gmra.mrb[0].mxu0 %v1080
        %v1082 = vpop.f32.mrb[0].mxu0
        %v1083 = vadd.f32 %v886, %v1082
        %v1084 = vpop.f32.mrb[0].mxu0
        %1085 = vmatprep.mubr.f32.mxu0 0.0
        %v1086 = vand.u32 %v249, 4294901760
        %v1087 = vsub.f32 %v249, %v1086
        %v1088 = vand.u32 %v1087, 4294901760
        %1089 = vmatmul.mubr.f32.gmra.mrb[0].mxu0 %v1088
        %v1090 = vpop.f32.mrb[0].mxu0
        %v1091 = vadd.f32 %v893, %v1090
        %v1092 = vpop.f32.mrb[0].mxu0
        %1093 = vmatprep.mubr.f32.mxu0 0.0
        %v1094 = vand.u32 %v250, 4294901760
        %v1095 = vsub.f32 %v250, %v1094
        %v1096 = vand.u32 %v1095, 4294901760
        %1097 = vmatmul.mubr.f32.gmra.mrb[0].mxu0 %v1096
        %v1098 = vpop.f32.mrb[0].mxu0
        %v1099 = vadd.f32 %v900, %v1098
        %v1100 = vpop.f32.mrb[0].mxu0
        %1101 = vmatprep.mubr.f32.mxu0 0.0
        %v1102 = vand.u32 %v251, 4294901760
        %v1103 = vsub.f32 %v251, %v1102
        %v1104 = vand.u32 %v1103, 4294901760
        %1105 = vmatmul.mubr.f32.gmra.mrb[0].mxu0 %v1104
        %v1106 = vpop.f32.mrb[0].mxu0
        %v1107 = vadd.f32 %v907, %v1106
        %v1108 = vpop.f32.mrb[0].mxu0
        %1109 = vmatprep.mubr.f32.mxu0 0.0
        %v1110 = vand.u32 %v252, 4294901760
        %v1111 = vsub.f32 %v252, %v1110
        %v1112 = vand.u32 %v1111, 4294901760
        %1113 = vmatmul.mubr.f32.gmra.mrb[0].mxu0 %v1112
        %v1114 = vpop.f32.mrb[0].mxu0
        %v1115 = vadd.f32 %v914, %v1114
        %v1116 = vpop.f32.mrb[0].mxu0
        %1117 = vmatprep.mubr.f32.mxu0 0.0
        %v1118 = vand.u32 %v253, 4294901760
        %v1119 = vsub.f32 %v253, %v1118
        %v1120 = vand.u32 %v1119, 4294901760
        %1121 = vmatmul.mubr.f32.gmra.mrb[0].mxu0 %v1120
        %v1122 = vpop.f32.mrb[0].mxu0
        %v1123 = vadd.f32 %v921, %v1122
        %v1124 = vpop.f32.mrb[0].mxu0
        %1125 = vmatprep.mubr.f32.mxu0 0.0
        %v1126 = vand.u32 %v254, 4294901760
        %v1127 = vsub.f32 %v254, %v1126
        %v1128 = vand.u32 %v1127, 4294901760
        %1129 = vmatmul.mubr.f32.gmra.mrb[0].mxu0 %v1128
        %v1130 = vpop.f32.mrb[0].mxu0
        %v1131 = vadd.f32 %v928, %v1130
        %v1132 = vpop.f32.mrb[0].mxu0
        %1133 = vmatprep.mubr.f32.mxu0 0.0
        %v1134 = vand.u32 %v255, 4294901760
        %v1135 = vsub.f32 %v255, %v1134
        %v1136 = vand.u32 %v1135, 4294901760
        %1137 = vmatmul.mubr.f32.gmra.mrb[0].mxu0 %v1136
        %v1138 = vpop.f32.mrb[0].mxu0
        %v1139 = vadd.f32 %v935, %v1138
        %v1140 = vpop.f32.mrb[0].mxu0
        %1141 = vmatprep.mubr.f32.mxu0 0.0
        %v1142 = vand.u32 %v256, 4294901760
        %v1143 = vsub.f32 %v256, %v1142
        %v1144 = vand.u32 %v1143, 4294901760
        %1145 = vmatmul.mubr.f32.gmra.mrb[0].mxu0 %v1144
        %v1146 = vpop.f32.mrb[0].mxu0
        %v1147 = vadd.f32 %v942, %v1146
        %v1148 = vpop.f32.mrb[0].mxu0
        %1149 = vmatprep.mubr.f32.mxu0 0.0
        %v1150 = vand.u32 %v257, 4294901760
        %v1151 = vsub.f32 %v257, %v1150
        %v1152 = vand.u32 %v1151, 4294901760
        %1153 = vmatmul.mubr.f32.gmra.mrb[0].mxu0 %v1152
        %v1154 = vpop.f32.mrb[0].mxu0
        %v1155 = vadd.f32 %v949, %v1154
        %v1156 = vpop.f32.mrb[0].mxu0
        %1157 = vmatprep.mubr.f32.mxu0 0.0
        %v1158 = vand.u32 %v258, 4294901760
        %v1159 = vsub.f32 %v258, %v1158
        %v1160 = vand.u32 %v1159, 4294901760
        %1161 = vmatmul.mubr.f32.gmra.mrb[0].mxu0 %v1160
        %v1162 = vpop.f32.mrb[0].mxu0
        %v1163 = vadd.f32 %v956, %v1162
        %v1164 = vpop.f32.mrb[0].mxu0
        %1165 = vmatprep.mubr.f32.mxu0 0.0
        %v1166 = vand.u32 %v259, 4294901760
        %v1167 = vsub.f32 %v259, %v1166
        %v1168 = vand.u32 %v1167, 4294901760
        %1169 = vmatmul.mubr.f32.gmra.mrb[0].mxu0 %v1168
        %v1170 = vpop.f32.mrb[0].mxu0
        %v1171 = vadd.f32 %v963, %v1170
        %v1172 = vpop.f32.mrb[0].mxu0
        %1173 = vmatprep.mubr.f32.mxu0 0.0
        %v1174 = vand.u32 %v260, 4294901760
        %v1175 = vsub.f32 %v260, %v1174
        %v1176 = vand.u32 %v1175, 4294901760
        %1177 = vmatmul.mubr.f32.gmra.mrb[0].mxu0 %v1176
        %v1178 = vpop.f32.mrb[0].mxu0
        %v1179 = vadd.f32 %v970, %v1178
        %v1180 = vpop.f32.mrb[0].mxu0
        %1181 = vdwg.mxu0
        %1182 = vmatprep.subr.mxu0 0.0
        %v1183 = vand.u32 %v261, 4294901760
        %v1184 = vsub.f32 %v261, %v1183
        %v1185 = vand.u32 %v1184, 4294901760
        %1186 = vmatpush1.msra.mxu0 %v1185
        %1187 = vmatprep.subr.mxu0 0.0
        %v1188 = vand.u32 %v262, 4294901760
        %v1189 = vsub.f32 %v262, %v1188
        %v1190 = vand.u32 %v1189, 4294901760
        %1191 = vmatpush1.msra.mxu0 %v1190
        %1192 = vmatprep.subr.mxu0 0.0
        %v1193 = vand.u32 %v263, 4294901760
        %v1194 = vsub.f32 %v263, %v1193
        %v1195 = vand.u32 %v1194, 4294901760
        %1196 = vmatpush1.msra.mxu0 %v1195
        %1197 = vmatprep.subr.mxu0 0.0
        %v1198 = vand.u32 %v264, 4294901760
        %v1199 = vsub.f32 %v264, %v1198
        %v1200 = vand.u32 %v1199, 4294901760
        %1201 = vmatpush1.msra.mxu0 %v1200
        %1202 = vmatprep.subr.mxu0 0.0
        %v1203 = vand.u32 %v265, 4294901760
        %v1204 = vsub.f32 %v265, %v1203
        %v1205 = vand.u32 %v1204, 4294901760
        %1206 = vmatpush1.msra.mxu0 %v1205
        %1207 = vmatprep.subr.mxu0 0.0
        %v1208 = vand.u32 %v266, 4294901760
        %v1209 = vsub.f32 %v266, %v1208
        %v1210 = vand.u32 %v1209, 4294901760
        %1211 = vmatpush1.msra.mxu0 %v1210
        %1212 = vmatprep.subr.mxu0 0.0
        %v1213 = vand.u32 %v267, 4294901760
        %v1214 = vsub.f32 %v267, %v1213
        %v1215 = vand.u32 %v1214, 4294901760
        %1216 = vmatpush1.msra.mxu0 %v1215
        %1217 = vmatprep.subr.mxu0 0.0
        %v1218 = vand.u32 %v268, 4294901760
        %v1219 = vsub.f32 %v268, %v1218
        %v1220 = vand.u32 %v1219, 4294901760
        %1221 = vmatpush1.msra.mxu0 %v1220
        %1222 = vmatprep.subr.mxu0 0.0
        %v1223 = vand.u32 %v269, 4294901760
        %v1224 = vsub.f32 %v269, %v1223
        %v1225 = vand.u32 %v1224, 4294901760
        %1226 = vmatpush1.msra.mxu0 %v1225
        %1227 = vmatprep.subr.mxu0 0.0
        %v1228 = vand.u32 %v270, 4294901760
        %v1229 = vsub.f32 %v270, %v1228
        %v1230 = vand.u32 %v1229, 4294901760
        %1231 = vmatpush1.msra.mxu0 %v1230
        %1232 = vmatprep.subr.mxu0 0.0
        %v1233 = vand.u32 %v271, 4294901760
        %v1234 = vsub.f32 %v271, %v1233
        %v1235 = vand.u32 %v1234, 4294901760
        %1236 = vmatpush1.msra.mxu0 %v1235
        %1237 = vmatprep.subr.mxu0 0.0
        %v1238 = vand.u32 %v272, 4294901760
        %v1239 = vsub.f32 %v272, %v1238
        %v1240 = vand.u32 %v1239, 4294901760
        %1241 = vmatpush1.msra.mxu0 %v1240
        %1242 = vmatprep.subr.mxu0 0.0
        %v1243 = vand.u32 %v273, 4294901760
        %v1244 = vsub.f32 %v273, %v1243
        %v1245 = vand.u32 %v1244, 4294901760
        %1246 = vmatpush1.msra.mxu0 %v1245
        %1247 = vmatprep.subr.mxu0 0.0
        %v1248 = vand.u32 %v274, 4294901760
        %v1249 = vsub.f32 %v274, %v1248
        %v1250 = vand.u32 %v1249, 4294901760
        %1251 = vmatpush1.msra.mxu0 %v1250
        %1252 = vmatprep.subr.mxu0 0.0
        %v1253 = vand.u32 %v275, 4294901760
        %v1254 = vsub.f32 %v275, %v1253
        %v1255 = vand.u32 %v1254, 4294901760
        %1256 = vmatpush1.msra.mxu0 %v1255
        %1257 = vmatprep.subr.mxu0 0.0
        %v1258 = vand.u32 %v276, 4294901760
        %v1259 = vsub.f32 %v276, %v1258
        %v1260 = vand.u32 %v1259, 4294901760
        %1261 = vmatpush1.msra.mxu0 %v1260
        %1262 = vmatprep.subr.mxu0 0.0
        %1263 = vmatpush1.msra.mxu0 0.0
        %1264 = vmatprep.subr.mxu0 0.0
        %1265 = vmatpush1.msra.mxu0 0.0
        %1266 = vmatprep.subr.mxu0 0.0
        %1267 = vmatpush1.msra.mxu0 0.0
        %1268 = vmatprep.subr.mxu0 0.0
        %1269 = vmatpush1.msra.mxu0 0.0
        %1270 = vmatprep.subr.mxu0 0.0
        %1271 = vmatpush1.msra.mxu0 0.0
        %1272 = vmatprep.subr.mxu0 0.0
        %1273 = vmatpush1.msra.mxu0 0.0
        %1274 = vmatprep.subr.mxu0 0.0
        %1275 = vmatpush1.msra.mxu0 0.0
        %1276 = vmatprep.subr.mxu0 0.0
        %1277 = vmatpush1.msra.mxu0 0.0
        %1278 = vmatprep.subr.mxu0 0.0
        %1279 = vmatpush1.msra.mxu0 0.0
        %1280 = vmatprep.subr.mxu0 0.0
        %1281 = vmatpush1.msra.mxu0 0.0
        %1282 = vmatprep.subr.mxu0 0.0
        %1283 = vmatpush1.msra.mxu0 0.0
        %1284 = vmatprep.subr.mxu0 0.0
        %1285 = vmatpush1.msra.mxu0 0.0
        %1286 = vmatprep.subr.mxu0 0.0
        %1287 = vmatpush1.msra.mxu0 0.0
        %1288 = vmatprep.subr.mxu0 0.0
        %1289 = vmatpush1.msra.mxu0 0.0
        %1290 = vmatprep.subr.mxu0 0.0
        %1291 = vmatpush1.msra.mxu0 0.0
        %1292 = vmatprep.subr.mxu0 0.0
        %1293 = vmatpush1.msra.mxu0 0.0
        %1294 = vmatprep.mubr.f32.mxu0 0.0
        %v1295 = vand.u32 %v245, 4294901760
        %1296 = vmatmul.mubr.f32.gmra.mrb[0].mxu0 %v1295
        %v1297 = vpop.f32.mrb[0].mxu0
        %v1298 = vadd.f32 %v1059, %v1297
        %v1299 = vpop.f32.mrb[0].mxu0
        %1300 = vmatprep.mubr.f32.mxu0 0.0
        %v1301 = vand.u32 %v246, 4294901760
        %1302 = vmatmul.mubr.f32.gmra.mrb[0].mxu0 %v1301
        %v1303 = vpop.f32.mrb[0].mxu0
        %v1304 = vadd.f32 %v1067, %v1303
        %v1305 = vpop.f32.mrb[0].mxu0
        %1306 = vmatprep.mubr.f32.mxu0 0.0
        %v1307 = vand.u32 %v247, 4294901760
        %1308 = vmatmul.mubr.f32.gmra.mrb[0].mxu0 %v1307
        %v1309 = vpop.f32.mrb[0].mxu0
        %v1310 = vadd.f32 %v1075, %v1309
        %v1311 = vpop.f32.mrb[0].mxu0
        %1312 = vmatprep.mubr.f32.mxu0 0.0
        %v1313 = vand.u32 %v248, 4294901760
        %1314 = vmatmul.mubr.f32.gmra.mrb[0].mxu0 %v1313
        %v1315 = vpop.f32.mrb[0].mxu0
        %v1316 = vadd.f32 %v1083, %v1315
        %v1317 = vpop.f32.mrb[0].mxu0
        %1318 = vmatprep.mubr.f32.mxu0 0.0
        %v1319 = vand.u32 %v249, 4294901760
        %1320 = vmatmul.mubr.f32.gmra.mrb[0].mxu0 %v1319
        %v1321 = vpop.f32.mrb[0].mxu0
        %v1322 = vadd.f32 %v1091, %v1321
        %v1323 = vpop.f32.mrb[0].mxu0
        %1324 = vmatprep.mubr.f32.mxu0 0.0
        %v1325 = vand.u32 %v250, 4294901760
        %1326 = vmatmul.mubr.f32.gmra.mrb[0].mxu0 %v1325
        %v1327 = vpop.f32.mrb[0].mxu0
        %v1328 = vadd.f32 %v1099, %v1327
        %v1329 = vpop.f32.mrb[0].mxu0
        %1330 = vmatprep.mubr.f32.mxu0 0.0
        %v1331 = vand.u32 %v251, 4294901760
        %1332 = vmatmul.mubr.f32.gmra.mrb[0].mxu0 %v1331
        %v1333 = vpop.f32.mrb[0].mxu0
        %v1334 = vadd.f32 %v1107, %v1333
        %v1335 = vpop.f32.mrb[0].mxu0
        %1336 = vmatprep.mubr.f32.mxu0 0.0
        %v1337 = vand.u32 %v252, 4294901760
        %1338 = vmatmul.mubr.f32.gmra.mrb[0].mxu0 %v1337
        %v1339 = vpop.f32.mrb[0].mxu0
        %v1340 = vadd.f32 %v1115, %v1339
        %v1341 = vpop.f32.mrb[0].mxu0
        %1342 = vmatprep.mubr.f32.mxu0 0.0
        %v1343 = vand.u32 %v253, 4294901760
        %1344 = vmatmul.mubr.f32.gmra.mrb[0].mxu0 %v1343
        %v1345 = vpop.f32.mrb[0].mxu0
        %v1346 = vadd.f32 %v1123, %v1345
        %v1347 = vpop.f32.mrb[0].mxu0
        %1348 = vmatprep.mubr.f32.mxu0 0.0
        %v1349 = vand.u32 %v254, 4294901760
        %1350 = vmatmul.mubr.f32.gmra.mrb[0].mxu0 %v1349
        %v1351 = vpop.f32.mrb[0].mxu0
        %v1352 = vadd.f32 %v1131, %v1351
        %v1353 = vpop.f32.mrb[0].mxu0
        %1354 = vmatprep.mubr.f32.mxu0 0.0
        %v1355 = vand.u32 %v255, 4294901760
        %1356 = vmatmul.mubr.f32.gmra.mrb[0].mxu0 %v1355
        %v1357 = vpop.f32.mrb[0].mxu0
        %v1358 = vadd.f32 %v1139, %v1357
        %v1359 = vpop.f32.mrb[0].mxu0
        %1360 = vmatprep.mubr.f32.mxu0 0.0
        %v1361 = vand.u32 %v256, 4294901760
        %1362 = vmatmul.mubr.f32.gmra.mrb[0].mxu0 %v1361
        %v1363 = vpop.f32.mrb[0].mxu0
        %v1364 = vadd.f32 %v1147, %v1363
        %v1365 = vpop.f32.mrb[0].mxu0
        %1366 = vmatprep.mubr.f32.mxu0 0.0
        %v1367 = vand.u32 %v257, 4294901760
        %1368 = vmatmul.mubr.f32.gmra.mrb[0].mxu0 %v1367
        %v1369 = vpop.f32.mrb[0].mxu0
        %v1370 = vadd.f32 %v1155, %v1369
        %v1371 = vpop.f32.mrb[0].mxu0
        %1372 = vmatprep.mubr.f32.mxu0 0.0
        %v1373 = vand.u32 %v258, 4294901760
        %1374 = vmatmul.mubr.f32.gmra.mrb[0].mxu0 %v1373
        %v1375 = vpop.f32.mrb[0].mxu0
        %v1376 = vadd.f32 %v1163, %v1375
        %v1377 = vpop.f32.mrb[0].mxu0
        %1378 = vmatprep.mubr.f32.mxu0 0.0
        %v1379 = vand.u32 %v259, 4294901760
        %1380 = vmatmul.mubr.f32.gmra.mrb[0].mxu0 %v1379
        %v1381 = vpop.f32.mrb[0].mxu0
        %v1382 = vadd.f32 %v1171, %v1381
        %v1383 = vpop.f32.mrb[0].mxu0
        %1384 = vmatprep.mubr.f32.mxu0 0.0
        %v1385 = vand.u32 %v260, 4294901760
        %1386 = vmatmul.mubr.f32.gmra.mrb[0].mxu0 %v1385
        %v1387 = vpop.f32.mrb[0].mxu0
        %v1388 = vadd.f32 %v1179, %v1387
        %v1389 = vpop.f32.mrb[0].mxu0
        %1390 = vdwg.mxu0
        %1391 = vmatprep.subr.mxu0 0.0
        %v1392 = vand.u32 %v261, 4294901760
        %1393 = vmatpush1.msra.mxu0 %v1392
        %1394 = vmatprep.subr.mxu0 0.0
        %v1395 = vand.u32 %v262, 4294901760
        %1396 = vmatpush1.msra.mxu0 %v1395
        %1397 = vmatprep.subr.mxu0 0.0
        %v1398 = vand.u32 %v263, 4294901760
        %1399 = vmatpush1.msra.mxu0 %v1398
        %1400 = vmatprep.subr.mxu0 0.0
        %v1401 = vand.u32 %v264, 4294901760
        %1402 = vmatpush1.msra.mxu0 %v1401
        %1403 = vmatprep.subr.mxu0 0.0
        %v1404 = vand.u32 %v265, 4294901760
        %1405 = vmatpush1.msra.mxu0 %v1404
        %1406 = vmatprep.subr.mxu0 0.0
        %v1407 = vand.u32 %v266, 4294901760
        %1408 = vmatpush1.msra.mxu0 %v1407
        %1409 = vmatprep.subr.mxu0 0.0
        %v1410 = vand.u32 %v267, 4294901760
        %1411 = vmatpush1.msra.mxu0 %v1410
        %1412 = vmatprep.subr.mxu0 0.0
        %v1413 = vand.u32 %v268, 4294901760
        %1414 = vmatpush1.msra.mxu0 %v1413
        %1415 = vmatprep.subr.mxu0 0.0
        %v1416 = vand.u32 %v269, 4294901760
        %1417 = vmatpush1.msra.mxu0 %v1416
        %1418 = vmatprep.subr.mxu0 0.0
        %v1419 = vand.u32 %v270, 4294901760
        %1420 = vmatpush1.msra.mxu0 %v1419
        %1421 = vmatprep.subr.mxu0 0.0
        %v1422 = vand.u32 %v271, 4294901760
        %1423 = vmatpush1.msra.mxu0 %v1422
        %1424 = vmatprep.subr.mxu0 0.0
        %v1425 = vand.u32 %v272, 4294901760
        %1426 = vmatpush1.msra.mxu0 %v1425
        %1427 = vmatprep.subr.mxu0 0.0
        %v1428 = vand.u32 %v273, 4294901760
        %1429 = vmatpush1.msra.mxu0 %v1428
        %1430 = vmatprep.subr.mxu0 0.0
        %v1431 = vand.u32 %v274, 4294901760
        %1432 = vmatpush1.msra.mxu0 %v1431
        %1433 = vmatprep.subr.mxu0 0.0
        %v1434 = vand.u32 %v275, 4294901760
        %1435 = vmatpush1.msra.mxu0 %v1434
        %1436 = vmatprep.subr.mxu0 0.0
        %v1437 = vand.u32 %v276, 4294901760
        %1438 = vmatpush1.msra.mxu0 %v1437
        %1439 = vmatprep.subr.mxu0 0.0
        %1440 = vmatpush1.msra.mxu0 0.0
        %1441 = vmatprep.subr.mxu0 0.0
        %1442 = vmatpush1.msra.mxu0 0.0
        %1443 = vmatprep.subr.mxu0 0.0
        %1444 = vmatpush1.msra.mxu0 0.0
        %1445 = vmatprep.subr.mxu0 0.0
        %1446 = vmatpush1.msra.mxu0 0.0
        %1447 = vmatprep.subr.mxu0 0.0
        %1448 = vmatpush1.msra.mxu0 0.0
        %1449 = vmatprep.subr.mxu0 0.0
        %1450 = vmatpush1.msra.mxu0 0.0
        %1451 = vmatprep.subr.mxu0 0.0
        %1452 = vmatpush1.msra.mxu0 0.0
        %1453 = vmatprep.subr.mxu0 0.0
        %1454 = vmatpush1.msra.mxu0 0.0
        %1455 = vmatprep.subr.mxu0 0.0
        %1456 = vmatpush1.msra.mxu0 0.0
        %1457 = vmatprep.subr.mxu0 0.0
        %1458 = vmatpush1.msra.mxu0 0.0
        %1459 = vmatprep.subr.mxu0 0.0
        %1460 = vmatpush1.msra.mxu0 0.0
        %1461 = vmatprep.subr.mxu0 0.0
        %1462 = vmatpush1.msra.mxu0 0.0
        %1463 = vmatprep.subr.mxu0 0.0
        %1464 = vmatpush1.msra.mxu0 0.0
        %1465 = vmatprep.subr.mxu0 0.0
        %1466 = vmatpush1.msra.mxu0 0.0
        %1467 = vmatprep.subr.mxu0 0.0
        %1468 = vmatpush1.msra.mxu0 0.0
        %1469 = vmatprep.subr.mxu0 0.0
        %1470 = vmatpush1.msra.mxu0 0.0
        %1471 = vmatprep.mubr.f32.mxu0 0.0
        %v1472 = vand.u32 %v245, 4294901760
        %1473 = vmatmul.mubr.f32.gmra.mrb[0].mxu0 %v1472
        %v1474 = vpop.f32.mrb[0].mxu0
        %v1475 = vadd.f32 %v1298, %v1474
        %v1476 = vpop.f32.mrb[0].mxu0
        %1477 = vmatprep.mubr.f32.mxu0 0.0
        %v1478 = vand.u32 %v246, 4294901760
        %1479 = vmatmul.mubr.f32.gmra.mrb[0].mxu0 %v1478
        %v1480 = vpop.f32.mrb[0].mxu0
        %v1481 = vadd.f32 %v1304, %v1480
        %v1482 = vpop.f32.mrb[0].mxu0
        %1483 = vmatprep.mubr.f32.mxu0 0.0
        %v1484 = vand.u32 %v247, 4294901760
        %1485 = vmatmul.mubr.f32.gmra.mrb[0].mxu0 %v1484
        %v1486 = vpop.f32.mrb[0].mxu0
        %v1487 = vadd.f32 %v1310, %v1486
        %v1488 = vpop.f32.mrb[0].mxu0
        %1489 = vmatprep.mubr.f32.mxu0 0.0
        %v1490 = vand.u32 %v248, 4294901760
        %1491 = vmatmul.mubr.f32.gmra.mrb[0].mxu0 %v1490
        %v1492 = vpop.f32.mrb[0].mxu0
        %v1493 = vadd.f32 %v1316, %v1492
        %v1494 = vpop.f32.mrb[0].mxu0
        %1495 = vmatprep.mubr.f32.mxu0 0.0
        %v1496 = vand.u32 %v249, 4294901760
        %1497 = vmatmul.mubr.f32.gmra.mrb[0].mxu0 %v1496
        %v1498 = vpop.f32.mrb[0].mxu0
        %v1499 = vadd.f32 %v1322, %v1498
        %v1500 = vpop.f32.mrb[0].mxu0
        %1501 = vmatprep.mubr.f32.mxu0 0.0
        %v1502 = vand.u32 %v250, 4294901760
        %1503 = vmatmul.mubr.f32.gmra.mrb[0].mxu0 %v1502
        %v1504 = vpop.f32.mrb[0].mxu0
        %v1505 = vadd.f32 %v1328, %v1504
        %v1506 = vpop.f32.mrb[0].mxu0
        %1507 = vmatprep.mubr.f32.mxu0 0.0
        %v1508 = vand.u32 %v251, 4294901760
        %1509 = vmatmul.mubr.f32.gmra.mrb[0].mxu0 %v1508
        %v1510 = vpop.f32.mrb[0].mxu0
        %v1511 = vadd.f32 %v1334, %v1510
        %v1512 = vpop.f32.mrb[0].mxu0
        %1513 = vmatprep.mubr.f32.mxu0 0.0
        %v1514 = vand.u32 %v252, 4294901760
        %1515 = vmatmul.mubr.f32.gmra.mrb[0].mxu0 %v1514
        %v1516 = vpop.f32.mrb[0].mxu0
        %v1517 = vadd.f32 %v1340, %v1516
        %v1518 = vpop.f32.mrb[0].mxu0
        %1519 = vmatprep.mubr.f32.mxu0 0.0
        %v1520 = vand.u32 %v253, 4294901760
        %1521 = vmatmul.mubr.f32.gmra.mrb[0].mxu0 %v1520
        %v1522 = vpop.f32.mrb[0].mxu0
        %v1523 = vadd.f32 %v1346, %v1522
        %v1524 = vpop.f32.mrb[0].mxu0
        %1525 = vmatprep.mubr.f32.mxu0 0.0
        %v1526 = vand.u32 %v254, 4294901760
        %1527 = vmatmul.mubr.f32.gmra.mrb[0].mxu0 %v1526
        %v1528 = vpop.f32.mrb[0].mxu0
        %v1529 = vadd.f32 %v1352, %v1528
        %v1530 = vpop.f32.mrb[0].mxu0
        %1531 = vmatprep.mubr.f32.mxu0 0.0
        %v1532 = vand.u32 %v255, 4294901760
        %1533 = vmatmul.mubr.f32.gmra.mrb[0].mxu0 %v1532
        %v1534 = vpop.f32.mrb[0].mxu0
        %v1535 = vadd.f32 %v1358, %v1534
        %v1536 = vpop.f32.mrb[0].mxu0
        %1537 = vmatprep.mubr.f32.mxu0 0.0
        %v1538 = vand.u32 %v256, 4294901760
        %1539 = vmatmul.mubr.f32.gmra.mrb[0].mxu0 %v1538
        %v1540 = vpop.f32.mrb[0].mxu0
        %v1541 = vadd.f32 %v1364, %v1540
        %v1542 = vpop.f32.mrb[0].mxu0
        %1543 = vmatprep.mubr.f32.mxu0 0.0
        %v1544 = vand.u32 %v257, 4294901760
        %1545 = vmatmul.mubr.f32.gmra.mrb[0].mxu0 %v1544
        %v1546 = vpop.f32.mrb[0].mxu0
        %v1547 = vadd.f32 %v1370, %v1546
        %v1548 = vpop.f32.mrb[0].mxu0
        %1549 = vmatprep.mubr.f32.mxu0 0.0
        %v1550 = vand.u32 %v258, 4294901760
        %1551 = vmatmul.mubr.f32.gmra.mrb[0].mxu0 %v1550
        %v1552 = vpop.f32.mrb[0].mxu0
        %v1553 = vadd.f32 %v1376, %v1552
        %v1554 = vpop.f32.mrb[0].mxu0
        %1555 = vmatprep.mubr.f32.mxu0 0.0
        %v1556 = vand.u32 %v259, 4294901760
        %1557 = vmatmul.mubr.f32.gmra.mrb[0].mxu0 %v1556
        %v1558 = vpop.f32.mrb[0].mxu0
        %v1559 = vadd.f32 %v1382, %v1558
        %v1560 = vpop.f32.mrb[0].mxu0
        %1561 = vmatprep.mubr.f32.mxu0 0.0
        %v1562 = vand.u32 %v260, 4294901760
        %1563 = vmatmul.mubr.f32.gmra.mrb[0].mxu0 %v1562
        %v1564 = vpop.f32.mrb[0].mxu0
        %v1565 = vadd.f32 %v1388, %v1564
        %v1566 = vpop.f32.mrb[0].mxu0
        %1567 = vdwg.mxu0
        %vm1568 = vcmp.gt.f32.partialorder %v1475, 0.0
        %vm1569 = vcmp.gt.f32.partialorder %v1481, 0.0
        %vm1570 = vcmp.gt.f32.partialorder %v1487, 0.0
        %vm1571 = vcmp.gt.f32.partialorder %v1493, 0.0
        %vm1572 = vcmp.gt.f32.partialorder %v1499, 0.0
        %vm1573 = vcmp.gt.f32.partialorder %v1505, 0.0
        %vm1574 = vcmp.gt.f32.partialorder %v1511, 0.0
        %vm1575 = vcmp.gt.f32.partialorder %v1517, 0.0
        %vm1576 = vcmp.gt.f32.partialorder %v1523, 0.0
        %vm1577 = vcmp.gt.f32.partialorder %v1529, 0.0
        %vm1578 = vcmp.gt.f32.partialorder %v1535, 0.0
        %vm1579 = vcmp.gt.f32.partialorder %v1541, 0.0
        %vm1580 = vcmp.gt.f32.partialorder %v1547, 0.0
        %vm1581 = vcmp.gt.f32.partialorder %v1553, 0.0
        %vm1582 = vcmp.gt.f32.partialorder %v1559, 0.0
        %vm1583 = vcmp.gt.f32.partialorder %v1565, 0.0
        %v1584 = vmul.f32 %v1475, 0.01
        %v1585 = vmul.f32 %v1481, 0.01
        %v1586 = vmul.f32 %v1487, 0.01
        %v1587 = vmul.f32 %v1493, 0.01
        %v1588 = vmul.f32 %v1499, 0.01
        %v1589 = vmul.f32 %v1505, 0.01
        %v1590 = vmul.f32 %v1511, 0.01
        %v1591 = vmul.f32 %v1517, 0.01
        %v1592 = vmul.f32 %v1523, 0.01
        %v1593 = vmul.f32 %v1529, 0.01
        %v1594 = vmul.f32 %v1535, 0.01
        %v1595 = vmul.f32 %v1541, 0.01
        %v1596 = vmul.f32 %v1547, 0.01
        %v1597 = vmul.f32 %v1553, 0.01
        %v1598 = vmul.f32 %v1559, 0.01
        %v1599 = vmul.f32 %v1565, 0.01
        %v1600 = vsel %vm1568, %v1475, %v1584
        %v1601 = vsel %vm1569, %v1481, %v1585
        %v1602 = vsel %vm1570, %v1487, %v1586
        %v1603 = vsel %vm1571, %v1493, %v1587
        %v1604 = vsel %vm1572, %v1499, %v1588
        %v1605 = vsel %vm1573, %v1505, %v1589
        %v1606 = vsel %vm1574, %v1511, %v1590
        %v1607 = vsel %vm1575, %v1517, %v1591
        %v1608 = vsel %vm1576, %v1523, %v1592
        %v1609 = vsel %vm1577, %v1529, %v1593
        %v1610 = vsel %vm1578, %v1535, %v1594
        %v1611 = vsel %vm1579, %v1541, %v1595
        %v1612 = vsel %vm1580, %v1547, %v1596
        %v1613 = vsel %vm1581, %v1553, %v1597
        %v1614 = vsel %vm1582, %v1559, %v1598
        %v1615 = vsel %vm1583, %v1565, %v1599
        %v1616 = vld [vmem:[#allocation7] sm:$0xff]
        %v1617 = vld [vmem:[#allocation7 + $0x8] sm:$0xff]
        %v1618 = vld [vmem:[#allocation7 + $0x10] sm:$0xff]
        %v1619 = vld [vmem:[#allocation7 + $0x18] sm:$0xff]
        %v1620 = vld [vmem:[#allocation7 + $0x20] sm:$0xff]
        %v1621 = vld [vmem:[#allocation7 + $0x28] sm:$0xff]
        %v1622 = vld [vmem:[#allocation7 + $0x30] sm:$0xff]
        %v1623 = vld [vmem:[#allocation7 + $0x38] sm:$0xff]
        %v1624 = vld [vmem:[#allocation7 + $0x40] sm:$0xff]
        %v1625 = vld [vmem:[#allocation7 + $0x48] sm:$0xff]
        %v1626 = vld [vmem:[#allocation7 + $0x50] sm:$0xff]
        %v1627 = vld [vmem:[#allocation7 + $0x58] sm:$0xff]
        %v1628 = vld [vmem:[#allocation7 + $0x60] sm:$0xff]
        %v1629 = vld [vmem:[#allocation7 + $0x68] sm:$0xff]
        %v1630 = vld [vmem:[#allocation7 + $0x70] sm:$0xff]
        %v1631 = vld [vmem:[#allocation7 + $0x78] sm:$0xff]
        %1632 = vmatprep.subr.mxu0 0.0
        %v1633 = vand.u32 %v1616, 4294901760
        %1634 = vmatpush1.msra.mxu0 %v1633
        %1635 = vmatprep.subr.mxu0 0.0
        %v1636 = vand.u32 %v1617, 4294901760
        %1637 = vmatpush1.msra.mxu0 %v1636
        %1638 = vmatprep.subr.mxu0 0.0
        %v1639 = vand.u32 %v1618, 4294901760
        %1640 = vmatpush1.msra.mxu0 %v1639
        %1641 = vmatprep.subr.mxu0 0.0
        %v1642 = vand.u32 %v1619, 4294901760
        %1643 = vmatpush1.msra.mxu0 %v1642
        %1644 = vmatprep.subr.mxu0 0.0
        %v1645 = vand.u32 %v1620, 4294901760
        %1646 = vmatpush1.msra.mxu0 %v1645
        %1647 = vmatprep.subr.mxu0 0.0
        %v1648 = vand.u32 %v1621, 4294901760
        %1649 = vmatpush1.msra.mxu0 %v1648
        %1650 = vmatprep.subr.mxu0 0.0
        %v1651 = vand.u32 %v1622, 4294901760
        %1652 = vmatpush1.msra.mxu0 %v1651
        %1653 = vmatprep.subr.mxu0 0.0
        %v1654 = vand.u32 %v1623, 4294901760
        %1655 = vmatpush1.msra.mxu0 %v1654
        %1656 = vmatprep.subr.mxu0 0.0
        %v1657 = vand.u32 %v1624, 4294901760
        %1658 = vmatpush1.msra.mxu0 %v1657
        %1659 = vmatprep.subr.mxu0 0.0
        %v1660 = vand.u32 %v1625, 4294901760
        %1661 = vmatpush1.msra.mxu0 %v1660
        %1662 = vmatprep.subr.mxu0 0.0
        %v1663 = vand.u32 %v1626, 4294901760
        %1664 = vmatpush1.msra.mxu0 %v1663
        %1665 = vmatprep.subr.mxu0 0.0
        %v1666 = vand.u32 %v1627, 4294901760
        %1667 = vmatpush1.msra.mxu0 %v1666
        %1668 = vmatprep.subr.mxu0 0.0
        %v1669 = vand.u32 %v1628, 4294901760
        %1670 = vmatpush1.msra.mxu0 %v1669
        %1671 = vmatprep.subr.mxu0 0.0
        %v1672 = vand.u32 %v1629, 4294901760
        %1673 = vmatpush1.msra.mxu0 %v1672
        %1674 = vmatprep.subr.mxu0 0.0
        %v1675 = vand.u32 %v1630, 4294901760
        %1676 = vmatpush1.msra.mxu0 %v1675
        %1677 = vmatprep.subr.mxu0 0.0
        %v1678 = vand.u32 %v1631, 4294901760
        %1679 = vmatpush1.msra.mxu0 %v1678
        %1680 = vmatprep.subr.mxu0 0.0
        %1681 = vmatpush1.msra.mxu0 0.0
        %1682 = vmatprep.subr.mxu0 0.0
        %1683 = vmatpush1.msra.mxu0 0.0
        %1684 = vmatprep.subr.mxu0 0.0
        %1685 = vmatpush1.msra.mxu0 0.0
        %1686 = vmatprep.subr.mxu0 0.0
        %1687 = vmatpush1.msra.mxu0 0.0
        %1688 = vmatprep.subr.mxu0 0.0
        %1689 = vmatpush1.msra.mxu0 0.0
        %1690 = vmatprep.subr.mxu0 0.0
        %1691 = vmatpush1.msra.mxu0 0.0
        %1692 = vmatprep.subr.mxu0 0.0
        %1693 = vmatpush1.msra.mxu0 0.0
        %1694 = vmatprep.subr.mxu0 0.0
        %1695 = vmatpush1.msra.mxu0 0.0
        %1696 = vmatprep.subr.mxu0 0.0
        %1697 = vmatpush1.msra.mxu0 0.0
        %1698 = vmatprep.subr.mxu0 0.0
        %1699 = vmatpush1.msra.mxu0 0.0
        %1700 = vmatprep.subr.mxu0 0.0
        %1701 = vmatpush1.msra.mxu0 0.0
        %1702 = vmatprep.subr.mxu0 0.0
        %1703 = vmatpush1.msra.mxu0 0.0
        %1704 = vmatprep.subr.mxu0 0.0
        %1705 = vmatpush1.msra.mxu0 0.0
        %1706 = vmatprep.subr.mxu0 0.0
        %1707 = vmatpush1.msra.mxu0 0.0
        %1708 = vmatprep.subr.mxu0 0.0
        %1709 = vmatpush1.msra.mxu0 0.0
        %1710 = vmatprep.subr.mxu0 0.0
        %1711 = vmatpush1.msra.mxu0 0.0
        %1712 = vmatprep.mubr.f32.mxu0 0.0
        %v1713 = vand.u32 %v1600, 4294901760
        %v1714 = vsub.f32 %v1600, %v1713
        %v1715 = vand.u32 %v1714, 4294901760
        %v1716 = vsub.f32 %v1714, %v1715
        %v1717 = vand.u32 %v1716, 4294901760
        %1718 = vmatmul.mubr.f32.gmra.mrb[0].mxu0 %v1717
        %v1719 = vpop.f32.mrb[0].mxu0
        %v1720 = vadd.f32 0.0, %v1719
        %v1721 = vpop.f32.mrb[0].mxu0
        %1722 = vmatprep.mubr.f32.mxu0 0.0
        %v1723 = vand.u32 %v1601, 4294901760
        %v1724 = vsub.f32 %v1601, %v1723
        %v1725 = vand.u32 %v1724, 4294901760
        %v1726 = vsub.f32 %v1724, %v1725
        %v1727 = vand.u32 %v1726, 4294901760
        %1728 = vmatmul.mubr.f32.gmra.mrb[0].mxu0 %v1727
        %v1729 = vpop.f32.mrb[0].mxu0
        %v1730 = vadd.f32 0.0, %v1729
        %v1731 = vpop.f32.mrb[0].mxu0
        %1732 = vmatprep.mubr.f32.mxu0 0.0
        %v1733 = vand.u32 %v1602, 4294901760
        %v1734 = vsub.f32 %v1602, %v1733
        %v1735 = vand.u32 %v1734, 4294901760
        %v1736 = vsub.f32 %v1734, %v1735
        %v1737 = vand.u32 %v1736, 4294901760
        %1738 = vmatmul.mubr.f32.gmra.mrb[0].mxu0 %v1737
        %v1739 = vpop.f32.mrb[0].mxu0
        %v1740 = vadd.f32 0.0, %v1739
        %v1741 = vpop.f32.mrb[0].mxu0
        %1742 = vmatprep.mubr.f32.mxu0 0.0
        %v1743 = vand.u32 %v1603, 4294901760
        %v1744 = vsub.f32 %v1603, %v1743
        %v1745 = vand.u32 %v1744, 4294901760
        %v1746 = vsub.f32 %v1744, %v1745
        %v1747 = vand.u32 %v1746, 4294901760
        %1748 = vmatmul.mubr.f32.gmra.mrb[0].mxu0 %v1747
        %v1749 = vpop.f32.mrb[0].mxu0
        %v1750 = vadd.f32 0.0, %v1749
        %v1751 = vpop.f32.mrb[0].mxu0
        %1752 = vmatprep.mubr.f32.mxu0 0.0
        %v1753 = vand.u32 %v1604, 4294901760
        %v1754 = vsub.f32 %v1604, %v1753
        %v1755 = vand.u32 %v1754, 4294901760
        %v1756 = vsub.f32 %v1754, %v1755
        %v1757 = vand.u32 %v1756, 4294901760
        %1758 = vmatmul.mubr.f32.gmra.mrb[0].mxu0 %v1757
        %v1759 = vpop.f32.mrb[0].mxu0
        %v1760 = vadd.f32 0.0, %v1759
        %v1761 = vpop.f32.mrb[0].mxu0
        %1762 = vmatprep.mubr.f32.mxu0 0.0
        %v1763 = vand.u32 %v1605, 4294901760
        %v1764 = vsub.f32 %v1605, %v1763
        %v1765 = vand.u32 %v1764, 4294901760
        %v1766 = vsub.f32 %v1764, %v1765
        %v1767 = vand.u32 %v1766, 4294901760
        %1768 = vmatmul.mubr.f32.gmra.mrb[0].mxu0 %v1767
        %v1769 = vpop.f32.mrb[0].mxu0
        %v1770 = vadd.f32 0.0, %v1769
        %v1771 = vpop.f32.mrb[0].mxu0
        %1772 = vmatprep.mubr.f32.mxu0 0.0
        %v1773 = vand.u32 %v1606, 4294901760
        %v1774 = vsub.f32 %v1606, %v1773
        %v1775 = vand.u32 %v1774, 4294901760
        %v1776 = vsub.f32 %v1774, %v1775
        %v1777 = vand.u32 %v1776, 4294901760
        %1778 = vmatmul.mubr.f32.gmra.mrb[0].mxu0 %v1777
        %v1779 = vpop.f32.mrb[0].mxu0
        %v1780 = vadd.f32 0.0, %v1779
        %v1781 = vpop.f32.mrb[0].mxu0
        %1782 = vmatprep.mubr.f32.mxu0 0.0
        %v1783 = vand.u32 %v1607, 4294901760
        %v1784 = vsub.f32 %v1607, %v1783
        %v1785 = vand.u32 %v1784, 4294901760
        %v1786 = vsub.f32 %v1784, %v1785
        %v1787 = vand.u32 %v1786, 4294901760
        %1788 = vmatmul.mubr.f32.gmra.mrb[0].mxu0 %v1787
        %v1789 = vpop.f32.mrb[0].mxu0
        %v1790 = vadd.f32 0.0, %v1789
        %v1791 = vpop.f32.mrb[0].mxu0
        %1792 = vmatprep.mubr.f32.mxu0 0.0
        %v1793 = vand.u32 %v1608, 4294901760
        %v1794 = vsub.f32 %v1608, %v1793
        %v1795 = vand.u32 %v1794, 4294901760
        %v1796 = vsub.f32 %v1794, %v1795
        %v1797 = vand.u32 %v1796, 4294901760
        %1798 = vmatmul.mubr.f32.gmra.mrb[0].mxu0 %v1797
        %v1799 = vpop.f32.mrb[0].mxu0
        %v1800 = vadd.f32 0.0, %v1799
        %v1801 = vpop.f32.mrb[0].mxu0
        %1802 = vmatprep.mubr.f32.mxu0 0.0
        %v1803 = vand.u32 %v1609, 4294901760
        %v1804 = vsub.f32 %v1609, %v1803
        %v1805 = vand.u32 %v1804, 4294901760
        %v1806 = vsub.f32 %v1804, %v1805
        %v1807 = vand.u32 %v1806, 4294901760
        %1808 = vmatmul.mubr.f32.gmra.mrb[0].mxu0 %v1807
        %v1809 = vpop.f32.mrb[0].mxu0
        %v1810 = vadd.f32 0.0, %v1809
        %v1811 = vpop.f32.mrb[0].mxu0
        %1812 = vmatprep.mubr.f32.mxu0 0.0
        %v1813 = vand.u32 %v1610, 4294901760
        %v1814 = vsub.f32 %v1610, %v1813
        %v1815 = vand.u32 %v1814, 4294901760
        %v1816 = vsub.f32 %v1814, %v1815
        %v1817 = vand.u32 %v1816, 4294901760
        %1818 = vmatmul.mubr.f32.gmra.mrb[0].mxu0 %v1817
        %v1819 = vpop.f32.mrb[0].mxu0
        %v1820 = vadd.f32 0.0, %v1819
        %v1821 = vpop.f32.mrb[0].mxu0
        %1822 = vmatprep.mubr.f32.mxu0 0.0
        %v1823 = vand.u32 %v1611, 4294901760
        %v1824 = vsub.f32 %v1611, %v1823
        %v1825 = vand.u32 %v1824, 4294901760
        %v1826 = vsub.f32 %v1824, %v1825
        %v1827 = vand.u32 %v1826, 4294901760
        %1828 = vmatmul.mubr.f32.gmra.mrb[0].mxu0 %v1827
        %v1829 = vpop.f32.mrb[0].mxu0
        %v1830 = vadd.f32 0.0, %v1829
        %v1831 = vpop.f32.mrb[0].mxu0
        %1832 = vmatprep.mubr.f32.mxu0 0.0
        %v1833 = vand.u32 %v1612, 4294901760
        %v1834 = vsub.f32 %v1612, %v1833
        %v1835 = vand.u32 %v1834, 4294901760
        %v1836 = vsub.f32 %v1834, %v1835
        %v1837 = vand.u32 %v1836, 4294901760
        %1838 = vmatmul.mubr.f32.gmra.mrb[0].mxu0 %v1837
        %v1839 = vpop.f32.mrb[0].mxu0
        %v1840 = vadd.f32 0.0, %v1839
        %v1841 = vpop.f32.mrb[0].mxu0
        %1842 = vmatprep.mubr.f32.mxu0 0.0
        %v1843 = vand.u32 %v1613, 4294901760
        %v1844 = vsub.f32 %v1613, %v1843
        %v1845 = vand.u32 %v1844, 4294901760
        %v1846 = vsub.f32 %v1844, %v1845
        %v1847 = vand.u32 %v1846, 4294901760
        %1848 = vmatmul.mubr.f32.gmra.mrb[0].mxu0 %v1847
        %v1849 = vpop.f32.mrb[0].mxu0
        %v1850 = vadd.f32 0.0, %v1849
        %v1851 = vpop.f32.mrb[0].mxu0
        %1852 = vmatprep.mubr.f32.mxu0 0.0
        %v1853 = vand.u32 %v1614, 4294901760
        %v1854 = vsub.f32 %v1614, %v1853
        %v1855 = vand.u32 %v1854, 4294901760
        %v1856 = vsub.f32 %v1854, %v1855
        %v1857 = vand.u32 %v1856, 4294901760
        %1858 = vmatmul.mubr.f32.gmra.mrb[0].mxu0 %v1857
        %v1859 = vpop.f32.mrb[0].mxu0
        %v1860 = vadd.f32 0.0, %v1859
        %v1861 = vpop.f32.mrb[0].mxu0
        %1862 = vmatprep.mubr.f32.mxu0 0.0
        %v1863 = vand.u32 %v1615, 4294901760
        %v1864 = vsub.f32 %v1615, %v1863
        %v1865 = vand.u32 %v1864, 4294901760
        %v1866 = vsub.f32 %v1864, %v1865
        %v1867 = vand.u32 %v1866, 4294901760
        %1868 = vmatmul.mubr.f32.gmra.mrb[0].mxu0 %v1867
        %v1869 = vpop.f32.mrb[0].mxu0
        %v1870 = vadd.f32 0.0, %v1869
        %v1871 = vpop.f32.mrb[0].mxu0
        %1872 = vdwg.mxu0
        %1873 = vmatprep.subr.mxu0 0.0
        %v1874 = vand.u32 %v1616, 4294901760
        %v1875 = vsub.f32 %v1616, %v1874
        %v1876 = vand.u32 %v1875, 4294901760
        %v1877 = vsub.f32 %v1875, %v1876
        %v1878 = vand.u32 %v1877, 4294901760
        %1879 = vmatpush1.msra.mxu0 %v1878
        %1880 = vmatprep.subr.mxu0 0.0
        %v1881 = vand.u32 %v1617, 4294901760
        %v1882 = vsub.f32 %v1617, %v1881
        %v1883 = vand.u32 %v1882, 4294901760
        %v1884 = vsub.f32 %v1882, %v1883
        %v1885 = vand.u32 %v1884, 4294901760
        %1886 = vmatpush1.msra.mxu0 %v1885
        %1887 = vmatprep.subr.mxu0 0.0
        %v1888 = vand.u32 %v1618, 4294901760
        %v1889 = vsub.f32 %v1618, %v1888
        %v1890 = vand.u32 %v1889, 4294901760
        %v1891 = vsub.f32 %v1889, %v1890
        %v1892 = vand.u32 %v1891, 4294901760
        %1893 = vmatpush1.msra.mxu0 %v1892
        %1894 = vmatprep.subr.mxu0 0.0
        %v1895 = vand.u32 %v1619, 4294901760
        %v1896 = vsub.f32 %v1619, %v1895
        %v1897 = vand.u32 %v1896, 4294901760
        %v1898 = vsub.f32 %v1896, %v1897
        %v1899 = vand.u32 %v1898, 4294901760
        %1900 = vmatpush1.msra.mxu0 %v1899
        %1901 = vmatprep.subr.mxu0 0.0
        %v1902 = vand.u32 %v1620, 4294901760
        %v1903 = vsub.f32 %v1620, %v1902
        %v1904 = vand.u32 %v1903, 4294901760
        %v1905 = vsub.f32 %v1903, %v1904
        %v1906 = vand.u32 %v1905, 4294901760
        %1907 = vmatpush1.msra.mxu0 %v1906
        %1908 = vmatprep.subr.mxu0 0.0
        %v1909 = vand.u32 %v1621, 4294901760
        %v1910 = vsub.f32 %v1621, %v1909
        %v1911 = vand.u32 %v1910, 4294901760
        %v1912 = vsub.f32 %v1910, %v1911
        %v1913 = vand.u32 %v1912, 4294901760
        %1914 = vmatpush1.msra.mxu0 %v1913
        %1915 = vmatprep.subr.mxu0 0.0
        %v1916 = vand.u32 %v1622, 4294901760
        %v1917 = vsub.f32 %v1622, %v1916
        %v1918 = vand.u32 %v1917, 4294901760
        %v1919 = vsub.f32 %v1917, %v1918
        %v1920 = vand.u32 %v1919, 4294901760
        %1921 = vmatpush1.msra.mxu0 %v1920
        %1922 = vmatprep.subr.mxu0 0.0
        %v1923 = vand.u32 %v1623, 4294901760
        %v1924 = vsub.f32 %v1623, %v1923
        %v1925 = vand.u32 %v1924, 4294901760
        %v1926 = vsub.f32 %v1924, %v1925
        %v1927 = vand.u32 %v1926, 4294901760
        %1928 = vmatpush1.msra.mxu0 %v1927
        %1929 = vmatprep.subr.mxu0 0.0
        %v1930 = vand.u32 %v1624, 4294901760
        %v1931 = vsub.f32 %v1624, %v1930
        %v1932 = vand.u32 %v1931, 4294901760
        %v1933 = vsub.f32 %v1931, %v1932
        %v1934 = vand.u32 %v1933, 4294901760
        %1935 = vmatpush1.msra.mxu0 %v1934
        %1936 = vmatprep.subr.mxu0 0.0
        %v1937 = vand.u32 %v1625, 4294901760
        %v1938 = vsub.f32 %v1625, %v1937
        %v1939 = vand.u32 %v1938, 4294901760
        %v1940 = vsub.f32 %v1938, %v1939
        %v1941 = vand.u32 %v1940, 4294901760
        %1942 = vmatpush1.msra.mxu0 %v1941
        %1943 = vmatprep.subr.mxu0 0.0
        %v1944 = vand.u32 %v1626, 4294901760
        %v1945 = vsub.f32 %v1626, %v1944
        %v1946 = vand.u32 %v1945, 4294901760
        %v1947 = vsub.f32 %v1945, %v1946
        %v1948 = vand.u32 %v1947, 4294901760
        %1949 = vmatpush1.msra.mxu0 %v1948
        %1950 = vmatprep.subr.mxu0 0.0
        %v1951 = vand.u32 %v1627, 4294901760
        %v1952 = vsub.f32 %v1627, %v1951
        %v1953 = vand.u32 %v1952, 4294901760
        %v1954 = vsub.f32 %v1952, %v1953
        %v1955 = vand.u32 %v1954, 4294901760
        %1956 = vmatpush1.msra.mxu0 %v1955
        %1957 = vmatprep.subr.mxu0 0.0
        %v1958 = vand.u32 %v1628, 4294901760
        %v1959 = vsub.f32 %v1628, %v1958
        %v1960 = vand.u32 %v1959, 4294901760
        %v1961 = vsub.f32 %v1959, %v1960
        %v1962 = vand.u32 %v1961, 4294901760
        %1963 = vmatpush1.msra.mxu0 %v1962
        %1964 = vmatprep.subr.mxu0 0.0
        %v1965 = vand.u32 %v1629, 4294901760
        %v1966 = vsub.f32 %v1629, %v1965
        %v1967 = vand.u32 %v1966, 4294901760
        %v1968 = vsub.f32 %v1966, %v1967
        %v1969 = vand.u32 %v1968, 4294901760
        %1970 = vmatpush1.msra.mxu0 %v1969
        %1971 = vmatprep.subr.mxu0 0.0
        %v1972 = vand.u32 %v1630, 4294901760
        %v1973 = vsub.f32 %v1630, %v1972
        %v1974 = vand.u32 %v1973, 4294901760
        %v1975 = vsub.f32 %v1973, %v1974
        %v1976 = vand.u32 %v1975, 4294901760
        %1977 = vmatpush1.msra.mxu0 %v1976
        %1978 = vmatprep.subr.mxu0 0.0
        %v1979 = vand.u32 %v1631, 4294901760
        %v1980 = vsub.f32 %v1631, %v1979
        %v1981 = vand.u32 %v1980, 4294901760
        %v1982 = vsub.f32 %v1980, %v1981
        %v1983 = vand.u32 %v1982, 4294901760
        %1984 = vmatpush1.msra.mxu0 %v1983
        %1985 = vmatprep.subr.mxu0 0.0
        %1986 = vmatpush1.msra.mxu0 0.0
        %1987 = vmatprep.subr.mxu0 0.0
        %1988 = vmatpush1.msra.mxu0 0.0
        %1989 = vmatprep.subr.mxu0 0.0
        %1990 = vmatpush1.msra.mxu0 0.0
        %1991 = vmatprep.subr.mxu0 0.0
        %1992 = vmatpush1.msra.mxu0 0.0
        %1993 = vmatprep.subr.mxu0 0.0
        %1994 = vmatpush1.msra.mxu0 0.0
        %1995 = vmatprep.subr.mxu0 0.0
        %1996 = vmatpush1.msra.mxu0 0.0
        %1997 = vmatprep.subr.mxu0 0.0
        %1998 = vmatpush1.msra.mxu0 0.0
        %1999 = vmatprep.subr.mxu0 0.0
        %2000 = vmatpush1.msra.mxu0 0.0
        %2001 = vmatprep.subr.mxu0 0.0
        %2002 = vmatpush1.msra.mxu0 0.0
        %2003 = vmatprep.subr.mxu0 0.0
        %2004 = vmatpush1.msra.mxu0 0.0
        %2005 = vmatprep.subr.mxu0 0.0
        %2006 = vmatpush1.msra.mxu0 0.0
        %2007 = vmatprep.subr.mxu0 0.0
        %2008 = vmatpush1.msra.mxu0 0.0
        %2009 = vmatprep.subr.mxu0 0.0
        %2010 = vmatpush1.msra.mxu0 0.0
        %2011 = vmatprep.subr.mxu0 0.0
        %2012 = vmatpush1.msra.mxu0 0.0
        %2013 = vmatprep.subr.mxu0 0.0
        %2014 = vmatpush1.msra.mxu0 0.0
        %2015 = vmatprep.subr.mxu0 0.0
        %2016 = vmatpush1.msra.mxu0 0.0
        %2017 = vmatprep.mubr.f32.mxu0 0.0
        %v2018 = vand.u32 %v1600, 4294901760
        %2019 = vmatmul.mubr.f32.gmra.mrb[0].mxu0 %v2018
        %v2020 = vpop.f32.mrb[0].mxu0
        %v2021 = vadd.f32 %v1720, %v2020
        %v2022 = vpop.f32.mrb[0].mxu0
        %2023 = vmatprep.mubr.f32.mxu0 0.0
        %v2024 = vand.u32 %v1601, 4294901760
        %2025 = vmatmul.mubr.f32.gmra.mrb[0].mxu0 %v2024
        %v2026 = vpop.f32.mrb[0].mxu0
        %v2027 = vadd.f32 %v1730, %v2026
        %v2028 = vpop.f32.mrb[0].mxu0
        %2029 = vmatprep.mubr.f32.mxu0 0.0
        %v2030 = vand.u32 %v1602, 4294901760
        %2031 = vmatmul.mubr.f32.gmra.mrb[0].mxu0 %v2030
        %v2032 = vpop.f32.mrb[0].mxu0
        %v2033 = vadd.f32 %v1740, %v2032
        %v2034 = vpop.f32.mrb[0].mxu0
        %2035 = vmatprep.mubr.f32.mxu0 0.0
        %v2036 = vand.u32 %v1603, 4294901760
        %2037 = vmatmul.mubr.f32.gmra.mrb[0].mxu0 %v2036
        %v2038 = vpop.f32.mrb[0].mxu0
        %v2039 = vadd.f32 %v1750, %v2038
        %v2040 = vpop.f32.mrb[0].mxu0
        %2041 = vmatprep.mubr.f32.mxu0 0.0
        %v2042 = vand.u32 %v1604, 4294901760
        %2043 = vmatmul.mubr.f32.gmra.mrb[0].mxu0 %v2042
        %v2044 = vpop.f32.mrb[0].mxu0
        %v2045 = vadd.f32 %v1760, %v2044
        %v2046 = vpop.f32.mrb[0].mxu0
        %2047 = vmatprep.mubr.f32.mxu0 0.0
        %v2048 = vand.u32 %v1605, 4294901760
        %2049 = vmatmul.mubr.f32.gmra.mrb[0].mxu0 %v2048
        %v2050 = vpop.f32.mrb[0].mxu0
        %v2051 = vadd.f32 %v1770, %v2050
        %v2052 = vpop.f32.mrb[0].mxu0
        %2053 = vmatprep.mubr.f32.mxu0 0.0
        %v2054 = vand.u32 %v1606, 4294901760
        %2055 = vmatmul.mubr.f32.gmra.mrb[0].mxu0 %v2054
        %v2056 = vpop.f32.mrb[0].mxu0
        %v2057 = vadd.f32 %v1780, %v2056
        %v2058 = vpop.f32.mrb[0].mxu0
        %2059 = vmatprep.mubr.f32.mxu0 0.0
        %v2060 = vand.u32 %v1607, 4294901760
        %2061 = vmatmul.mubr.f32.gmra.mrb[0].mxu0 %v2060
        %v2062 = vpop.f32.mrb[0].mxu0
        %v2063 = vadd.f32 %v1790, %v2062
        %v2064 = vpop.f32.mrb[0].mxu0
        %2065 = vmatprep.mubr.f32.mxu0 0.0
        %v2066 = vand.u32 %v1608, 4294901760
        %2067 = vmatmul.mubr.f32.gmra.mrb[0].mxu0 %v2066
        %v2068 = vpop.f32.mrb[0].mxu0
        %v2069 = vadd.f32 %v1800, %v2068
        %v2070 = vpop.f32.mrb[0].mxu0
        %2071 = vmatprep.mubr.f32.mxu0 0.0
        %v2072 = vand.u32 %v1609, 4294901760
        %2073 = vmatmul.mubr.f32.gmra.mrb[0].mxu0 %v2072
        %v2074 = vpop.f32.mrb[0].mxu0
        %v2075 = vadd.f32 %v1810, %v2074
        %v2076 = vpop.f32.mrb[0].mxu0
        %2077 = vmatprep.mubr.f32.mxu0 0.0
        %v2078 = vand.u32 %v1610, 4294901760
        %2079 = vmatmul.mubr.f32.gmra.mrb[0].mxu0 %v2078
        %v2080 = vpop.f32.mrb[0].mxu0
        %v2081 = vadd.f32 %v1820, %v2080
        %v2082 = vpop.f32.mrb[0].mxu0
        %2083 = vmatprep.mubr.f32.mxu0 0.0
        %v2084 = vand.u32 %v1611, 4294901760
        %2085 = vmatmul.mubr.f32.gmra.mrb[0].mxu0 %v2084
        %v2086 = vpop.f32.mrb[0].mxu0
        %v2087 = vadd.f32 %v1830, %v2086
        %v2088 = vpop.f32.mrb[0].mxu0
        %2089 = vmatprep.mubr.f32.mxu0 0.0
        %v2090 = vand.u32 %v1612, 4294901760
        %2091 = vmatmul.mubr.f32.gmra.mrb[0].mxu0 %v2090
        %v2092 = vpop.f32.mrb[0].mxu0
        %v2093 = vadd.f32 %v1840, %v2092
        %v2094 = vpop.f32.mrb[0].mxu0
        %2095 = vmatprep.mubr.f32.mxu0 0.0
        %v2096 = vand.u32 %v1613, 4294901760
        %2097 = vmatmul.mubr.f32.gmra.mrb[0].mxu0 %v2096
        %v2098 = vpop.f32.mrb[0].mxu0
        %v2099 = vadd.f32 %v1850, %v2098
        %v2100 = vpop.f32.mrb[0].mxu0
        %2101 = vmatprep.mubr.f32.mxu0 0.0
        %v2102 = vand.u32 %v1614, 4294901760
        %2103 = vmatmul.mubr.f32.gmra.mrb[0].mxu0 %v2102
        %v2104 = vpop.f32.mrb[0].mxu0
        %v2105 = vadd.f32 %v1860, %v2104
        %v2106 = vpop.f32.mrb[0].mxu0
        %2107 = vmatprep.mubr.f32.mxu0 0.0
        %v2108 = vand.u32 %v1615, 4294901760
        %2109 = vmatmul.mubr.f32.gmra.mrb[0].mxu0 %v2108
        %v2110 = vpop.f32.mrb[0].mxu0
        %v2111 = vadd.f32 %v1870, %v2110
        %v2112 = vpop.f32.mrb[0].mxu0
        %2113 = vdwg.mxu0
        %2114 = vmatprep.subr.mxu0 0.0
        %v2115 = vand.u32 %v1616, 4294901760
        %v2116 = vsub.f32 %v1616, %v2115
        %2117 = vmatpush1.msra.mxu0 %v2116
        %2118 = vmatprep.subr.mxu0 0.0
        %v2119 = vand.u32 %v1617, 4294901760
        %v2120 = vsub.f32 %v1617, %v2119
        %2121 = vmatpush1.msra.mxu0 %v2120
        %2122 = vmatprep.subr.mxu0 0.0
        %v2123 = vand.u32 %v1618, 4294901760
        %v2124 = vsub.f32 %v1618, %v2123
        %2125 = vmatpush1.msra.mxu0 %v2124
        %2126 = vmatprep.subr.mxu0 0.0
        %v2127 = vand.u32 %v1619, 4294901760
        %v2128 = vsub.f32 %v1619, %v2127
        %2129 = vmatpush1.msra.mxu0 %v2128
        %2130 = vmatprep.subr.mxu0 0.0
        %v2131 = vand.u32 %v1620, 4294901760
        %v2132 = vsub.f32 %v1620, %v2131
        %2133 = vmatpush1.msra.mxu0 %v2132
        %2134 = vmatprep.subr.mxu0 0.0
        %v2135 = vand.u32 %v1621, 4294901760
        %v2136 = vsub.f32 %v1621, %v2135
        %2137 = vmatpush1.msra.mxu0 %v2136
        %2138 = vmatprep.subr.mxu0 0.0
        %v2139 = vand.u32 %v1622, 4294901760
        %v2140 = vsub.f32 %v1622, %v2139
        %2141 = vmatpush1.msra.mxu0 %v2140
        %2142 = vmatprep.subr.mxu0 0.0
        %v2143 = vand.u32 %v1623, 4294901760
        %v2144 = vsub.f32 %v1623, %v2143
        %2145 = vmatpush1.msra.mxu0 %v2144
        %2146 = vmatprep.subr.mxu0 0.0
        %v2147 = vand.u32 %v1624, 4294901760
        %v2148 = vsub.f32 %v1624, %v2147
        %2149 = vmatpush1.msra.mxu0 %v2148
        %2150 = vmatprep.subr.mxu0 0.0
        %v2151 = vand.u32 %v1625, 4294901760
        %v2152 = vsub.f32 %v1625, %v2151
        %2153 = vmatpush1.msra.mxu0 %v2152
        %2154 = vmatprep.subr.mxu0 0.0
        %v2155 = vand.u32 %v1626, 4294901760
        %v2156 = vsub.f32 %v1626, %v2155
        %2157 = vmatpush1.msra.mxu0 %v2156
        %2158 = vmatprep.subr.mxu0 0.0
        %v2159 = vand.u32 %v1627, 4294901760
        %v2160 = vsub.f32 %v1627, %v2159
        %2161 = vmatpush1.msra.mxu0 %v2160
        %2162 = vmatprep.subr.mxu0 0.0
        %v2163 = vand.u32 %v1628, 4294901760
        %v2164 = vsub.f32 %v1628, %v2163
        %2165 = vmatpush1.msra.mxu0 %v2164
        %2166 = vmatprep.subr.mxu0 0.0
        %v2167 = vand.u32 %v1629, 4294901760
        %v2168 = vsub.f32 %v1629, %v2167
        %2169 = vmatpush1.msra.mxu0 %v2168
        %2170 = vmatprep.subr.mxu0 0.0
        %v2171 = vand.u32 %v1630, 4294901760
        %v2172 = vsub.f32 %v1630, %v2171
        %2173 = vmatpush1.msra.mxu0 %v2172
        %2174 = vmatprep.subr.mxu0 0.0
        %v2175 = vand.u32 %v1631, 4294901760
        %v2176 = vsub.f32 %v1631, %v2175
        %2177 = vmatpush1.msra.mxu0 %v2176
        %2178 = vmatprep.subr.mxu0 0.0
        %2179 = vmatpush1.msra.mxu0 0.0
        %2180 = vmatprep.subr.mxu0 0.0
        %2181 = vmatpush1.msra.mxu0 0.0
        %2182 = vmatprep.subr.mxu0 0.0
        %2183 = vmatpush1.msra.mxu0 0.0
        %2184 = vmatprep.subr.mxu0 0.0
        %2185 = vmatpush1.msra.mxu0 0.0
        %2186 = vmatprep.subr.mxu0 0.0
        %2187 = vmatpush1.msra.mxu0 0.0
        %2188 = vmatprep.subr.mxu0 0.0
        %2189 = vmatpush1.msra.mxu0 0.0
        %2190 = vmatprep.subr.mxu0 0.0
        %2191 = vmatpush1.msra.mxu0 0.0
        %2192 = vmatprep.subr.mxu0 0.0
        %2193 = vmatpush1.msra.mxu0 0.0
        %2194 = vmatprep.subr.mxu0 0.0
        %2195 = vmatpush1.msra.mxu0 0.0
        %2196 = vmatprep.subr.mxu0 0.0
        %2197 = vmatpush1.msra.mxu0 0.0
        %2198 = vmatprep.subr.mxu0 0.0
        %2199 = vmatpush1.msra.mxu0 0.0
        %2200 = vmatprep.subr.mxu0 0.0
        %2201 = vmatpush1.msra.mxu0 0.0
        %2202 = vmatprep.subr.mxu0 0.0
        %2203 = vmatpush1.msra.mxu0 0.0
        %2204 = vmatprep.subr.mxu0 0.0
        %2205 = vmatpush1.msra.mxu0 0.0
        %2206 = vmatprep.subr.mxu0 0.0
        %2207 = vmatpush1.msra.mxu0 0.0
        %2208 = vmatprep.subr.mxu0 0.0
        %2209 = vmatpush1.msra.mxu0 0.0
        %2210 = vmatprep.mubr.f32.mxu0 0.0
        %v2211 = vand.u32 %v1600, 4294901760
        %v2212 = vsub.f32 %v1600, %v2211
        %2213 = vmatmul.mubr.f32.gmra.mrb[0].mxu0 %v2212
        %v2214 = vpop.f32.mrb[0].mxu0
        %v2215 = vadd.f32 %v2021, %v2214
        %v2216 = vpop.f32.mrb[0].mxu0
        %2217 = vmatprep.mubr.f32.mxu0 0.0
        %v2218 = vand.u32 %v1601, 4294901760
        %v2219 = vsub.f32 %v1601, %v2218
        %2220 = vmatmul.mubr.f32.gmra.mrb[0].mxu0 %v2219
        %v2221 = vpop.f32.mrb[0].mxu0
        %v2222 = vadd.f32 %v2027, %v2221
        %v2223 = vpop.f32.mrb[0].mxu0
        %2224 = vmatprep.mubr.f32.mxu0 0.0
        %v2225 = vand.u32 %v1602, 4294901760
        %v2226 = vsub.f32 %v1602, %v2225
        %2227 = vmatmul.mubr.f32.gmra.mrb[0].mxu0 %v2226
        %v2228 = vpop.f32.mrb[0].mxu0
        %v2229 = vadd.f32 %v2033, %v2228
        %v2230 = vpop.f32.mrb[0].mxu0
        %2231 = vmatprep.mubr.f32.mxu0 0.0
        %v2232 = vand.u32 %v1603, 4294901760
        %v2233 = vsub.f32 %v1603, %v2232
        %2234 = vmatmul.mubr.f32.gmra.mrb[0].mxu0 %v2233
        %v2235 = vpop.f32.mrb[0].mxu0
        %v2236 = vadd.f32 %v2039, %v2235
        %v2237 = vpop.f32.mrb[0].mxu0
        %2238 = vmatprep.mubr.f32.mxu0 0.0
        %v2239 = vand.u32 %v1604, 4294901760
        %v2240 = vsub.f32 %v1604, %v2239
        %2241 = vmatmul.mubr.f32.gmra.mrb[0].mxu0 %v2240
        %v2242 = vpop.f32.mrb[0].mxu0
        %v2243 = vadd.f32 %v2045, %v2242
        %v2244 = vpop.f32.mrb[0].mxu0
        %2245 = vmatprep.mubr.f32.mxu0 0.0
        %v2246 = vand.u32 %v1605, 4294901760
        %v2247 = vsub.f32 %v1605, %v2246
        %2248 = vmatmul.mubr.f32.gmra.mrb[0].mxu0 %v2247
        %v2249 = vpop.f32.mrb[0].mxu0
        %v2250 = vadd.f32 %v2051, %v2249
        %v2251 = vpop.f32.mrb[0].mxu0
        %2252 = vmatprep.mubr.f32.mxu0 0.0
        %v2253 = vand.u32 %v1606, 4294901760
        %v2254 = vsub.f32 %v1606, %v2253
        %2255 = vmatmul.mubr.f32.gmra.mrb[0].mxu0 %v2254
        %v2256 = vpop.f32.mrb[0].mxu0
        %v2257 = vadd.f32 %v2057, %v2256
        %v2258 = vpop.f32.mrb[0].mxu0
        %2259 = vmatprep.mubr.f32.mxu0 0.0
        %v2260 = vand.u32 %v1607, 4294901760
        %v2261 = vsub.f32 %v1607, %v2260
        %2262 = vmatmul.mubr.f32.gmra.mrb[0].mxu0 %v2261
        %v2263 = vpop.f32.mrb[0].mxu0
        %v2264 = vadd.f32 %v2063, %v2263
        %v2265 = vpop.f32.mrb[0].mxu0
        %2266 = vmatprep.mubr.f32.mxu0 0.0
        %v2267 = vand.u32 %v1608, 4294901760
        %v2268 = vsub.f32 %v1608, %v2267
        %2269 = vmatmul.mubr.f32.gmra.mrb[0].mxu0 %v2268
        %v2270 = vpop.f32.mrb[0].mxu0
        %v2271 = vadd.f32 %v2069, %v2270
        %v2272 = vpop.f32.mrb[0].mxu0
        %2273 = vmatprep.mubr.f32.mxu0 0.0
        %v2274 = vand.u32 %v1609, 4294901760
        %v2275 = vsub.f32 %v1609, %v2274
        %2276 = vmatmul.mubr.f32.gmra.mrb[0].mxu0 %v2275
        %v2277 = vpop.f32.mrb[0].mxu0
        %v2278 = vadd.f32 %v2075, %v2277
        %v2279 = vpop.f32.mrb[0].mxu0
        %2280 = vmatprep.mubr.f32.mxu0 0.0
        %v2281 = vand.u32 %v1610, 4294901760
        %v2282 = vsub.f32 %v1610, %v2281
        %2283 = vmatmul.mubr.f32.gmra.mrb[0].mxu0 %v2282
        %v2284 = vpop.f32.mrb[0].mxu0
        %v2285 = vadd.f32 %v2081, %v2284
        %v2286 = vpop.f32.mrb[0].mxu0
        %2287 = vmatprep.mubr.f32.mxu0 0.0
        %v2288 = vand.u32 %v1611, 4294901760
        %v2289 = vsub.f32 %v1611, %v2288
        %2290 = vmatmul.mubr.f32.gmra.mrb[0].mxu0 %v2289
        %v2291 = vpop.f32.mrb[0].mxu0
        %v2292 = vadd.f32 %v2087, %v2291
        %v2293 = vpop.f32.mrb[0].mxu0
        %2294 = vmatprep.mubr.f32.mxu0 0.0
        %v2295 = vand.u32 %v1612, 4294901760
        %v2296 = vsub.f32 %v1612, %v2295
        %2297 = vmatmul.mubr.f32.gmra.mrb[0].mxu0 %v2296
        %v2298 = vpop.f32.mrb[0].mxu0
        %v2299 = vadd.f32 %v2093, %v2298
        %v2300 = vpop.f32.mrb[0].mxu0
        %2301 = vmatprep.mubr.f32.mxu0 0.0
        %v2302 = vand.u32 %v1613, 4294901760
        %v2303 = vsub.f32 %v1613, %v2302
        %2304 = vmatmul.mubr.f32.gmra.mrb[0].mxu0 %v2303
        %v2305 = vpop.f32.mrb[0].mxu0
        %v2306 = vadd.f32 %v2099, %v2305
        %v2307 = vpop.f32.mrb[0].mxu0
        %2308 = vmatprep.mubr.f32.mxu0 0.0
        %v2309 = vand.u32 %v1614, 4294901760
        %v2310 = vsub.f32 %v1614, %v2309
        %2311 = vmatmul.mubr.f32.gmra.mrb[0].mxu0 %v2310
        %v2312 = vpop.f32.mrb[0].mxu0
        %v2313 = vadd.f32 %v2105, %v2312
        %v2314 = vpop.f32.mrb[0].mxu0
        %2315 = vmatprep.mubr.f32.mxu0 0.0
        %v2316 = vand.u32 %v1615, 4294901760
        %v2317 = vsub.f32 %v1615, %v2316
        %2318 = vmatmul.mubr.f32.gmra.mrb[0].mxu0 %v2317
        %v2319 = vpop.f32.mrb[0].mxu0
        %v2320 = vadd.f32 %v2111, %v2319
        %v2321 = vpop.f32.mrb[0].mxu0
        %2322 = vdwg.mxu0
        %2323 = vmatprep.subr.mxu0 0.0
        %v2324 = vand.u32 %v1616, 4294901760
        %2325 = vmatpush1.msra.mxu0 %v2324
        %2326 = vmatprep.subr.mxu0 0.0
        %v2327 = vand.u32 %v1617, 4294901760
        %2328 = vmatpush1.msra.mxu0 %v2327
        %2329 = vmatprep.subr.mxu0 0.0
        %v2330 = vand.u32 %v1618, 4294901760
        %2331 = vmatpush1.msra.mxu0 %v2330
        %2332 = vmatprep.subr.mxu0 0.0
        %v2333 = vand.u32 %v1619, 4294901760
        %2334 = vmatpush1.msra.mxu0 %v2333
        %2335 = vmatprep.subr.mxu0 0.0
        %v2336 = vand.u32 %v1620, 4294901760
        %2337 = vmatpush1.msra.mxu0 %v2336
        %2338 = vmatprep.subr.mxu0 0.0
        %v2339 = vand.u32 %v1621, 4294901760
        %2340 = vmatpush1.msra.mxu0 %v2339
        %2341 = vmatprep.subr.mxu0 0.0
        %v2342 = vand.u32 %v1622, 4294901760
        %2343 = vmatpush1.msra.mxu0 %v2342
        %2344 = vmatprep.subr.mxu0 0.0
        %v2345 = vand.u32 %v1623, 4294901760
        %2346 = vmatpush1.msra.mxu0 %v2345
        %2347 = vmatprep.subr.mxu0 0.0
        %v2348 = vand.u32 %v1624, 4294901760
        %2349 = vmatpush1.msra.mxu0 %v2348
        %2350 = vmatprep.subr.mxu0 0.0
        %v2351 = vand.u32 %v1625, 4294901760
        %2352 = vmatpush1.msra.mxu0 %v2351
        %2353 = vmatprep.subr.mxu0 0.0
        %v2354 = vand.u32 %v1626, 4294901760
        %2355 = vmatpush1.msra.mxu0 %v2354
        %2356 = vmatprep.subr.mxu0 0.0
        %v2357 = vand.u32 %v1627, 4294901760
        %2358 = vmatpush1.msra.mxu0 %v2357
        %2359 = vmatprep.subr.mxu0 0.0
        %v2360 = vand.u32 %v1628, 4294901760
        %2361 = vmatpush1.msra.mxu0 %v2360
        %2362 = vmatprep.subr.mxu0 0.0
        %v2363 = vand.u32 %v1629, 4294901760
        %2364 = vmatpush1.msra.mxu0 %v2363
        %2365 = vmatprep.subr.mxu0 0.0
        %v2366 = vand.u32 %v1630, 4294901760
        %2367 = vmatpush1.msra.mxu0 %v2366
        %2368 = vmatprep.subr.mxu0 0.0
        %v2369 = vand.u32 %v1631, 4294901760
        %2370 = vmatpush1.msra.mxu0 %v2369
        %2371 = vmatprep.subr.mxu0 0.0
        %2372 = vmatpush1.msra.mxu0 0.0
        %2373 = vmatprep.subr.mxu0 0.0
        %2374 = vmatpush1.msra.mxu0 0.0
        %2375 = vmatprep.subr.mxu0 0.0
        %2376 = vmatpush1.msra.mxu0 0.0
        %2377 = vmatprep.subr.mxu0 0.0
        %2378 = vmatpush1.msra.mxu0 0.0
        %2379 = vmatprep.subr.mxu0 0.0
        %2380 = vmatpush1.msra.mxu0 0.0
        %2381 = vmatprep.subr.mxu0 0.0
        %2382 = vmatpush1.msra.mxu0 0.0
        %2383 = vmatprep.subr.mxu0 0.0
        %2384 = vmatpush1.msra.mxu0 0.0
        %2385 = vmatprep.subr.mxu0 0.0
        %2386 = vmatpush1.msra.mxu0 0.0
        %2387 = vmatprep.subr.mxu0 0.0
        %2388 = vmatpush1.msra.mxu0 0.0
        %2389 = vmatprep.subr.mxu0 0.0
        %2390 = vmatpush1.msra.mxu0 0.0
        %2391 = vmatprep.subr.mxu0 0.0
        %2392 = vmatpush1.msra.mxu0 0.0
        %2393 = vmatprep.subr.mxu0 0.0
        %2394 = vmatpush1.msra.mxu0 0.0
        %2395 = vmatprep.subr.mxu0 0.0
        %2396 = vmatpush1.msra.mxu0 0.0
        %2397 = vmatprep.subr.mxu0 0.0
        %2398 = vmatpush1.msra.mxu0 0.0
        %2399 = vmatprep.subr.mxu0 0.0
        %2400 = vmatpush1.msra.mxu0 0.0
        %2401 = vmatprep.subr.mxu0 0.0
        %2402 = vmatpush1.msra.mxu0 0.0
        %2403 = vmatprep.mubr.f32.mxu0 0.0
        %v2404 = vand.u32 %v1600, 4294901760
        %v2405 = vsub.f32 %v1600, %v2404
        %v2406 = vand.u32 %v2405, 4294901760
        %2407 = vmatmul.mubr.f32.gmra.mrb[0].mxu0 %v2406
        %v2408 = vpop.f32.mrb[0].mxu0
        %v2409 = vadd.f32 %v2215, %v2408
        %v2410 = vpop.f32.mrb[0].mxu0
        %2411 = vmatprep.mubr.f32.mxu0 0.0
        %v2412 = vand.u32 %v1601, 4294901760
        %v2413 = vsub.f32 %v1601, %v2412
        %v2414 = vand.u32 %v2413, 4294901760
        %2415 = vmatmul.mubr.f32.gmra.mrb[0].mxu0 %v2414
        %v2416 = vpop.f32.mrb[0].mxu0
        %v2417 = vadd.f32 %v2222, %v2416
        %v2418 = vpop.f32.mrb[0].mxu0
        %2419 = vmatprep.mubr.f32.mxu0 0.0
        %v2420 = vand.u32 %v1602, 4294901760
        %v2421 = vsub.f32 %v1602, %v2420
        %v2422 = vand.u32 %v2421, 4294901760
        %2423 = vmatmul.mubr.f32.gmra.mrb[0].mxu0 %v2422
        %v2424 = vpop.f32.mrb[0].mxu0
        %v2425 = vadd.f32 %v2229, %v2424
        %v2426 = vpop.f32.mrb[0].mxu0
        %2427 = vmatprep.mubr.f32.mxu0 0.0
        %v2428 = vand.u32 %v1603, 4294901760
        %v2429 = vsub.f32 %v1603, %v2428
        %v2430 = vand.u32 %v2429, 4294901760
        %2431 = vmatmul.mubr.f32.gmra.mrb[0].mxu0 %v2430
        %v2432 = vpop.f32.mrb[0].mxu0
        %v2433 = vadd.f32 %v2236, %v2432
        %v2434 = vpop.f32.mrb[0].mxu0
        %2435 = vmatprep.mubr.f32.mxu0 0.0
        %v2436 = vand.u32 %v1604, 4294901760
        %v2437 = vsub.f32 %v1604, %v2436
        %v2438 = vand.u32 %v2437, 4294901760
        %2439 = vmatmul.mubr.f32.gmra.mrb[0].mxu0 %v2438
        %v2440 = vpop.f32.mrb[0].mxu0
        %v2441 = vadd.f32 %v2243, %v2440
        %v2442 = vpop.f32.mrb[0].mxu0
        %2443 = vmatprep.mubr.f32.mxu0 0.0
        %v2444 = vand.u32 %v1605, 4294901760
        %v2445 = vsub.f32 %v1605, %v2444
        %v2446 = vand.u32 %v2445, 4294901760
        %2447 = vmatmul.mubr.f32.gmra.mrb[0].mxu0 %v2446
        %v2448 = vpop.f32.mrb[0].mxu0
        %v2449 = vadd.f32 %v2250, %v2448
        %v2450 = vpop.f32.mrb[0].mxu0
        %2451 = vmatprep.mubr.f32.mxu0 0.0
        %v2452 = vand.u32 %v1606, 4294901760
        %v2453 = vsub.f32 %v1606, %v2452
        %v2454 = vand.u32 %v2453, 4294901760
        %2455 = vmatmul.mubr.f32.gmra.mrb[0].mxu0 %v2454
        %v2456 = vpop.f32.mrb[0].mxu0
        %v2457 = vadd.f32 %v2257, %v2456
        %v2458 = vpop.f32.mrb[0].mxu0
        %2459 = vmatprep.mubr.f32.mxu0 0.0
        %v2460 = vand.u32 %v1607, 4294901760
        %v2461 = vsub.f32 %v1607, %v2460
        %v2462 = vand.u32 %v2461, 4294901760
        %2463 = vmatmul.mubr.f32.gmra.mrb[0].mxu0 %v2462
        %v2464 = vpop.f32.mrb[0].mxu0
        %v2465 = vadd.f32 %v2264, %v2464
        %v2466 = vpop.f32.mrb[0].mxu0
        %2467 = vmatprep.mubr.f32.mxu0 0.0
        %v2468 = vand.u32 %v1608, 4294901760
        %v2469 = vsub.f32 %v1608, %v2468
        %v2470 = vand.u32 %v2469, 4294901760
        %2471 = vmatmul.mubr.f32.gmra.mrb[0].mxu0 %v2470
        %v2472 = vpop.f32.mrb[0].mxu0
        %v2473 = vadd.f32 %v2271, %v2472
        %v2474 = vpop.f32.mrb[0].mxu0
        %2475 = vmatprep.mubr.f32.mxu0 0.0
        %v2476 = vand.u32 %v1609, 4294901760
        %v2477 = vsub.f32 %v1609, %v2476
        %v2478 = vand.u32 %v2477, 4294901760
        %2479 = vmatmul.mubr.f32.gmra.mrb[0].mxu0 %v2478
        %v2480 = vpop.f32.mrb[0].mxu0
        %v2481 = vadd.f32 %v2278, %v2480
        %v2482 = vpop.f32.mrb[0].mxu0
        %2483 = vmatprep.mubr.f32.mxu0 0.0
        %v2484 = vand.u32 %v1610, 4294901760
        %v2485 = vsub.f32 %v1610, %v2484
        %v2486 = vand.u32 %v2485, 4294901760
        %2487 = vmatmul.mubr.f32.gmra.mrb[0].mxu0 %v2486
        %v2488 = vpop.f32.mrb[0].mxu0
        %v2489 = vadd.f32 %v2285, %v2488
        %v2490 = vpop.f32.mrb[0].mxu0
        %2491 = vmatprep.mubr.f32.mxu0 0.0
        %v2492 = vand.u32 %v1611, 4294901760
        %v2493 = vsub.f32 %v1611, %v2492
        %v2494 = vand.u32 %v2493, 4294901760
        %2495 = vmatmul.mubr.f32.gmra.mrb[0].mxu0 %v2494
        %v2496 = vpop.f32.mrb[0].mxu0
        %v2497 = vadd.f32 %v2292, %v2496
        %v2498 = vpop.f32.mrb[0].mxu0
        %2499 = vmatprep.mubr.f32.mxu0 0.0
        %v2500 = vand.u32 %v1612, 4294901760
        %v2501 = vsub.f32 %v1612, %v2500
        %v2502 = vand.u32 %v2501, 4294901760
        %2503 = vmatmul.mubr.f32.gmra.mrb[0].mxu0 %v2502
        %v2504 = vpop.f32.mrb[0].mxu0
        %v2505 = vadd.f32 %v2299, %v2504
        %v2506 = vpop.f32.mrb[0].mxu0
        %2507 = vmatprep.mubr.f32.mxu0 0.0
        %v2508 = vand.u32 %v1613, 4294901760
        %v2509 = vsub.f32 %v1613, %v2508
        %v2510 = vand.u32 %v2509, 4294901760
        %2511 = vmatmul.mubr.f32.gmra.mrb[0].mxu0 %v2510
        %v2512 = vpop.f32.mrb[0].mxu0
        %v2513 = vadd.f32 %v2306, %v2512
        %v2514 = vpop.f32.mrb[0].mxu0
        %2515 = vmatprep.mubr.f32.mxu0 0.0
        %v2516 = vand.u32 %v1614, 4294901760
        %v2517 = vsub.f32 %v1614, %v2516
        %v2518 = vand.u32 %v2517, 4294901760
        %2519 = vmatmul.mubr.f32.gmra.mrb[0].mxu0 %v2518
        %v2520 = vpop.f32.mrb[0].mxu0
        %v2521 = vadd.f32 %v2313, %v2520
        %v2522 = vpop.f32.mrb[0].mxu0
        %2523 = vmatprep.mubr.f32.mxu0 0.0
        %v2524 = vand.u32 %v1615, 4294901760
        %v2525 = vsub.f32 %v1615, %v2524
        %v2526 = vand.u32 %v2525, 4294901760
        %2527 = vmatmul.mubr.f32.gmra.mrb[0].mxu0 %v2526
        %v2528 = vpop.f32.mrb[0].mxu0
        %v2529 = vadd.f32 %v2320, %v2528
        %v2530 = vpop.f32.mrb[0].mxu0
        %2531 = vdwg.mxu0
        %2532 = vmatprep.subr.mxu0 0.0
        %v2533 = vand.u32 %v1616, 4294901760
        %v2534 = vsub.f32 %v1616, %v2533
        %v2535 = vand.u32 %v2534, 4294901760
        %2536 = vmatpush1.msra.mxu0 %v2535
        %2537 = vmatprep.subr.mxu0 0.0
        %v2538 = vand.u32 %v1617, 4294901760
        %v2539 = vsub.f32 %v1617, %v2538
        %v2540 = vand.u32 %v2539, 4294901760
        %2541 = vmatpush1.msra.mxu0 %v2540
        %2542 = vmatprep.subr.mxu0 0.0
        %v2543 = vand.u32 %v1618, 4294901760
        %v2544 = vsub.f32 %v1618, %v2543
        %v2545 = vand.u32 %v2544, 4294901760
        %2546 = vmatpush1.msra.mxu0 %v2545
        %2547 = vmatprep.subr.mxu0 0.0
        %v2548 = vand.u32 %v1619, 4294901760
        %v2549 = vsub.f32 %v1619, %v2548
        %v2550 = vand.u32 %v2549, 4294901760
        %2551 = vmatpush1.msra.mxu0 %v2550
        %2552 = vmatprep.subr.mxu0 0.0
        %v2553 = vand.u32 %v1620, 4294901760
        %v2554 = vsub.f32 %v1620, %v2553
        %v2555 = vand.u32 %v2554, 4294901760
        %2556 = vmatpush1.msra.mxu0 %v2555
        %2557 = vmatprep.subr.mxu0 0.0
        %v2558 = vand.u32 %v1621, 4294901760
        %v2559 = vsub.f32 %v1621, %v2558
        %v2560 = vand.u32 %v2559, 4294901760
        %2561 = vmatpush1.msra.mxu0 %v2560
        %2562 = vmatprep.subr.mxu0 0.0
        %v2563 = vand.u32 %v1622, 4294901760
        %v2564 = vsub.f32 %v1622, %v2563
        %v2565 = vand.u32 %v2564, 4294901760
        %2566 = vmatpush1.msra.mxu0 %v2565
        %2567 = vmatprep.subr.mxu0 0.0
        %v2568 = vand.u32 %v1623, 4294901760
        %v2569 = vsub.f32 %v1623, %v2568
        %v2570 = vand.u32 %v2569, 4294901760
        %2571 = vmatpush1.msra.mxu0 %v2570
        %2572 = vmatprep.subr.mxu0 0.0
        %v2573 = vand.u32 %v1624, 4294901760
        %v2574 = vsub.f32 %v1624, %v2573
        %v2575 = vand.u32 %v2574, 4294901760
        %2576 = vmatpush1.msra.mxu0 %v2575
        %2577 = vmatprep.subr.mxu0 0.0
        %v2578 = vand.u32 %v1625, 4294901760
        %v2579 = vsub.f32 %v1625, %v2578
        %v2580 = vand.u32 %v2579, 4294901760
        %2581 = vmatpush1.msra.mxu0 %v2580
        %2582 = vmatprep.subr.mxu0 0.0
        %v2583 = vand.u32 %v1626, 4294901760
        %v2584 = vsub.f32 %v1626, %v2583
        %v2585 = vand.u32 %v2584, 4294901760
        %2586 = vmatpush1.msra.mxu0 %v2585
        %2587 = vmatprep.subr.mxu0 0.0
        %v2588 = vand.u32 %v1627, 4294901760
        %v2589 = vsub.f32 %v1627, %v2588
        %v2590 = vand.u32 %v2589, 4294901760
        %2591 = vmatpush1.msra.mxu0 %v2590
        %2592 = vmatprep.subr.mxu0 0.0
        %v2593 = vand.u32 %v1628, 4294901760
        %v2594 = vsub.f32 %v1628, %v2593
        %v2595 = vand.u32 %v2594, 4294901760
        %2596 = vmatpush1.msra.mxu0 %v2595
        %2597 = vmatprep.subr.mxu0 0.0
        %v2598 = vand.u32 %v1629, 4294901760
        %v2599 = vsub.f32 %v1629, %v2598
        %v2600 = vand.u32 %v2599, 4294901760
        %2601 = vmatpush1.msra.mxu0 %v2600
        %2602 = vmatprep.subr.mxu0 0.0
        %v2603 = vand.u32 %v1630, 4294901760
        %v2604 = vsub.f32 %v1630, %v2603
        %v2605 = vand.u32 %v2604, 4294901760
        %2606 = vmatpush1.msra.mxu0 %v2605
        %2607 = vmatprep.subr.mxu0 0.0
        %v2608 = vand.u32 %v1631, 4294901760
        %v2609 = vsub.f32 %v1631, %v2608
        %v2610 = vand.u32 %v2609, 4294901760
        %2611 = vmatpush1.msra.mxu0 %v2610
        %2612 = vmatprep.subr.mxu0 0.0
        %2613 = vmatpush1.msra.mxu0 0.0
        %2614 = vmatprep.subr.mxu0 0.0
        %2615 = vmatpush1.msra.mxu0 0.0
        %2616 = vmatprep.subr.mxu0 0.0
        %2617 = vmatpush1.msra.mxu0 0.0
        %2618 = vmatprep.subr.mxu0 0.0
        %2619 = vmatpush1.msra.mxu0 0.0
        %2620 = vmatprep.subr.mxu0 0.0
        %2621 = vmatpush1.msra.mxu0 0.0
        %2622 = vmatprep.subr.mxu0 0.0
        %2623 = vmatpush1.msra.mxu0 0.0
        %2624 = vmatprep.subr.mxu0 0.0
        %2625 = vmatpush1.msra.mxu0 0.0
        %2626 = vmatprep.subr.mxu0 0.0
        %2627 = vmatpush1.msra.mxu0 0.0
        %2628 = vmatprep.subr.mxu0 0.0
        %2629 = vmatpush1.msra.mxu0 0.0
        %2630 = vmatprep.subr.mxu0 0.0
        %2631 = vmatpush1.msra.mxu0 0.0
        %2632 = vmatprep.subr.mxu0 0.0
        %2633 = vmatpush1.msra.mxu0 0.0
        %2634 = vmatprep.subr.mxu0 0.0
        %2635 = vmatpush1.msra.mxu0 0.0
        %2636 = vmatprep.subr.mxu0 0.0
        %2637 = vmatpush1.msra.mxu0 0.0
        %2638 = vmatprep.subr.mxu0 0.0
        %2639 = vmatpush1.msra.mxu0 0.0
        %2640 = vmatprep.subr.mxu0 0.0
        %2641 = vmatpush1.msra.mxu0 0.0
        %2642 = vmatprep.subr.mxu0 0.0
        %2643 = vmatpush1.msra.mxu0 0.0
        %2644 = vmatprep.mubr.f32.mxu0 0.0
        %v2645 = vand.u32 %v1600, 4294901760
        %2646 = vmatmul.mubr.f32.gmra.mrb[0].mxu0 %v2645
        %v2647 = vpop.f32.mrb[0].mxu0
        %v2648 = vadd.f32 %v2409, %v2647
        %v2649 = vpop.f32.mrb[0].mxu0
        %2650 = vmatprep.mubr.f32.mxu0 0.0
        %v2651 = vand.u32 %v1601, 4294901760
        %2652 = vmatmul.mubr.f32.gmra.mrb[0].mxu0 %v2651
        %v2653 = vpop.f32.mrb[0].mxu0
        %v2654 = vadd.f32 %v2417, %v2653
        %v2655 = vpop.f32.mrb[0].mxu0
        %2656 = vmatprep.mubr.f32.mxu0 0.0
        %v2657 = vand.u32 %v1602, 4294901760
        %2658 = vmatmul.mubr.f32.gmra.mrb[0].mxu0 %v2657
        %v2659 = vpop.f32.mrb[0].mxu0
        %v2660 = vadd.f32 %v2425, %v2659
        %v2661 = vpop.f32.mrb[0].mxu0
        %2662 = vmatprep.mubr.f32.mxu0 0.0
        %v2663 = vand.u32 %v1603, 4294901760
        %2664 = vmatmul.mubr.f32.gmra.mrb[0].mxu0 %v2663
        %v2665 = vpop.f32.mrb[0].mxu0
        %v2666 = vadd.f32 %v2433, %v2665
        %v2667 = vpop.f32.mrb[0].mxu0
        %2668 = vmatprep.mubr.f32.mxu0 0.0
        %v2669 = vand.u32 %v1604, 4294901760
        %2670 = vmatmul.mubr.f32.gmra.mrb[0].mxu0 %v2669
        %v2671 = vpop.f32.mrb[0].mxu0
        %v2672 = vadd.f32 %v2441, %v2671
        %v2673 = vpop.f32.mrb[0].mxu0
        %2674 = vmatprep.mubr.f32.mxu0 0.0
        %v2675 = vand.u32 %v1605, 4294901760
        %2676 = vmatmul.mubr.f32.gmra.mrb[0].mxu0 %v2675
        %v2677 = vpop.f32.mrb[0].mxu0
        %v2678 = vadd.f32 %v2449, %v2677
        %v2679 = vpop.f32.mrb[0].mxu0
        %2680 = vmatprep.mubr.f32.mxu0 0.0
        %v2681 = vand.u32 %v1606, 4294901760
        %2682 = vmatmul.mubr.f32.gmra.mrb[0].mxu0 %v2681
        %v2683 = vpop.f32.mrb[0].mxu0
        %v2684 = vadd.f32 %v2457, %v2683
        %v2685 = vpop.f32.mrb[0].mxu0
        %2686 = vmatprep.mubr.f32.mxu0 0.0
        %v2687 = vand.u32 %v1607, 4294901760
        %2688 = vmatmul.mubr.f32.gmra.mrb[0].mxu0 %v2687
        %v2689 = vpop.f32.mrb[0].mxu0
        %v2690 = vadd.f32 %v2465, %v2689
        %v2691 = vpop.f32.mrb[0].mxu0
        %2692 = vmatprep.mubr.f32.mxu0 0.0
        %v2693 = vand.u32 %v1608, 4294901760
        %2694 = vmatmul.mubr.f32.gmra.mrb[0].mxu0 %v2693
        %v2695 = vpop.f32.mrb[0].mxu0
        %v2696 = vadd.f32 %v2473, %v2695
        %v2697 = vpop.f32.mrb[0].mxu0
        %2698 = vmatprep.mubr.f32.mxu0 0.0
        %v2699 = vand.u32 %v1609, 4294901760
        %2700 = vmatmul.mubr.f32.gmra.mrb[0].mxu0 %v2699
        %v2701 = vpop.f32.mrb[0].mxu0
        %v2702 = vadd.f32 %v2481, %v2701
        %v2703 = vpop.f32.mrb[0].mxu0
        %2704 = vmatprep.mubr.f32.mxu0 0.0
        %v2705 = vand.u32 %v1610, 4294901760
        %2706 = vmatmul.mubr.f32.gmra.mrb[0].mxu0 %v2705
        %v2707 = vpop.f32.mrb[0].mxu0
        %v2708 = vadd.f32 %v2489, %v2707
        %v2709 = vpop.f32.mrb[0].mxu0
        %2710 = vmatprep.mubr.f32.mxu0 0.0
        %v2711 = vand.u32 %v1611, 4294901760
        %2712 = vmatmul.mubr.f32.gmra.mrb[0].mxu0 %v2711
        %v2713 = vpop.f32.mrb[0].mxu0
        %v2714 = vadd.f32 %v2497, %v2713
        %v2715 = vpop.f32.mrb[0].mxu0
        %2716 = vmatprep.mubr.f32.mxu0 0.0
        %v2717 = vand.u32 %v1612, 4294901760
        %2718 = vmatmul.mubr.f32.gmra.mrb[0].mxu0 %v2717
        %v2719 = vpop.f32.mrb[0].mxu0
        %v2720 = vadd.f32 %v2505, %v2719
        %v2721 = vpop.f32.mrb[0].mxu0
        %2722 = vmatprep.mubr.f32.mxu0 0.0
        %v2723 = vand.u32 %v1613, 4294901760
        %2724 = vmatmul.mubr.f32.gmra.mrb[0].mxu0 %v2723
        %v2725 = vpop.f32.mrb[0].mxu0
        %v2726 = vadd.f32 %v2513, %v2725
        %v2727 = vpop.f32.mrb[0].mxu0
        %2728 = vmatprep.mubr.f32.mxu0 0.0
        %v2729 = vand.u32 %v1614, 4294901760
        %2730 = vmatmul.mubr.f32.gmra.mrb[0].mxu0 %v2729
        %v2731 = vpop.f32.mrb[0].mxu0
        %v2732 = vadd.f32 %v2521, %v2731
        %v2733 = vpop.f32.mrb[0].mxu0
        %2734 = vmatprep.mubr.f32.mxu0 0.0
        %v2735 = vand.u32 %v1615, 4294901760
        %2736 = vmatmul.mubr.f32.gmra.mrb[0].mxu0 %v2735
        %v2737 = vpop.f32.mrb[0].mxu0
        %v2738 = vadd.f32 %v2529, %v2737
        %v2739 = vpop.f32.mrb[0].mxu0
        %2740 = vdwg.mxu0
        %2741 = vmatprep.subr.mxu0 0.0
        %v2742 = vand.u32 %v1616, 4294901760
        %2743 = vmatpush1.msra.mxu0 %v2742
        %2744 = vmatprep.subr.mxu0 0.0
        %v2745 = vand.u32 %v1617, 4294901760
        %2746 = vmatpush1.msra.mxu0 %v2745
        %2747 = vmatprep.subr.mxu0 0.0
        %v2748 = vand.u32 %v1618, 4294901760
        %2749 = vmatpush1.msra.mxu0 %v2748
        %2750 = vmatprep.subr.mxu0 0.0
        %v2751 = vand.u32 %v1619, 4294901760
        %2752 = vmatpush1.msra.mxu0 %v2751
        %2753 = vmatprep.subr.mxu0 0.0
        %v2754 = vand.u32 %v1620, 4294901760
        %2755 = vmatpush1.msra.mxu0 %v2754
        %2756 = vmatprep.subr.mxu0 0.0
        %v2757 = vand.u32 %v1621, 4294901760
        %2758 = vmatpush1.msra.mxu0 %v2757
        %2759 = vmatprep.subr.mxu0 0.0
        %v2760 = vand.u32 %v1622, 4294901760
        %2761 = vmatpush1.msra.mxu0 %v2760
        %2762 = vmatprep.subr.mxu0 0.0
        %v2763 = vand.u32 %v1623, 4294901760
        %2764 = vmatpush1.msra.mxu0 %v2763
        %2765 = vmatprep.subr.mxu0 0.0
        %v2766 = vand.u32 %v1624, 4294901760
        %2767 = vmatpush1.msra.mxu0 %v2766
        %2768 = vmatprep.subr.mxu0 0.0
        %v2769 = vand.u32 %v1625, 4294901760
        %2770 = vmatpush1.msra.mxu0 %v2769
        %2771 = vmatprep.subr.mxu0 0.0
        %v2772 = vand.u32 %v1626, 4294901760
        %2773 = vmatpush1.msra.mxu0 %v2772
        %2774 = vmatprep.subr.mxu0 0.0
        %v2775 = vand.u32 %v1627, 4294901760
        %2776 = vmatpush1.msra.mxu0 %v2775
        %2777 = vmatprep.subr.mxu0 0.0
        %v2778 = vand.u32 %v1628, 4294901760
        %2779 = vmatpush1.msra.mxu0 %v2778
        %2780 = vmatprep.subr.mxu0 0.0
        %v2781 = vand.u32 %v1629, 4294901760
        %2782 = vmatpush1.msra.mxu0 %v2781
        %2783 = vmatprep.subr.mxu0 0.0
        %v2784 = vand.u32 %v1630, 4294901760
        %2785 = vmatpush1.msra.mxu0 %v2784
        %2786 = vmatprep.subr.mxu0 0.0
        %v2787 = vand.u32 %v1631, 4294901760
        %2788 = vmatpush1.msra.mxu0 %v2787
        %2789 = vmatprep.subr.mxu0 0.0
        %2790 = vmatpush1.msra.mxu0 0.0
        %2791 = vmatprep.subr.mxu0 0.0
        %2792 = vmatpush1.msra.mxu0 0.0
        %2793 = vmatprep.subr.mxu0 0.0
        %2794 = vmatpush1.msra.mxu0 0.0
        %2795 = vmatprep.subr.mxu0 0.0
        %2796 = vmatpush1.msra.mxu0 0.0
        %2797 = vmatprep.subr.mxu0 0.0
        %2798 = vmatpush1.msra.mxu0 0.0
        %2799 = vmatprep.subr.mxu0 0.0
        %2800 = vmatpush1.msra.mxu0 0.0
        %2801 = vmatprep.subr.mxu0 0.0
        %2802 = vmatpush1.msra.mxu0 0.0
        %2803 = vmatprep.subr.mxu0 0.0
        %2804 = vmatpush1.msra.mxu0 0.0
        %2805 = vmatprep.subr.mxu0 0.0
        %2806 = vmatpush1.msra.mxu0 0.0
        %2807 = vmatprep.subr.mxu0 0.0
        %2808 = vmatpush1.msra.mxu0 0.0
        %2809 = vmatprep.subr.mxu0 0.0
        %2810 = vmatpush1.msra.mxu0 0.0
        %2811 = vmatprep.subr.mxu0 0.0
        %2812 = vmatpush1.msra.mxu0 0.0
        %2813 = vmatprep.subr.mxu0 0.0
        %2814 = vmatpush1.msra.mxu0 0.0
        %2815 = vmatprep.subr.mxu0 0.0
        %2816 = vmatpush1.msra.mxu0 0.0
        %2817 = vmatprep.subr.mxu0 0.0
        %2818 = vmatpush1.msra.mxu0 0.0
        %2819 = vmatprep.subr.mxu0 0.0
        %2820 = vmatpush1.msra.mxu0 0.0
        %2821 = vmatprep.mubr.f32.mxu0 0.0
        %v2822 = vand.u32 %v1600, 4294901760
        %2823 = vmatmul.mubr.f32.gmra.mrb[0].mxu0 %v2822
        %v2824 = vpop.f32.mrb[0].mxu0
        %v2825 = vadd.f32 %v2648, %v2824
        %v2826 = vpop.f32.mrb[0].mxu0
        %2827 = vmatprep.mubr.f32.mxu0 0.0
        %v2828 = vand.u32 %v1601, 4294901760
        %2829 = vmatmul.mubr.f32.gmra.mrb[0].mxu0 %v2828
        %v2830 = vpop.f32.mrb[0].mxu0
        %v2831 = vadd.f32 %v2654, %v2830
        %v2832 = vpop.f32.mrb[0].mxu0
        %2833 = vmatprep.mubr.f32.mxu0 0.0
        %v2834 = vand.u32 %v1602, 4294901760
        %2835 = vmatmul.mubr.f32.gmra.mrb[0].mxu0 %v2834
        %v2836 = vpop.f32.mrb[0].mxu0
        %v2837 = vadd.f32 %v2660, %v2836
        %v2838 = vpop.f32.mrb[0].mxu0
        %2839 = vmatprep.mubr.f32.mxu0 0.0
        %v2840 = vand.u32 %v1603, 4294901760
        %2841 = vmatmul.mubr.f32.gmra.mrb[0].mxu0 %v2840
        %v2842 = vpop.f32.mrb[0].mxu0
        %v2843 = vadd.f32 %v2666, %v2842
        %v2844 = vpop.f32.mrb[0].mxu0
        %2845 = vmatprep.mubr.f32.mxu0 0.0
        %v2846 = vand.u32 %v1604, 4294901760
        %2847 = vmatmul.mubr.f32.gmra.mrb[0].mxu0 %v2846
        %v2848 = vpop.f32.mrb[0].mxu0
        %v2849 = vadd.f32 %v2672, %v2848
        %v2850 = vpop.f32.mrb[0].mxu0
        %2851 = vmatprep.mubr.f32.mxu0 0.0
        %v2852 = vand.u32 %v1605, 4294901760
        %2853 = vmatmul.mubr.f32.gmra.mrb[0].mxu0 %v2852
        %v2854 = vpop.f32.mrb[0].mxu0
        %v2855 = vadd.f32 %v2678, %v2854
        %v2856 = vpop.f32.mrb[0].mxu0
        %2857 = vmatprep.mubr.f32.mxu0 0.0
        %v2858 = vand.u32 %v1606, 4294901760
        %2859 = vmatmul.mubr.f32.gmra.mrb[0].mxu0 %v2858
        %v2860 = vpop.f32.mrb[0].mxu0
        %v2861 = vadd.f32 %v2684, %v2860
        %v2862 = vpop.f32.mrb[0].mxu0
        %2863 = vmatprep.mubr.f32.mxu0 0.0
        %v2864 = vand.u32 %v1607, 4294901760
        %2865 = vmatmul.mubr.f32.gmra.mrb[0].mxu0 %v2864
        %v2866 = vpop.f32.mrb[0].mxu0
        %v2867 = vadd.f32 %v2690, %v2866
        %v2868 = vpop.f32.mrb[0].mxu0
        %2869 = vmatprep.mubr.f32.mxu0 0.0
        %v2870 = vand.u32 %v1608, 4294901760
        %2871 = vmatmul.mubr.f32.gmra.mrb[0].mxu0 %v2870
        %v2872 = vpop.f32.mrb[0].mxu0
        %v2873 = vadd.f32 %v2696, %v2872
        %v2874 = vpop.f32.mrb[0].mxu0
        %2875 = vmatprep.mubr.f32.mxu0 0.0
        %v2876 = vand.u32 %v1609, 4294901760
        %2877 = vmatmul.mubr.f32.gmra.mrb[0].mxu0 %v2876
        %v2878 = vpop.f32.mrb[0].mxu0
        %v2879 = vadd.f32 %v2702, %v2878
        %v2880 = vpop.f32.mrb[0].mxu0
        %2881 = vmatprep.mubr.f32.mxu0 0.0
        %v2882 = vand.u32 %v1610, 4294901760
        %2883 = vmatmul.mubr.f32.gmra.mrb[0].mxu0 %v2882
        %v2884 = vpop.f32.mrb[0].mxu0
        %v2885 = vadd.f32 %v2708, %v2884
        %v2886 = vpop.f32.mrb[0].mxu0
        %2887 = vmatprep.mubr.f32.mxu0 0.0
        %v2888 = vand.u32 %v1611, 4294901760
        %2889 = vmatmul.mubr.f32.gmra.mrb[0].mxu0 %v2888
        %v2890 = vpop.f32.mrb[0].mxu0
        %v2891 = vadd.f32 %v2714, %v2890
        %v2892 = vpop.f32.mrb[0].mxu0
        %2893 = vmatprep.mubr.f32.mxu0 0.0
        %v2894 = vand.u32 %v1612, 4294901760
        %2895 = vmatmul.mubr.f32.gmra.mrb[0].mxu0 %v2894
        %v2896 = vpop.f32.mrb[0].mxu0
        %v2897 = vadd.f32 %v2720, %v2896
        %v2898 = vpop.f32.mrb[0].mxu0
        %2899 = vmatprep.mubr.f32.mxu0 0.0
        %v2900 = vand.u32 %v1613, 4294901760
        %2901 = vmatmul.mubr.f32.gmra.mrb[0].mxu0 %v2900
        %v2902 = vpop.f32.mrb[0].mxu0
        %v2903 = vadd.f32 %v2726, %v2902
        %v2904 = vpop.f32.mrb[0].mxu0
        %2905 = vmatprep.mubr.f32.mxu0 0.0
        %v2906 = vand.u32 %v1614, 4294901760
        %2907 = vmatmul.mubr.f32.gmra.mrb[0].mxu0 %v2906
        %v2908 = vpop.f32.mrb[0].mxu0
        %v2909 = vadd.f32 %v2732, %v2908
        %v2910 = vpop.f32.mrb[0].mxu0
        %2911 = vmatprep.mubr.f32.mxu0 0.0
        %v2912 = vand.u32 %v1615, 4294901760
        %2913 = vmatmul.mubr.f32.gmra.mrb[0].mxu0 %v2912
        %v2914 = vpop.f32.mrb[0].mxu0
        %v2915 = vadd.f32 %v2738, %v2914
        %v2916 = vpop.f32.mrb[0].mxu0
        %2917 = vdwg.mxu0
        %v2918 = vld [vmem:[%s3 + $0x1] sm:$0x1]
        %v2919 = vlaneseq
        %v2920 = vshrl.u32 %v2919, 7
        %v2921 = vsub.s32 0, %v2920
        %v2922 = vrot.slane %v2918, %v2921
        %2923 = vmatprep.subr.mxu0 0.0
        %v2924 = vand.u32 %v2825, 4294901760
        %2925 = vmatpush1.msra.mxu0 %v2924
        %2926 = vmatprep.subr.mxu0 0.0
        %v2927 = vand.u32 %v2831, 4294901760
        %2928 = vmatpush1.msra.mxu0 %v2927
        %2929 = vmatprep.subr.mxu0 0.0
        %v2930 = vand.u32 %v2837, 4294901760
        %2931 = vmatpush1.msra.mxu0 %v2930
        %2932 = vmatprep.subr.mxu0 0.0
        %v2933 = vand.u32 %v2843, 4294901760
        %2934 = vmatpush1.msra.mxu0 %v2933
        %2935 = vmatprep.subr.mxu0 0.0
        %v2936 = vand.u32 %v2849, 4294901760
        %2937 = vmatpush1.msra.mxu0 %v2936
        %2938 = vmatprep.subr.mxu0 0.0
        %v2939 = vand.u32 %v2855, 4294901760
        %2940 = vmatpush1.msra.mxu0 %v2939
        %2941 = vmatprep.subr.mxu0 0.0
        %v2942 = vand.u32 %v2861, 4294901760
        %2943 = vmatpush1.msra.mxu0 %v2942
        %2944 = vmatprep.subr.mxu0 0.0
        %v2945 = vand.u32 %v2867, 4294901760
        %2946 = vmatpush1.msra.mxu0 %v2945
        %2947 = vmatprep.subr.mxu0 0.0
        %v2948 = vand.u32 %v2873, 4294901760
        %2949 = vmatpush1.msra.mxu0 %v2948
        %2950 = vmatprep.subr.mxu0 0.0
        %v2951 = vand.u32 %v2879, 4294901760
        %2952 = vmatpush1.msra.mxu0 %v2951
        %2953 = vmatprep.subr.mxu0 0.0
        %v2954 = vand.u32 %v2885, 4294901760
        %2955 = vmatpush1.msra.mxu0 %v2954
        %2956 = vmatprep.subr.mxu0 0.0
        %v2957 = vand.u32 %v2891, 4294901760
        %2958 = vmatpush1.msra.mxu0 %v2957
        %2959 = vmatprep.subr.mxu0 0.0
        %v2960 = vand.u32 %v2897, 4294901760
        %2961 = vmatpush1.msra.mxu0 %v2960
        %2962 = vmatprep.subr.mxu0 0.0
        %v2963 = vand.u32 %v2903, 4294901760
        %2964 = vmatpush1.msra.mxu0 %v2963
        %2965 = vmatprep.subr.mxu0 0.0
        %v2966 = vand.u32 %v2909, 4294901760
        %2967 = vmatpush1.msra.mxu0 %v2966
        %2968 = vmatprep.subr.mxu0 0.0
        %v2969 = vand.u32 %v2915, 4294901760
        %2970 = vmatpush1.msra.mxu0 %v2969
        %2971 = vmatprep.subr.mxu0 0.0
        %2972 = vmatpush1.msra.mxu0 0.0
        %2973 = vmatprep.subr.mxu0 0.0
        %2974 = vmatpush1.msra.mxu0 0.0
        %2975 = vmatprep.subr.mxu0 0.0
        %2976 = vmatpush1.msra.mxu0 0.0
        %2977 = vmatprep.subr.mxu0 0.0
        %2978 = vmatpush1.msra.mxu0 0.0
        %2979 = vmatprep.subr.mxu0 0.0
        %2980 = vmatpush1.msra.mxu0 0.0
        %2981 = vmatprep.subr.mxu0 0.0
        %2982 = vmatpush1.msra.mxu0 0.0
        %2983 = vmatprep.subr.mxu0 0.0
        %2984 = vmatpush1.msra.mxu0 0.0
        %2985 = vmatprep.subr.mxu0 0.0
        %2986 = vmatpush1.msra.mxu0 0.0
        %2987 = vmatprep.subr.mxu0 0.0
        %2988 = vmatpush1.msra.mxu0 0.0
        %2989 = vmatprep.subr.mxu0 0.0
        %2990 = vmatpush1.msra.mxu0 0.0
        %2991 = vmatprep.subr.mxu0 0.0
        %2992 = vmatpush1.msra.mxu0 0.0
        %2993 = vmatprep.subr.mxu0 0.0
        %2994 = vmatpush1.msra.mxu0 0.0
        %2995 = vmatprep.subr.mxu0 0.0
        %2996 = vmatpush1.msra.mxu0 0.0
        %2997 = vmatprep.subr.mxu0 0.0
        %2998 = vmatpush1.msra.mxu0 0.0
        %2999 = vmatprep.subr.mxu0 0.0
        %3000 = vmatpush1.msra.mxu0 0.0
        %3001 = vmatprep.subr.mxu0 0.0
        %3002 = vmatpush1.msra.mxu0 0.0
        %3003 = vmatprep.mubr.f32.mxu0 0.0
        %v3004 = vand.u32 %v245, 4294901760
        %v3005 = vsub.f32 %v245, %v3004
        %v3006 = vand.u32 %v3005, 4294901760
        %v3007 = vsub.f32 %v3005, %v3006
        %v3008 = vand.u32 %v3007, 4294901760
        %3009 = vmatmul.mubr.f32.gmra.mrb[0].mxu0 %v3008
        %v3010 = vpop.f32.mrb[0].mxu0
        %v3011 = vadd.f32 %v2922, %v3010
        %v3012 = vpop.f32.mrb[0].mxu0
        %3013 = vmatprep.mubr.f32.mxu0 0.0
        %v3014 = vand.u32 %v246, 4294901760
        %v3015 = vsub.f32 %v246, %v3014
        %v3016 = vand.u32 %v3015, 4294901760
        %v3017 = vsub.f32 %v3015, %v3016
        %v3018 = vand.u32 %v3017, 4294901760
        %3019 = vmatmul.mubr.f32.gmra.mrb[0].mxu0 %v3018
        %v3020 = vpop.f32.mrb[0].mxu0
        %v3021 = vadd.f32 %v2922, %v3020
        %v3022 = vpop.f32.mrb[0].mxu0
        %3023 = vmatprep.mubr.f32.mxu0 0.0
        %v3024 = vand.u32 %v247, 4294901760
        %v3025 = vsub.f32 %v247, %v3024
        %v3026 = vand.u32 %v3025, 4294901760
        %v3027 = vsub.f32 %v3025, %v3026
        %v3028 = vand.u32 %v3027, 4294901760
        %3029 = vmatmul.mubr.f32.gmra.mrb[0].mxu0 %v3028
        %v3030 = vpop.f32.mrb[0].mxu0
        %v3031 = vadd.f32 %v2922, %v3030
        %v3032 = vpop.f32.mrb[0].mxu0
        %3033 = vmatprep.mubr.f32.mxu0 0.0
        %v3034 = vand.u32 %v248, 4294901760
        %v3035 = vsub.f32 %v248, %v3034
        %v3036 = vand.u32 %v3035, 4294901760
        %v3037 = vsub.f32 %v3035, %v3036
        %v3038 = vand.u32 %v3037, 4294901760
        %3039 = vmatmul.mubr.f32.gmra.mrb[0].mxu0 %v3038
        %v3040 = vpop.f32.mrb[0].mxu0
        %v3041 = vadd.f32 %v2922, %v3040
        %v3042 = vpop.f32.mrb[0].mxu0
        %3043 = vmatprep.mubr.f32.mxu0 0.0
        %v3044 = vand.u32 %v249, 4294901760
        %v3045 = vsub.f32 %v249, %v3044
        %v3046 = vand.u32 %v3045, 4294901760
        %v3047 = vsub.f32 %v3045, %v3046
        %v3048 = vand.u32 %v3047, 4294901760
        %3049 = vmatmul.mubr.f32.gmra.mrb[0].mxu0 %v3048
        %v3050 = vpop.f32.mrb[0].mxu0
        %v3051 = vadd.f32 %v2922, %v3050
        %v3052 = vpop.f32.mrb[0].mxu0
        %3053 = vmatprep.mubr.f32.mxu0 0.0
        %v3054 = vand.u32 %v250, 4294901760
        %v3055 = vsub.f32 %v250, %v3054
        %v3056 = vand.u32 %v3055, 4294901760
        %v3057 = vsub.f32 %v3055, %v3056
        %v3058 = vand.u32 %v3057, 4294901760
        %3059 = vmatmul.mubr.f32.gmra.mrb[0].mxu0 %v3058
        %v3060 = vpop.f32.mrb[0].mxu0
        %v3061 = vadd.f32 %v2922, %v3060
        %v3062 = vpop.f32.mrb[0].mxu0
        %3063 = vmatprep.mubr.f32.mxu0 0.0
        %v3064 = vand.u32 %v251, 4294901760
        %v3065 = vsub.f32 %v251, %v3064
        %v3066 = vand.u32 %v3065, 4294901760
        %v3067 = vsub.f32 %v3065, %v3066
        %v3068 = vand.u32 %v3067, 4294901760
        %3069 = vmatmul.mubr.f32.gmra.mrb[0].mxu0 %v3068
        %v3070 = vpop.f32.mrb[0].mxu0
        %v3071 = vadd.f32 %v2922, %v3070
        %v3072 = vpop.f32.mrb[0].mxu0
        %3073 = vmatprep.mubr.f32.mxu0 0.0
        %v3074 = vand.u32 %v252, 4294901760
        %v3075 = vsub.f32 %v252, %v3074
        %v3076 = vand.u32 %v3075, 4294901760
        %v3077 = vsub.f32 %v3075, %v3076
        %v3078 = vand.u32 %v3077, 4294901760
        %3079 = vmatmul.mubr.f32.gmra.mrb[0].mxu0 %v3078
        %v3080 = vpop.f32.mrb[0].mxu0
        %v3081 = vadd.f32 %v2922, %v3080
        %v3082 = vpop.f32.mrb[0].mxu0
        %3083 = vmatprep.mubr.f32.mxu0 0.0
        %v3084 = vand.u32 %v253, 4294901760
        %v3085 = vsub.f32 %v253, %v3084
        %v3086 = vand.u32 %v3085, 4294901760
        %v3087 = vsub.f32 %v3085, %v3086
        %v3088 = vand.u32 %v3087, 4294901760
        %3089 = vmatmul.mubr.f32.gmra.mrb[0].mxu0 %v3088
        %v3090 = vpop.f32.mrb[0].mxu0
        %v3091 = vadd.f32 %v2922, %v3090
        %v3092 = vpop.f32.mrb[0].mxu0
        %3093 = vmatprep.mubr.f32.mxu0 0.0
        %v3094 = vand.u32 %v254, 4294901760
        %v3095 = vsub.f32 %v254, %v3094
        %v3096 = vand.u32 %v3095, 4294901760
        %v3097 = vsub.f32 %v3095, %v3096
        %v3098 = vand.u32 %v3097, 4294901760
        %3099 = vmatmul.mubr.f32.gmra.mrb[0].mxu0 %v3098
        %v3100 = vpop.f32.mrb[0].mxu0
        %v3101 = vadd.f32 %v2922, %v3100
        %v3102 = vpop.f32.mrb[0].mxu0
        %3103 = vmatprep.mubr.f32.mxu0 0.0
        %v3104 = vand.u32 %v255, 4294901760
        %v3105 = vsub.f32 %v255, %v3104
        %v3106 = vand.u32 %v3105, 4294901760
        %v3107 = vsub.f32 %v3105, %v3106
        %v3108 = vand.u32 %v3107, 4294901760
        %3109 = vmatmul.mubr.f32.gmra.mrb[0].mxu0 %v3108
        %v3110 = vpop.f32.mrb[0].mxu0
        %v3111 = vadd.f32 %v2922, %v3110
        %v3112 = vpop.f32.mrb[0].mxu0
        %3113 = vmatprep.mubr.f32.mxu0 0.0
        %v3114 = vand.u32 %v256, 4294901760
        %v3115 = vsub.f32 %v256, %v3114
        %v3116 = vand.u32 %v3115, 4294901760
        %v3117 = vsub.f32 %v3115, %v3116
        %v3118 = vand.u32 %v3117, 4294901760
        %3119 = vmatmul.mubr.f32.gmra.mrb[0].mxu0 %v3118
        %v3120 = vpop.f32.mrb[0].mxu0
        %v3121 = vadd.f32 %v2922, %v3120
        %v3122 = vpop.f32.mrb[0].mxu0
        %3123 = vmatprep.mubr.f32.mxu0 0.0
        %v3124 = vand.u32 %v257, 4294901760
        %v3125 = vsub.f32 %v257, %v3124
        %v3126 = vand.u32 %v3125, 4294901760
        %v3127 = vsub.f32 %v3125, %v3126
        %v3128 = vand.u32 %v3127, 4294901760
        %3129 = vmatmul.mubr.f32.gmra.mrb[0].mxu0 %v3128
        %v3130 = vpop.f32.mrb[0].mxu0
        %v3131 = vadd.f32 %v2922, %v3130
        %v3132 = vpop.f32.mrb[0].mxu0
        %3133 = vmatprep.mubr.f32.mxu0 0.0
        %v3134 = vand.u32 %v258, 4294901760
        %v3135 = vsub.f32 %v258, %v3134
        %v3136 = vand.u32 %v3135, 4294901760
        %v3137 = vsub.f32 %v3135, %v3136
        %v3138 = vand.u32 %v3137, 4294901760
        %3139 = vmatmul.mubr.f32.gmra.mrb[0].mxu0 %v3138
        %v3140 = vpop.f32.mrb[0].mxu0
        %v3141 = vadd.f32 %v2922, %v3140
        %v3142 = vpop.f32.mrb[0].mxu0
        %3143 = vmatprep.mubr.f32.mxu0 0.0
        %v3144 = vand.u32 %v259, 4294901760
        %v3145 = vsub.f32 %v259, %v3144
        %v3146 = vand.u32 %v3145, 4294901760
        %v3147 = vsub.f32 %v3145, %v3146
        %v3148 = vand.u32 %v3147, 4294901760
        %3149 = vmatmul.mubr.f32.gmra.mrb[0].mxu0 %v3148
        %v3150 = vpop.f32.mrb[0].mxu0
        %v3151 = vadd.f32 %v2922, %v3150
        %v3152 = vpop.f32.mrb[0].mxu0
        %3153 = vmatprep.mubr.f32.mxu0 0.0
        %v3154 = vand.u32 %v260, 4294901760
        %v3155 = vsub.f32 %v260, %v3154
        %v3156 = vand.u32 %v3155, 4294901760
        %v3157 = vsub.f32 %v3155, %v3156
        %v3158 = vand.u32 %v3157, 4294901760
        %3159 = vmatmul.mubr.f32.gmra.mrb[0].mxu0 %v3158
        %v3160 = vpop.f32.mrb[0].mxu0
        %v3161 = vadd.f32 %v2922, %v3160
        %v3162 = vpop.f32.mrb[0].mxu0
        %3163 = vdwg.mxu0
        %3164 = vmatprep.subr.mxu0 0.0
        %v3165 = vand.u32 %v2825, 4294901760
        %v3166 = vsub.f32 %v2825, %v3165
        %v3167 = vand.u32 %v3166, 4294901760
        %v3168 = vsub.f32 %v3166, %v3167
        %v3169 = vand.u32 %v3168, 4294901760
        %3170 = vmatpush1.msra.mxu0 %v3169
        %3171 = vmatprep.subr.mxu0 0.0
        %v3172 = vand.u32 %v2831, 4294901760
        %v3173 = vsub.f32 %v2831, %v3172
        %v3174 = vand.u32 %v3173, 4294901760
        %v3175 = vsub.f32 %v3173, %v3174
        %v3176 = vand.u32 %v3175, 4294901760
        %3177 = vmatpush1.msra.mxu0 %v3176
        %3178 = vmatprep.subr.mxu0 0.0
        %v3179 = vand.u32 %v2837, 4294901760
        %v3180 = vsub.f32 %v2837, %v3179
        %v3181 = vand.u32 %v3180, 4294901760
        %v3182 = vsub.f32 %v3180, %v3181
        %v3183 = vand.u32 %v3182, 4294901760
        %3184 = vmatpush1.msra.mxu0 %v3183
        %3185 = vmatprep.subr.mxu0 0.0
        %v3186 = vand.u32 %v2843, 4294901760
        %v3187 = vsub.f32 %v2843, %v3186
        %v3188 = vand.u32 %v3187, 4294901760
        %v3189 = vsub.f32 %v3187, %v3188
        %v3190 = vand.u32 %v3189, 4294901760
        %3191 = vmatpush1.msra.mxu0 %v3190
        %3192 = vmatprep.subr.mxu0 0.0
        %v3193 = vand.u32 %v2849, 4294901760
        %v3194 = vsub.f32 %v2849, %v3193
        %v3195 = vand.u32 %v3194, 4294901760
        %v3196 = vsub.f32 %v3194, %v3195
        %v3197 = vand.u32 %v3196, 4294901760
        %3198 = vmatpush1.msra.mxu0 %v3197
        %3199 = vmatprep.subr.mxu0 0.0
        %v3200 = vand.u32 %v2855, 4294901760
        %v3201 = vsub.f32 %v2855, %v3200
        %v3202 = vand.u32 %v3201, 4294901760
        %v3203 = vsub.f32 %v3201, %v3202
        %v3204 = vand.u32 %v3203, 4294901760
        %3205 = vmatpush1.msra.mxu0 %v3204
        %3206 = vmatprep.subr.mxu0 0.0
        %v3207 = vand.u32 %v2861, 4294901760
        %v3208 = vsub.f32 %v2861, %v3207
        %v3209 = vand.u32 %v3208, 4294901760
        %v3210 = vsub.f32 %v3208, %v3209
        %v3211 = vand.u32 %v3210, 4294901760
        %3212 = vmatpush1.msra.mxu0 %v3211
        %3213 = vmatprep.subr.mxu0 0.0
        %v3214 = vand.u32 %v2867, 4294901760
        %v3215 = vsub.f32 %v2867, %v3214
        %v3216 = vand.u32 %v3215, 4294901760
        %v3217 = vsub.f32 %v3215, %v3216
        %v3218 = vand.u32 %v3217, 4294901760
        %3219 = vmatpush1.msra.mxu0 %v3218
        %3220 = vmatprep.subr.mxu0 0.0
        %v3221 = vand.u32 %v2873, 4294901760
        %v3222 = vsub.f32 %v2873, %v3221
        %v3223 = vand.u32 %v3222, 4294901760
        %v3224 = vsub.f32 %v3222, %v3223
        %v3225 = vand.u32 %v3224, 4294901760
        %3226 = vmatpush1.msra.mxu0 %v3225
        %3227 = vmatprep.subr.mxu0 0.0
        %v3228 = vand.u32 %v2879, 4294901760
        %v3229 = vsub.f32 %v2879, %v3228
        %v3230 = vand.u32 %v3229, 4294901760
        %v3231 = vsub.f32 %v3229, %v3230
        %v3232 = vand.u32 %v3231, 4294901760
        %3233 = vmatpush1.msra.mxu0 %v3232
        %3234 = vmatprep.subr.mxu0 0.0
        %v3235 = vand.u32 %v2885, 4294901760
        %v3236 = vsub.f32 %v2885, %v3235
        %v3237 = vand.u32 %v3236, 4294901760
        %v3238 = vsub.f32 %v3236, %v3237
        %v3239 = vand.u32 %v3238, 4294901760
        %3240 = vmatpush1.msra.mxu0 %v3239
        %3241 = vmatprep.subr.mxu0 0.0
        %v3242 = vand.u32 %v2891, 4294901760
        %v3243 = vsub.f32 %v2891, %v3242
        %v3244 = vand.u32 %v3243, 4294901760
        %v3245 = vsub.f32 %v3243, %v3244
        %v3246 = vand.u32 %v3245, 4294901760
        %3247 = vmatpush1.msra.mxu0 %v3246
        %3248 = vmatprep.subr.mxu0 0.0
        %v3249 = vand.u32 %v2897, 4294901760
        %v3250 = vsub.f32 %v2897, %v3249
        %v3251 = vand.u32 %v3250, 4294901760
        %v3252 = vsub.f32 %v3250, %v3251
        %v3253 = vand.u32 %v3252, 4294901760
        %3254 = vmatpush1.msra.mxu0 %v3253
        %3255 = vmatprep.subr.mxu0 0.0
        %v3256 = vand.u32 %v2903, 4294901760
        %v3257 = vsub.f32 %v2903, %v3256
        %v3258 = vand.u32 %v3257, 4294901760
        %v3259 = vsub.f32 %v3257, %v3258
        %v3260 = vand.u32 %v3259, 4294901760
        %3261 = vmatpush1.msra.mxu0 %v3260
        %3262 = vmatprep.subr.mxu0 0.0
        %v3263 = vand.u32 %v2909, 4294901760
        %v3264 = vsub.f32 %v2909, %v3263
        %v3265 = vand.u32 %v3264, 4294901760
        %v3266 = vsub.f32 %v3264, %v3265
        %v3267 = vand.u32 %v3266, 4294901760
        %3268 = vmatpush1.msra.mxu0 %v3267
        %3269 = vmatprep.subr.mxu0 0.0
        %v3270 = vand.u32 %v2915, 4294901760
        %v3271 = vsub.f32 %v2915, %v3270
        %v3272 = vand.u32 %v3271, 4294901760
        %v3273 = vsub.f32 %v3271, %v3272
        %v3274 = vand.u32 %v3273, 4294901760
        %3275 = vmatpush1.msra.mxu0 %v3274
        %3276 = vmatprep.subr.mxu0 0.0
        %3277 = vmatpush1.msra.mxu0 0.0
        %3278 = vmatprep.subr.mxu0 0.0
        %3279 = vmatpush1.msra.mxu0 0.0
        %3280 = vmatprep.subr.mxu0 0.0
        %3281 = vmatpush1.msra.mxu0 0.0
        %3282 = vmatprep.subr.mxu0 0.0
        %3283 = vmatpush1.msra.mxu0 0.0
        %3284 = vmatprep.subr.mxu0 0.0
        %3285 = vmatpush1.msra.mxu0 0.0
        %3286 = vmatprep.subr.mxu0 0.0
        %3287 = vmatpush1.msra.mxu0 0.0
        %3288 = vmatprep.subr.mxu0 0.0
        %3289 = vmatpush1.msra.mxu0 0.0
        %3290 = vmatprep.subr.mxu0 0.0
        %3291 = vmatpush1.msra.mxu0 0.0
        %3292 = vmatprep.subr.mxu0 0.0
        %3293 = vmatpush1.msra.mxu0 0.0
        %3294 = vmatprep.subr.mxu0 0.0
        %3295 = vmatpush1.msra.mxu0 0.0
        %3296 = vmatprep.subr.mxu0 0.0
        %3297 = vmatpush1.msra.mxu0 0.0
        %3298 = vmatprep.subr.mxu0 0.0
        %3299 = vmatpush1.msra.mxu0 0.0
        %3300 = vmatprep.subr.mxu0 0.0
        %3301 = vmatpush1.msra.mxu0 0.0
        %3302 = vmatprep.subr.mxu0 0.0
        %3303 = vmatpush1.msra.mxu0 0.0
        %3304 = vmatprep.subr.mxu0 0.0
        %3305 = vmatpush1.msra.mxu0 0.0
        %3306 = vmatprep.subr.mxu0 0.0
        %3307 = vmatpush1.msra.mxu0 0.0
        %3308 = vmatprep.mubr.f32.mxu0 0.0
        %v3309 = vand.u32 %v245, 4294901760
        %3310 = vmatmul.mubr.f32.gmra.mrb[0].mxu0 %v3309
        %v3311 = vpop.f32.mrb[0].mxu0
        %v3312 = vadd.f32 %v3011, %v3311
        %v3313 = vpop.f32.mrb[0].mxu0
        %3314 = vmatprep.mubr.f32.mxu0 0.0
        %v3315 = vand.u32 %v246, 4294901760
        %3316 = vmatmul.mubr.f32.gmra.mrb[0].mxu0 %v3315
        %v3317 = vpop.f32.mrb[0].mxu0
        %v3318 = vadd.f32 %v3021, %v3317
        %v3319 = vpop.f32.mrb[0].mxu0
        %3320 = vmatprep.mubr.f32.mxu0 0.0
        %v3321 = vand.u32 %v247, 4294901760
        %3322 = vmatmul.mubr.f32.gmra.mrb[0].mxu0 %v3321
        %v3323 = vpop.f32.mrb[0].mxu0
        %v3324 = vadd.f32 %v3031, %v3323
        %v3325 = vpop.f32.mrb[0].mxu0
        %3326 = vmatprep.mubr.f32.mxu0 0.0
        %v3327 = vand.u32 %v248, 4294901760
        %3328 = vmatmul.mubr.f32.gmra.mrb[0].mxu0 %v3327
        %v3329 = vpop.f32.mrb[0].mxu0
        %v3330 = vadd.f32 %v3041, %v3329
        %v3331 = vpop.f32.mrb[0].mxu0
        %3332 = vmatprep.mubr.f32.mxu0 0.0
        %v3333 = vand.u32 %v249, 4294901760
        %3334 = vmatmul.mubr.f32.gmra.mrb[0].mxu0 %v3333
        %v3335 = vpop.f32.mrb[0].mxu0
        %v3336 = vadd.f32 %v3051, %v3335
        %v3337 = vpop.f32.mrb[0].mxu0
        %3338 = vmatprep.mubr.f32.mxu0 0.0
        %v3339 = vand.u32 %v250, 4294901760
        %3340 = vmatmul.mubr.f32.gmra.mrb[0].mxu0 %v3339
        %v3341 = vpop.f32.mrb[0].mxu0
        %v3342 = vadd.f32 %v3061, %v3341
        %v3343 = vpop.f32.mrb[0].mxu0
        %3344 = vmatprep.mubr.f32.mxu0 0.0
        %v3345 = vand.u32 %v251, 4294901760
        %3346 = vmatmul.mubr.f32.gmra.mrb[0].mxu0 %v3345
        %v3347 = vpop.f32.mrb[0].mxu0
        %v3348 = vadd.f32 %v3071, %v3347
        %v3349 = vpop.f32.mrb[0].mxu0
        %3350 = vmatprep.mubr.f32.mxu0 0.0
        %v3351 = vand.u32 %v252, 4294901760
        %3352 = vmatmul.mubr.f32.gmra.mrb[0].mxu0 %v3351
        %v3353 = vpop.f32.mrb[0].mxu0
        %v3354 = vadd.f32 %v3081, %v3353
        %v3355 = vpop.f32.mrb[0].mxu0
        %3356 = vmatprep.mubr.f32.mxu0 0.0
        %v3357 = vand.u32 %v253, 4294901760
        %3358 = vmatmul.mubr.f32.gmra.mrb[0].mxu0 %v3357
        %v3359 = vpop.f32.mrb[0].mxu0
        %v3360 = vadd.f32 %v3091, %v3359
        %v3361 = vpop.f32.mrb[0].mxu0
        %3362 = vmatprep.mubr.f32.mxu0 0.0
        %v3363 = vand.u32 %v254, 4294901760
        %3364 = vmatmul.mubr.f32.gmra.mrb[0].mxu0 %v3363
        %v3365 = vpop.f32.mrb[0].mxu0
        %v3366 = vadd.f32 %v3101, %v3365
        %v3367 = vpop.f32.mrb[0].mxu0
        %3368 = vmatprep.mubr.f32.mxu0 0.0
        %v3369 = vand.u32 %v255, 4294901760
        %3370 = vmatmul.mubr.f32.gmra.mrb[0].mxu0 %v3369
        %v3371 = vpop.f32.mrb[0].mxu0
        %v3372 = vadd.f32 %v3111, %v3371
        %v3373 = vpop.f32.mrb[0].mxu0
        %3374 = vmatprep.mubr.f32.mxu0 0.0
        %v3375 = vand.u32 %v256, 4294901760
        %3376 = vmatmul.mubr.f32.gmra.mrb[0].mxu0 %v3375
        %v3377 = vpop.f32.mrb[0].mxu0
        %v3378 = vadd.f32 %v3121, %v3377
        %v3379 = vpop.f32.mrb[0].mxu0
        %3380 = vmatprep.mubr.f32.mxu0 0.0
        %v3381 = vand.u32 %v257, 4294901760
        %3382 = vmatmul.mubr.f32.gmra.mrb[0].mxu0 %v3381
        %v3383 = vpop.f32.mrb[0].mxu0
        %v3384 = vadd.f32 %v3131, %v3383
        %v3385 = vpop.f32.mrb[0].mxu0
        %3386 = vmatprep.mubr.f32.mxu0 0.0
        %v3387 = vand.u32 %v258, 4294901760
        %3388 = vmatmul.mubr.f32.gmra.mrb[0].mxu0 %v3387
        %v3389 = vpop.f32.mrb[0].mxu0
        %v3390 = vadd.f32 %v3141, %v3389
        %v3391 = vpop.f32.mrb[0].mxu0
        %3392 = vmatprep.mubr.f32.mxu0 0.0
        %v3393 = vand.u32 %v259, 4294901760
        %3394 = vmatmul.mubr.f32.gmra.mrb[0].mxu0 %v3393
        %v3395 = vpop.f32.mrb[0].mxu0
        %v3396 = vadd.f32 %v3151, %v3395
        %v3397 = vpop.f32.mrb[0].mxu0
        %3398 = vmatprep.mubr.f32.mxu0 0.0
        %v3399 = vand.u32 %v260, 4294901760
        %3400 = vmatmul.mubr.f32.gmra.mrb[0].mxu0 %v3399
        %v3401 = vpop.f32.mrb[0].mxu0
        %v3402 = vadd.f32 %v3161, %v3401
        %v3403 = vpop.f32.mrb[0].mxu0
        %3404 = vdwg.mxu0
        %3405 = vmatprep.subr.mxu0 0.0
        %v3406 = vand.u32 %v2825, 4294901760
        %v3407 = vsub.f32 %v2825, %v3406
        %3408 = vmatpush1.msra.mxu0 %v3407
        %3409 = vmatprep.subr.mxu0 0.0
        %v3410 = vand.u32 %v2831, 4294901760
        %v3411 = vsub.f32 %v2831, %v3410
        %3412 = vmatpush1.msra.mxu0 %v3411
        %3413 = vmatprep.subr.mxu0 0.0
        %v3414 = vand.u32 %v2837, 4294901760
        %v3415 = vsub.f32 %v2837, %v3414
        %3416 = vmatpush1.msra.mxu0 %v3415
        %3417 = vmatprep.subr.mxu0 0.0
        %v3418 = vand.u32 %v2843, 4294901760
        %v3419 = vsub.f32 %v2843, %v3418
        %3420 = vmatpush1.msra.mxu0 %v3419
        %3421 = vmatprep.subr.mxu0 0.0
        %v3422 = vand.u32 %v2849, 4294901760
        %v3423 = vsub.f32 %v2849, %v3422
        %3424 = vmatpush1.msra.mxu0 %v3423
        %3425 = vmatprep.subr.mxu0 0.0
        %v3426 = vand.u32 %v2855, 4294901760
        %v3427 = vsub.f32 %v2855, %v3426
        %3428 = vmatpush1.msra.mxu0 %v3427
        %3429 = vmatprep.subr.mxu0 0.0
        %v3430 = vand.u32 %v2861, 4294901760
        %v3431 = vsub.f32 %v2861, %v3430
        %3432 = vmatpush1.msra.mxu0 %v3431
        %3433 = vmatprep.subr.mxu0 0.0
        %v3434 = vand.u32 %v2867, 4294901760
        %v3435 = vsub.f32 %v2867, %v3434
        %3436 = vmatpush1.msra.mxu0 %v3435
        %3437 = vmatprep.subr.mxu0 0.0
        %v3438 = vand.u32 %v2873, 4294901760
        %v3439 = vsub.f32 %v2873, %v3438
        %3440 = vmatpush1.msra.mxu0 %v3439
        %3441 = vmatprep.subr.mxu0 0.0
        %v3442 = vand.u32 %v2879, 4294901760
        %v3443 = vsub.f32 %v2879, %v3442
        %3444 = vmatpush1.msra.mxu0 %v3443
        %3445 = vmatprep.subr.mxu0 0.0
        %v3446 = vand.u32 %v2885, 4294901760
        %v3447 = vsub.f32 %v2885, %v3446
        %3448 = vmatpush1.msra.mxu0 %v3447
        %3449 = vmatprep.subr.mxu0 0.0
        %v3450 = vand.u32 %v2891, 4294901760
        %v3451 = vsub.f32 %v2891, %v3450
        %3452 = vmatpush1.msra.mxu0 %v3451
        %3453 = vmatprep.subr.mxu0 0.0
        %v3454 = vand.u32 %v2897, 4294901760
        %v3455 = vsub.f32 %v2897, %v3454
        %3456 = vmatpush1.msra.mxu0 %v3455
        %3457 = vmatprep.subr.mxu0 0.0
        %v3458 = vand.u32 %v2903, 4294901760
        %v3459 = vsub.f32 %v2903, %v3458
        %3460 = vmatpush1.msra.mxu0 %v3459
        %3461 = vmatprep.subr.mxu0 0.0
        %v3462 = vand.u32 %v2909, 4294901760
        %v3463 = vsub.f32 %v2909, %v3462
        %3464 = vmatpush1.msra.mxu0 %v3463
        %3465 = vmatprep.subr.mxu0 0.0
        %v3466 = vand.u32 %v2915, 4294901760
        %v3467 = vsub.f32 %v2915, %v3466
        %3468 = vmatpush1.msra.mxu0 %v3467
        %3469 = vmatprep.subr.mxu0 0.0
        %3470 = vmatpush1.msra.mxu0 0.0
        %3471 = vmatprep.subr.mxu0 0.0
        %3472 = vmatpush1.msra.mxu0 0.0
        %3473 = vmatprep.subr.mxu0 0.0
        %3474 = vmatpush1.msra.mxu0 0.0
        %3475 = vmatprep.subr.mxu0 0.0
        %3476 = vmatpush1.msra.mxu0 0.0
        %3477 = vmatprep.subr.mxu0 0.0
        %3478 = vmatpush1.msra.mxu0 0.0
        %3479 = vmatprep.subr.mxu0 0.0
        %3480 = vmatpush1.msra.mxu0 0.0
        %3481 = vmatprep.subr.mxu0 0.0
        %3482 = vmatpush1.msra.mxu0 0.0
        %3483 = vmatprep.subr.mxu0 0.0
        %3484 = vmatpush1.msra.mxu0 0.0
        %3485 = vmatprep.subr.mxu0 0.0
        %3486 = vmatpush1.msra.mxu0 0.0
        %3487 = vmatprep.subr.mxu0 0.0
        %3488 = vmatpush1.msra.mxu0 0.0
        %3489 = vmatprep.subr.mxu0 0.0
        %3490 = vmatpush1.msra.mxu0 0.0
        %3491 = vmatprep.subr.mxu0 0.0
        %3492 = vmatpush1.msra.mxu0 0.0
        %3493 = vmatprep.subr.mxu0 0.0
        %3494 = vmatpush1.msra.mxu0 0.0
        %3495 = vmatprep.subr.mxu0 0.0
        %3496 = vmatpush1.msra.mxu0 0.0
        %3497 = vmatprep.subr.mxu0 0.0
        %3498 = vmatpush1.msra.mxu0 0.0
        %3499 = vmatprep.subr.mxu0 0.0
        %3500 = vmatpush1.msra.mxu0 0.0
        %3501 = vmatprep.mubr.f32.mxu0 0.0
        %v3502 = vand.u32 %v245, 4294901760
        %v3503 = vsub.f32 %v245, %v3502
        %3504 = vmatmul.mubr.f32.gmra.mrb[0].mxu0 %v3503
        %v3505 = vpop.f32.mrb[0].mxu0
        %v3506 = vadd.f32 %v3312, %v3505
        %v3507 = vpop.f32.mrb[0].mxu0
        %3508 = vmatprep.mubr.f32.mxu0 0.0
        %v3509 = vand.u32 %v246, 4294901760
        %v3510 = vsub.f32 %v246, %v3509
        %3511 = vmatmul.mubr.f32.gmra.mrb[0].mxu0 %v3510
        %v3512 = vpop.f32.mrb[0].mxu0
        %v3513 = vadd.f32 %v3318, %v3512
        %v3514 = vpop.f32.mrb[0].mxu0
        %3515 = vmatprep.mubr.f32.mxu0 0.0
        %v3516 = vand.u32 %v247, 4294901760
        %v3517 = vsub.f32 %v247, %v3516
        %3518 = vmatmul.mubr.f32.gmra.mrb[0].mxu0 %v3517
        %v3519 = vpop.f32.mrb[0].mxu0
        %v3520 = vadd.f32 %v3324, %v3519
        %v3521 = vpop.f32.mrb[0].mxu0
        %3522 = vmatprep.mubr.f32.mxu0 0.0
        %v3523 = vand.u32 %v248, 4294901760
        %v3524 = vsub.f32 %v248, %v3523
        %3525 = vmatmul.mubr.f32.gmra.mrb[0].mxu0 %v3524
        %v3526 = vpop.f32.mrb[0].mxu0
        %v3527 = vadd.f32 %v3330, %v3526
        %v3528 = vpop.f32.mrb[0].mxu0
        %3529 = vmatprep.mubr.f32.mxu0 0.0
        %v3530 = vand.u32 %v249, 4294901760
        %v3531 = vsub.f32 %v249, %v3530
        %3532 = vmatmul.mubr.f32.gmra.mrb[0].mxu0 %v3531
        %v3533 = vpop.f32.mrb[0].mxu0
        %v3534 = vadd.f32 %v3336, %v3533
        %v3535 = vpop.f32.mrb[0].mxu0
        %3536 = vmatprep.mubr.f32.mxu0 0.0
        %v3537 = vand.u32 %v250, 4294901760
        %v3538 = vsub.f32 %v250, %v3537
        %3539 = vmatmul.mubr.f32.gmra.mrb[0].mxu0 %v3538
        %v3540 = vpop.f32.mrb[0].mxu0
        %v3541 = vadd.f32 %v3342, %v3540
        %v3542 = vpop.f32.mrb[0].mxu0
        %3543 = vmatprep.mubr.f32.mxu0 0.0
        %v3544 = vand.u32 %v251, 4294901760
        %v3545 = vsub.f32 %v251, %v3544
        %3546 = vmatmul.mubr.f32.gmra.mrb[0].mxu0 %v3545
        %v3547 = vpop.f32.mrb[0].mxu0
        %v3548 = vadd.f32 %v3348, %v3547
        %v3549 = vpop.f32.mrb[0].mxu0
        %3550 = vmatprep.mubr.f32.mxu0 0.0
        %v3551 = vand.u32 %v252, 4294901760
        %v3552 = vsub.f32 %v252, %v3551
        %3553 = vmatmul.mubr.f32.gmra.mrb[0].mxu0 %v3552
        %v3554 = vpop.f32.mrb[0].mxu0
        %v3555 = vadd.f32 %v3354, %v3554
        %v3556 = vpop.f32.mrb[0].mxu0
        %3557 = vmatprep.mubr.f32.mxu0 0.0
        %v3558 = vand.u32 %v253, 4294901760
        %v3559 = vsub.f32 %v253, %v3558
        %3560 = vmatmul.mubr.f32.gmra.mrb[0].mxu0 %v3559
        %v3561 = vpop.f32.mrb[0].mxu0
        %v3562 = vadd.f32 %v3360, %v3561
        %v3563 = vpop.f32.mrb[0].mxu0
        %3564 = vmatprep.mubr.f32.mxu0 0.0
        %v3565 = vand.u32 %v254, 4294901760
        %v3566 = vsub.f32 %v254, %v3565
        %3567 = vmatmul.mubr.f32.gmra.mrb[0].mxu0 %v3566
        %v3568 = vpop.f32.mrb[0].mxu0
        %v3569 = vadd.f32 %v3366, %v3568
        %v3570 = vpop.f32.mrb[0].mxu0
        %3571 = vmatprep.mubr.f32.mxu0 0.0
        %v3572 = vand.u32 %v255, 4294901760
        %v3573 = vsub.f32 %v255, %v3572
        %3574 = vmatmul.mubr.f32.gmra.mrb[0].mxu0 %v3573
        %v3575 = vpop.f32.mrb[0].mxu0
        %v3576 = vadd.f32 %v3372, %v3575
        %v3577 = vpop.f32.mrb[0].mxu0
        %3578 = vmatprep.mubr.f32.mxu0 0.0
        %v3579 = vand.u32 %v256, 4294901760
        %v3580 = vsub.f32 %v256, %v3579
        %3581 = vmatmul.mubr.f32.gmra.mrb[0].mxu0 %v3580
        %v3582 = vpop.f32.mrb[0].mxu0
        %v3583 = vadd.f32 %v3378, %v3582
        %v3584 = vpop.f32.mrb[0].mxu0
        %3585 = vmatprep.mubr.f32.mxu0 0.0
        %v3586 = vand.u32 %v257, 4294901760
        %v3587 = vsub.f32 %v257, %v3586
        %3588 = vmatmul.mubr.f32.gmra.mrb[0].mxu0 %v3587
        %v3589 = vpop.f32.mrb[0].mxu0
        %v3590 = vadd.f32 %v3384, %v3589
        %v3591 = vpop.f32.mrb[0].mxu0
        %3592 = vmatprep.mubr.f32.mxu0 0.0
        %v3593 = vand.u32 %v258, 4294901760
        %v3594 = vsub.f32 %v258, %v3593
        %3595 = vmatmul.mubr.f32.gmra.mrb[0].mxu0 %v3594
        %v3596 = vpop.f32.mrb[0].mxu0
        %v3597 = vadd.f32 %v3390, %v3596
        %v3598 = vpop.f32.mrb[0].mxu0
        %3599 = vmatprep.mubr.f32.mxu0 0.0
        %v3600 = vand.u32 %v259, 4294901760
        %v3601 = vsub.f32 %v259, %v3600
        %3602 = vmatmul.mubr.f32.gmra.mrb[0].mxu0 %v3601
        %v3603 = vpop.f32.mrb[0].mxu0
        %v3604 = vadd.f32 %v3396, %v3603
        %v3605 = vpop.f32.mrb[0].mxu0
        %3606 = vmatprep.mubr.f32.mxu0 0.0
        %v3607 = vand.u32 %v260, 4294901760
        %v3608 = vsub.f32 %v260, %v3607
        %3609 = vmatmul.mubr.f32.gmra.mrb[0].mxu0 %v3608
        %v3610 = vpop.f32.mrb[0].mxu0
        %v3611 = vadd.f32 %v3402, %v3610
        %v3612 = vpop.f32.mrb[0].mxu0
        %3613 = vdwg.mxu0
        %3614 = vmatprep.subr.mxu0 0.0
        %v3615 = vand.u32 %v2825, 4294901760
        %3616 = vmatpush1.msra.mxu0 %v3615
        %3617 = vmatprep.subr.mxu0 0.0
        %v3618 = vand.u32 %v2831, 4294901760
        %3619 = vmatpush1.msra.mxu0 %v3618
        %3620 = vmatprep.subr.mxu0 0.0
        %v3621 = vand.u32 %v2837, 4294901760
        %3622 = vmatpush1.msra.mxu0 %v3621
        %3623 = vmatprep.subr.mxu0 0.0
        %v3624 = vand.u32 %v2843, 4294901760
        %3625 = vmatpush1.msra.mxu0 %v3624
        %3626 = vmatprep.subr.mxu0 0.0
        %v3627 = vand.u32 %v2849, 4294901760
        %3628 = vmatpush1.msra.mxu0 %v3627
        %3629 = vmatprep.subr.mxu0 0.0
        %v3630 = vand.u32 %v2855, 4294901760
        %3631 = vmatpush1.msra.mxu0 %v3630
        %3632 = vmatprep.subr.mxu0 0.0
        %v3633 = vand.u32 %v2861, 4294901760
        %3634 = vmatpush1.msra.mxu0 %v3633
        %3635 = vmatprep.subr.mxu0 0.0
        %v3636 = vand.u32 %v2867, 4294901760
        %3637 = vmatpush1.msra.mxu0 %v3636
        %3638 = vmatprep.subr.mxu0 0.0
        %v3639 = vand.u32 %v2873, 4294901760
        %3640 = vmatpush1.msra.mxu0 %v3639
        %3641 = vmatprep.subr.mxu0 0.0
        %v3642 = vand.u32 %v2879, 4294901760
        %3643 = vmatpush1.msra.mxu0 %v3642
        %3644 = vmatprep.subr.mxu0 0.0
        %v3645 = vand.u32 %v2885, 4294901760
        %3646 = vmatpush1.msra.mxu0 %v3645
        %3647 = vmatprep.subr.mxu0 0.0
        %v3648 = vand.u32 %v2891, 4294901760
        %3649 = vmatpush1.msra.mxu0 %v3648
        %3650 = vmatprep.subr.mxu0 0.0
        %v3651 = vand.u32 %v2897, 4294901760
        %3652 = vmatpush1.msra.mxu0 %v3651
        %3653 = vmatprep.subr.mxu0 0.0
        %v3654 = vand.u32 %v2903, 4294901760
        %3655 = vmatpush1.msra.mxu0 %v3654
        %3656 = vmatprep.subr.mxu0 0.0
        %v3657 = vand.u32 %v2909, 4294901760
        %3658 = vmatpush1.msra.mxu0 %v3657
        %3659 = vmatprep.subr.mxu0 0.0
        %v3660 = vand.u32 %v2915, 4294901760
        %3661 = vmatpush1.msra.mxu0 %v3660
        %3662 = vmatprep.subr.mxu0 0.0
        %3663 = vmatpush1.msra.mxu0 0.0
        %3664 = vmatprep.subr.mxu0 0.0
        %3665 = vmatpush1.msra.mxu0 0.0
        %3666 = vmatprep.subr.mxu0 0.0
        %3667 = vmatpush1.msra.mxu0 0.0
        %3668 = vmatprep.subr.mxu0 0.0
        %3669 = vmatpush1.msra.mxu0 0.0
        %3670 = vmatprep.subr.mxu0 0.0
        %3671 = vmatpush1.msra.mxu0 0.0
        %3672 = vmatprep.subr.mxu0 0.0
        %3673 = vmatpush1.msra.mxu0 0.0
        %3674 = vmatprep.subr.mxu0 0.0
        %3675 = vmatpush1.msra.mxu0 0.0
        %3676 = vmatprep.subr.mxu0 0.0
        %3677 = vmatpush1.msra.mxu0 0.0
        %3678 = vmatprep.subr.mxu0 0.0
        %3679 = vmatpush1.msra.mxu0 0.0
        %3680 = vmatprep.subr.mxu0 0.0
        %3681 = vmatpush1.msra.mxu0 0.0
        %3682 = vmatprep.subr.mxu0 0.0
        %3683 = vmatpush1.msra.mxu0 0.0
        %3684 = vmatprep.subr.mxu0 0.0
        %3685 = vmatpush1.msra.mxu0 0.0
        %3686 = vmatprep.subr.mxu0 0.0
        %3687 = vmatpush1.msra.mxu0 0.0
        %3688 = vmatprep.subr.mxu0 0.0
        %3689 = vmatpush1.msra.mxu0 0.0
        %3690 = vmatprep.subr.mxu0 0.0
        %3691 = vmatpush1.msra.mxu0 0.0
        %3692 = vmatprep.subr.mxu0 0.0
        %3693 = vmatpush1.msra.mxu0 0.0
        %3694 = vmatprep.mubr.f32.mxu0 0.0
        %v3695 = vand.u32 %v245, 4294901760
        %v3696 = vsub.f32 %v245, %v3695
        %v3697 = vand.u32 %v3696, 4294901760
        %3698 = vmatmul.mubr.f32.gmra.mrb[0].mxu0 %v3697
        %v3699 = vpop.f32.mrb[0].mxu0
        %v3700 = vadd.f32 %v3506, %v3699
        %v3701 = vpop.f32.mrb[0].mxu0
        %3702 = vmatprep.mubr.f32.mxu0 0.0
        %v3703 = vand.u32 %v246, 4294901760
        %v3704 = vsub.f32 %v246, %v3703
        %v3705 = vand.u32 %v3704, 4294901760
        %3706 = vmatmul.mubr.f32.gmra.mrb[0].mxu0 %v3705
        %v3707 = vpop.f32.mrb[0].mxu0
        %v3708 = vadd.f32 %v3513, %v3707
        %v3709 = vpop.f32.mrb[0].mxu0
        %3710 = vmatprep.mubr.f32.mxu0 0.0
        %v3711 = vand.u32 %v247, 4294901760
        %v3712 = vsub.f32 %v247, %v3711
        %v3713 = vand.u32 %v3712, 4294901760
        %3714 = vmatmul.mubr.f32.gmra.mrb[0].mxu0 %v3713
        %v3715 = vpop.f32.mrb[0].mxu0
        %v3716 = vadd.f32 %v3520, %v3715
        %v3717 = vpop.f32.mrb[0].mxu0
        %3718 = vmatprep.mubr.f32.mxu0 0.0
        %v3719 = vand.u32 %v248, 4294901760
        %v3720 = vsub.f32 %v248, %v3719
        %v3721 = vand.u32 %v3720, 4294901760
        %3722 = vmatmul.mubr.f32.gmra.mrb[0].mxu0 %v3721
        %v3723 = vpop.f32.mrb[0].mxu0
        %v3724 = vadd.f32 %v3527, %v3723
        %v3725 = vpop.f32.mrb[0].mxu0
        %3726 = vmatprep.mubr.f32.mxu0 0.0
        %v3727 = vand.u32 %v249, 4294901760
        %v3728 = vsub.f32 %v249, %v3727
        %v3729 = vand.u32 %v3728, 4294901760
        %3730 = vmatmul.mubr.f32.gmra.mrb[0].mxu0 %v3729
        %v3731 = vpop.f32.mrb[0].mxu0
        %v3732 = vadd.f32 %v3534, %v3731
        %v3733 = vpop.f32.mrb[0].mxu0
        %3734 = vmatprep.mubr.f32.mxu0 0.0
        %v3735 = vand.u32 %v250, 4294901760
        %v3736 = vsub.f32 %v250, %v3735
        %v3737 = vand.u32 %v3736, 4294901760
        %3738 = vmatmul.mubr.f32.gmra.mrb[0].mxu0 %v3737
        %v3739 = vpop.f32.mrb[0].mxu0
        %v3740 = vadd.f32 %v3541, %v3739
        %v3741 = vpop.f32.mrb[0].mxu0
        %3742 = vmatprep.mubr.f32.mxu0 0.0
        %v3743 = vand.u32 %v251, 4294901760
        %v3744 = vsub.f32 %v251, %v3743
        %v3745 = vand.u32 %v3744, 4294901760
        %3746 = vmatmul.mubr.f32.gmra.mrb[0].mxu0 %v3745
        %v3747 = vpop.f32.mrb[0].mxu0
        %v3748 = vadd.f32 %v3548, %v3747
        %v3749 = vpop.f32.mrb[0].mxu0
        %3750 = vmatprep.mubr.f32.mxu0 0.0
        %v3751 = vand.u32 %v252, 4294901760
        %v3752 = vsub.f32 %v252, %v3751
        %v3753 = vand.u32 %v3752, 4294901760
        %3754 = vmatmul.mubr.f32.gmra.mrb[0].mxu0 %v3753
        %v3755 = vpop.f32.mrb[0].mxu0
        %v3756 = vadd.f32 %v3555, %v3755
        %v3757 = vpop.f32.mrb[0].mxu0
        %3758 = vmatprep.mubr.f32.mxu0 0.0
        %v3759 = vand.u32 %v253, 4294901760
        %v3760 = vsub.f32 %v253, %v3759
        %v3761 = vand.u32 %v3760, 4294901760
        %3762 = vmatmul.mubr.f32.gmra.mrb[0].mxu0 %v3761
        %v3763 = vpop.f32.mrb[0].mxu0
        %v3764 = vadd.f32 %v3562, %v3763
        %v3765 = vpop.f32.mrb[0].mxu0
        %3766 = vmatprep.mubr.f32.mxu0 0.0
        %v3767 = vand.u32 %v254, 4294901760
        %v3768 = vsub.f32 %v254, %v3767
        %v3769 = vand.u32 %v3768, 4294901760
        %3770 = vmatmul.mubr.f32.gmra.mrb[0].mxu0 %v3769
        %v3771 = vpop.f32.mrb[0].mxu0
        %v3772 = vadd.f32 %v3569, %v3771
        %v3773 = vpop.f32.mrb[0].mxu0
        %3774 = vmatprep.mubr.f32.mxu0 0.0
        %v3775 = vand.u32 %v255, 4294901760
        %v3776 = vsub.f32 %v255, %v3775
        %v3777 = vand.u32 %v3776, 4294901760
        %3778 = vmatmul.mubr.f32.gmra.mrb[0].mxu0 %v3777
        %v3779 = vpop.f32.mrb[0].mxu0
        %v3780 = vadd.f32 %v3576, %v3779
        %v3781 = vpop.f32.mrb[0].mxu0
        %3782 = vmatprep.mubr.f32.mxu0 0.0
        %v3783 = vand.u32 %v256, 4294901760
        %v3784 = vsub.f32 %v256, %v3783
        %v3785 = vand.u32 %v3784, 4294901760
        %3786 = vmatmul.mubr.f32.gmra.mrb[0].mxu0 %v3785
        %v3787 = vpop.f32.mrb[0].mxu0
        %v3788 = vadd.f32 %v3583, %v3787
        %v3789 = vpop.f32.mrb[0].mxu0
        %3790 = vmatprep.mubr.f32.mxu0 0.0
        %v3791 = vand.u32 %v257, 4294901760
        %v3792 = vsub.f32 %v257, %v3791
        %v3793 = vand.u32 %v3792, 4294901760
        %3794 = vmatmul.mubr.f32.gmra.mrb[0].mxu0 %v3793
        %v3795 = vpop.f32.mrb[0].mxu0
        %v3796 = vadd.f32 %v3590, %v3795
        %v3797 = vpop.f32.mrb[0].mxu0
        %3798 = vmatprep.mubr.f32.mxu0 0.0
        %v3799 = vand.u32 %v258, 4294901760
        %v3800 = vsub.f32 %v258, %v3799
        %v3801 = vand.u32 %v3800, 4294901760
        %3802 = vmatmul.mubr.f32.gmra.mrb[0].mxu0 %v3801
        %v3803 = vpop.f32.mrb[0].mxu0
        %v3804 = vadd.f32 %v3597, %v3803
        %v3805 = vpop.f32.mrb[0].mxu0
        %3806 = vmatprep.mubr.f32.mxu0 0.0
        %v3807 = vand.u32 %v259, 4294901760
        %v3808 = vsub.f32 %v259, %v3807
        %v3809 = vand.u32 %v3808, 4294901760
        %3810 = vmatmul.mubr.f32.gmra.mrb[0].mxu0 %v3809
        %v3811 = vpop.f32.mrb[0].mxu0
        %v3812 = vadd.f32 %v3604, %v3811
        %v3813 = vpop.f32.mrb[0].mxu0
        %3814 = vmatprep.mubr.f32.mxu0 0.0
        %v3815 = vand.u32 %v260, 4294901760
        %v3816 = vsub.f32 %v260, %v3815
        %v3817 = vand.u32 %v3816, 4294901760
        %3818 = vmatmul.mubr.f32.gmra.mrb[0].mxu0 %v3817
        %v3819 = vpop.f32.mrb[0].mxu0
        %v3820 = vadd.f32 %v3611, %v3819
        %v3821 = vpop.f32.mrb[0].mxu0
        %3822 = vdwg.mxu0
        %3823 = vmatprep.subr.mxu0 0.0
        %v3824 = vand.u32 %v2825, 4294901760
        %v3825 = vsub.f32 %v2825, %v3824
        %v3826 = vand.u32 %v3825, 4294901760
        %3827 = vmatpush1.msra.mxu0 %v3826
        %3828 = vmatprep.subr.mxu0 0.0
        %v3829 = vand.u32 %v2831, 4294901760
        %v3830 = vsub.f32 %v2831, %v3829
        %v3831 = vand.u32 %v3830, 4294901760
        %3832 = vmatpush1.msra.mxu0 %v3831
        %3833 = vmatprep.subr.mxu0 0.0
        %v3834 = vand.u32 %v2837, 4294901760
        %v3835 = vsub.f32 %v2837, %v3834
        %v3836 = vand.u32 %v3835, 4294901760
        %3837 = vmatpush1.msra.mxu0 %v3836
        %3838 = vmatprep.subr.mxu0 0.0
        %v3839 = vand.u32 %v2843, 4294901760
        %v3840 = vsub.f32 %v2843, %v3839
        %v3841 = vand.u32 %v3840, 4294901760
        %3842 = vmatpush1.msra.mxu0 %v3841
        %3843 = vmatprep.subr.mxu0 0.0
        %v3844 = vand.u32 %v2849, 4294901760
        %v3845 = vsub.f32 %v2849, %v3844
        %v3846 = vand.u32 %v3845, 4294901760
        %3847 = vmatpush1.msra.mxu0 %v3846
        %3848 = vmatprep.subr.mxu0 0.0
        %v3849 = vand.u32 %v2855, 4294901760
        %v3850 = vsub.f32 %v2855, %v3849
        %v3851 = vand.u32 %v3850, 4294901760
        %3852 = vmatpush1.msra.mxu0 %v3851
        %3853 = vmatprep.subr.mxu0 0.0
        %v3854 = vand.u32 %v2861, 4294901760
        %v3855 = vsub.f32 %v2861, %v3854
        %v3856 = vand.u32 %v3855, 4294901760
        %3857 = vmatpush1.msra.mxu0 %v3856
        %3858 = vmatprep.subr.mxu0 0.0
        %v3859 = vand.u32 %v2867, 4294901760
        %v3860 = vsub.f32 %v2867, %v3859
        %v3861 = vand.u32 %v3860, 4294901760
        %3862 = vmatpush1.msra.mxu0 %v3861
        %3863 = vmatprep.subr.mxu0 0.0
        %v3864 = vand.u32 %v2873, 4294901760
        %v3865 = vsub.f32 %v2873, %v3864
        %v3866 = vand.u32 %v3865, 4294901760
        %3867 = vmatpush1.msra.mxu0 %v3866
        %3868 = vmatprep.subr.mxu0 0.0
        %v3869 = vand.u32 %v2879, 4294901760
        %v3870 = vsub.f32 %v2879, %v3869
        %v3871 = vand.u32 %v3870, 4294901760
        %3872 = vmatpush1.msra.mxu0 %v3871
        %3873 = vmatprep.subr.mxu0 0.0
        %v3874 = vand.u32 %v2885, 4294901760
        %v3875 = vsub.f32 %v2885, %v3874
        %v3876 = vand.u32 %v3875, 4294901760
        %3877 = vmatpush1.msra.mxu0 %v3876
        %3878 = vmatprep.subr.mxu0 0.0
        %v3879 = vand.u32 %v2891, 4294901760
        %v3880 = vsub.f32 %v2891, %v3879
        %v3881 = vand.u32 %v3880, 4294901760
        %3882 = vmatpush1.msra.mxu0 %v3881
        %3883 = vmatprep.subr.mxu0 0.0
        %v3884 = vand.u32 %v2897, 4294901760
        %v3885 = vsub.f32 %v2897, %v3884
        %v3886 = vand.u32 %v3885, 4294901760
        %3887 = vmatpush1.msra.mxu0 %v3886
        %3888 = vmatprep.subr.mxu0 0.0
        %v3889 = vand.u32 %v2903, 4294901760
        %v3890 = vsub.f32 %v2903, %v3889
        %v3891 = vand.u32 %v3890, 4294901760
        %3892 = vmatpush1.msra.mxu0 %v3891
        %3893 = vmatprep.subr.mxu0 0.0
        %v3894 = vand.u32 %v2909, 4294901760
        %v3895 = vsub.f32 %v2909, %v3894
        %v3896 = vand.u32 %v3895, 4294901760
        %3897 = vmatpush1.msra.mxu0 %v3896
        %3898 = vmatprep.subr.mxu0 0.0
        %v3899 = vand.u32 %v2915, 4294901760
        %v3900 = vsub.f32 %v2915, %v3899
        %v3901 = vand.u32 %v3900, 4294901760
        %3902 = vmatpush1.msra.mxu0 %v3901
        %3903 = vmatprep.subr.mxu0 0.0
        %3904 = vmatpush1.msra.mxu0 0.0
        %3905 = vmatprep.subr.mxu0 0.0
        %3906 = vmatpush1.msra.mxu0 0.0
        %3907 = vmatprep.subr.mxu0 0.0
        %3908 = vmatpush1.msra.mxu0 0.0
        %3909 = vmatprep.subr.mxu0 0.0
        %3910 = vmatpush1.msra.mxu0 0.0
        %3911 = vmatprep.subr.mxu0 0.0
        %3912 = vmatpush1.msra.mxu0 0.0
        %3913 = vmatprep.subr.mxu0 0.0
        %3914 = vmatpush1.msra.mxu0 0.0
        %3915 = vmatprep.subr.mxu0 0.0
        %3916 = vmatpush1.msra.mxu0 0.0
        %3917 = vmatprep.subr.mxu0 0.0
        %3918 = vmatpush1.msra.mxu0 0.0
        %3919 = vmatprep.subr.mxu0 0.0
        %3920 = vmatpush1.msra.mxu0 0.0
        %3921 = vmatprep.subr.mxu0 0.0
        %3922 = vmatpush1.msra.mxu0 0.0
        %3923 = vmatprep.subr.mxu0 0.0
        %3924 = vmatpush1.msra.mxu0 0.0
        %3925 = vmatprep.subr.mxu0 0.0
        %3926 = vmatpush1.msra.mxu0 0.0
        %3927 = vmatprep.subr.mxu0 0.0
        %3928 = vmatpush1.msra.mxu0 0.0
        %3929 = vmatprep.subr.mxu0 0.0
        %3930 = vmatpush1.msra.mxu0 0.0
        %3931 = vmatprep.subr.mxu0 0.0
        %3932 = vmatpush1.msra.mxu0 0.0
        %3933 = vmatprep.subr.mxu0 0.0
        %3934 = vmatpush1.msra.mxu0 0.0
        %3935 = vmatprep.mubr.f32.mxu0 0.0
        %v3936 = vand.u32 %v245, 4294901760
        %3937 = vmatmul.mubr.f32.gmra.mrb[0].mxu0 %v3936
        %v3938 = vpop.f32.mrb[0].mxu0
        %v3939 = vadd.f32 %v3700, %v3938
        %v3940 = vpop.f32.mrb[0].mxu0
        %3941 = vmatprep.mubr.f32.mxu0 0.0
        %v3942 = vand.u32 %v246, 4294901760
        %3943 = vmatmul.mubr.f32.gmra.mrb[0].mxu0 %v3942
        %v3944 = vpop.f32.mrb[0].mxu0
        %v3945 = vadd.f32 %v3708, %v3944
        %v3946 = vpop.f32.mrb[0].mxu0
        %3947 = vmatprep.mubr.f32.mxu0 0.0
        %v3948 = vand.u32 %v247, 4294901760
        %3949 = vmatmul.mubr.f32.gmra.mrb[0].mxu0 %v3948
        %v3950 = vpop.f32.mrb[0].mxu0
        %v3951 = vadd.f32 %v3716, %v3950
        %v3952 = vpop.f32.mrb[0].mxu0
        %3953 = vmatprep.mubr.f32.mxu0 0.0
        %v3954 = vand.u32 %v248, 4294901760
        %3955 = vmatmul.mubr.f32.gmra.mrb[0].mxu0 %v3954
        %v3956 = vpop.f32.mrb[0].mxu0
        %v3957 = vadd.f32 %v3724, %v3956
        %v3958 = vpop.f32.mrb[0].mxu0
        %3959 = vmatprep.mubr.f32.mxu0 0.0
        %v3960 = vand.u32 %v249, 4294901760
        %3961 = vmatmul.mubr.f32.gmra.mrb[0].mxu0 %v3960
        %v3962 = vpop.f32.mrb[0].mxu0
        %v3963 = vadd.f32 %v3732, %v3962
        %v3964 = vpop.f32.mrb[0].mxu0
        %3965 = vmatprep.mubr.f32.mxu0 0.0
        %v3966 = vand.u32 %v250, 4294901760
        %3967 = vmatmul.mubr.f32.gmra.mrb[0].mxu0 %v3966
        %v3968 = vpop.f32.mrb[0].mxu0
        %v3969 = vadd.f32 %v3740, %v3968
        %v3970 = vpop.f32.mrb[0].mxu0
        %3971 = vmatprep.mubr.f32.mxu0 0.0
        %v3972 = vand.u32 %v251, 4294901760
        %3973 = vmatmul.mubr.f32.gmra.mrb[0].mxu0 %v3972
        %v3974 = vpop.f32.mrb[0].mxu0
        %v3975 = vadd.f32 %v3748, %v3974
        %v3976 = vpop.f32.mrb[0].mxu0
        %3977 = vmatprep.mubr.f32.mxu0 0.0
        %v3978 = vand.u32 %v252, 4294901760
        %3979 = vmatmul.mubr.f32.gmra.mrb[0].mxu0 %v3978
        %v3980 = vpop.f32.mrb[0].mxu0
        %v3981 = vadd.f32 %v3756, %v3980
        %v3982 = vpop.f32.mrb[0].mxu0
        %3983 = vmatprep.mubr.f32.mxu0 0.0
        %v3984 = vand.u32 %v253, 4294901760
        %3985 = vmatmul.mubr.f32.gmra.mrb[0].mxu0 %v3984
        %v3986 = vpop.f32.mrb[0].mxu0
        %v3987 = vadd.f32 %v3764, %v3986
        %v3988 = vpop.f32.mrb[0].mxu0
        %3989 = vmatprep.mubr.f32.mxu0 0.0
        %v3990 = vand.u32 %v254, 4294901760
        %3991 = vmatmul.mubr.f32.gmra.mrb[0].mxu0 %v3990
        %v3992 = vpop.f32.mrb[0].mxu0
        %v3993 = vadd.f32 %v3772, %v3992
        %v3994 = vpop.f32.mrb[0].mxu0
        %3995 = vmatprep.mubr.f32.mxu0 0.0
        %v3996 = vand.u32 %v255, 4294901760
        %3997 = vmatmul.mubr.f32.gmra.mrb[0].mxu0 %v3996
        %v3998 = vpop.f32.mrb[0].mxu0
        %v3999 = vadd.f32 %v3780, %v3998
        %v4000 = vpop.f32.mrb[0].mxu0
        %4001 = vmatprep.mubr.f32.mxu0 0.0
        %v4002 = vand.u32 %v256, 4294901760
        %4003 = vmatmul.mubr.f32.gmra.mrb[0].mxu0 %v4002
        %v4004 = vpop.f32.mrb[0].mxu0
        %v4005 = vadd.f32 %v3788, %v4004
        %v4006 = vpop.f32.mrb[0].mxu0
        %4007 = vmatprep.mubr.f32.mxu0 0.0
        %v4008 = vand.u32 %v257, 4294901760
        %4009 = vmatmul.mubr.f32.gmra.mrb[0].mxu0 %v4008
        %v4010 = vpop.f32.mrb[0].mxu0
        %v4011 = vadd.f32 %v3796, %v4010
        %v4012 = vpop.f32.mrb[0].mxu0
        %4013 = vmatprep.mubr.f32.mxu0 0.0
        %v4014 = vand.u32 %v258, 4294901760
        %4015 = vmatmul.mubr.f32.gmra.mrb[0].mxu0 %v4014
        %v4016 = vpop.f32.mrb[0].mxu0
        %v4017 = vadd.f32 %v3804, %v4016
        %v4018 = vpop.f32.mrb[0].mxu0
        %4019 = vmatprep.mubr.f32.mxu0 0.0
        %v4020 = vand.u32 %v259, 4294901760
        %4021 = vmatmul.mubr.f32.gmra.mrb[0].mxu0 %v4020
        %v4022 = vpop.f32.mrb[0].mxu0
        %v4023 = vadd.f32 %v3812, %v4022
        %v4024 = vpop.f32.mrb[0].mxu0
        %4025 = vmatprep.mubr.f32.mxu0 0.0
        %v4026 = vand.u32 %v260, 4294901760
        %4027 = vmatmul.mubr.f32.gmra.mrb[0].mxu0 %v4026
        %v4028 = vpop.f32.mrb[0].mxu0
        %v4029 = vadd.f32 %v3820, %v4028
        %v4030 = vpop.f32.mrb[0].mxu0
        %4031 = vdwg.mxu0
        %4032 = vmatprep.subr.mxu0 0.0
        %v4033 = vand.u32 %v2825, 4294901760
        %4034 = vmatpush1.msra.mxu0 %v4033
        %4035 = vmatprep.subr.mxu0 0.0
        %v4036 = vand.u32 %v2831, 4294901760
        %4037 = vmatpush1.msra.mxu0 %v4036
        %4038 = vmatprep.subr.mxu0 0.0
        %v4039 = vand.u32 %v2837, 4294901760
        %4040 = vmatpush1.msra.mxu0 %v4039
        %4041 = vmatprep.subr.mxu0 0.0
        %v4042 = vand.u32 %v2843, 4294901760
        %4043 = vmatpush1.msra.mxu0 %v4042
        %4044 = vmatprep.subr.mxu0 0.0
        %v4045 = vand.u32 %v2849, 4294901760
        %4046 = vmatpush1.msra.mxu0 %v4045
        %4047 = vmatprep.subr.mxu0 0.0
        %v4048 = vand.u32 %v2855, 4294901760
        %4049 = vmatpush1.msra.mxu0 %v4048
        %4050 = vmatprep.subr.mxu0 0.0
        %v4051 = vand.u32 %v2861, 4294901760
        %4052 = vmatpush1.msra.mxu0 %v4051
        %4053 = vmatprep.subr.mxu0 0.0
        %v4054 = vand.u32 %v2867, 4294901760
        %4055 = vmatpush1.msra.mxu0 %v4054
        %4056 = vmatprep.subr.mxu0 0.0
        %v4057 = vand.u32 %v2873, 4294901760
        %4058 = vmatpush1.msra.mxu0 %v4057
        %4059 = vmatprep.subr.mxu0 0.0
        %v4060 = vand.u32 %v2879, 4294901760
        %4061 = vmatpush1.msra.mxu0 %v4060
        %4062 = vmatprep.subr.mxu0 0.0
        %v4063 = vand.u32 %v2885, 4294901760
        %4064 = vmatpush1.msra.mxu0 %v4063
        %4065 = vmatprep.subr.mxu0 0.0
        %v4066 = vand.u32 %v2891, 4294901760
        %4067 = vmatpush1.msra.mxu0 %v4066
        %4068 = vmatprep.subr.mxu0 0.0
        %v4069 = vand.u32 %v2897, 4294901760
        %4070 = vmatpush1.msra.mxu0 %v4069
        %4071 = vmatprep.subr.mxu0 0.0
        %v4072 = vand.u32 %v2903, 4294901760
        %4073 = vmatpush1.msra.mxu0 %v4072
        %4074 = vmatprep.subr.mxu0 0.0
        %v4075 = vand.u32 %v2909, 4294901760
        %4076 = vmatpush1.msra.mxu0 %v4075
        %4077 = vmatprep.subr.mxu0 0.0
        %v4078 = vand.u32 %v2915, 4294901760
        %4079 = vmatpush1.msra.mxu0 %v4078
        %4080 = vmatprep.subr.mxu0 0.0
        %4081 = vmatpush1.msra.mxu0 0.0
        %4082 = vmatprep.subr.mxu0 0.0
        %4083 = vmatpush1.msra.mxu0 0.0
        %4084 = vmatprep.subr.mxu0 0.0
        %4085 = vmatpush1.msra.mxu0 0.0
        %4086 = vmatprep.subr.mxu0 0.0
        %4087 = vmatpush1.msra.mxu0 0.0
        %4088 = vmatprep.subr.mxu0 0.0
        %4089 = vmatpush1.msra.mxu0 0.0
        %4090 = vmatprep.subr.mxu0 0.0
        %4091 = vmatpush1.msra.mxu0 0.0
        %4092 = vmatprep.subr.mxu0 0.0
        %4093 = vmatpush1.msra.mxu0 0.0
        %4094 = vmatprep.subr.mxu0 0.0
        %4095 = vmatpush1.msra.mxu0 0.0
        %4096 = vmatprep.subr.mxu0 0.0
        %4097 = vmatpush1.msra.mxu0 0.0
        %4098 = vmatprep.subr.mxu0 0.0
        %4099 = vmatpush1.msra.mxu0 0.0
        %4100 = vmatprep.subr.mxu0 0.0
        %4101 = vmatpush1.msra.mxu0 0.0
        %4102 = vmatprep.subr.mxu0 0.0
        %4103 = vmatpush1.msra.mxu0 0.0
        %4104 = vmatprep.subr.mxu0 0.0
        %4105 = vmatpush1.msra.mxu0 0.0
        %4106 = vmatprep.subr.mxu0 0.0
        %4107 = vmatpush1.msra.mxu0 0.0
        %4108 = vmatprep.subr.mxu0 0.0
        %4109 = vmatpush1.msra.mxu0 0.0
        %4110 = vmatprep.subr.mxu0 0.0
        %4111 = vmatpush1.msra.mxu0 0.0
        %4112 = vmatprep.mubr.f32.mxu0 0.0
        %v4113 = vand.u32 %v245, 4294901760
        %4114 = vmatmul.mubr.f32.gmra.mrb[0].mxu0 %v4113
        %v4115 = vpop.f32.mrb[0].mxu0
        %v4116 = vadd.f32 %v3939, %v4115
        %v4117 = vpop.f32.mrb[0].mxu0
        %4118 = vmatprep.mubr.f32.mxu0 0.0
        %v4119 = vand.u32 %v246, 4294901760
        %4120 = vmatmul.mubr.f32.gmra.mrb[0].mxu0 %v4119
        %v4121 = vpop.f32.mrb[0].mxu0
        %v4122 = vadd.f32 %v3945, %v4121
        %v4123 = vpop.f32.mrb[0].mxu0
        %4124 = vmatprep.mubr.f32.mxu0 0.0
        %v4125 = vand.u32 %v247, 4294901760
        %4126 = vmatmul.mubr.f32.gmra.mrb[0].mxu0 %v4125
        %v4127 = vpop.f32.mrb[0].mxu0
        %v4128 = vadd.f32 %v3951, %v4127
        %v4129 = vpop.f32.mrb[0].mxu0
        %4130 = vmatprep.mubr.f32.mxu0 0.0
        %v4131 = vand.u32 %v248, 4294901760
        %4132 = vmatmul.mubr.f32.gmra.mrb[0].mxu0 %v4131
        %v4133 = vpop.f32.mrb[0].mxu0
        %v4134 = vadd.f32 %v3957, %v4133
        %v4135 = vpop.f32.mrb[0].mxu0
        %4136 = vmatprep.mubr.f32.mxu0 0.0
        %v4137 = vand.u32 %v249, 4294901760
        %4138 = vmatmul.mubr.f32.gmra.mrb[0].mxu0 %v4137
        %v4139 = vpop.f32.mrb[0].mxu0
        %v4140 = vadd.f32 %v3963, %v4139
        %v4141 = vpop.f32.mrb[0].mxu0
        %4142 = vmatprep.mubr.f32.mxu0 0.0
        %v4143 = vand.u32 %v250, 4294901760
        %4144 = vmatmul.mubr.f32.gmra.mrb[0].mxu0 %v4143
        %v4145 = vpop.f32.mrb[0].mxu0
        %v4146 = vadd.f32 %v3969, %v4145
        %v4147 = vpop.f32.mrb[0].mxu0
        %4148 = vmatprep.mubr.f32.mxu0 0.0
        %v4149 = vand.u32 %v251, 4294901760
        %4150 = vmatmul.mubr.f32.gmra.mrb[0].mxu0 %v4149
        %v4151 = vpop.f32.mrb[0].mxu0
        %v4152 = vadd.f32 %v3975, %v4151
        %v4153 = vpop.f32.mrb[0].mxu0
        %4154 = vmatprep.mubr.f32.mxu0 0.0
        %v4155 = vand.u32 %v252, 4294901760
        %4156 = vmatmul.mubr.f32.gmra.mrb[0].mxu0 %v4155
        %v4157 = vpop.f32.mrb[0].mxu0
        %v4158 = vadd.f32 %v3981, %v4157
        %v4159 = vpop.f32.mrb[0].mxu0
        %4160 = vmatprep.mubr.f32.mxu0 0.0
        %v4161 = vand.u32 %v253, 4294901760
        %4162 = vmatmul.mubr.f32.gmra.mrb[0].mxu0 %v4161
        %v4163 = vpop.f32.mrb[0].mxu0
        %v4164 = vadd.f32 %v3987, %v4163
        %v4165 = vpop.f32.mrb[0].mxu0
        %4166 = vmatprep.mubr.f32.mxu0 0.0
        %v4167 = vand.u32 %v254, 4294901760
        %4168 = vmatmul.mubr.f32.gmra.mrb[0].mxu0 %v4167
        %v4169 = vpop.f32.mrb[0].mxu0
        %v4170 = vadd.f32 %v3993, %v4169
        %v4171 = vpop.f32.mrb[0].mxu0
        %4172 = vmatprep.mubr.f32.mxu0 0.0
        %v4173 = vand.u32 %v255, 4294901760
        %4174 = vmatmul.mubr.f32.gmra.mrb[0].mxu0 %v4173
        %v4175 = vpop.f32.mrb[0].mxu0
        %v4176 = vadd.f32 %v3999, %v4175
        %v4177 = vpop.f32.mrb[0].mxu0
        %4178 = vmatprep.mubr.f32.mxu0 0.0
        %v4179 = vand.u32 %v256, 4294901760
        %4180 = vmatmul.mubr.f32.gmra.mrb[0].mxu0 %v4179
        %v4181 = vpop.f32.mrb[0].mxu0
        %v4182 = vadd.f32 %v4005, %v4181
        %v4183 = vpop.f32.mrb[0].mxu0
        %4184 = vmatprep.mubr.f32.mxu0 0.0
        %v4185 = vand.u32 %v257, 4294901760
        %4186 = vmatmul.mubr.f32.gmra.mrb[0].mxu0 %v4185
        %v4187 = vpop.f32.mrb[0].mxu0
        %v4188 = vadd.f32 %v4011, %v4187
        %v4189 = vpop.f32.mrb[0].mxu0
        %4190 = vmatprep.mubr.f32.mxu0 0.0
        %v4191 = vand.u32 %v258, 4294901760
        %4192 = vmatmul.mubr.f32.gmra.mrb[0].mxu0 %v4191
        %v4193 = vpop.f32.mrb[0].mxu0
        %v4194 = vadd.f32 %v4017, %v4193
        %v4195 = vpop.f32.mrb[0].mxu0
        %4196 = vmatprep.mubr.f32.mxu0 0.0
        %v4197 = vand.u32 %v259, 4294901760
        %4198 = vmatmul.mubr.f32.gmra.mrb[0].mxu0 %v4197
        %v4199 = vpop.f32.mrb[0].mxu0
        %v4200 = vadd.f32 %v4023, %v4199
        %v4201 = vpop.f32.mrb[0].mxu0
        %4202 = vmatprep.mubr.f32.mxu0 0.0
        %v4203 = vand.u32 %v260, 4294901760
        %4204 = vmatmul.mubr.f32.gmra.mrb[0].mxu0 %v4203
        %v4205 = vpop.f32.mrb[0].mxu0
        %v4206 = vadd.f32 %v4029, %v4205
        %v4207 = vpop.f32.mrb[0].mxu0
        %4208 = vdwg.mxu0
        %vm4209 = vcmp.gt.f32.partialorder %v4116, 0.0
        %vm4210 = vcmp.gt.f32.partialorder %v4122, 0.0
        %vm4211 = vcmp.gt.f32.partialorder %v4128, 0.0
        %vm4212 = vcmp.gt.f32.partialorder %v4134, 0.0
        %vm4213 = vcmp.gt.f32.partialorder %v4140, 0.0
        %vm4214 = vcmp.gt.f32.partialorder %v4146, 0.0
        %vm4215 = vcmp.gt.f32.partialorder %v4152, 0.0
        %vm4216 = vcmp.gt.f32.partialorder %v4158, 0.0
        %vm4217 = vcmp.gt.f32.partialorder %v4164, 0.0
        %vm4218 = vcmp.gt.f32.partialorder %v4170, 0.0
        %vm4219 = vcmp.gt.f32.partialorder %v4176, 0.0
        %vm4220 = vcmp.gt.f32.partialorder %v4182, 0.0
        %vm4221 = vcmp.gt.f32.partialorder %v4188, 0.0
        %vm4222 = vcmp.gt.f32.partialorder %v4194, 0.0
        %vm4223 = vcmp.gt.f32.partialorder %v4200, 0.0
        %vm4224 = vcmp.gt.f32.partialorder %v4206, 0.0
        %v4225 = vmul.f32 %v4116, 0.01
        %v4226 = vmul.f32 %v4122, 0.01
        %v4227 = vmul.f32 %v4128, 0.01
        %v4228 = vmul.f32 %v4134, 0.01
        %v4229 = vmul.f32 %v4140, 0.01
        %v4230 = vmul.f32 %v4146, 0.01
        %v4231 = vmul.f32 %v4152, 0.01
        %v4232 = vmul.f32 %v4158, 0.01
        %v4233 = vmul.f32 %v4164, 0.01
        %v4234 = vmul.f32 %v4170, 0.01
        %v4235 = vmul.f32 %v4176, 0.01
        %v4236 = vmul.f32 %v4182, 0.01
        %v4237 = vmul.f32 %v4188, 0.01
        %v4238 = vmul.f32 %v4194, 0.01
        %v4239 = vmul.f32 %v4200, 0.01
        %v4240 = vmul.f32 %v4206, 0.01
        %v4241 = vsel %vm4209, %v4116, %v4225
        %v4242 = vsel %vm4210, %v4122, %v4226
        %v4243 = vsel %vm4211, %v4128, %v4227
        %v4244 = vsel %vm4212, %v4134, %v4228
        %v4245 = vsel %vm4213, %v4140, %v4229
        %v4246 = vsel %vm4214, %v4146, %v4230
        %v4247 = vsel %vm4215, %v4152, %v4231
        %v4248 = vsel %vm4216, %v4158, %v4232
        %v4249 = vsel %vm4217, %v4164, %v4233
        %v4250 = vsel %vm4218, %v4170, %v4234
        %v4251 = vsel %vm4219, %v4176, %v4235
        %v4252 = vsel %vm4220, %v4182, %v4236
        %v4253 = vsel %vm4221, %v4188, %v4237
        %v4254 = vsel %vm4222, %v4194, %v4238
        %v4255 = vsel %vm4223, %v4200, %v4239
        %v4256 = vsel %vm4224, %v4206, %v4240
        %s4257 = scalar_lea.vmem [#allocation7], 128
        %v4258 = vld [vmem:[%s4257] sm:$0xff]
        %v4259 = vld [vmem:[%s4257 + $0x8] sm:$0xff]
        %v4260 = vld [vmem:[%s4257 + $0x10] sm:$0xff]
        %v4261 = vld [vmem:[%s4257 + $0x18] sm:$0xff]
        %v4262 = vld [vmem:[%s4257 + $0x20] sm:$0xff]
        %v4263 = vld [vmem:[%s4257 + $0x28] sm:$0xff]
        %v4264 = vld [vmem:[%s4257 + $0x30] sm:$0xff]
        %v4265 = vld [vmem:[%s4257 + $0x38] sm:$0xff]
        %v4266 = vld [vmem:[%s4257 + $0x40] sm:$0xff]
        %v4267 = vld [vmem:[%s4257 + $0x48] sm:$0xff]
        %v4268 = vld [vmem:[%s4257 + $0x50] sm:$0xff]
        %v4269 = vld [vmem:[%s4257 + $0x58] sm:$0xff]
        %v4270 = vld [vmem:[%s4257 + $0x60] sm:$0xff]
        %v4271 = vld [vmem:[%s4257 + $0x68] sm:$0xff]
        %v4272 = vld [vmem:[%s4257 + $0x70] sm:$0xff]
        %v4273 = vld [vmem:[%s4257 + $0x78] sm:$0xff]
        %4274 = vmatprep.subr.mxu0 0.0
        %v4275 = vand.u32 %v4258, 4294901760
        %4276 = vmatpush1.msra.mxu0 %v4275
        %4277 = vmatprep.subr.mxu0 0.0
        %v4278 = vand.u32 %v4259, 4294901760
        %4279 = vmatpush1.msra.mxu0 %v4278
        %4280 = vmatprep.subr.mxu0 0.0
        %v4281 = vand.u32 %v4260, 4294901760
        %4282 = vmatpush1.msra.mxu0 %v4281
        %4283 = vmatprep.subr.mxu0 0.0
        %v4284 = vand.u32 %v4261, 4294901760
        %4285 = vmatpush1.msra.mxu0 %v4284
        %4286 = vmatprep.subr.mxu0 0.0
        %v4287 = vand.u32 %v4262, 4294901760
        %4288 = vmatpush1.msra.mxu0 %v4287
        %4289 = vmatprep.subr.mxu0 0.0
        %v4290 = vand.u32 %v4263, 4294901760
        %4291 = vmatpush1.msra.mxu0 %v4290
        %4292 = vmatprep.subr.mxu0 0.0
        %v4293 = vand.u32 %v4264, 4294901760
        %4294 = vmatpush1.msra.mxu0 %v4293
        %4295 = vmatprep.subr.mxu0 0.0
        %v4296 = vand.u32 %v4265, 4294901760
        %4297 = vmatpush1.msra.mxu0 %v4296
        %4298 = vmatprep.subr.mxu0 0.0
        %v4299 = vand.u32 %v4266, 4294901760
        %4300 = vmatpush1.msra.mxu0 %v4299
        %4301 = vmatprep.subr.mxu0 0.0
        %v4302 = vand.u32 %v4267, 4294901760
        %4303 = vmatpush1.msra.mxu0 %v4302
        %4304 = vmatprep.subr.mxu0 0.0
        %v4305 = vand.u32 %v4268, 4294901760
        %4306 = vmatpush1.msra.mxu0 %v4305
        %4307 = vmatprep.subr.mxu0 0.0
        %v4308 = vand.u32 %v4269, 4294901760
        %4309 = vmatpush1.msra.mxu0 %v4308
        %4310 = vmatprep.subr.mxu0 0.0
        %v4311 = vand.u32 %v4270, 4294901760
        %4312 = vmatpush1.msra.mxu0 %v4311
        %4313 = vmatprep.subr.mxu0 0.0
        %v4314 = vand.u32 %v4271, 4294901760
        %4315 = vmatpush1.msra.mxu0 %v4314
        %4316 = vmatprep.subr.mxu0 0.0
        %v4317 = vand.u32 %v4272, 4294901760
        %4318 = vmatpush1.msra.mxu0 %v4317
        %4319 = vmatprep.subr.mxu0 0.0
        %v4320 = vand.u32 %v4273, 4294901760
        %4321 = vmatpush1.msra.mxu0 %v4320
        %4322 = vmatprep.subr.mxu0 0.0
        %4323 = vmatpush1.msra.mxu0 0.0
        %4324 = vmatprep.subr.mxu0 0.0
        %4325 = vmatpush1.msra.mxu0 0.0
        %4326 = vmatprep.subr.mxu0 0.0
        %4327 = vmatpush1.msra.mxu0 0.0
        %4328 = vmatprep.subr.mxu0 0.0
        %4329 = vmatpush1.msra.mxu0 0.0
        %4330 = vmatprep.subr.mxu0 0.0
        %4331 = vmatpush1.msra.mxu0 0.0
        %4332 = vmatprep.subr.mxu0 0.0
        %4333 = vmatpush1.msra.mxu0 0.0
        %4334 = vmatprep.subr.mxu0 0.0
        %4335 = vmatpush1.msra.mxu0 0.0
        %4336 = vmatprep.subr.mxu0 0.0
        %4337 = vmatpush1.msra.mxu0 0.0
        %4338 = vmatprep.subr.mxu0 0.0
        %4339 = vmatpush1.msra.mxu0 0.0
        %4340 = vmatprep.subr.mxu0 0.0
        %4341 = vmatpush1.msra.mxu0 0.0
        %4342 = vmatprep.subr.mxu0 0.0
        %4343 = vmatpush1.msra.mxu0 0.0
        %4344 = vmatprep.subr.mxu0 0.0
        %4345 = vmatpush1.msra.mxu0 0.0
        %4346 = vmatprep.subr.mxu0 0.0
        %4347 = vmatpush1.msra.mxu0 0.0
        %4348 = vmatprep.subr.mxu0 0.0
        %4349 = vmatpush1.msra.mxu0 0.0
        %4350 = vmatprep.subr.mxu0 0.0
        %4351 = vmatpush1.msra.mxu0 0.0
        %4352 = vmatprep.subr.mxu0 0.0
        %4353 = vmatpush1.msra.mxu0 0.0
        %4354 = vmatprep.mubr.f32.mxu0 0.0
        %v4355 = vand.u32 %v4241, 4294901760
        %v4356 = vsub.f32 %v4241, %v4355
        %v4357 = vand.u32 %v4356, 4294901760
        %v4358 = vsub.f32 %v4356, %v4357
        %v4359 = vand.u32 %v4358, 4294901760
        %4360 = vmatmul.mubr.f32.gmra.mrb[0].mxu0 %v4359
        %v4361 = vpop.f32.mrb[0].mxu0
        %v4362 = vadd.f32 0.0, %v4361
        %v4363 = vpop.f32.mrb[0].mxu0
        %4364 = vmatprep.mubr.f32.mxu0 0.0
        %v4365 = vand.u32 %v4242, 4294901760
        %v4366 = vsub.f32 %v4242, %v4365
        %v4367 = vand.u32 %v4366, 4294901760
        %v4368 = vsub.f32 %v4366, %v4367
        %v4369 = vand.u32 %v4368, 4294901760
        %4370 = vmatmul.mubr.f32.gmra.mrb[0].mxu0 %v4369
        %v4371 = vpop.f32.mrb[0].mxu0
        %v4372 = vadd.f32 0.0, %v4371
        %v4373 = vpop.f32.mrb[0].mxu0
        %4374 = vmatprep.mubr.f32.mxu0 0.0
        %v4375 = vand.u32 %v4243, 4294901760
        %v4376 = vsub.f32 %v4243, %v4375
        %v4377 = vand.u32 %v4376, 4294901760
        %v4378 = vsub.f32 %v4376, %v4377
        %v4379 = vand.u32 %v4378, 4294901760
        %4380 = vmatmul.mubr.f32.gmra.mrb[0].mxu0 %v4379
        %v4381 = vpop.f32.mrb[0].mxu0
        %v4382 = vadd.f32 0.0, %v4381
        %v4383 = vpop.f32.mrb[0].mxu0
        %4384 = vmatprep.mubr.f32.mxu0 0.0
        %v4385 = vand.u32 %v4244, 4294901760
        %v4386 = vsub.f32 %v4244, %v4385
        %v4387 = vand.u32 %v4386, 4294901760
        %v4388 = vsub.f32 %v4386, %v4387
        %v4389 = vand.u32 %v4388, 4294901760
        %4390 = vmatmul.mubr.f32.gmra.mrb[0].mxu0 %v4389
        %v4391 = vpop.f32.mrb[0].mxu0
        %v4392 = vadd.f32 0.0, %v4391
        %v4393 = vpop.f32.mrb[0].mxu0
        %4394 = vmatprep.mubr.f32.mxu0 0.0
        %v4395 = vand.u32 %v4245, 4294901760
        %v4396 = vsub.f32 %v4245, %v4395
        %v4397 = vand.u32 %v4396, 4294901760
        %v4398 = vsub.f32 %v4396, %v4397
        %v4399 = vand.u32 %v4398, 4294901760
        %4400 = vmatmul.mubr.f32.gmra.mrb[0].mxu0 %v4399
        %v4401 = vpop.f32.mrb[0].mxu0
        %v4402 = vadd.f32 0.0, %v4401
        %v4403 = vpop.f32.mrb[0].mxu0
        %4404 = vmatprep.mubr.f32.mxu0 0.0
        %v4405 = vand.u32 %v4246, 4294901760
        %v4406 = vsub.f32 %v4246, %v4405
        %v4407 = vand.u32 %v4406, 4294901760
        %v4408 = vsub.f32 %v4406, %v4407
        %v4409 = vand.u32 %v4408, 4294901760
        %4410 = vmatmul.mubr.f32.gmra.mrb[0].mxu0 %v4409
        %v4411 = vpop.f32.mrb[0].mxu0
        %v4412 = vadd.f32 0.0, %v4411
        %v4413 = vpop.f32.mrb[0].mxu0
        %4414 = vmatprep.mubr.f32.mxu0 0.0
        %v4415 = vand.u32 %v4247, 4294901760
        %v4416 = vsub.f32 %v4247, %v4415
        %v4417 = vand.u32 %v4416, 4294901760
        %v4418 = vsub.f32 %v4416, %v4417
        %v4419 = vand.u32 %v4418, 4294901760
        %4420 = vmatmul.mubr.f32.gmra.mrb[0].mxu0 %v4419
        %v4421 = vpop.f32.mrb[0].mxu0
        %v4422 = vadd.f32 0.0, %v4421
        %v4423 = vpop.f32.mrb[0].mxu0
        %4424 = vmatprep.mubr.f32.mxu0 0.0
        %v4425 = vand.u32 %v4248, 4294901760
        %v4426 = vsub.f32 %v4248, %v4425
        %v4427 = vand.u32 %v4426, 4294901760
        %v4428 = vsub.f32 %v4426, %v4427
        %v4429 = vand.u32 %v4428, 4294901760
        %4430 = vmatmul.mubr.f32.gmra.mrb[0].mxu0 %v4429
        %v4431 = vpop.f32.mrb[0].mxu0
        %v4432 = vadd.f32 0.0, %v4431
        %v4433 = vpop.f32.mrb[0].mxu0
        %4434 = vmatprep.mubr.f32.mxu0 0.0
        %v4435 = vand.u32 %v4249, 4294901760
        %v4436 = vsub.f32 %v4249, %v4435
        %v4437 = vand.u32 %v4436, 4294901760
        %v4438 = vsub.f32 %v4436, %v4437
        %v4439 = vand.u32 %v4438, 4294901760
        %4440 = vmatmul.mubr.f32.gmra.mrb[0].mxu0 %v4439
        %v4441 = vpop.f32.mrb[0].mxu0
        %v4442 = vadd.f32 0.0, %v4441
        %v4443 = vpop.f32.mrb[0].mxu0
        %4444 = vmatprep.mubr.f32.mxu0 0.0
        %v4445 = vand.u32 %v4250, 4294901760
        %v4446 = vsub.f32 %v4250, %v4445
        %v4447 = vand.u32 %v4446, 4294901760
        %v4448 = vsub.f32 %v4446, %v4447
        %v4449 = vand.u32 %v4448, 4294901760
        %4450 = vmatmul.mubr.f32.gmra.mrb[0].mxu0 %v4449
        %v4451 = vpop.f32.mrb[0].mxu0
        %v4452 = vadd.f32 0.0, %v4451
        %v4453 = vpop.f32.mrb[0].mxu0
        %4454 = vmatprep.mubr.f32.mxu0 0.0
        %v4455 = vand.u32 %v4251, 4294901760
        %v4456 = vsub.f32 %v4251, %v4455
        %v4457 = vand.u32 %v4456, 4294901760
        %v4458 = vsub.f32 %v4456, %v4457
        %v4459 = vand.u32 %v4458, 4294901760
        %4460 = vmatmul.mubr.f32.gmra.mrb[0].mxu0 %v4459
        %v4461 = vpop.f32.mrb[0].mxu0
        %v4462 = vadd.f32 0.0, %v4461
        %v4463 = vpop.f32.mrb[0].mxu0
        %4464 = vmatprep.mubr.f32.mxu0 0.0
        %v4465 = vand.u32 %v4252, 4294901760
        %v4466 = vsub.f32 %v4252, %v4465
        %v4467 = vand.u32 %v4466, 4294901760
        %v4468 = vsub.f32 %v4466, %v4467
        %v4469 = vand.u32 %v4468, 4294901760
        %4470 = vmatmul.mubr.f32.gmra.mrb[0].mxu0 %v4469
        %v4471 = vpop.f32.mrb[0].mxu0
        %v4472 = vadd.f32 0.0, %v4471
        %v4473 = vpop.f32.mrb[0].mxu0
        %4474 = vmatprep.mubr.f32.mxu0 0.0
        %v4475 = vand.u32 %v4253, 4294901760
        %v4476 = vsub.f32 %v4253, %v4475
        %v4477 = vand.u32 %v4476, 4294901760
        %v4478 = vsub.f32 %v4476, %v4477
        %v4479 = vand.u32 %v4478, 4294901760
        %4480 = vmatmul.mubr.f32.gmra.mrb[0].mxu0 %v4479
        %v4481 = vpop.f32.mrb[0].mxu0
        %v4482 = vadd.f32 0.0, %v4481
        %v4483 = vpop.f32.mrb[0].mxu0
        %4484 = vmatprep.mubr.f32.mxu0 0.0
        %v4485 = vand.u32 %v4254, 4294901760
        %v4486 = vsub.f32 %v4254, %v4485
        %v4487 = vand.u32 %v4486, 4294901760
        %v4488 = vsub.f32 %v4486, %v4487
        %v4489 = vand.u32 %v4488, 4294901760
        %4490 = vmatmul.mubr.f32.gmra.mrb[0].mxu0 %v4489
        %v4491 = vpop.f32.mrb[0].mxu0
        %v4492 = vadd.f32 0.0, %v4491
        %v4493 = vpop.f32.mrb[0].mxu0
        %4494 = vmatprep.mubr.f32.mxu0 0.0
        %v4495 = vand.u32 %v4255, 4294901760
        %v4496 = vsub.f32 %v4255, %v4495
        %v4497 = vand.u32 %v4496, 4294901760
        %v4498 = vsub.f32 %v4496, %v4497
        %v4499 = vand.u32 %v4498, 4294901760
        %4500 = vmatmul.mubr.f32.gmra.mrb[0].mxu0 %v4499
        %v4501 = vpop.f32.mrb[0].mxu0
        %v4502 = vadd.f32 0.0, %v4501
        %v4503 = vpop.f32.mrb[0].mxu0
        %4504 = vmatprep.mubr.f32.mxu0 0.0
        %v4505 = vand.u32 %v4256, 4294901760
        %v4506 = vsub.f32 %v4256, %v4505
        %v4507 = vand.u32 %v4506, 4294901760
        %v4508 = vsub.f32 %v4506, %v4507
        %v4509 = vand.u32 %v4508, 4294901760
        %4510 = vmatmul.mubr.f32.gmra.mrb[0].mxu0 %v4509
        %v4511 = vpop.f32.mrb[0].mxu0
        %v4512 = vadd.f32 0.0, %v4511
        %v4513 = vpop.f32.mrb[0].mxu0
        %4514 = vdwg.mxu0
        %4515 = vmatprep.subr.mxu0 0.0
        %v4516 = vand.u32 %v4258, 4294901760
        %v4517 = vsub.f32 %v4258, %v4516
        %v4518 = vand.u32 %v4517, 4294901760
        %v4519 = vsub.f32 %v4517, %v4518
        %v4520 = vand.u32 %v4519, 4294901760
        %4521 = vmatpush1.msra.mxu0 %v4520
        %4522 = vmatprep.subr.mxu0 0.0
        %v4523 = vand.u32 %v4259, 4294901760
        %v4524 = vsub.f32 %v4259, %v4523
        %v4525 = vand.u32 %v4524, 4294901760
        %v4526 = vsub.f32 %v4524, %v4525
        %v4527 = vand.u32 %v4526, 4294901760
        %4528 = vmatpush1.msra.mxu0 %v4527
        %4529 = vmatprep.subr.mxu0 0.0
        %v4530 = vand.u32 %v4260, 4294901760
        %v4531 = vsub.f32 %v4260, %v4530
        %v4532 = vand.u32 %v4531, 4294901760
        %v4533 = vsub.f32 %v4531, %v4532
        %v4534 = vand.u32 %v4533, 4294901760
        %4535 = vmatpush1.msra.mxu0 %v4534
        %4536 = vmatprep.subr.mxu0 0.0
        %v4537 = vand.u32 %v4261, 4294901760
        %v4538 = vsub.f32 %v4261, %v4537
        %v4539 = vand.u32 %v4538, 4294901760
        %v4540 = vsub.f32 %v4538, %v4539
        %v4541 = vand.u32 %v4540, 4294901760
        %4542 = vmatpush1.msra.mxu0 %v4541
        %4543 = vmatprep.subr.mxu0 0.0
        %v4544 = vand.u32 %v4262, 4294901760
        %v4545 = vsub.f32 %v4262, %v4544
        %v4546 = vand.u32 %v4545, 4294901760
        %v4547 = vsub.f32 %v4545, %v4546
        %v4548 = vand.u32 %v4547, 4294901760
        %4549 = vmatpush1.msra.mxu0 %v4548
        %4550 = vmatprep.subr.mxu0 0.0
        %v4551 = vand.u32 %v4263, 4294901760
        %v4552 = vsub.f32 %v4263, %v4551
        %v4553 = vand.u32 %v4552, 4294901760
        %v4554 = vsub.f32 %v4552, %v4553
        %v4555 = vand.u32 %v4554, 4294901760
        %4556 = vmatpush1.msra.mxu0 %v4555
        %4557 = vmatprep.subr.mxu0 0.0
        %v4558 = vand.u32 %v4264, 4294901760
        %v4559 = vsub.f32 %v4264, %v4558
        %v4560 = vand.u32 %v4559, 4294901760
        %v4561 = vsub.f32 %v4559, %v4560
        %v4562 = vand.u32 %v4561, 4294901760
        %4563 = vmatpush1.msra.mxu0 %v4562
        %4564 = vmatprep.subr.mxu0 0.0
        %v4565 = vand.u32 %v4265, 4294901760
        %v4566 = vsub.f32 %v4265, %v4565
        %v4567 = vand.u32 %v4566, 4294901760
        %v4568 = vsub.f32 %v4566, %v4567
        %v4569 = vand.u32 %v4568, 4294901760
        %4570 = vmatpush1.msra.mxu0 %v4569
        %4571 = vmatprep.subr.mxu0 0.0
        %v4572 = vand.u32 %v4266, 4294901760
        %v4573 = vsub.f32 %v4266, %v4572
        %v4574 = vand.u32 %v4573, 4294901760
        %v4575 = vsub.f32 %v4573, %v4574
        %v4576 = vand.u32 %v4575, 4294901760
        %4577 = vmatpush1.msra.mxu0 %v4576
        %4578 = vmatprep.subr.mxu0 0.0
        %v4579 = vand.u32 %v4267, 4294901760
        %v4580 = vsub.f32 %v4267, %v4579
        %v4581 = vand.u32 %v4580, 4294901760
        %v4582 = vsub.f32 %v4580, %v4581
        %v4583 = vand.u32 %v4582, 4294901760
        %4584 = vmatpush1.msra.mxu0 %v4583
        %4585 = vmatprep.subr.mxu0 0.0
        %v4586 = vand.u32 %v4268, 4294901760
        %v4587 = vsub.f32 %v4268, %v4586
        %v4588 = vand.u32 %v4587, 4294901760
        %v4589 = vsub.f32 %v4587, %v4588
        %v4590 = vand.u32 %v4589, 4294901760
        %4591 = vmatpush1.msra.mxu0 %v4590
        %4592 = vmatprep.subr.mxu0 0.0
        %v4593 = vand.u32 %v4269, 4294901760
        %v4594 = vsub.f32 %v4269, %v4593
        %v4595 = vand.u32 %v4594, 4294901760
        %v4596 = vsub.f32 %v4594, %v4595
        %v4597 = vand.u32 %v4596, 4294901760
        %4598 = vmatpush1.msra.mxu0 %v4597
        %4599 = vmatprep.subr.mxu0 0.0
        %v4600 = vand.u32 %v4270, 4294901760
        %v4601 = vsub.f32 %v4270, %v4600
        %v4602 = vand.u32 %v4601, 4294901760
        %v4603 = vsub.f32 %v4601, %v4602
        %v4604 = vand.u32 %v4603, 4294901760
        %4605 = vmatpush1.msra.mxu0 %v4604
        %4606 = vmatprep.subr.mxu0 0.0
        %v4607 = vand.u32 %v4271, 4294901760
        %v4608 = vsub.f32 %v4271, %v4607
        %v4609 = vand.u32 %v4608, 4294901760
        %v4610 = vsub.f32 %v4608, %v4609
        %v4611 = vand.u32 %v4610, 4294901760
        %4612 = vmatpush1.msra.mxu0 %v4611
        %4613 = vmatprep.subr.mxu0 0.0
        %v4614 = vand.u32 %v4272, 4294901760
        %v4615 = vsub.f32 %v4272, %v4614
        %v4616 = vand.u32 %v4615, 4294901760
        %v4617 = vsub.f32 %v4615, %v4616
        %v4618 = vand.u32 %v4617, 4294901760
        %4619 = vmatpush1.msra.mxu0 %v4618
        %4620 = vmatprep.subr.mxu0 0.0
        %v4621 = vand.u32 %v4273, 4294901760
        %v4622 = vsub.f32 %v4273, %v4621
        %v4623 = vand.u32 %v4622, 4294901760
        %v4624 = vsub.f32 %v4622, %v4623
        %v4625 = vand.u32 %v4624, 4294901760
        %4626 = vmatpush1.msra.mxu0 %v4625
        %4627 = vmatprep.subr.mxu0 0.0
        %4628 = vmatpush1.msra.mxu0 0.0
        %4629 = vmatprep.subr.mxu0 0.0
        %4630 = vmatpush1.msra.mxu0 0.0
        %4631 = vmatprep.subr.mxu0 0.0
        %4632 = vmatpush1.msra.mxu0 0.0
        %4633 = vmatprep.subr.mxu0 0.0
        %4634 = vmatpush1.msra.mxu0 0.0
        %4635 = vmatprep.subr.mxu0 0.0
        %4636 = vmatpush1.msra.mxu0 0.0
        %4637 = vmatprep.subr.mxu0 0.0
        %4638 = vmatpush1.msra.mxu0 0.0
        %4639 = vmatprep.subr.mxu0 0.0
        %4640 = vmatpush1.msra.mxu0 0.0
        %4641 = vmatprep.subr.mxu0 0.0
        %4642 = vmatpush1.msra.mxu0 0.0
        %4643 = vmatprep.subr.mxu0 0.0
        %4644 = vmatpush1.msra.mxu0 0.0
        %4645 = vmatprep.subr.mxu0 0.0
        %4646 = vmatpush1.msra.mxu0 0.0
        %4647 = vmatprep.subr.mxu0 0.0
        %4648 = vmatpush1.msra.mxu0 0.0
        %4649 = vmatprep.subr.mxu0 0.0
        %4650 = vmatpush1.msra.mxu0 0.0
        %4651 = vmatprep.subr.mxu0 0.0
        %4652 = vmatpush1.msra.mxu0 0.0
        %4653 = vmatprep.subr.mxu0 0.0
        %4654 = vmatpush1.msra.mxu0 0.0
        %4655 = vmatprep.subr.mxu0 0.0
        %4656 = vmatpush1.msra.mxu0 0.0
        %4657 = vmatprep.subr.mxu0 0.0
        %4658 = vmatpush1.msra.mxu0 0.0
        %4659 = vmatprep.mubr.f32.mxu0 0.0
        %v4660 = vand.u32 %v4241, 4294901760
        %4661 = vmatmul.mubr.f32.gmra.mrb[0].mxu0 %v4660
        %v4662 = vpop.f32.mrb[0].mxu0
        %v4663 = vadd.f32 %v4362, %v4662
        %v4664 = vpop.f32.mrb[0].mxu0
        %4665 = vmatprep.mubr.f32.mxu0 0.0
        %v4666 = vand.u32 %v4242, 4294901760
        %4667 = vmatmul.mubr.f32.gmra.mrb[0].mxu0 %v4666
        %v4668 = vpop.f32.mrb[0].mxu0
        %v4669 = vadd.f32 %v4372, %v4668
        %v4670 = vpop.f32.mrb[0].mxu0
        %4671 = vmatprep.mubr.f32.mxu0 0.0
        %v4672 = vand.u32 %v4243, 4294901760
        %4673 = vmatmul.mubr.f32.gmra.mrb[0].mxu0 %v4672
        %v4674 = vpop.f32.mrb[0].mxu0
        %v4675 = vadd.f32 %v4382, %v4674
        %v4676 = vpop.f32.mrb[0].mxu0
        %4677 = vmatprep.mubr.f32.mxu0 0.0
        %v4678 = vand.u32 %v4244, 4294901760
        %4679 = vmatmul.mubr.f32.gmra.mrb[0].mxu0 %v4678
        %v4680 = vpop.f32.mrb[0].mxu0
        %v4681 = vadd.f32 %v4392, %v4680
        %v4682 = vpop.f32.mrb[0].mxu0
        %4683 = vmatprep.mubr.f32.mxu0 0.0
        %v4684 = vand.u32 %v4245, 4294901760
        %4685 = vmatmul.mubr.f32.gmra.mrb[0].mxu0 %v4684
        %v4686 = vpop.f32.mrb[0].mxu0
        %v4687 = vadd.f32 %v4402, %v4686
        %v4688 = vpop.f32.mrb[0].mxu0
        %4689 = vmatprep.mubr.f32.mxu0 0.0
        %v4690 = vand.u32 %v4246, 4294901760
        %4691 = vmatmul.mubr.f32.gmra.mrb[0].mxu0 %v4690
        %v4692 = vpop.f32.mrb[0].mxu0
        %v4693 = vadd.f32 %v4412, %v4692
        %v4694 = vpop.f32.mrb[0].mxu0
        %4695 = vmatprep.mubr.f32.mxu0 0.0
        %v4696 = vand.u32 %v4247, 4294901760
        %4697 = vmatmul.mubr.f32.gmra.mrb[0].mxu0 %v4696
        %v4698 = vpop.f32.mrb[0].mxu0
        %v4699 = vadd.f32 %v4422, %v4698
        %v4700 = vpop.f32.mrb[0].mxu0
        %4701 = vmatprep.mubr.f32.mxu0 0.0
        %v4702 = vand.u32 %v4248, 4294901760
        %4703 = vmatmul.mubr.f32.gmra.mrb[0].mxu0 %v4702
        %v4704 = vpop.f32.mrb[0].mxu0
        %v4705 = vadd.f32 %v4432, %v4704
        %v4706 = vpop.f32.mrb[0].mxu0
        %4707 = vmatprep.mubr.f32.mxu0 0.0
        %v4708 = vand.u32 %v4249, 4294901760
        %4709 = vmatmul.mubr.f32.gmra.mrb[0].mxu0 %v4708
        %v4710 = vpop.f32.mrb[0].mxu0
        %v4711 = vadd.f32 %v4442, %v4710
        %v4712 = vpop.f32.mrb[0].mxu0
        %4713 = vmatprep.mubr.f32.mxu0 0.0
        %v4714 = vand.u32 %v4250, 4294901760
        %4715 = vmatmul.mubr.f32.gmra.mrb[0].mxu0 %v4714
        %v4716 = vpop.f32.mrb[0].mxu0
        %v4717 = vadd.f32 %v4452, %v4716
        %v4718 = vpop.f32.mrb[0].mxu0
        %4719 = vmatprep.mubr.f32.mxu0 0.0
        %v4720 = vand.u32 %v4251, 4294901760
        %4721 = vmatmul.mubr.f32.gmra.mrb[0].mxu0 %v4720
        %v4722 = vpop.f32.mrb[0].mxu0
        %v4723 = vadd.f32 %v4462, %v4722
        %v4724 = vpop.f32.mrb[0].mxu0
        %4725 = vmatprep.mubr.f32.mxu0 0.0
        %v4726 = vand.u32 %v4252, 4294901760
        %4727 = vmatmul.mubr.f32.gmra.mrb[0].mxu0 %v4726
        %v4728 = vpop.f32.mrb[0].mxu0
        %v4729 = vadd.f32 %v4472, %v4728
        %v4730 = vpop.f32.mrb[0].mxu0
        %4731 = vmatprep.mubr.f32.mxu0 0.0
        %v4732 = vand.u32 %v4253, 4294901760
        %4733 = vmatmul.mubr.f32.gmra.mrb[0].mxu0 %v4732
        %v4734 = vpop.f32.mrb[0].mxu0
        %v4735 = vadd.f32 %v4482, %v4734
        %v4736 = vpop.f32.mrb[0].mxu0
        %4737 = vmatprep.mubr.f32.mxu0 0.0
        %v4738 = vand.u32 %v4254, 4294901760
        %4739 = vmatmul.mubr.f32.gmra.mrb[0].mxu0 %v4738
        %v4740 = vpop.f32.mrb[0].mxu0
        %v4741 = vadd.f32 %v4492, %v4740
        %v4742 = vpop.f32.mrb[0].mxu0
        %4743 = vmatprep.mubr.f32.mxu0 0.0
        %v4744 = vand.u32 %v4255, 4294901760
        %4745 = vmatmul.mubr.f32.gmra.mrb[0].mxu0 %v4744
        %v4746 = vpop.f32.mrb[0].mxu0
        %v4747 = vadd.f32 %v4502, %v4746
        %v4748 = vpop.f32.mrb[0].mxu0
        %4749 = vmatprep.mubr.f32.mxu0 0.0
        %v4750 = vand.u32 %v4256, 4294901760
        %4751 = vmatmul.mubr.f32.gmra.mrb[0].mxu0 %v4750
        %v4752 = vpop.f32.mrb[0].mxu0
        %v4753 = vadd.f32 %v4512, %v4752
        %v4754 = vpop.f32.mrb[0].mxu0
        %4755 = vdwg.mxu0
        %4756 = vmatprep.subr.mxu0 0.0
        %v4757 = vand.u32 %v4258, 4294901760
        %v4758 = vsub.f32 %v4258, %v4757
        %4759 = vmatpush1.msra.mxu0 %v4758
        %4760 = vmatprep.subr.mxu0 0.0
        %v4761 = vand.u32 %v4259, 4294901760
        %v4762 = vsub.f32 %v4259, %v4761
        %4763 = vmatpush1.msra.mxu0 %v4762
        %4764 = vmatprep.subr.mxu0 0.0
        %v4765 = vand.u32 %v4260, 4294901760
        %v4766 = vsub.f32 %v4260, %v4765
        %4767 = vmatpush1.msra.mxu0 %v4766
        %4768 = vmatprep.subr.mxu0 0.0
        %v4769 = vand.u32 %v4261, 4294901760
        %v4770 = vsub.f32 %v4261, %v4769
        %4771 = vmatpush1.msra.mxu0 %v4770
        %4772 = vmatprep.subr.mxu0 0.0
        %v4773 = vand.u32 %v4262, 4294901760
        %v4774 = vsub.f32 %v4262, %v4773
        %4775 = vmatpush1.msra.mxu0 %v4774
        %4776 = vmatprep.subr.mxu0 0.0
        %v4777 = vand.u32 %v4263, 4294901760
        %v4778 = vsub.f32 %v4263, %v4777
        %4779 = vmatpush1.msra.mxu0 %v4778
        %4780 = vmatprep.subr.mxu0 0.0
        %v4781 = vand.u32 %v4264, 4294901760
        %v4782 = vsub.f32 %v4264, %v4781
        %4783 = vmatpush1.msra.mxu0 %v4782
        %4784 = vmatprep.subr.mxu0 0.0
        %v4785 = vand.u32 %v4265, 4294901760
        %v4786 = vsub.f32 %v4265, %v4785
        %4787 = vmatpush1.msra.mxu0 %v4786
        %4788 = vmatprep.subr.mxu0 0.0
        %v4789 = vand.u32 %v4266, 4294901760
        %v4790 = vsub.f32 %v4266, %v4789
        %4791 = vmatpush1.msra.mxu0 %v4790
        %4792 = vmatprep.subr.mxu0 0.0
        %v4793 = vand.u32 %v4267, 4294901760
        %v4794 = vsub.f32 %v4267, %v4793
        %4795 = vmatpush1.msra.mxu0 %v4794
        %4796 = vmatprep.subr.mxu0 0.0
        %v4797 = vand.u32 %v4268, 4294901760
        %v4798 = vsub.f32 %v4268, %v4797
        %4799 = vmatpush1.msra.mxu0 %v4798
        %4800 = vmatprep.subr.mxu0 0.0
        %v4801 = vand.u32 %v4269, 4294901760
        %v4802 = vsub.f32 %v4269, %v4801
        %4803 = vmatpush1.msra.mxu0 %v4802
        %4804 = vmatprep.subr.mxu0 0.0
        %v4805 = vand.u32 %v4270, 4294901760
        %v4806 = vsub.f32 %v4270, %v4805
        %4807 = vmatpush1.msra.mxu0 %v4806
        %4808 = vmatprep.subr.mxu0 0.0
        %v4809 = vand.u32 %v4271, 4294901760
        %v4810 = vsub.f32 %v4271, %v4809
        %4811 = vmatpush1.msra.mxu0 %v4810
        %4812 = vmatprep.subr.mxu0 0.0
        %v4813 = vand.u32 %v4272, 4294901760
        %v4814 = vsub.f32 %v4272, %v4813
        %4815 = vmatpush1.msra.mxu0 %v4814
        %4816 = vmatprep.subr.mxu0 0.0
        %v4817 = vand.u32 %v4273, 4294901760
        %v4818 = vsub.f32 %v4273, %v4817
        %4819 = vmatpush1.msra.mxu0 %v4818
        %4820 = vmatprep.subr.mxu0 0.0
        %4821 = vmatpush1.msra.mxu0 0.0
        %4822 = vmatprep.subr.mxu0 0.0
        %4823 = vmatpush1.msra.mxu0 0.0
        %4824 = vmatprep.subr.mxu0 0.0
        %4825 = vmatpush1.msra.mxu0 0.0
        %4826 = vmatprep.subr.mxu0 0.0
        %4827 = vmatpush1.msra.mxu0 0.0
        %4828 = vmatprep.subr.mxu0 0.0
        %4829 = vmatpush1.msra.mxu0 0.0
        %4830 = vmatprep.subr.mxu0 0.0
        %4831 = vmatpush1.msra.mxu0 0.0
        %4832 = vmatprep.subr.mxu0 0.0
        %4833 = vmatpush1.msra.mxu0 0.0
        %4834 = vmatprep.subr.mxu0 0.0
        %4835 = vmatpush1.msra.mxu0 0.0
        %4836 = vmatprep.subr.mxu0 0.0
        %4837 = vmatpush1.msra.mxu0 0.0
        %4838 = vmatprep.subr.mxu0 0.0
        %4839 = vmatpush1.msra.mxu0 0.0
        %4840 = vmatprep.subr.mxu0 0.0
        %4841 = vmatpush1.msra.mxu0 0.0
        %4842 = vmatprep.subr.mxu0 0.0
        %4843 = vmatpush1.msra.mxu0 0.0
        %4844 = vmatprep.subr.mxu0 0.0
        %4845 = vmatpush1.msra.mxu0 0.0
        %4846 = vmatprep.subr.mxu0 0.0
        %4847 = vmatpush1.msra.mxu0 0.0
        %4848 = vmatprep.subr.mxu0 0.0
        %4849 = vmatpush1.msra.mxu0 0.0
        %4850 = vmatprep.subr.mxu0 0.0
        %4851 = vmatpush1.msra.mxu0 0.0
        %4852 = vmatprep.mubr.f32.mxu0 0.0
        %v4853 = vand.u32 %v4241, 4294901760
        %v4854 = vsub.f32 %v4241, %v4853
        %4855 = vmatmul.mubr.f32.gmra.mrb[0].mxu0 %v4854
        %v4856 = vpop.f32.mrb[0].mxu0
        %v4857 = vadd.f32 %v4663, %v4856
        %v4858 = vpop.f32.mrb[0].mxu0
        %4859 = vmatprep.mubr.f32.mxu0 0.0
        %v4860 = vand.u32 %v4242, 4294901760
        %v4861 = vsub.f32 %v4242, %v4860
        %4862 = vmatmul.mubr.f32.gmra.mrb[0].mxu0 %v4861
        %v4863 = vpop.f32.mrb[0].mxu0
        %v4864 = vadd.f32 %v4669, %v4863
        %v4865 = vpop.f32.mrb[0].mxu0
        %4866 = vmatprep.mubr.f32.mxu0 0.0
        %v4867 = vand.u32 %v4243, 4294901760
        %v4868 = vsub.f32 %v4243, %v4867
        %4869 = vmatmul.mubr.f32.gmra.mrb[0].mxu0 %v4868
        %v4870 = vpop.f32.mrb[0].mxu0
        %v4871 = vadd.f32 %v4675, %v4870
        %v4872 = vpop.f32.mrb[0].mxu0
        %4873 = vmatprep.mubr.f32.mxu0 0.0
        %v4874 = vand.u32 %v4244, 4294901760
        %v4875 = vsub.f32 %v4244, %v4874
        %4876 = vmatmul.mubr.f32.gmra.mrb[0].mxu0 %v4875
        %v4877 = vpop.f32.mrb[0].mxu0
        %v4878 = vadd.f32 %v4681, %v4877
        %v4879 = vpop.f32.mrb[0].mxu0
        %4880 = vmatprep.mubr.f32.mxu0 0.0
        %v4881 = vand.u32 %v4245, 4294901760
        %v4882 = vsub.f32 %v4245, %v4881
        %4883 = vmatmul.mubr.f32.gmra.mrb[0].mxu0 %v4882
        %v4884 = vpop.f32.mrb[0].mxu0
        %v4885 = vadd.f32 %v4687, %v4884
        %v4886 = vpop.f32.mrb[0].mxu0
        %4887 = vmatprep.mubr.f32.mxu0 0.0
        %v4888 = vand.u32 %v4246, 4294901760
        %v4889 = vsub.f32 %v4246, %v4888
        %4890 = vmatmul.mubr.f32.gmra.mrb[0].mxu0 %v4889
        %v4891 = vpop.f32.mrb[0].mxu0
        %v4892 = vadd.f32 %v4693, %v4891
        %v4893 = vpop.f32.mrb[0].mxu0
        %4894 = vmatprep.mubr.f32.mxu0 0.0
        %v4895 = vand.u32 %v4247, 4294901760
        %v4896 = vsub.f32 %v4247, %v4895
        %4897 = vmatmul.mubr.f32.gmra.mrb[0].mxu0 %v4896
        %v4898 = vpop.f32.mrb[0].mxu0
        %v4899 = vadd.f32 %v4699, %v4898
        %v4900 = vpop.f32.mrb[0].mxu0
        %4901 = vmatprep.mubr.f32.mxu0 0.0
        %v4902 = vand.u32 %v4248, 4294901760
        %v4903 = vsub.f32 %v4248, %v4902
        %4904 = vmatmul.mubr.f32.gmra.mrb[0].mxu0 %v4903
        %v4905 = vpop.f32.mrb[0].mxu0
        %v4906 = vadd.f32 %v4705, %v4905
        %v4907 = vpop.f32.mrb[0].mxu0
        %4908 = vmatprep.mubr.f32.mxu0 0.0
        %v4909 = vand.u32 %v4249, 4294901760
        %v4910 = vsub.f32 %v4249, %v4909
        %4911 = vmatmul.mubr.f32.gmra.mrb[0].mxu0 %v4910
        %v4912 = vpop.f32.mrb[0].mxu0
        %v4913 = vadd.f32 %v4711, %v4912
        %v4914 = vpop.f32.mrb[0].mxu0
        %4915 = vmatprep.mubr.f32.mxu0 0.0
        %v4916 = vand.u32 %v4250, 4294901760
        %v4917 = vsub.f32 %v4250, %v4916
        %4918 = vmatmul.mubr.f32.gmra.mrb[0].mxu0 %v4917
        %v4919 = vpop.f32.mrb[0].mxu0
        %v4920 = vadd.f32 %v4717, %v4919
        %v4921 = vpop.f32.mrb[0].mxu0
        %4922 = vmatprep.mubr.f32.mxu0 0.0
        %v4923 = vand.u32 %v4251, 4294901760
        %v4924 = vsub.f32 %v4251, %v4923
        %4925 = vmatmul.mubr.f32.gmra.mrb[0].mxu0 %v4924
        %v4926 = vpop.f32.mrb[0].mxu0
        %v4927 = vadd.f32 %v4723, %v4926
        %v4928 = vpop.f32.mrb[0].mxu0
        %4929 = vmatprep.mubr.f32.mxu0 0.0
        %v4930 = vand.u32 %v4252, 4294901760
        %v4931 = vsub.f32 %v4252, %v4930
        %4932 = vmatmul.mubr.f32.gmra.mrb[0].mxu0 %v4931
        %v4933 = vpop.f32.mrb[0].mxu0
        %v4934 = vadd.f32 %v4729, %v4933
        %v4935 = vpop.f32.mrb[0].mxu0
        %4936 = vmatprep.mubr.f32.mxu0 0.0
        %v4937 = vand.u32 %v4253, 4294901760
        %v4938 = vsub.f32 %v4253, %v4937
        %4939 = vmatmul.mubr.f32.gmra.mrb[0].mxu0 %v4938
        %v4940 = vpop.f32.mrb[0].mxu0
        %v4941 = vadd.f32 %v4735, %v4940
        %v4942 = vpop.f32.mrb[0].mxu0
        %4943 = vmatprep.mubr.f32.mxu0 0.0
        %v4944 = vand.u32 %v4254, 4294901760
        %v4945 = vsub.f32 %v4254, %v4944
        %4946 = vmatmul.mubr.f32.gmra.mrb[0].mxu0 %v4945
        %v4947 = vpop.f32.mrb[0].mxu0
        %v4948 = vadd.f32 %v4741, %v4947
        %v4949 = vpop.f32.mrb[0].mxu0
        %4950 = vmatprep.mubr.f32.mxu0 0.0
        %v4951 = vand.u32 %v4255, 4294901760
        %v4952 = vsub.f32 %v4255, %v4951
        %4953 = vmatmul.mubr.f32.gmra.mrb[0].mxu0 %v4952
        %v4954 = vpop.f32.mrb[0].mxu0
        %v4955 = vadd.f32 %v4747, %v4954
        %v4956 = vpop.f32.mrb[0].mxu0
        %4957 = vmatprep.mubr.f32.mxu0 0.0
        %v4958 = vand.u32 %v4256, 4294901760
        %v4959 = vsub.f32 %v4256, %v4958
        %4960 = vmatmul.mubr.f32.gmra.mrb[0].mxu0 %v4959
        %v4961 = vpop.f32.mrb[0].mxu0
        %v4962 = vadd.f32 %v4753, %v4961
        %v4963 = vpop.f32.mrb[0].mxu0
        %4964 = vdwg.mxu0
        %4965 = vmatprep.subr.mxu0 0.0
        %v4966 = vand.u32 %v4258, 4294901760
        %4967 = vmatpush1.msra.mxu0 %v4966
        %4968 = vmatprep.subr.mxu0 0.0
        %v4969 = vand.u32 %v4259, 4294901760
        %4970 = vmatpush1.msra.mxu0 %v4969
        %4971 = vmatprep.subr.mxu0 0.0
        %v4972 = vand.u32 %v4260, 4294901760
        %4973 = vmatpush1.msra.mxu0 %v4972
        %4974 = vmatprep.subr.mxu0 0.0
        %v4975 = vand.u32 %v4261, 4294901760
        %4976 = vmatpush1.msra.mxu0 %v4975
        %4977 = vmatprep.subr.mxu0 0.0
        %v4978 = vand.u32 %v4262, 4294901760
        %4979 = vmatpush1.msra.mxu0 %v4978
        %4980 = vmatprep.subr.mxu0 0.0
        %v4981 = vand.u32 %v4263, 4294901760
        %4982 = vmatpush1.msra.mxu0 %v4981
        %4983 = vmatprep.subr.mxu0 0.0
        %v4984 = vand.u32 %v4264, 4294901760
        %4985 = vmatpush1.msra.mxu0 %v4984
        %4986 = vmatprep.subr.mxu0 0.0
        %v4987 = vand.u32 %v4265, 4294901760
        %4988 = vmatpush1.msra.mxu0 %v4987
        %4989 = vmatprep.subr.mxu0 0.0
        %v4990 = vand.u32 %v4266, 4294901760
        %4991 = vmatpush1.msra.mxu0 %v4990
        %4992 = vmatprep.subr.mxu0 0.0
        %v4993 = vand.u32 %v4267, 4294901760
        %4994 = vmatpush1.msra.mxu0 %v4993
        %4995 = vmatprep.subr.mxu0 0.0
        %v4996 = vand.u32 %v4268, 4294901760
        %4997 = vmatpush1.msra.mxu0 %v4996
        %4998 = vmatprep.subr.mxu0 0.0
        %v4999 = vand.u32 %v4269, 4294901760
        %5000 = vmatpush1.msra.mxu0 %v4999
        %5001 = vmatprep.subr.mxu0 0.0
        %v5002 = vand.u32 %v4270, 4294901760
        %5003 = vmatpush1.msra.mxu0 %v5002
        %5004 = vmatprep.subr.mxu0 0.0
        %v5005 = vand.u32 %v4271, 4294901760
        %5006 = vmatpush1.msra.mxu0 %v5005
        %5007 = vmatprep.subr.mxu0 0.0
        %v5008 = vand.u32 %v4272, 4294901760
        %5009 = vmatpush1.msra.mxu0 %v5008
        %5010 = vmatprep.subr.mxu0 0.0
        %v5011 = vand.u32 %v4273, 4294901760
        %5012 = vmatpush1.msra.mxu0 %v5011
        %5013 = vmatprep.subr.mxu0 0.0
        %5014 = vmatpush1.msra.mxu0 0.0
        %5015 = vmatprep.subr.mxu0 0.0
        %5016 = vmatpush1.msra.mxu0 0.0
        %5017 = vmatprep.subr.mxu0 0.0
        %5018 = vmatpush1.msra.mxu0 0.0
        %5019 = vmatprep.subr.mxu0 0.0
        %5020 = vmatpush1.msra.mxu0 0.0
        %5021 = vmatprep.subr.mxu0 0.0
        %5022 = vmatpush1.msra.mxu0 0.0
        %5023 = vmatprep.subr.mxu0 0.0
        %5024 = vmatpush1.msra.mxu0 0.0
        %5025 = vmatprep.subr.mxu0 0.0
        %5026 = vmatpush1.msra.mxu0 0.0
        %5027 = vmatprep.subr.mxu0 0.0
        %5028 = vmatpush1.msra.mxu0 0.0
        %5029 = vmatprep.subr.mxu0 0.0
        %5030 = vmatpush1.msra.mxu0 0.0
        %5031 = vmatprep.subr.mxu0 0.0
        %5032 = vmatpush1.msra.mxu0 0.0
        %5033 = vmatprep.subr.mxu0 0.0
        %5034 = vmatpush1.msra.mxu0 0.0
        %5035 = vmatprep.subr.mxu0 0.0
        %5036 = vmatpush1.msra.mxu0 0.0
        %5037 = vmatprep.subr.mxu0 0.0
        %5038 = vmatpush1.msra.mxu0 0.0
        %5039 = vmatprep.subr.mxu0 0.0
        %5040 = vmatpush1.msra.mxu0 0.0
        %5041 = vmatprep.subr.mxu0 0.0
        %5042 = vmatpush1.msra.mxu0 0.0
        %5043 = vmatprep.subr.mxu0 0.0
        %5044 = vmatpush1.msra.mxu0 0.0
        %5045 = vmatprep.mubr.f32.mxu0 0.0
        %v5046 = vand.u32 %v4241, 4294901760
        %v5047 = vsub.f32 %v4241, %v5046
        %v5048 = vand.u32 %v5047, 4294901760
        %5049 = vmatmul.mubr.f32.gmra.mrb[0].mxu0 %v5048
        %v5050 = vpop.f32.mrb[0].mxu0
        %v5051 = vadd.f32 %v4857, %v5050
        %v5052 = vpop.f32.mrb[0].mxu0
        %5053 = vmatprep.mubr.f32.mxu0 0.0
        %v5054 = vand.u32 %v4242, 4294901760
        %v5055 = vsub.f32 %v4242, %v5054
        %v5056 = vand.u32 %v5055, 4294901760
        %5057 = vmatmul.mubr.f32.gmra.mrb[0].mxu0 %v5056
        %v5058 = vpop.f32.mrb[0].mxu0
        %v5059 = vadd.f32 %v4864, %v5058
        %v5060 = vpop.f32.mrb[0].mxu0
        %5061 = vmatprep.mubr.f32.mxu0 0.0
        %v5062 = vand.u32 %v4243, 4294901760
        %v5063 = vsub.f32 %v4243, %v5062
        %v5064 = vand.u32 %v5063, 4294901760
        %5065 = vmatmul.mubr.f32.gmra.mrb[0].mxu0 %v5064
        %v5066 = vpop.f32.mrb[0].mxu0
        %v5067 = vadd.f32 %v4871, %v5066
        %v5068 = vpop.f32.mrb[0].mxu0
        %5069 = vmatprep.mubr.f32.mxu0 0.0
        %v5070 = vand.u32 %v4244, 4294901760
        %v5071 = vsub.f32 %v4244, %v5070
        %v5072 = vand.u32 %v5071, 4294901760
        %5073 = vmatmul.mubr.f32.gmra.mrb[0].mxu0 %v5072
        %v5074 = vpop.f32.mrb[0].mxu0
        %v5075 = vadd.f32 %v4878, %v5074
        %v5076 = vpop.f32.mrb[0].mxu0
        %5077 = vmatprep.mubr.f32.mxu0 0.0
        %v5078 = vand.u32 %v4245, 4294901760
        %v5079 = vsub.f32 %v4245, %v5078
        %v5080 = vand.u32 %v5079, 4294901760
        %5081 = vmatmul.mubr.f32.gmra.mrb[0].mxu0 %v5080
        %v5082 = vpop.f32.mrb[0].mxu0
        %v5083 = vadd.f32 %v4885, %v5082
        %v5084 = vpop.f32.mrb[0].mxu0
        %5085 = vmatprep.mubr.f32.mxu0 0.0
        %v5086 = vand.u32 %v4246, 4294901760
        %v5087 = vsub.f32 %v4246, %v5086
        %v5088 = vand.u32 %v5087, 4294901760
        %5089 = vmatmul.mubr.f32.gmra.mrb[0].mxu0 %v5088
        %v5090 = vpop.f32.mrb[0].mxu0
        %v5091 = vadd.f32 %v4892, %v5090
        %v5092 = vpop.f32.mrb[0].mxu0
        %5093 = vmatprep.mubr.f32.mxu0 0.0
        %v5094 = vand.u32 %v4247, 4294901760
        %v5095 = vsub.f32 %v4247, %v5094
        %v5096 = vand.u32 %v5095, 4294901760
        %5097 = vmatmul.mubr.f32.gmra.mrb[0].mxu0 %v5096
        %v5098 = vpop.f32.mrb[0].mxu0
        %v5099 = vadd.f32 %v4899, %v5098
        %v5100 = vpop.f32.mrb[0].mxu0
        %5101 = vmatprep.mubr.f32.mxu0 0.0
        %v5102 = vand.u32 %v4248, 4294901760
        %v5103 = vsub.f32 %v4248, %v5102
        %v5104 = vand.u32 %v5103, 4294901760
        %5105 = vmatmul.mubr.f32.gmra.mrb[0].mxu0 %v5104
        %v5106 = vpop.f32.mrb[0].mxu0
        %v5107 = vadd.f32 %v4906, %v5106
        %v5108 = vpop.f32.mrb[0].mxu0
        %5109 = vmatprep.mubr.f32.mxu0 0.0
        %v5110 = vand.u32 %v4249, 4294901760
        %v5111 = vsub.f32 %v4249, %v5110
        %v5112 = vand.u32 %v5111, 4294901760
        %5113 = vmatmul.mubr.f32.gmra.mrb[0].mxu0 %v5112
        %v5114 = vpop.f32.mrb[0].mxu0
        %v5115 = vadd.f32 %v4913, %v5114
        %v5116 = vpop.f32.mrb[0].mxu0
        %5117 = vmatprep.mubr.f32.mxu0 0.0
        %v5118 = vand.u32 %v4250, 4294901760
        %v5119 = vsub.f32 %v4250, %v5118
        %v5120 = vand.u32 %v5119, 4294901760
        %5121 = vmatmul.mubr.f32.gmra.mrb[0].mxu0 %v5120
        %v5122 = vpop.f32.mrb[0].mxu0
        %v5123 = vadd.f32 %v4920, %v5122
        %v5124 = vpop.f32.mrb[0].mxu0
        %5125 = vmatprep.mubr.f32.mxu0 0.0
        %v5126 = vand.u32 %v4251, 4294901760
        %v5127 = vsub.f32 %v4251, %v5126
        %v5128 = vand.u32 %v5127, 4294901760
        %5129 = vmatmul.mubr.f32.gmra.mrb[0].mxu0 %v5128
        %v5130 = vpop.f32.mrb[0].mxu0
        %v5131 = vadd.f32 %v4927, %v5130
        %v5132 = vpop.f32.mrb[0].mxu0
        %5133 = vmatprep.mubr.f32.mxu0 0.0
        %v5134 = vand.u32 %v4252, 4294901760
        %v5135 = vsub.f32 %v4252, %v5134
        %v5136 = vand.u32 %v5135, 4294901760
        %5137 = vmatmul.mubr.f32.gmra.mrb[0].mxu0 %v5136
        %v5138 = vpop.f32.mrb[0].mxu0
        %v5139 = vadd.f32 %v4934, %v5138
        %v5140 = vpop.f32.mrb[0].mxu0
        %5141 = vmatprep.mubr.f32.mxu0 0.0
        %v5142 = vand.u32 %v4253, 4294901760
        %v5143 = vsub.f32 %v4253, %v5142
        %v5144 = vand.u32 %v5143, 4294901760
        %5145 = vmatmul.mubr.f32.gmra.mrb[0].mxu0 %v5144
        %v5146 = vpop.f32.mrb[0].mxu0
        %v5147 = vadd.f32 %v4941, %v5146
        %v5148 = vpop.f32.mrb[0].mxu0
        %5149 = vmatprep.mubr.f32.mxu0 0.0
        %v5150 = vand.u32 %v4254, 4294901760
        %v5151 = vsub.f32 %v4254, %v5150
        %v5152 = vand.u32 %v5151, 4294901760
        %5153 = vmatmul.mubr.f32.gmra.mrb[0].mxu0 %v5152
        %v5154 = vpop.f32.mrb[0].mxu0
        %v5155 = vadd.f32 %v4948, %v5154
        %v5156 = vpop.f32.mrb[0].mxu0
        %5157 = vmatprep.mubr.f32.mxu0 0.0
        %v5158 = vand.u32 %v4255, 4294901760
        %v5159 = vsub.f32 %v4255, %v5158
        %v5160 = vand.u32 %v5159, 4294901760
        %5161 = vmatmul.mubr.f32.gmra.mrb[0].mxu0 %v5160
        %v5162 = vpop.f32.mrb[0].mxu0
        %v5163 = vadd.f32 %v4955, %v5162
        %v5164 = vpop.f32.mrb[0].mxu0
        %5165 = vmatprep.mubr.f32.mxu0 0.0
        %v5166 = vand.u32 %v4256, 4294901760
        %v5167 = vsub.f32 %v4256, %v5166
        %v5168 = vand.u32 %v5167, 4294901760
        %5169 = vmatmul.mubr.f32.gmra.mrb[0].mxu0 %v5168
        %v5170 = vpop.f32.mrb[0].mxu0
        %v5171 = vadd.f32 %v4962, %v5170
        %v5172 = vpop.f32.mrb[0].mxu0
        %5173 = vdwg.mxu0
        %5174 = vmatprep.subr.mxu0 0.0
        %v5175 = vand.u32 %v4258, 4294901760
        %v5176 = vsub.f32 %v4258, %v5175
        %v5177 = vand.u32 %v5176, 4294901760
        %5178 = vmatpush1.msra.mxu0 %v5177
        %5179 = vmatprep.subr.mxu0 0.0
        %v5180 = vand.u32 %v4259, 4294901760
        %v5181 = vsub.f32 %v4259, %v5180
        %v5182 = vand.u32 %v5181, 4294901760
        %5183 = vmatpush1.msra.mxu0 %v5182
        %5184 = vmatprep.subr.mxu0 0.0
        %v5185 = vand.u32 %v4260, 4294901760
        %v5186 = vsub.f32 %v4260, %v5185
        %v5187 = vand.u32 %v5186, 4294901760
        %5188 = vmatpush1.msra.mxu0 %v5187
        %5189 = vmatprep.subr.mxu0 0.0
        %v5190 = vand.u32 %v4261, 4294901760
        %v5191 = vsub.f32 %v4261, %v5190
        %v5192 = vand.u32 %v5191, 4294901760
        %5193 = vmatpush1.msra.mxu0 %v5192
        %5194 = vmatprep.subr.mxu0 0.0
        %v5195 = vand.u32 %v4262, 4294901760
        %v5196 = vsub.f32 %v4262, %v5195
        %v5197 = vand.u32 %v5196, 4294901760
        %5198 = vmatpush1.msra.mxu0 %v5197
        %5199 = vmatprep.subr.mxu0 0.0
        %v5200 = vand.u32 %v4263, 4294901760
        %v5201 = vsub.f32 %v4263, %v5200
        %v5202 = vand.u32 %v5201, 4294901760
        %5203 = vmatpush1.msra.mxu0 %v5202
        %5204 = vmatprep.subr.mxu0 0.0
        %v5205 = vand.u32 %v4264, 4294901760
        %v5206 = vsub.f32 %v4264, %v5205
        %v5207 = vand.u32 %v5206, 4294901760
        %5208 = vmatpush1.msra.mxu0 %v5207
        %5209 = vmatprep.subr.mxu0 0.0
        %v5210 = vand.u32 %v4265, 4294901760
        %v5211 = vsub.f32 %v4265, %v5210
        %v5212 = vand.u32 %v5211, 4294901760
        %5213 = vmatpush1.msra.mxu0 %v5212
        %5214 = vmatprep.subr.mxu0 0.0
        %v5215 = vand.u32 %v4266, 4294901760
        %v5216 = vsub.f32 %v4266, %v5215
        %v5217 = vand.u32 %v5216, 4294901760
        %5218 = vmatpush1.msra.mxu0 %v5217
        %5219 = vmatprep.subr.mxu0 0.0
        %v5220 = vand.u32 %v4267, 4294901760
        %v5221 = vsub.f32 %v4267, %v5220
        %v5222 = vand.u32 %v5221, 4294901760
        %5223 = vmatpush1.msra.mxu0 %v5222
        %5224 = vmatprep.subr.mxu0 0.0
        %v5225 = vand.u32 %v4268, 4294901760
        %v5226 = vsub.f32 %v4268, %v5225
        %v5227 = vand.u32 %v5226, 4294901760
        %5228 = vmatpush1.msra.mxu0 %v5227
        %5229 = vmatprep.subr.mxu0 0.0
        %v5230 = vand.u32 %v4269, 4294901760
        %v5231 = vsub.f32 %v4269, %v5230
        %v5232 = vand.u32 %v5231, 4294901760
        %5233 = vmatpush1.msra.mxu0 %v5232
        %5234 = vmatprep.subr.mxu0 0.0
        %v5235 = vand.u32 %v4270, 4294901760
        %v5236 = vsub.f32 %v4270, %v5235
        %v5237 = vand.u32 %v5236, 4294901760
        %5238 = vmatpush1.msra.mxu0 %v5237
        %5239 = vmatprep.subr.mxu0 0.0
        %v5240 = vand.u32 %v4271, 4294901760
        %v5241 = vsub.f32 %v4271, %v5240
        %v5242 = vand.u32 %v5241, 4294901760
        %5243 = vmatpush1.msra.mxu0 %v5242
        %5244 = vmatprep.subr.mxu0 0.0
        %v5245 = vand.u32 %v4272, 4294901760
        %v5246 = vsub.f32 %v4272, %v5245
        %v5247 = vand.u32 %v5246, 4294901760
        %5248 = vmatpush1.msra.mxu0 %v5247
        %5249 = vmatprep.subr.mxu0 0.0
        %v5250 = vand.u32 %v4273, 4294901760
        %v5251 = vsub.f32 %v4273, %v5250
        %v5252 = vand.u32 %v5251, 4294901760
        %5253 = vmatpush1.msra.mxu0 %v5252
        %5254 = vmatprep.subr.mxu0 0.0
        %5255 = vmatpush1.msra.mxu0 0.0
        %5256 = vmatprep.subr.mxu0 0.0
        %5257 = vmatpush1.msra.mxu0 0.0
        %5258 = vmatprep.subr.mxu0 0.0
        %5259 = vmatpush1.msra.mxu0 0.0
        %5260 = vmatprep.subr.mxu0 0.0
        %5261 = vmatpush1.msra.mxu0 0.0
        %5262 = vmatprep.subr.mxu0 0.0
        %5263 = vmatpush1.msra.mxu0 0.0
        %5264 = vmatprep.subr.mxu0 0.0
        %5265 = vmatpush1.msra.mxu0 0.0
        %5266 = vmatprep.subr.mxu0 0.0
        %5267 = vmatpush1.msra.mxu0 0.0
        %5268 = vmatprep.subr.mxu0 0.0
        %5269 = vmatpush1.msra.mxu0 0.0
        %5270 = vmatprep.subr.mxu0 0.0
        %5271 = vmatpush1.msra.mxu0 0.0
        %5272 = vmatprep.subr.mxu0 0.0
        %5273 = vmatpush1.msra.mxu0 0.0
        %5274 = vmatprep.subr.mxu0 0.0
        %5275 = vmatpush1.msra.mxu0 0.0
        %5276 = vmatprep.subr.mxu0 0.0
        %5277 = vmatpush1.msra.mxu0 0.0
        %5278 = vmatprep.subr.mxu0 0.0
        %5279 = vmatpush1.msra.mxu0 0.0
        %5280 = vmatprep.subr.mxu0 0.0
        %5281 = vmatpush1.msra.mxu0 0.0
        %5282 = vmatprep.subr.mxu0 0.0
        %5283 = vmatpush1.msra.mxu0 0.0
        %5284 = vmatprep.subr.mxu0 0.0
        %5285 = vmatpush1.msra.mxu0 0.0
        %5286 = vmatprep.mubr.f32.mxu0 0.0
        %v5287 = vand.u32 %v4241, 4294901760
        %5288 = vmatmul.mubr.f32.gmra.mrb[0].mxu0 %v5287
        %v5289 = vpop.f32.mrb[0].mxu0
        %v5290 = vadd.f32 %v5051, %v5289
        %v5291 = vpop.f32.mrb[0].mxu0
        %5292 = vmatprep.mubr.f32.mxu0 0.0
        %v5293 = vand.u32 %v4242, 4294901760
        %5294 = vmatmul.mubr.f32.gmra.mrb[0].mxu0 %v5293
        %v5295 = vpop.f32.mrb[0].mxu0
        %v5296 = vadd.f32 %v5059, %v5295
        %v5297 = vpop.f32.mrb[0].mxu0
        %5298 = vmatprep.mubr.f32.mxu0 0.0
        %v5299 = vand.u32 %v4243, 4294901760
        %5300 = vmatmul.mubr.f32.gmra.mrb[0].mxu0 %v5299
        %v5301 = vpop.f32.mrb[0].mxu0
        %v5302 = vadd.f32 %v5067, %v5301
        %v5303 = vpop.f32.mrb[0].mxu0
        %5304 = vmatprep.mubr.f32.mxu0 0.0
        %v5305 = vand.u32 %v4244, 4294901760
        %5306 = vmatmul.mubr.f32.gmra.mrb[0].mxu0 %v5305
        %v5307 = vpop.f32.mrb[0].mxu0
        %v5308 = vadd.f32 %v5075, %v5307
        %v5309 = vpop.f32.mrb[0].mxu0
        %5310 = vmatprep.mubr.f32.mxu0 0.0
        %v5311 = vand.u32 %v4245, 4294901760
        %5312 = vmatmul.mubr.f32.gmra.mrb[0].mxu0 %v5311
        %v5313 = vpop.f32.mrb[0].mxu0
        %v5314 = vadd.f32 %v5083, %v5313
        %v5315 = vpop.f32.mrb[0].mxu0
        %5316 = vmatprep.mubr.f32.mxu0 0.0
        %v5317 = vand.u32 %v4246, 4294901760
        %5318 = vmatmul.mubr.f32.gmra.mrb[0].mxu0 %v5317
        %v5319 = vpop.f32.mrb[0].mxu0
        %v5320 = vadd.f32 %v5091, %v5319
        %v5321 = vpop.f32.mrb[0].mxu0
        %5322 = vmatprep.mubr.f32.mxu0 0.0
        %v5323 = vand.u32 %v4247, 4294901760
        %5324 = vmatmul.mubr.f32.gmra.mrb[0].mxu0 %v5323
        %v5325 = vpop.f32.mrb[0].mxu0
        %v5326 = vadd.f32 %v5099, %v5325
        %v5327 = vpop.f32.mrb[0].mxu0
        %5328 = vmatprep.mubr.f32.mxu0 0.0
        %v5329 = vand.u32 %v4248, 4294901760
        %5330 = vmatmul.mubr.f32.gmra.mrb[0].mxu0 %v5329
        %v5331 = vpop.f32.mrb[0].mxu0
        %v5332 = vadd.f32 %v5107, %v5331
        %v5333 = vpop.f32.mrb[0].mxu0
        %5334 = vmatprep.mubr.f32.mxu0 0.0
        %v5335 = vand.u32 %v4249, 4294901760
        %5336 = vmatmul.mubr.f32.gmra.mrb[0].mxu0 %v5335
        %v5337 = vpop.f32.mrb[0].mxu0
        %v5338 = vadd.f32 %v5115, %v5337
        %v5339 = vpop.f32.mrb[0].mxu0
        %5340 = vmatprep.mubr.f32.mxu0 0.0
        %v5341 = vand.u32 %v4250, 4294901760
        %5342 = vmatmul.mubr.f32.gmra.mrb[0].mxu0 %v5341
        %v5343 = vpop.f32.mrb[0].mxu0
        %v5344 = vadd.f32 %v5123, %v5343
        %v5345 = vpop.f32.mrb[0].mxu0
        %5346 = vmatprep.mubr.f32.mxu0 0.0
        %v5347 = vand.u32 %v4251, 4294901760
        %5348 = vmatmul.mubr.f32.gmra.mrb[0].mxu0 %v5347
        %v5349 = vpop.f32.mrb[0].mxu0
        %v5350 = vadd.f32 %v5131, %v5349
        %v5351 = vpop.f32.mrb[0].mxu0
        %5352 = vmatprep.mubr.f32.mxu0 0.0
        %v5353 = vand.u32 %v4252, 4294901760
        %5354 = vmatmul.mubr.f32.gmra.mrb[0].mxu0 %v5353
        %v5355 = vpop.f32.mrb[0].mxu0
        %v5356 = vadd.f32 %v5139, %v5355
        %v5357 = vpop.f32.mrb[0].mxu0
        %5358 = vmatprep.mubr.f32.mxu0 0.0
        %v5359 = vand.u32 %v4253, 4294901760
        %5360 = vmatmul.mubr.f32.gmra.mrb[0].mxu0 %v5359
        %v5361 = vpop.f32.mrb[0].mxu0
        %v5362 = vadd.f32 %v5147, %v5361
        %v5363 = vpop.f32.mrb[0].mxu0
        %5364 = vmatprep.mubr.f32.mxu0 0.0
        %v5365 = vand.u32 %v4254, 4294901760
        %5366 = vmatmul.mubr.f32.gmra.mrb[0].mxu0 %v5365
        %v5367 = vpop.f32.mrb[0].mxu0
        %v5368 = vadd.f32 %v5155, %v5367
        %v5369 = vpop.f32.mrb[0].mxu0
        %5370 = vmatprep.mubr.f32.mxu0 0.0
        %v5371 = vand.u32 %v4255, 4294901760
        %5372 = vmatmul.mubr.f32.gmra.mrb[0].mxu0 %v5371
        %v5373 = vpop.f32.mrb[0].mxu0
        %v5374 = vadd.f32 %v5163, %v5373
        %v5375 = vpop.f32.mrb[0].mxu0
        %5376 = vmatprep.mubr.f32.mxu0 0.0
        %v5377 = vand.u32 %v4256, 4294901760
        %5378 = vmatmul.mubr.f32.gmra.mrb[0].mxu0 %v5377
        %v5379 = vpop.f32.mrb[0].mxu0
        %v5380 = vadd.f32 %v5171, %v5379
        %v5381 = vpop.f32.mrb[0].mxu0
        %5382 = vdwg.mxu0
        %5383 = vmatprep.subr.mxu0 0.0
        %v5384 = vand.u32 %v4258, 4294901760
        %5385 = vmatpush1.msra.mxu0 %v5384
        %5386 = vmatprep.subr.mxu0 0.0
        %v5387 = vand.u32 %v4259, 4294901760
        %5388 = vmatpush1.msra.mxu0 %v5387
        %5389 = vmatprep.subr.mxu0 0.0
        %v5390 = vand.u32 %v4260, 4294901760
        %5391 = vmatpush1.msra.mxu0 %v5390
        %5392 = vmatprep.subr.mxu0 0.0
        %v5393 = vand.u32 %v4261, 4294901760
        %5394 = vmatpush1.msra.mxu0 %v5393
        %5395 = vmatprep.subr.mxu0 0.0
        %v5396 = vand.u32 %v4262, 4294901760
        %5397 = vmatpush1.msra.mxu0 %v5396
        %5398 = vmatprep.subr.mxu0 0.0
        %v5399 = vand.u32 %v4263, 4294901760
        %5400 = vmatpush1.msra.mxu0 %v5399
        %5401 = vmatprep.subr.mxu0 0.0
        %v5402 = vand.u32 %v4264, 4294901760
        %5403 = vmatpush1.msra.mxu0 %v5402
        %5404 = vmatprep.subr.mxu0 0.0
        %v5405 = vand.u32 %v4265, 4294901760
        %5406 = vmatpush1.msra.mxu0 %v5405
        %5407 = vmatprep.subr.mxu0 0.0
        %v5408 = vand.u32 %v4266, 4294901760
        %5409 = vmatpush1.msra.mxu0 %v5408
        %5410 = vmatprep.subr.mxu0 0.0
        %v5411 = vand.u32 %v4267, 4294901760
        %5412 = vmatpush1.msra.mxu0 %v5411
        %5413 = vmatprep.subr.mxu0 0.0
        %v5414 = vand.u32 %v4268, 4294901760
        %5415 = vmatpush1.msra.mxu0 %v5414
        %5416 = vmatprep.subr.mxu0 0.0
        %v5417 = vand.u32 %v4269, 4294901760
        %5418 = vmatpush1.msra.mxu0 %v5417
        %5419 = vmatprep.subr.mxu0 0.0
        %v5420 = vand.u32 %v4270, 4294901760
        %5421 = vmatpush1.msra.mxu0 %v5420
        %5422 = vmatprep.subr.mxu0 0.0
        %v5423 = vand.u32 %v4271, 4294901760
        %5424 = vmatpush1.msra.mxu0 %v5423
        %5425 = vmatprep.subr.mxu0 0.0
        %v5426 = vand.u32 %v4272, 4294901760
        %5427 = vmatpush1.msra.mxu0 %v5426
        %5428 = vmatprep.subr.mxu0 0.0
        %v5429 = vand.u32 %v4273, 4294901760
        %5430 = vmatpush1.msra.mxu0 %v5429
        %5431 = vmatprep.subr.mxu0 0.0
        %5432 = vmatpush1.msra.mxu0 0.0
        %5433 = vmatprep.subr.mxu0 0.0
        %5434 = vmatpush1.msra.mxu0 0.0
        %5435 = vmatprep.subr.mxu0 0.0
        %5436 = vmatpush1.msra.mxu0 0.0
        %5437 = vmatprep.subr.mxu0 0.0
        %5438 = vmatpush1.msra.mxu0 0.0
        %5439 = vmatprep.subr.mxu0 0.0
        %5440 = vmatpush1.msra.mxu0 0.0
        %5441 = vmatprep.subr.mxu0 0.0
        %5442 = vmatpush1.msra.mxu0 0.0
        %5443 = vmatprep.subr.mxu0 0.0
        %5444 = vmatpush1.msra.mxu0 0.0
        %5445 = vmatprep.subr.mxu0 0.0
        %5446 = vmatpush1.msra.mxu0 0.0
        %5447 = vmatprep.subr.mxu0 0.0
        %5448 = vmatpush1.msra.mxu0 0.0
        %5449 = vmatprep.subr.mxu0 0.0
        %5450 = vmatpush1.msra.mxu0 0.0
        %5451 = vmatprep.subr.mxu0 0.0
        %5452 = vmatpush1.msra.mxu0 0.0
        %5453 = vmatprep.subr.mxu0 0.0
        %5454 = vmatpush1.msra.mxu0 0.0
        %5455 = vmatprep.subr.mxu0 0.0
        %5456 = vmatpush1.msra.mxu0 0.0
        %5457 = vmatprep.subr.mxu0 0.0
        %5458 = vmatpush1.msra.mxu0 0.0
        %5459 = vmatprep.subr.mxu0 0.0
        %5460 = vmatpush1.msra.mxu0 0.0
        %5461 = vmatprep.subr.mxu0 0.0
        %5462 = vmatpush1.msra.mxu0 0.0
        %5463 = vmatprep.mubr.f32.mxu0 0.0
        %v5464 = vand.u32 %v4241, 4294901760
        %5465 = vmatmul.mubr.f32.gmra.mrb[0].mxu0 %v5464
        %v5466 = vpop.f32.mrb[0].mxu0
        %v5467 = vadd.f32 %v5290, %v5466
        %v5468 = vpop.f32.mrb[0].mxu0
        %5469 = vmatprep.mubr.f32.mxu0 0.0
        %v5470 = vand.u32 %v4242, 4294901760
        %5471 = vmatmul.mubr.f32.gmra.mrb[0].mxu0 %v5470
        %v5472 = vpop.f32.mrb[0].mxu0
        %v5473 = vadd.f32 %v5296, %v5472
        %v5474 = vpop.f32.mrb[0].mxu0
        %5475 = vmatprep.mubr.f32.mxu0 0.0
        %v5476 = vand.u32 %v4243, 4294901760
        %5477 = vmatmul.mubr.f32.gmra.mrb[0].mxu0 %v5476
        %v5478 = vpop.f32.mrb[0].mxu0
        %v5479 = vadd.f32 %v5302, %v5478
        %v5480 = vpop.f32.mrb[0].mxu0
        %5481 = vmatprep.mubr.f32.mxu0 0.0
        %v5482 = vand.u32 %v4244, 4294901760
        %5483 = vmatmul.mubr.f32.gmra.mrb[0].mxu0 %v5482
        %v5484 = vpop.f32.mrb[0].mxu0
        %v5485 = vadd.f32 %v5308, %v5484
        %v5486 = vpop.f32.mrb[0].mxu0
        %5487 = vmatprep.mubr.f32.mxu0 0.0
        %v5488 = vand.u32 %v4245, 4294901760
        %5489 = vmatmul.mubr.f32.gmra.mrb[0].mxu0 %v5488
        %v5490 = vpop.f32.mrb[0].mxu0
        %v5491 = vadd.f32 %v5314, %v5490
        %v5492 = vpop.f32.mrb[0].mxu0
        %5493 = vmatprep.mubr.f32.mxu0 0.0
        %v5494 = vand.u32 %v4246, 4294901760
        %5495 = vmatmul.mubr.f32.gmra.mrb[0].mxu0 %v5494
        %v5496 = vpop.f32.mrb[0].mxu0
        %v5497 = vadd.f32 %v5320, %v5496
        %v5498 = vpop.f32.mrb[0].mxu0
        %5499 = vmatprep.mubr.f32.mxu0 0.0
        %v5500 = vand.u32 %v4247, 4294901760
        %5501 = vmatmul.mubr.f32.gmra.mrb[0].mxu0 %v5500
        %v5502 = vpop.f32.mrb[0].mxu0
        %v5503 = vadd.f32 %v5326, %v5502
        %v5504 = vpop.f32.mrb[0].mxu0
        %5505 = vmatprep.mubr.f32.mxu0 0.0
        %v5506 = vand.u32 %v4248, 4294901760
        %5507 = vmatmul.mubr.f32.gmra.mrb[0].mxu0 %v5506
        %v5508 = vpop.f32.mrb[0].mxu0
        %v5509 = vadd.f32 %v5332, %v5508
        %v5510 = vpop.f32.mrb[0].mxu0
        %5511 = vmatprep.mubr.f32.mxu0 0.0
        %v5512 = vand.u32 %v4249, 4294901760
        %5513 = vmatmul.mubr.f32.gmra.mrb[0].mxu0 %v5512
        %v5514 = vpop.f32.mrb[0].mxu0
        %v5515 = vadd.f32 %v5338, %v5514
        %v5516 = vpop.f32.mrb[0].mxu0
        %5517 = vmatprep.mubr.f32.mxu0 0.0
        %v5518 = vand.u32 %v4250, 4294901760
        %5519 = vmatmul.mubr.f32.gmra.mrb[0].mxu0 %v5518
        %v5520 = vpop.f32.mrb[0].mxu0
        %v5521 = vadd.f32 %v5344, %v5520
        %v5522 = vpop.f32.mrb[0].mxu0
        %5523 = vmatprep.mubr.f32.mxu0 0.0
        %v5524 = vand.u32 %v4251, 4294901760
        %5525 = vmatmul.mubr.f32.gmra.mrb[0].mxu0 %v5524
        %v5526 = vpop.f32.mrb[0].mxu0
        %v5527 = vadd.f32 %v5350, %v5526
        %v5528 = vpop.f32.mrb[0].mxu0
        %5529 = vmatprep.mubr.f32.mxu0 0.0
        %v5530 = vand.u32 %v4252, 4294901760
        %5531 = vmatmul.mubr.f32.gmra.mrb[0].mxu0 %v5530
        %v5532 = vpop.f32.mrb[0].mxu0
        %v5533 = vadd.f32 %v5356, %v5532
        %v5534 = vpop.f32.mrb[0].mxu0
        %5535 = vmatprep.mubr.f32.mxu0 0.0
        %v5536 = vand.u32 %v4253, 4294901760
        %5537 = vmatmul.mubr.f32.gmra.mrb[0].mxu0 %v5536
        %v5538 = vpop.f32.mrb[0].mxu0
        %v5539 = vadd.f32 %v5362, %v5538
        %v5540 = vpop.f32.mrb[0].mxu0
        %5541 = vmatprep.mubr.f32.mxu0 0.0
        %v5542 = vand.u32 %v4254, 4294901760
        %5543 = vmatmul.mubr.f32.gmra.mrb[0].mxu0 %v5542
        %v5544 = vpop.f32.mrb[0].mxu0
        %v5545 = vadd.f32 %v5368, %v5544
        %v5546 = vpop.f32.mrb[0].mxu0
        %5547 = vmatprep.mubr.f32.mxu0 0.0
        %v5548 = vand.u32 %v4255, 4294901760
        %5549 = vmatmul.mubr.f32.gmra.mrb[0].mxu0 %v5548
        %v5550 = vpop.f32.mrb[0].mxu0
        %v5551 = vadd.f32 %v5374, %v5550
        %v5552 = vpop.f32.mrb[0].mxu0
        %5553 = vmatprep.mubr.f32.mxu0 0.0
        %v5554 = vand.u32 %v4256, 4294901760
        %5555 = vmatmul.mubr.f32.gmra.mrb[0].mxu0 %v5554
        %v5556 = vpop.f32.mrb[0].mxu0
        %v5557 = vadd.f32 %v5380, %v5556
        %v5558 = vpop.f32.mrb[0].mxu0
        %5559 = vdwg.mxu0
        %v5560 = vld [vmem:[%s3 + $0x2] sm:$0x1]
        %v5561 = vlaneseq
        %v5562 = vshrl.u32 %v5561, 7
        %v5563 = vsub.s32 0, %v5562
        %v5564 = vrot.slane %v5560, %v5563
        %5565 = vmatprep.subr.mxu0 0.0
        %v5566 = vand.u32 %v5467, 4294901760
        %5567 = vmatpush1.msra.mxu0 %v5566
        %5568 = vmatprep.subr.mxu0 0.0
        %v5569 = vand.u32 %v5473, 4294901760
        %5570 = vmatpush1.msra.mxu0 %v5569
        %5571 = vmatprep.subr.mxu0 0.0
        %v5572 = vand.u32 %v5479, 4294901760
        %5573 = vmatpush1.msra.mxu0 %v5572
        %5574 = vmatprep.subr.mxu0 0.0
        %v5575 = vand.u32 %v5485, 4294901760
        %5576 = vmatpush1.msra.mxu0 %v5575
        %5577 = vmatprep.subr.mxu0 0.0
        %v5578 = vand.u32 %v5491, 4294901760
        %5579 = vmatpush1.msra.mxu0 %v5578
        %5580 = vmatprep.subr.mxu0 0.0
        %v5581 = vand.u32 %v5497, 4294901760
        %5582 = vmatpush1.msra.mxu0 %v5581
        %5583 = vmatprep.subr.mxu0 0.0
        %v5584 = vand.u32 %v5503, 4294901760
        %5585 = vmatpush1.msra.mxu0 %v5584
        %5586 = vmatprep.subr.mxu0 0.0
        %v5587 = vand.u32 %v5509, 4294901760
        %5588 = vmatpush1.msra.mxu0 %v5587
        %5589 = vmatprep.subr.mxu0 0.0
        %v5590 = vand.u32 %v5515, 4294901760
        %5591 = vmatpush1.msra.mxu0 %v5590
        %5592 = vmatprep.subr.mxu0 0.0
        %v5593 = vand.u32 %v5521, 4294901760
        %5594 = vmatpush1.msra.mxu0 %v5593
        %5595 = vmatprep.subr.mxu0 0.0
        %v5596 = vand.u32 %v5527, 4294901760
        %5597 = vmatpush1.msra.mxu0 %v5596
        %5598 = vmatprep.subr.mxu0 0.0
        %v5599 = vand.u32 %v5533, 4294901760
        %5600 = vmatpush1.msra.mxu0 %v5599
        %5601 = vmatprep.subr.mxu0 0.0
        %v5602 = vand.u32 %v5539, 4294901760
        %5603 = vmatpush1.msra.mxu0 %v5602
        %5604 = vmatprep.subr.mxu0 0.0
        %v5605 = vand.u32 %v5545, 4294901760
        %5606 = vmatpush1.msra.mxu0 %v5605
        %5607 = vmatprep.subr.mxu0 0.0
        %v5608 = vand.u32 %v5551, 4294901760
        %5609 = vmatpush1.msra.mxu0 %v5608
        %5610 = vmatprep.subr.mxu0 0.0
        %v5611 = vand.u32 %v5557, 4294901760
        %5612 = vmatpush1.msra.mxu0 %v5611
        %5613 = vmatprep.subr.mxu0 0.0
        %5614 = vmatpush1.msra.mxu0 0.0
        %5615 = vmatprep.subr.mxu0 0.0
        %5616 = vmatpush1.msra.mxu0 0.0
        %5617 = vmatprep.subr.mxu0 0.0
        %5618 = vmatpush1.msra.mxu0 0.0
        %5619 = vmatprep.subr.mxu0 0.0
        %5620 = vmatpush1.msra.mxu0 0.0
        %5621 = vmatprep.subr.mxu0 0.0
        %5622 = vmatpush1.msra.mxu0 0.0
        %5623 = vmatprep.subr.mxu0 0.0
        %5624 = vmatpush1.msra.mxu0 0.0
        %5625 = vmatprep.subr.mxu0 0.0
        %5626 = vmatpush1.msra.mxu0 0.0
        %5627 = vmatprep.subr.mxu0 0.0
        %5628 = vmatpush1.msra.mxu0 0.0
        %5629 = vmatprep.subr.mxu0 0.0
        %5630 = vmatpush1.msra.mxu0 0.0
        %5631 = vmatprep.subr.mxu0 0.0
        %5632 = vmatpush1.msra.mxu0 0.0
        %5633 = vmatprep.subr.mxu0 0.0
        %5634 = vmatpush1.msra.mxu0 0.0
        %5635 = vmatprep.subr.mxu0 0.0
        %5636 = vmatpush1.msra.mxu0 0.0
        %5637 = vmatprep.subr.mxu0 0.0
        %5638 = vmatpush1.msra.mxu0 0.0
        %5639 = vmatprep.subr.mxu0 0.0
        %5640 = vmatpush1.msra.mxu0 0.0
        %5641 = vmatprep.subr.mxu0 0.0
        %5642 = vmatpush1.msra.mxu0 0.0
        %5643 = vmatprep.subr.mxu0 0.0
        %5644 = vmatpush1.msra.mxu0 0.0
        %5645 = vmatprep.mubr.f32.mxu0 0.0
        %v5646 = vand.u32 %v245, 4294901760
        %v5647 = vsub.f32 %v245, %v5646
        %v5648 = vand.u32 %v5647, 4294901760
        %v5649 = vsub.f32 %v5647, %v5648
        %v5650 = vand.u32 %v5649, 4294901760
        %5651 = vmatmul.mubr.f32.gmra.mrb[0].mxu0 %v5650
        %v5652 = vpop.f32.mrb[0].mxu0
        %v5653 = vadd.f32 %v5564, %v5652
        %v5654 = vpop.f32.mrb[0].mxu0
        %5655 = vmatprep.mubr.f32.mxu0 0.0
        %v5656 = vand.u32 %v246, 4294901760
        %v5657 = vsub.f32 %v246, %v5656
        %v5658 = vand.u32 %v5657, 4294901760
        %v5659 = vsub.f32 %v5657, %v5658
        %v5660 = vand.u32 %v5659, 4294901760
        %5661 = vmatmul.mubr.f32.gmra.mrb[0].mxu0 %v5660
        %v5662 = vpop.f32.mrb[0].mxu0
        %v5663 = vadd.f32 %v5564, %v5662
        %v5664 = vpop.f32.mrb[0].mxu0
        %5665 = vmatprep.mubr.f32.mxu0 0.0
        %v5666 = vand.u32 %v247, 4294901760
        %v5667 = vsub.f32 %v247, %v5666
        %v5668 = vand.u32 %v5667, 4294901760
        %v5669 = vsub.f32 %v5667, %v5668
        %v5670 = vand.u32 %v5669, 4294901760
        %5671 = vmatmul.mubr.f32.gmra.mrb[0].mxu0 %v5670
        %v5672 = vpop.f32.mrb[0].mxu0
        %v5673 = vadd.f32 %v5564, %v5672
        %v5674 = vpop.f32.mrb[0].mxu0
        %5675 = vmatprep.mubr.f32.mxu0 0.0
        %v5676 = vand.u32 %v248, 4294901760
        %v5677 = vsub.f32 %v248, %v5676
        %v5678 = vand.u32 %v5677, 4294901760
        %v5679 = vsub.f32 %v5677, %v5678
        %v5680 = vand.u32 %v5679, 4294901760
        %5681 = vmatmul.mubr.f32.gmra.mrb[0].mxu0 %v5680
        %v5682 = vpop.f32.mrb[0].mxu0
        %v5683 = vadd.f32 %v5564, %v5682
        %v5684 = vpop.f32.mrb[0].mxu0
        %5685 = vmatprep.mubr.f32.mxu0 0.0
        %v5686 = vand.u32 %v249, 4294901760
        %v5687 = vsub.f32 %v249, %v5686
        %v5688 = vand.u32 %v5687, 4294901760
        %v5689 = vsub.f32 %v5687, %v5688
        %v5690 = vand.u32 %v5689, 4294901760
        %5691 = vmatmul.mubr.f32.gmra.mrb[0].mxu0 %v5690
        %v5692 = vpop.f32.mrb[0].mxu0
        %v5693 = vadd.f32 %v5564, %v5692
        %v5694 = vpop.f32.mrb[0].mxu0
        %5695 = vmatprep.mubr.f32.mxu0 0.0
        %v5696 = vand.u32 %v250, 4294901760
        %v5697 = vsub.f32 %v250, %v5696
        %v5698 = vand.u32 %v5697, 4294901760
        %v5699 = vsub.f32 %v5697, %v5698
        %v5700 = vand.u32 %v5699, 4294901760
        %5701 = vmatmul.mubr.f32.gmra.mrb[0].mxu0 %v5700
        %v5702 = vpop.f32.mrb[0].mxu0
        %v5703 = vadd.f32 %v5564, %v5702
        %v5704 = vpop.f32.mrb[0].mxu0
        %5705 = vmatprep.mubr.f32.mxu0 0.0
        %v5706 = vand.u32 %v251, 4294901760
        %v5707 = vsub.f32 %v251, %v5706
        %v5708 = vand.u32 %v5707, 4294901760
        %v5709 = vsub.f32 %v5707, %v5708
        %v5710 = vand.u32 %v5709, 4294901760
        %5711 = vmatmul.mubr.f32.gmra.mrb[0].mxu0 %v5710
        %v5712 = vpop.f32.mrb[0].mxu0
        %v5713 = vadd.f32 %v5564, %v5712
        %v5714 = vpop.f32.mrb[0].mxu0
        %5715 = vmatprep.mubr.f32.mxu0 0.0
        %v5716 = vand.u32 %v252, 4294901760
        %v5717 = vsub.f32 %v252, %v5716
        %v5718 = vand.u32 %v5717, 4294901760
        %v5719 = vsub.f32 %v5717, %v5718
        %v5720 = vand.u32 %v5719, 4294901760
        %5721 = vmatmul.mubr.f32.gmra.mrb[0].mxu0 %v5720
        %v5722 = vpop.f32.mrb[0].mxu0
        %v5723 = vadd.f32 %v5564, %v5722
        %v5724 = vpop.f32.mrb[0].mxu0
        %5725 = vmatprep.mubr.f32.mxu0 0.0
        %v5726 = vand.u32 %v253, 4294901760
        %v5727 = vsub.f32 %v253, %v5726
        %v5728 = vand.u32 %v5727, 4294901760
        %v5729 = vsub.f32 %v5727, %v5728
        %v5730 = vand.u32 %v5729, 4294901760
        %5731 = vmatmul.mubr.f32.gmra.mrb[0].mxu0 %v5730
        %v5732 = vpop.f32.mrb[0].mxu0
        %v5733 = vadd.f32 %v5564, %v5732
        %v5734 = vpop.f32.mrb[0].mxu0
        %5735 = vmatprep.mubr.f32.mxu0 0.0
        %v5736 = vand.u32 %v254, 4294901760
        %v5737 = vsub.f32 %v254, %v5736
        %v5738 = vand.u32 %v5737, 4294901760
        %v5739 = vsub.f32 %v5737, %v5738
        %v5740 = vand.u32 %v5739, 4294901760
        %5741 = vmatmul.mubr.f32.gmra.mrb[0].mxu0 %v5740
        %v5742 = vpop.f32.mrb[0].mxu0
        %v5743 = vadd.f32 %v5564, %v5742
        %v5744 = vpop.f32.mrb[0].mxu0
        %5745 = vmatprep.mubr.f32.mxu0 0.0
        %v5746 = vand.u32 %v255, 4294901760
        %v5747 = vsub.f32 %v255, %v5746
        %v5748 = vand.u32 %v5747, 4294901760
        %v5749 = vsub.f32 %v5747, %v5748
        %v5750 = vand.u32 %v5749, 4294901760
        %5751 = vmatmul.mubr.f32.gmra.mrb[0].mxu0 %v5750
        %v5752 = vpop.f32.mrb[0].mxu0
        %v5753 = vadd.f32 %v5564, %v5752
        %v5754 = vpop.f32.mrb[0].mxu0
        %5755 = vmatprep.mubr.f32.mxu0 0.0
        %v5756 = vand.u32 %v256, 4294901760
        %v5757 = vsub.f32 %v256, %v5756
        %v5758 = vand.u32 %v5757, 4294901760
        %v5759 = vsub.f32 %v5757, %v5758
        %v5760 = vand.u32 %v5759, 4294901760
        %5761 = vmatmul.mubr.f32.gmra.mrb[0].mxu0 %v5760
        %v5762 = vpop.f32.mrb[0].mxu0
        %v5763 = vadd.f32 %v5564, %v5762
        %v5764 = vpop.f32.mrb[0].mxu0
        %5765 = vmatprep.mubr.f32.mxu0 0.0
        %v5766 = vand.u32 %v257, 4294901760
        %v5767 = vsub.f32 %v257, %v5766
        %v5768 = vand.u32 %v5767, 4294901760
        %v5769 = vsub.f32 %v5767, %v5768
        %v5770 = vand.u32 %v5769, 4294901760
        %5771 = vmatmul.mubr.f32.gmra.mrb[0].mxu0 %v5770
        %v5772 = vpop.f32.mrb[0].mxu0
        %v5773 = vadd.f32 %v5564, %v5772
        %v5774 = vpop.f32.mrb[0].mxu0
        %5775 = vmatprep.mubr.f32.mxu0 0.0
        %v5776 = vand.u32 %v258, 4294901760
        %v5777 = vsub.f32 %v258, %v5776
        %v5778 = vand.u32 %v5777, 4294901760
        %v5779 = vsub.f32 %v5777, %v5778
        %v5780 = vand.u32 %v5779, 4294901760
        %5781 = vmatmul.mubr.f32.gmra.mrb[0].mxu0 %v5780
        %v5782 = vpop.f32.mrb[0].mxu0
        %v5783 = vadd.f32 %v5564, %v5782
        %v5784 = vpop.f32.mrb[0].mxu0
        %5785 = vmatprep.mubr.f32.mxu0 0.0
        %v5786 = vand.u32 %v259, 4294901760
        %v5787 = vsub.f32 %v259, %v5786
        %v5788 = vand.u32 %v5787, 4294901760
        %v5789 = vsub.f32 %v5787, %v5788
        %v5790 = vand.u32 %v5789, 4294901760
        %5791 = vmatmul.mubr.f32.gmra.mrb[0].mxu0 %v5790
        %v5792 = vpop.f32.mrb[0].mxu0
        %v5793 = vadd.f32 %v5564, %v5792
        %v5794 = vpop.f32.mrb[0].mxu0
        %5795 = vmatprep.mubr.f32.mxu0 0.0
        %v5796 = vand.u32 %v260, 4294901760
        %v5797 = vsub.f32 %v260, %v5796
        %v5798 = vand.u32 %v5797, 4294901760
        %v5799 = vsub.f32 %v5797, %v5798
        %v5800 = vand.u32 %v5799, 4294901760
        %5801 = vmatmul.mubr.f32.gmra.mrb[0].mxu0 %v5800
        %v5802 = vpop.f32.mrb[0].mxu0
        %v5803 = vadd.f32 %v5564, %v5802
        %v5804 = vpop.f32.mrb[0].mxu0
        %5805 = vdwg.mxu0
        %5806 = vmatprep.subr.mxu0 0.0
        %v5807 = vand.u32 %v5467, 4294901760
        %v5808 = vsub.f32 %v5467, %v5807
        %v5809 = vand.u32 %v5808, 4294901760
        %v5810 = vsub.f32 %v5808, %v5809
        %v5811 = vand.u32 %v5810, 4294901760
        %5812 = vmatpush1.msra.mxu0 %v5811
        %5813 = vmatprep.subr.mxu0 0.0
        %v5814 = vand.u32 %v5473, 4294901760
        %v5815 = vsub.f32 %v5473, %v5814
        %v5816 = vand.u32 %v5815, 4294901760
        %v5817 = vsub.f32 %v5815, %v5816
        %v5818 = vand.u32 %v5817, 4294901760
        %5819 = vmatpush1.msra.mxu0 %v5818
        %5820 = vmatprep.subr.mxu0 0.0
        %v5821 = vand.u32 %v5479, 4294901760
        %v5822 = vsub.f32 %v5479, %v5821
        %v5823 = vand.u32 %v5822, 4294901760
        %v5824 = vsub.f32 %v5822, %v5823
        %v5825 = vand.u32 %v5824, 4294901760
        %5826 = vmatpush1.msra.mxu0 %v5825
        %5827 = vmatprep.subr.mxu0 0.0
        %v5828 = vand.u32 %v5485, 4294901760
        %v5829 = vsub.f32 %v5485, %v5828
        %v5830 = vand.u32 %v5829, 4294901760
        %v5831 = vsub.f32 %v5829, %v5830
        %v5832 = vand.u32 %v5831, 4294901760
        %5833 = vmatpush1.msra.mxu0 %v5832
        %5834 = vmatprep.subr.mxu0 0.0
        %v5835 = vand.u32 %v5491, 4294901760
        %v5836 = vsub.f32 %v5491, %v5835
        %v5837 = vand.u32 %v5836, 4294901760
        %v5838 = vsub.f32 %v5836, %v5837
        %v5839 = vand.u32 %v5838, 4294901760
        %5840 = vmatpush1.msra.mxu0 %v5839
        %5841 = vmatprep.subr.mxu0 0.0
        %v5842 = vand.u32 %v5497, 4294901760
        %v5843 = vsub.f32 %v5497, %v5842
        %v5844 = vand.u32 %v5843, 4294901760
        %v5845 = vsub.f32 %v5843, %v5844
        %v5846 = vand.u32 %v5845, 4294901760
        %5847 = vmatpush1.msra.mxu0 %v5846
        %5848 = vmatprep.subr.mxu0 0.0
        %v5849 = vand.u32 %v5503, 4294901760
        %v5850 = vsub.f32 %v5503, %v5849
        %v5851 = vand.u32 %v5850, 4294901760
        %v5852 = vsub.f32 %v5850, %v5851
        %v5853 = vand.u32 %v5852, 4294901760
        %5854 = vmatpush1.msra.mxu0 %v5853
        %5855 = vmatprep.subr.mxu0 0.0
        %v5856 = vand.u32 %v5509, 4294901760
        %v5857 = vsub.f32 %v5509, %v5856
        %v5858 = vand.u32 %v5857, 4294901760
        %v5859 = vsub.f32 %v5857, %v5858
        %v5860 = vand.u32 %v5859, 4294901760
        %5861 = vmatpush1.msra.mxu0 %v5860
        %5862 = vmatprep.subr.mxu0 0.0
        %v5863 = vand.u32 %v5515, 4294901760
        %v5864 = vsub.f32 %v5515, %v5863
        %v5865 = vand.u32 %v5864, 4294901760
        %v5866 = vsub.f32 %v5864, %v5865
        %v5867 = vand.u32 %v5866, 4294901760
        %5868 = vmatpush1.msra.mxu0 %v5867
        %5869 = vmatprep.subr.mxu0 0.0
        %v5870 = vand.u32 %v5521, 4294901760
        %v5871 = vsub.f32 %v5521, %v5870
        %v5872 = vand.u32 %v5871, 4294901760
        %v5873 = vsub.f32 %v5871, %v5872
        %v5874 = vand.u32 %v5873, 4294901760
        %5875 = vmatpush1.msra.mxu0 %v5874
        %5876 = vmatprep.subr.mxu0 0.0
        %v5877 = vand.u32 %v5527, 4294901760
        %v5878 = vsub.f32 %v5527, %v5877
        %v5879 = vand.u32 %v5878, 4294901760
        %v5880 = vsub.f32 %v5878, %v5879
        %v5881 = vand.u32 %v5880, 4294901760
        %5882 = vmatpush1.msra.mxu0 %v5881
        %5883 = vmatprep.subr.mxu0 0.0
        %v5884 = vand.u32 %v5533, 4294901760
        %v5885 = vsub.f32 %v5533, %v5884
        %v5886 = vand.u32 %v5885, 4294901760
        %v5887 = vsub.f32 %v5885, %v5886
        %v5888 = vand.u32 %v5887, 4294901760
        %5889 = vmatpush1.msra.mxu0 %v5888
        %5890 = vmatprep.subr.mxu0 0.0
        %v5891 = vand.u32 %v5539, 4294901760
        %v5892 = vsub.f32 %v5539, %v5891
        %v5893 = vand.u32 %v5892, 4294901760
        %v5894 = vsub.f32 %v5892, %v5893
        %v5895 = vand.u32 %v5894, 4294901760
        %5896 = vmatpush1.msra.mxu0 %v5895
        %5897 = vmatprep.subr.mxu0 0.0
        %v5898 = vand.u32 %v5545, 4294901760
        %v5899 = vsub.f32 %v5545, %v5898
        %v5900 = vand.u32 %v5899, 4294901760
        %v5901 = vsub.f32 %v5899, %v5900
        %v5902 = vand.u32 %v5901, 4294901760
        %5903 = vmatpush1.msra.mxu0 %v5902
        %5904 = vmatprep.subr.mxu0 0.0
        %v5905 = vand.u32 %v5551, 4294901760
        %v5906 = vsub.f32 %v5551, %v5905
        %v5907 = vand.u32 %v5906, 4294901760
        %v5908 = vsub.f32 %v5906, %v5907
        %v5909 = vand.u32 %v5908, 4294901760
        %5910 = vmatpush1.msra.mxu0 %v5909
        %5911 = vmatprep.subr.mxu0 0.0
        %v5912 = vand.u32 %v5557, 4294901760
        %v5913 = vsub.f32 %v5557, %v5912
        %v5914 = vand.u32 %v5913, 4294901760
        %v5915 = vsub.f32 %v5913, %v5914
        %v5916 = vand.u32 %v5915, 4294901760
        %5917 = vmatpush1.msra.mxu0 %v5916
        %5918 = vmatprep.subr.mxu0 0.0
        %5919 = vmatpush1.msra.mxu0 0.0
        %5920 = vmatprep.subr.mxu0 0.0
        %5921 = vmatpush1.msra.mxu0 0.0
        %5922 = vmatprep.subr.mxu0 0.0
        %5923 = vmatpush1.msra.mxu0 0.0
        %5924 = vmatprep.subr.mxu0 0.0
        %5925 = vmatpush1.msra.mxu0 0.0
        %5926 = vmatprep.subr.mxu0 0.0
        %5927 = vmatpush1.msra.mxu0 0.0
        %5928 = vmatprep.subr.mxu0 0.0
        %5929 = vmatpush1.msra.mxu0 0.0
        %5930 = vmatprep.subr.mxu0 0.0
        %5931 = vmatpush1.msra.mxu0 0.0
        %5932 = vmatprep.subr.mxu0 0.0
        %5933 = vmatpush1.msra.mxu0 0.0
        %5934 = vmatprep.subr.mxu0 0.0
        %5935 = vmatpush1.msra.mxu0 0.0
        %5936 = vmatprep.subr.mxu0 0.0
        %5937 = vmatpush1.msra.mxu0 0.0
        %5938 = vmatprep.subr.mxu0 0.0
        %5939 = vmatpush1.msra.mxu0 0.0
        %5940 = vmatprep.subr.mxu0 0.0
        %5941 = vmatpush1.msra.mxu0 0.0
        %5942 = vmatprep.subr.mxu0 0.0
        %5943 = vmatpush1.msra.mxu0 0.0
        %5944 = vmatprep.subr.mxu0 0.0
        %5945 = vmatpush1.msra.mxu0 0.0
        %5946 = vmatprep.subr.mxu0 0.0
        %5947 = vmatpush1.msra.mxu0 0.0
        %5948 = vmatprep.subr.mxu0 0.0
        %5949 = vmatpush1.msra.mxu0 0.0
        %5950 = vmatprep.mubr.f32.mxu0 0.0
        %v5951 = vand.u32 %v245, 4294901760
        %5952 = vmatmul.mubr.f32.gmra.mrb[0].mxu0 %v5951
        %v5953 = vpop.f32.mrb[0].mxu0
        %v5954 = vadd.f32 %v5653, %v5953
        %v5955 = vpop.f32.mrb[0].mxu0
        %5956 = vmatprep.mubr.f32.mxu0 0.0
        %v5957 = vand.u32 %v246, 4294901760
        %5958 = vmatmul.mubr.f32.gmra.mrb[0].mxu0 %v5957
        %v5959 = vpop.f32.mrb[0].mxu0
        %v5960 = vadd.f32 %v5663, %v5959
        %v5961 = vpop.f32.mrb[0].mxu0
        %5962 = vmatprep.mubr.f32.mxu0 0.0
        %v5963 = vand.u32 %v247, 4294901760
        %5964 = vmatmul.mubr.f32.gmra.mrb[0].mxu0 %v5963
        %v5965 = vpop.f32.mrb[0].mxu0
        %v5966 = vadd.f32 %v5673, %v5965
        %v5967 = vpop.f32.mrb[0].mxu0
        %5968 = vmatprep.mubr.f32.mxu0 0.0
        %v5969 = vand.u32 %v248, 4294901760
        %5970 = vmatmul.mubr.f32.gmra.mrb[0].mxu0 %v5969
        %v5971 = vpop.f32.mrb[0].mxu0
        %v5972 = vadd.f32 %v5683, %v5971
        %v5973 = vpop.f32.mrb[0].mxu0
        %5974 = vmatprep.mubr.f32.mxu0 0.0
        %v5975 = vand.u32 %v249, 4294901760
        %5976 = vmatmul.mubr.f32.gmra.mrb[0].mxu0 %v5975
        %v5977 = vpop.f32.mrb[0].mxu0
        %v5978 = vadd.f32 %v5693, %v5977
        %v5979 = vpop.f32.mrb[0].mxu0
        %5980 = vmatprep.mubr.f32.mxu0 0.0
        %v5981 = vand.u32 %v250, 4294901760
        %5982 = vmatmul.mubr.f32.gmra.mrb[0].mxu0 %v5981
        %v5983 = vpop.f32.mrb[0].mxu0
        %v5984 = vadd.f32 %v5703, %v5983
        %v5985 = vpop.f32.mrb[0].mxu0
        %5986 = vmatprep.mubr.f32.mxu0 0.0
        %v5987 = vand.u32 %v251, 4294901760
        %5988 = vmatmul.mubr.f32.gmra.mrb[0].mxu0 %v5987
        %v5989 = vpop.f32.mrb[0].mxu0
        %v5990 = vadd.f32 %v5713, %v5989
        %v5991 = vpop.f32.mrb[0].mxu0
        %5992 = vmatprep.mubr.f32.mxu0 0.0
        %v5993 = vand.u32 %v252, 4294901760
        %5994 = vmatmul.mubr.f32.gmra.mrb[0].mxu0 %v5993
        %v5995 = vpop.f32.mrb[0].mxu0
        %v5996 = vadd.f32 %v5723, %v5995
        %v5997 = vpop.f32.mrb[0].mxu0
        %5998 = vmatprep.mubr.f32.mxu0 0.0
        %v5999 = vand.u32 %v253, 4294901760
        %6000 = vmatmul.mubr.f32.gmra.mrb[0].mxu0 %v5999
        %v6001 = vpop.f32.mrb[0].mxu0
        %v6002 = vadd.f32 %v5733, %v6001
        %v6003 = vpop.f32.mrb[0].mxu0
        %6004 = vmatprep.mubr.f32.mxu0 0.0
        %v6005 = vand.u32 %v254, 4294901760
        %6006 = vmatmul.mubr.f32.gmra.mrb[0].mxu0 %v6005
        %v6007 = vpop.f32.mrb[0].mxu0
        %v6008 = vadd.f32 %v5743, %v6007
        %v6009 = vpop.f32.mrb[0].mxu0
        %6010 = vmatprep.mubr.f32.mxu0 0.0
        %v6011 = vand.u32 %v255, 4294901760
        %6012 = vmatmul.mubr.f32.gmra.mrb[0].mxu0 %v6011
        %v6013 = vpop.f32.mrb[0].mxu0
        %v6014 = vadd.f32 %v5753, %v6013
        %v6015 = vpop.f32.mrb[0].mxu0
        %6016 = vmatprep.mubr.f32.mxu0 0.0
        %v6017 = vand.u32 %v256, 4294901760
        %6018 = vmatmul.mubr.f32.gmra.mrb[0].mxu0 %v6017
        %v6019 = vpop.f32.mrb[0].mxu0
        %v6020 = vadd.f32 %v5763, %v6019
        %v6021 = vpop.f32.mrb[0].mxu0
        %6022 = vmatprep.mubr.f32.mxu0 0.0
        %v6023 = vand.u32 %v257, 4294901760
        %6024 = vmatmul.mubr.f32.gmra.mrb[0].mxu0 %v6023
        %v6025 = vpop.f32.mrb[0].mxu0
        %v6026 = vadd.f32 %v5773, %v6025
        %v6027 = vpop.f32.mrb[0].mxu0
        %6028 = vmatprep.mubr.f32.mxu0 0.0
        %v6029 = vand.u32 %v258, 4294901760
        %6030 = vmatmul.mubr.f32.gmra.mrb[0].mxu0 %v6029
        %v6031 = vpop.f32.mrb[0].mxu0
        %v6032 = vadd.f32 %v5783, %v6031
        %v6033 = vpop.f32.mrb[0].mxu0
        %6034 = vmatprep.mubr.f32.mxu0 0.0
        %v6035 = vand.u32 %v259, 4294901760
        %6036 = vmatmul.mubr.f32.gmra.mrb[0].mxu0 %v6035
        %v6037 = vpop.f32.mrb[0].mxu0
        %v6038 = vadd.f32 %v5793, %v6037
        %v6039 = vpop.f32.mrb[0].mxu0
        %6040 = vmatprep.mubr.f32.mxu0 0.0
        %v6041 = vand.u32 %v260, 4294901760
        %6042 = vmatmul.mubr.f32.gmra.mrb[0].mxu0 %v6041
        %v6043 = vpop.f32.mrb[0].mxu0
        %v6044 = vadd.f32 %v5803, %v6043
        %v6045 = vpop.f32.mrb[0].mxu0
        %6046 = vdwg.mxu0
        %6047 = vmatprep.subr.mxu0 0.0
        %v6048 = vand.u32 %v5467, 4294901760
        %v6049 = vsub.f32 %v5467, %v6048
        %6050 = vmatpush1.msra.mxu0 %v6049
        %6051 = vmatprep.subr.mxu0 0.0
        %v6052 = vand.u32 %v5473, 4294901760
        %v6053 = vsub.f32 %v5473, %v6052
        %6054 = vmatpush1.msra.mxu0 %v6053
        %6055 = vmatprep.subr.mxu0 0.0
        %v6056 = vand.u32 %v5479, 4294901760
        %v6057 = vsub.f32 %v5479, %v6056
        %6058 = vmatpush1.msra.mxu0 %v6057
        %6059 = vmatprep.subr.mxu0 0.0
        %v6060 = vand.u32 %v5485, 4294901760
        %v6061 = vsub.f32 %v5485, %v6060
        %6062 = vmatpush1.msra.mxu0 %v6061
        %6063 = vmatprep.subr.mxu0 0.0
        %v6064 = vand.u32 %v5491, 4294901760
        %v6065 = vsub.f32 %v5491, %v6064
        %6066 = vmatpush1.msra.mxu0 %v6065
        %6067 = vmatprep.subr.mxu0 0.0
        %v6068 = vand.u32 %v5497, 4294901760
        %v6069 = vsub.f32 %v5497, %v6068
        %6070 = vmatpush1.msra.mxu0 %v6069
        %6071 = vmatprep.subr.mxu0 0.0
        %v6072 = vand.u32 %v5503, 4294901760
        %v6073 = vsub.f32 %v5503, %v6072
        %6074 = vmatpush1.msra.mxu0 %v6073
        %6075 = vmatprep.subr.mxu0 0.0
        %v6076 = vand.u32 %v5509, 4294901760
        %v6077 = vsub.f32 %v5509, %v6076
        %6078 = vmatpush1.msra.mxu0 %v6077
        %6079 = vmatprep.subr.mxu0 0.0
        %v6080 = vand.u32 %v5515, 4294901760
        %v6081 = vsub.f32 %v5515, %v6080
        %6082 = vmatpush1.msra.mxu0 %v6081
        %6083 = vmatprep.subr.mxu0 0.0
        %v6084 = vand.u32 %v5521, 4294901760
        %v6085 = vsub.f32 %v5521, %v6084
        %6086 = vmatpush1.msra.mxu0 %v6085
        %6087 = vmatprep.subr.mxu0 0.0
        %v6088 = vand.u32 %v5527, 4294901760
        %v6089 = vsub.f32 %v5527, %v6088
        %6090 = vmatpush1.msra.mxu0 %v6089
        %6091 = vmatprep.subr.mxu0 0.0
        %v6092 = vand.u32 %v5533, 4294901760
        %v6093 = vsub.f32 %v5533, %v6092
        %6094 = vmatpush1.msra.mxu0 %v6093
        %6095 = vmatprep.subr.mxu0 0.0
        %v6096 = vand.u32 %v5539, 4294901760
        %v6097 = vsub.f32 %v5539, %v6096
        %6098 = vmatpush1.msra.mxu0 %v6097
        %6099 = vmatprep.subr.mxu0 0.0
        %v6100 = vand.u32 %v5545, 4294901760
        %v6101 = vsub.f32 %v5545, %v6100
        %6102 = vmatpush1.msra.mxu0 %v6101
        %6103 = vmatprep.subr.mxu0 0.0
        %v6104 = vand.u32 %v5551, 4294901760
        %v6105 = vsub.f32 %v5551, %v6104
        %6106 = vmatpush1.msra.mxu0 %v6105
        %6107 = vmatprep.subr.mxu0 0.0
        %v6108 = vand.u32 %v5557, 4294901760
        %v6109 = vsub.f32 %v5557, %v6108
        %6110 = vmatpush1.msra.mxu0 %v6109
        %6111 = vmatprep.subr.mxu0 0.0
        %6112 = vmatpush1.msra.mxu0 0.0
        %6113 = vmatprep.subr.mxu0 0.0
        %6114 = vmatpush1.msra.mxu0 0.0
        %6115 = vmatprep.subr.mxu0 0.0
        %6116 = vmatpush1.msra.mxu0 0.0
        %6117 = vmatprep.subr.mxu0 0.0
        %6118 = vmatpush1.msra.mxu0 0.0
        %6119 = vmatprep.subr.mxu0 0.0
        %6120 = vmatpush1.msra.mxu0 0.0
        %6121 = vmatprep.subr.mxu0 0.0
        %6122 = vmatpush1.msra.mxu0 0.0
        %6123 = vmatprep.subr.mxu0 0.0
        %6124 = vmatpush1.msra.mxu0 0.0
        %6125 = vmatprep.subr.mxu0 0.0
        %6126 = vmatpush1.msra.mxu0 0.0
        %6127 = vmatprep.subr.mxu0 0.0
        %6128 = vmatpush1.msra.mxu0 0.0
        %6129 = vmatprep.subr.mxu0 0.0
        %6130 = vmatpush1.msra.mxu0 0.0
        %6131 = vmatprep.subr.mxu0 0.0
        %6132 = vmatpush1.msra.mxu0 0.0
        %6133 = vmatprep.subr.mxu0 0.0
        %6134 = vmatpush1.msra.mxu0 0.0
        %6135 = vmatprep.subr.mxu0 0.0
        %6136 = vmatpush1.msra.mxu0 0.0
        %6137 = vmatprep.subr.mxu0 0.0
        %6138 = vmatpush1.msra.mxu0 0.0
        %6139 = vmatprep.subr.mxu0 0.0
        %6140 = vmatpush1.msra.mxu0 0.0
        %6141 = vmatprep.subr.mxu0 0.0
        %6142 = vmatpush1.msra.mxu0 0.0
        %6143 = vmatprep.mubr.f32.mxu0 0.0
        %v6144 = vand.u32 %v245, 4294901760
        %v6145 = vsub.f32 %v245, %v6144
        %6146 = vmatmul.mubr.f32.gmra.mrb[0].mxu0 %v6145
        %v6147 = vpop.f32.mrb[0].mxu0
        %v6148 = vadd.f32 %v5954, %v6147
        %v6149 = vpop.f32.mrb[0].mxu0
        %6150 = vmatprep.mubr.f32.mxu0 0.0
        %v6151 = vand.u32 %v246, 4294901760
        %v6152 = vsub.f32 %v246, %v6151
        %6153 = vmatmul.mubr.f32.gmra.mrb[0].mxu0 %v6152
        %v6154 = vpop.f32.mrb[0].mxu0
        %v6155 = vadd.f32 %v5960, %v6154
        %v6156 = vpop.f32.mrb[0].mxu0
        %6157 = vmatprep.mubr.f32.mxu0 0.0
        %v6158 = vand.u32 %v247, 4294901760
        %v6159 = vsub.f32 %v247, %v6158
        %6160 = vmatmul.mubr.f32.gmra.mrb[0].mxu0 %v6159
        %v6161 = vpop.f32.mrb[0].mxu0
        %v6162 = vadd.f32 %v5966, %v6161
        %v6163 = vpop.f32.mrb[0].mxu0
        %6164 = vmatprep.mubr.f32.mxu0 0.0
        %v6165 = vand.u32 %v248, 4294901760
        %v6166 = vsub.f32 %v248, %v6165
        %6167 = vmatmul.mubr.f32.gmra.mrb[0].mxu0 %v6166
        %v6168 = vpop.f32.mrb[0].mxu0
        %v6169 = vadd.f32 %v5972, %v6168
        %v6170 = vpop.f32.mrb[0].mxu0
        %6171 = vmatprep.mubr.f32.mxu0 0.0
        %v6172 = vand.u32 %v249, 4294901760
        %v6173 = vsub.f32 %v249, %v6172
        %6174 = vmatmul.mubr.f32.gmra.mrb[0].mxu0 %v6173
        %v6175 = vpop.f32.mrb[0].mxu0
        %v6176 = vadd.f32 %v5978, %v6175
        %v6177 = vpop.f32.mrb[0].mxu0
        %6178 = vmatprep.mubr.f32.mxu0 0.0
        %v6179 = vand.u32 %v250, 4294901760
        %v6180 = vsub.f32 %v250, %v6179
        %6181 = vmatmul.mubr.f32.gmra.mrb[0].mxu0 %v6180
        %v6182 = vpop.f32.mrb[0].mxu0
        %v6183 = vadd.f32 %v5984, %v6182
        %v6184 = vpop.f32.mrb[0].mxu0
        %6185 = vmatprep.mubr.f32.mxu0 0.0
        %v6186 = vand.u32 %v251, 4294901760
        %v6187 = vsub.f32 %v251, %v6186
        %6188 = vmatmul.mubr.f32.gmra.mrb[0].mxu0 %v6187
        %v6189 = vpop.f32.mrb[0].mxu0
        %v6190 = vadd.f32 %v5990, %v6189
        %v6191 = vpop.f32.mrb[0].mxu0
        %6192 = vmatprep.mubr.f32.mxu0 0.0
        %v6193 = vand.u32 %v252, 4294901760
        %v6194 = vsub.f32 %v252, %v6193
        %6195 = vmatmul.mubr.f32.gmra.mrb[0].mxu0 %v6194
        %v6196 = vpop.f32.mrb[0].mxu0
        %v6197 = vadd.f32 %v5996, %v6196
        %v6198 = vpop.f32.mrb[0].mxu0
        %6199 = vmatprep.mubr.f32.mxu0 0.0
        %v6200 = vand.u32 %v253, 4294901760
        %v6201 = vsub.f32 %v253, %v6200
        %6202 = vmatmul.mubr.f32.gmra.mrb[0].mxu0 %v6201
        %v6203 = vpop.f32.mrb[0].mxu0
        %v6204 = vadd.f32 %v6002, %v6203
        %v6205 = vpop.f32.mrb[0].mxu0
        %6206 = vmatprep.mubr.f32.mxu0 0.0
        %v6207 = vand.u32 %v254, 4294901760
        %v6208 = vsub.f32 %v254, %v6207
        %6209 = vmatmul.mubr.f32.gmra.mrb[0].mxu0 %v6208
        %v6210 = vpop.f32.mrb[0].mxu0
        %v6211 = vadd.f32 %v6008, %v6210
        %v6212 = vpop.f32.mrb[0].mxu0
        %6213 = vmatprep.mubr.f32.mxu0 0.0
        %v6214 = vand.u32 %v255, 4294901760
        %v6215 = vsub.f32 %v255, %v6214
        %6216 = vmatmul.mubr.f32.gmra.mrb[0].mxu0 %v6215
        %v6217 = vpop.f32.mrb[0].mxu0
        %v6218 = vadd.f32 %v6014, %v6217
        %v6219 = vpop.f32.mrb[0].mxu0
        %6220 = vmatprep.mubr.f32.mxu0 0.0
        %v6221 = vand.u32 %v256, 4294901760
        %v6222 = vsub.f32 %v256, %v6221
        %6223 = vmatmul.mubr.f32.gmra.mrb[0].mxu0 %v6222
        %v6224 = vpop.f32.mrb[0].mxu0
        %v6225 = vadd.f32 %v6020, %v6224
        %v6226 = vpop.f32.mrb[0].mxu0
        %6227 = vmatprep.mubr.f32.mxu0 0.0
        %v6228 = vand.u32 %v257, 4294901760
        %v6229 = vsub.f32 %v257, %v6228
        %6230 = vmatmul.mubr.f32.gmra.mrb[0].mxu0 %v6229
        %v6231 = vpop.f32.mrb[0].mxu0
        %v6232 = vadd.f32 %v6026, %v6231
        %v6233 = vpop.f32.mrb[0].mxu0
        %6234 = vmatprep.mubr.f32.mxu0 0.0
        %v6235 = vand.u32 %v258, 4294901760
        %v6236 = vsub.f32 %v258, %v6235
        %6237 = vmatmul.mubr.f32.gmra.mrb[0].mxu0 %v6236
        %v6238 = vpop.f32.mrb[0].mxu0
        %v6239 = vadd.f32 %v6032, %v6238
        %v6240 = vpop.f32.mrb[0].mxu0
        %6241 = vmatprep.mubr.f32.mxu0 0.0
        %v6242 = vand.u32 %v259, 4294901760
        %v6243 = vsub.f32 %v259, %v6242
        %6244 = vmatmul.mubr.f32.gmra.mrb[0].mxu0 %v6243
        %v6245 = vpop.f32.mrb[0].mxu0
        %v6246 = vadd.f32 %v6038, %v6245
        %v6247 = vpop.f32.mrb[0].mxu0
        %6248 = vmatprep.mubr.f32.mxu0 0.0
        %v6249 = vand.u32 %v260, 4294901760
        %v6250 = vsub.f32 %v260, %v6249
        %6251 = vmatmul.mubr.f32.gmra.mrb[0].mxu0 %v6250
        %v6252 = vpop.f32.mrb[0].mxu0
        %v6253 = vadd.f32 %v6044, %v6252
        %v6254 = vpop.f32.mrb[0].mxu0
        %6255 = vdwg.mxu0
        %6256 = vmatprep.subr.mxu0 0.0
        %v6257 = vand.u32 %v5467, 4294901760
        %6258 = vmatpush1.msra.mxu0 %v6257
        %6259 = vmatprep.subr.mxu0 0.0
        %v6260 = vand.u32 %v5473, 4294901760
        %6261 = vmatpush1.msra.mxu0 %v6260
        %6262 = vmatprep.subr.mxu0 0.0
        %v6263 = vand.u32 %v5479, 4294901760
        %6264 = vmatpush1.msra.mxu0 %v6263
        %6265 = vmatprep.subr.mxu0 0.0
        %v6266 = vand.u32 %v5485, 4294901760
        %6267 = vmatpush1.msra.mxu0 %v6266
        %6268 = vmatprep.subr.mxu0 0.0
        %v6269 = vand.u32 %v5491, 4294901760
        %6270 = vmatpush1.msra.mxu0 %v6269
        %6271 = vmatprep.subr.mxu0 0.0
        %v6272 = vand.u32 %v5497, 4294901760
        %6273 = vmatpush1.msra.mxu0 %v6272
        %6274 = vmatprep.subr.mxu0 0.0
        %v6275 = vand.u32 %v5503, 4294901760
        %6276 = vmatpush1.msra.mxu0 %v6275
        %6277 = vmatprep.subr.mxu0 0.0
        %v6278 = vand.u32 %v5509, 4294901760
        %6279 = vmatpush1.msra.mxu0 %v6278
        %6280 = vmatprep.subr.mxu0 0.0
        %v6281 = vand.u32 %v5515, 4294901760
        %6282 = vmatpush1.msra.mxu0 %v6281
        %6283 = vmatprep.subr.mxu0 0.0
        %v6284 = vand.u32 %v5521, 4294901760
        %6285 = vmatpush1.msra.mxu0 %v6284
        %6286 = vmatprep.subr.mxu0 0.0
        %v6287 = vand.u32 %v5527, 4294901760
        %6288 = vmatpush1.msra.mxu0 %v6287
        %6289 = vmatprep.subr.mxu0 0.0
        %v6290 = vand.u32 %v5533, 4294901760
        %6291 = vmatpush1.msra.mxu0 %v6290
        %6292 = vmatprep.subr.mxu0 0.0
        %v6293 = vand.u32 %v5539, 4294901760
        %6294 = vmatpush1.msra.mxu0 %v6293
        %6295 = vmatprep.subr.mxu0 0.0
        %v6296 = vand.u32 %v5545, 4294901760
        %6297 = vmatpush1.msra.mxu0 %v6296
        %6298 = vmatprep.subr.mxu0 0.0
        %v6299 = vand.u32 %v5551, 4294901760
        %6300 = vmatpush1.msra.mxu0 %v6299
        %6301 = vmatprep.subr.mxu0 0.0
        %v6302 = vand.u32 %v5557, 4294901760
        %6303 = vmatpush1.msra.mxu0 %v6302
        %6304 = vmatprep.subr.mxu0 0.0
        %6305 = vmatpush1.msra.mxu0 0.0
        %6306 = vmatprep.subr.mxu0 0.0
        %6307 = vmatpush1.msra.mxu0 0.0
        %6308 = vmatprep.subr.mxu0 0.0
        %6309 = vmatpush1.msra.mxu0 0.0
        %6310 = vmatprep.subr.mxu0 0.0
        %6311 = vmatpush1.msra.mxu0 0.0
        %6312 = vmatprep.subr.mxu0 0.0
        %6313 = vmatpush1.msra.mxu0 0.0
        %6314 = vmatprep.subr.mxu0 0.0
        %6315 = vmatpush1.msra.mxu0 0.0
        %6316 = vmatprep.subr.mxu0 0.0
        %6317 = vmatpush1.msra.mxu0 0.0
        %6318 = vmatprep.subr.mxu0 0.0
        %6319 = vmatpush1.msra.mxu0 0.0
        %6320 = vmatprep.subr.mxu0 0.0
        %6321 = vmatpush1.msra.mxu0 0.0
        %6322 = vmatprep.subr.mxu0 0.0
        %6323 = vmatpush1.msra.mxu0 0.0
        %6324 = vmatprep.subr.mxu0 0.0
        %6325 = vmatpush1.msra.mxu0 0.0
        %6326 = vmatprep.subr.mxu0 0.0
        %6327 = vmatpush1.msra.mxu0 0.0
        %6328 = vmatprep.subr.mxu0 0.0
        %6329 = vmatpush1.msra.mxu0 0.0
        %6330 = vmatprep.subr.mxu0 0.0
        %6331 = vmatpush1.msra.mxu0 0.0
        %6332 = vmatprep.subr.mxu0 0.0
        %6333 = vmatpush1.msra.mxu0 0.0
        %6334 = vmatprep.subr.mxu0 0.0
        %6335 = vmatpush1.msra.mxu0 0.0
        %6336 = vmatprep.mubr.f32.mxu0 0.0
        %v6337 = vand.u32 %v245, 4294901760
        %v6338 = vsub.f32 %v245, %v6337
        %v6339 = vand.u32 %v6338, 4294901760
        %6340 = vmatmul.mubr.f32.gmra.mrb[0].mxu0 %v6339
        %v6341 = vpop.f32.mrb[0].mxu0
        %v6342 = vadd.f32 %v6148, %v6341
        %v6343 = vpop.f32.mrb[0].mxu0
        %6344 = vmatprep.mubr.f32.mxu0 0.0
        %v6345 = vand.u32 %v246, 4294901760
        %v6346 = vsub.f32 %v246, %v6345
        %v6347 = vand.u32 %v6346, 4294901760
        %6348 = vmatmul.mubr.f32.gmra.mrb[0].mxu0 %v6347
        %v6349 = vpop.f32.mrb[0].mxu0
        %v6350 = vadd.f32 %v6155, %v6349
        %v6351 = vpop.f32.mrb[0].mxu0
        %6352 = vmatprep.mubr.f32.mxu0 0.0
        %v6353 = vand.u32 %v247, 4294901760
        %v6354 = vsub.f32 %v247, %v6353
        %v6355 = vand.u32 %v6354, 4294901760
        %6356 = vmatmul.mubr.f32.gmra.mrb[0].mxu0 %v6355
        %v6357 = vpop.f32.mrb[0].mxu0
        %v6358 = vadd.f32 %v6162, %v6357
        %v6359 = vpop.f32.mrb[0].mxu0
        %6360 = vmatprep.mubr.f32.mxu0 0.0
        %v6361 = vand.u32 %v248, 4294901760
        %v6362 = vsub.f32 %v248, %v6361
        %v6363 = vand.u32 %v6362, 4294901760
        %6364 = vmatmul.mubr.f32.gmra.mrb[0].mxu0 %v6363
        %v6365 = vpop.f32.mrb[0].mxu0
        %v6366 = vadd.f32 %v6169, %v6365
        %v6367 = vpop.f32.mrb[0].mxu0
        %6368 = vmatprep.mubr.f32.mxu0 0.0
        %v6369 = vand.u32 %v249, 4294901760
        %v6370 = vsub.f32 %v249, %v6369
        %v6371 = vand.u32 %v6370, 4294901760
        %6372 = vmatmul.mubr.f32.gmra.mrb[0].mxu0 %v6371
        %v6373 = vpop.f32.mrb[0].mxu0
        %v6374 = vadd.f32 %v6176, %v6373
        %v6375 = vpop.f32.mrb[0].mxu0
        %6376 = vmatprep.mubr.f32.mxu0 0.0
        %v6377 = vand.u32 %v250, 4294901760
        %v6378 = vsub.f32 %v250, %v6377
        %v6379 = vand.u32 %v6378, 4294901760
        %6380 = vmatmul.mubr.f32.gmra.mrb[0].mxu0 %v6379
        %v6381 = vpop.f32.mrb[0].mxu0
        %v6382 = vadd.f32 %v6183, %v6381
        %v6383 = vpop.f32.mrb[0].mxu0
        %6384 = vmatprep.mubr.f32.mxu0 0.0
        %v6385 = vand.u32 %v251, 4294901760
        %v6386 = vsub.f32 %v251, %v6385
        %v6387 = vand.u32 %v6386, 4294901760
        %6388 = vmatmul.mubr.f32.gmra.mrb[0].mxu0 %v6387
        %v6389 = vpop.f32.mrb[0].mxu0
        %v6390 = vadd.f32 %v6190, %v6389
        %v6391 = vpop.f32.mrb[0].mxu0
        %6392 = vmatprep.mubr.f32.mxu0 0.0
        %v6393 = vand.u32 %v252, 4294901760
        %v6394 = vsub.f32 %v252, %v6393
        %v6395 = vand.u32 %v6394, 4294901760
        %6396 = vmatmul.mubr.f32.gmra.mrb[0].mxu0 %v6395
        %v6397 = vpop.f32.mrb[0].mxu0
        %v6398 = vadd.f32 %v6197, %v6397
        %v6399 = vpop.f32.mrb[0].mxu0
        %6400 = vmatprep.mubr.f32.mxu0 0.0
        %v6401 = vand.u32 %v253, 4294901760
        %v6402 = vsub.f32 %v253, %v6401
        %v6403 = vand.u32 %v6402, 4294901760
        %6404 = vmatmul.mubr.f32.gmra.mrb[0].mxu0 %v6403
        %v6405 = vpop.f32.mrb[0].mxu0
        %v6406 = vadd.f32 %v6204, %v6405
        %v6407 = vpop.f32.mrb[0].mxu0
        %6408 = vmatprep.mubr.f32.mxu0 0.0
        %v6409 = vand.u32 %v254, 4294901760
        %v6410 = vsub.f32 %v254, %v6409
        %v6411 = vand.u32 %v6410, 4294901760
        %6412 = vmatmul.mubr.f32.gmra.mrb[0].mxu0 %v6411
        %v6413 = vpop.f32.mrb[0].mxu0
        %v6414 = vadd.f32 %v6211, %v6413
        %v6415 = vpop.f32.mrb[0].mxu0
        %6416 = vmatprep.mubr.f32.mxu0 0.0
        %v6417 = vand.u32 %v255, 4294901760
        %v6418 = vsub.f32 %v255, %v6417
        %v6419 = vand.u32 %v6418, 4294901760
        %6420 = vmatmul.mubr.f32.gmra.mrb[0].mxu0 %v6419
        %v6421 = vpop.f32.mrb[0].mxu0
        %v6422 = vadd.f32 %v6218, %v6421
        %v6423 = vpop.f32.mrb[0].mxu0
        %6424 = vmatprep.mubr.f32.mxu0 0.0
        %v6425 = vand.u32 %v256, 4294901760
        %v6426 = vsub.f32 %v256, %v6425
        %v6427 = vand.u32 %v6426, 4294901760
        %6428 = vmatmul.mubr.f32.gmra.mrb[0].mxu0 %v6427
        %v6429 = vpop.f32.mrb[0].mxu0
        %v6430 = vadd.f32 %v6225, %v6429
        %v6431 = vpop.f32.mrb[0].mxu0
        %6432 = vmatprep.mubr.f32.mxu0 0.0
        %v6433 = vand.u32 %v257, 4294901760
        %v6434 = vsub.f32 %v257, %v6433
        %v6435 = vand.u32 %v6434, 4294901760
        %6436 = vmatmul.mubr.f32.gmra.mrb[0].mxu0 %v6435
        %v6437 = vpop.f32.mrb[0].mxu0
        %v6438 = vadd.f32 %v6232, %v6437
        %v6439 = vpop.f32.mrb[0].mxu0
        %6440 = vmatprep.mubr.f32.mxu0 0.0
        %v6441 = vand.u32 %v258, 4294901760
        %v6442 = vsub.f32 %v258, %v6441
        %v6443 = vand.u32 %v6442, 4294901760
        %6444 = vmatmul.mubr.f32.gmra.mrb[0].mxu0 %v6443
        %v6445 = vpop.f32.mrb[0].mxu0
        %v6446 = vadd.f32 %v6239, %v6445
        %v6447 = vpop.f32.mrb[0].mxu0
        %6448 = vmatprep.mubr.f32.mxu0 0.0
        %v6449 = vand.u32 %v259, 4294901760
        %v6450 = vsub.f32 %v259, %v6449
        %v6451 = vand.u32 %v6450, 4294901760
        %6452 = vmatmul.mubr.f32.gmra.mrb[0].mxu0 %v6451
        %v6453 = vpop.f32.mrb[0].mxu0
        %v6454 = vadd.f32 %v6246, %v6453
        %v6455 = vpop.f32.mrb[0].mxu0
        %6456 = vmatprep.mubr.f32.mxu0 0.0
        %v6457 = vand.u32 %v260, 4294901760
        %v6458 = vsub.f32 %v260, %v6457
        %v6459 = vand.u32 %v6458, 4294901760
        %6460 = vmatmul.mubr.f32.gmra.mrb[0].mxu0 %v6459
        %v6461 = vpop.f32.mrb[0].mxu0
        %v6462 = vadd.f32 %v6253, %v6461
        %v6463 = vpop.f32.mrb[0].mxu0
        %6464 = vdwg.mxu0
        %6465 = vmatprep.subr.mxu0 0.0
        %v6466 = vand.u32 %v5467, 4294901760
        %v6467 = vsub.f32 %v5467, %v6466
        %v6468 = vand.u32 %v6467, 4294901760
        %6469 = vmatpush1.msra.mxu0 %v6468
        %6470 = vmatprep.subr.mxu0 0.0
        %v6471 = vand.u32 %v5473, 4294901760
        %v6472 = vsub.f32 %v5473, %v6471
        %v6473 = vand.u32 %v6472, 4294901760
        %6474 = vmatpush1.msra.mxu0 %v6473
        %6475 = vmatprep.subr.mxu0 0.0
        %v6476 = vand.u32 %v5479, 4294901760
        %v6477 = vsub.f32 %v5479, %v6476
        %v6478 = vand.u32 %v6477, 4294901760
        %6479 = vmatpush1.msra.mxu0 %v6478
        %6480 = vmatprep.subr.mxu0 0.0
        %v6481 = vand.u32 %v5485, 4294901760
        %v6482 = vsub.f32 %v5485, %v6481
        %v6483 = vand.u32 %v6482, 4294901760
        %6484 = vmatpush1.msra.mxu0 %v6483
        %6485 = vmatprep.subr.mxu0 0.0
        %v6486 = vand.u32 %v5491, 4294901760
        %v6487 = vsub.f32 %v5491, %v6486
        %v6488 = vand.u32 %v6487, 4294901760
        %6489 = vmatpush1.msra.mxu0 %v6488
        %6490 = vmatprep.subr.mxu0 0.0
        %v6491 = vand.u32 %v5497, 4294901760
        %v6492 = vsub.f32 %v5497, %v6491
        %v6493 = vand.u32 %v6492, 4294901760
        %6494 = vmatpush1.msra.mxu0 %v6493
        %6495 = vmatprep.subr.mxu0 0.0
        %v6496 = vand.u32 %v5503, 4294901760
        %v6497 = vsub.f32 %v5503, %v6496
        %v6498 = vand.u32 %v6497, 4294901760
        %6499 = vmatpush1.msra.mxu0 %v6498
        %6500 = vmatprep.subr.mxu0 0.0
        %v6501 = vand.u32 %v5509, 4294901760
        %v6502 = vsub.f32 %v5509, %v6501
        %v6503 = vand.u32 %v6502, 4294901760
        %6504 = vmatpush1.msra.mxu0 %v6503
        %6505 = vmatprep.subr.mxu0 0.0
        %v6506 = vand.u32 %v5515, 4294901760
        %v6507 = vsub.f32 %v5515, %v6506
        %v6508 = vand.u32 %v6507, 4294901760
        %6509 = vmatpush1.msra.mxu0 %v6508
        %6510 = vmatprep.subr.mxu0 0.0
        %v6511 = vand.u32 %v5521, 4294901760
        %v6512 = vsub.f32 %v5521, %v6511
        %v6513 = vand.u32 %v6512, 4294901760
        %6514 = vmatpush1.msra.mxu0 %v6513
        %6515 = vmatprep.subr.mxu0 0.0
        %v6516 = vand.u32 %v5527, 4294901760
        %v6517 = vsub.f32 %v5527, %v6516
        %v6518 = vand.u32 %v6517, 4294901760
        %6519 = vmatpush1.msra.mxu0 %v6518
        %6520 = vmatprep.subr.mxu0 0.0
        %v6521 = vand.u32 %v5533, 4294901760
        %v6522 = vsub.f32 %v5533, %v6521
        %v6523 = vand.u32 %v6522, 4294901760
        %6524 = vmatpush1.msra.mxu0 %v6523
        %6525 = vmatprep.subr.mxu0 0.0
        %v6526 = vand.u32 %v5539, 4294901760
        %v6527 = vsub.f32 %v5539, %v6526
        %v6528 = vand.u32 %v6527, 4294901760
        %6529 = vmatpush1.msra.mxu0 %v6528
        %6530 = vmatprep.subr.mxu0 0.0
        %v6531 = vand.u32 %v5545, 4294901760
        %v6532 = vsub.f32 %v5545, %v6531
        %v6533 = vand.u32 %v6532, 4294901760
        %6534 = vmatpush1.msra.mxu0 %v6533
        %6535 = vmatprep.subr.mxu0 0.0
        %v6536 = vand.u32 %v5551, 4294901760
        %v6537 = vsub.f32 %v5551, %v6536
        %v6538 = vand.u32 %v6537, 4294901760
        %6539 = vmatpush1.msra.mxu0 %v6538
        %6540 = vmatprep.subr.mxu0 0.0
        %v6541 = vand.u32 %v5557, 4294901760
        %v6542 = vsub.f32 %v5557, %v6541
        %v6543 = vand.u32 %v6542, 4294901760
        %6544 = vmatpush1.msra.mxu0 %v6543
        %6545 = vmatprep.subr.mxu0 0.0
        %6546 = vmatpush1.msra.mxu0 0.0
        %6547 = vmatprep.subr.mxu0 0.0
        %6548 = vmatpush1.msra.mxu0 0.0
        %6549 = vmatprep.subr.mxu0 0.0
        %6550 = vmatpush1.msra.mxu0 0.0
        %6551 = vmatprep.subr.mxu0 0.0
        %6552 = vmatpush1.msra.mxu0 0.0
        %6553 = vmatprep.subr.mxu0 0.0
        %6554 = vmatpush1.msra.mxu0 0.0
        %6555 = vmatprep.subr.mxu0 0.0
        %6556 = vmatpush1.msra.mxu0 0.0
        %6557 = vmatprep.subr.mxu0 0.0
        %6558 = vmatpush1.msra.mxu0 0.0
        %6559 = vmatprep.subr.mxu0 0.0
        %6560 = vmatpush1.msra.mxu0 0.0
        %6561 = vmatprep.subr.mxu0 0.0
        %6562 = vmatpush1.msra.mxu0 0.0
        %6563 = vmatprep.subr.mxu0 0.0
        %6564 = vmatpush1.msra.mxu0 0.0
        %6565 = vmatprep.subr.mxu0 0.0
        %6566 = vmatpush1.msra.mxu0 0.0
        %6567 = vmatprep.subr.mxu0 0.0
        %6568 = vmatpush1.msra.mxu0 0.0
        %6569 = vmatprep.subr.mxu0 0.0
        %6570 = vmatpush1.msra.mxu0 0.0
        %6571 = vmatprep.subr.mxu0 0.0
        %6572 = vmatpush1.msra.mxu0 0.0
        %6573 = vmatprep.subr.mxu0 0.0
        %6574 = vmatpush1.msra.mxu0 0.0
        %6575 = vmatprep.subr.mxu0 0.0
        %6576 = vmatpush1.msra.mxu0 0.0
        %6577 = vmatprep.mubr.f32.mxu0 0.0
        %v6578 = vand.u32 %v245, 4294901760
        %6579 = vmatmul.mubr.f32.gmra.mrb[0].mxu0 %v6578
        %v6580 = vpop.f32.mrb[0].mxu0
        %v6581 = vadd.f32 %v6342, %v6580
        %v6582 = vpop.f32.mrb[0].mxu0
        %6583 = vmatprep.mubr.f32.mxu0 0.0
        %v6584 = vand.u32 %v246, 4294901760
        %6585 = vmatmul.mubr.f32.gmra.mrb[0].mxu0 %v6584
        %v6586 = vpop.f32.mrb[0].mxu0
        %v6587 = vadd.f32 %v6350, %v6586
        %v6588 = vpop.f32.mrb[0].mxu0
        %6589 = vmatprep.mubr.f32.mxu0 0.0
        %v6590 = vand.u32 %v247, 4294901760
        %6591 = vmatmul.mubr.f32.gmra.mrb[0].mxu0 %v6590
        %v6592 = vpop.f32.mrb[0].mxu0
        %v6593 = vadd.f32 %v6358, %v6592
        %v6594 = vpop.f32.mrb[0].mxu0
        %6595 = vmatprep.mubr.f32.mxu0 0.0
        %v6596 = vand.u32 %v248, 4294901760
        %6597 = vmatmul.mubr.f32.gmra.mrb[0].mxu0 %v6596
        %v6598 = vpop.f32.mrb[0].mxu0
        %v6599 = vadd.f32 %v6366, %v6598
        %v6600 = vpop.f32.mrb[0].mxu0
        %6601 = vmatprep.mubr.f32.mxu0 0.0
        %v6602 = vand.u32 %v249, 4294901760
        %6603 = vmatmul.mubr.f32.gmra.mrb[0].mxu0 %v6602
        %v6604 = vpop.f32.mrb[0].mxu0
        %v6605 = vadd.f32 %v6374, %v6604
        %v6606 = vpop.f32.mrb[0].mxu0
        %6607 = vmatprep.mubr.f32.mxu0 0.0
        %v6608 = vand.u32 %v250, 4294901760
        %6609 = vmatmul.mubr.f32.gmra.mrb[0].mxu0 %v6608
        %v6610 = vpop.f32.mrb[0].mxu0
        %v6611 = vadd.f32 %v6382, %v6610
        %v6612 = vpop.f32.mrb[0].mxu0
        %6613 = vmatprep.mubr.f32.mxu0 0.0
        %v6614 = vand.u32 %v251, 4294901760
        %6615 = vmatmul.mubr.f32.gmra.mrb[0].mxu0 %v6614
        %v6616 = vpop.f32.mrb[0].mxu0
        %v6617 = vadd.f32 %v6390, %v6616
        %v6618 = vpop.f32.mrb[0].mxu0
        %6619 = vmatprep.mubr.f32.mxu0 0.0
        %v6620 = vand.u32 %v252, 4294901760
        %6621 = vmatmul.mubr.f32.gmra.mrb[0].mxu0 %v6620
        %v6622 = vpop.f32.mrb[0].mxu0
        %v6623 = vadd.f32 %v6398, %v6622
        %v6624 = vpop.f32.mrb[0].mxu0
        %6625 = vmatprep.mubr.f32.mxu0 0.0
        %v6626 = vand.u32 %v253, 4294901760
        %6627 = vmatmul.mubr.f32.gmra.mrb[0].mxu0 %v6626
        %v6628 = vpop.f32.mrb[0].mxu0
        %v6629 = vadd.f32 %v6406, %v6628
        %v6630 = vpop.f32.mrb[0].mxu0
        %6631 = vmatprep.mubr.f32.mxu0 0.0
        %v6632 = vand.u32 %v254, 4294901760
        %6633 = vmatmul.mubr.f32.gmra.mrb[0].mxu0 %v6632
        %v6634 = vpop.f32.mrb[0].mxu0
        %v6635 = vadd.f32 %v6414, %v6634
        %v6636 = vpop.f32.mrb[0].mxu0
        %6637 = vmatprep.mubr.f32.mxu0 0.0
        %v6638 = vand.u32 %v255, 4294901760
        %6639 = vmatmul.mubr.f32.gmra.mrb[0].mxu0 %v6638
        %v6640 = vpop.f32.mrb[0].mxu0
        %v6641 = vadd.f32 %v6422, %v6640
        %v6642 = vpop.f32.mrb[0].mxu0
        %6643 = vmatprep.mubr.f32.mxu0 0.0
        %v6644 = vand.u32 %v256, 4294901760
        %6645 = vmatmul.mubr.f32.gmra.mrb[0].mxu0 %v6644
        %v6646 = vpop.f32.mrb[0].mxu0
        %v6647 = vadd.f32 %v6430, %v6646
        %v6648 = vpop.f32.mrb[0].mxu0
        %6649 = vmatprep.mubr.f32.mxu0 0.0
        %v6650 = vand.u32 %v257, 4294901760
        %6651 = vmatmul.mubr.f32.gmra.mrb[0].mxu0 %v6650
        %v6652 = vpop.f32.mrb[0].mxu0
        %v6653 = vadd.f32 %v6438, %v6652
        %v6654 = vpop.f32.mrb[0].mxu0
        %6655 = vmatprep.mubr.f32.mxu0 0.0
        %v6656 = vand.u32 %v258, 4294901760
        %6657 = vmatmul.mubr.f32.gmra.mrb[0].mxu0 %v6656
        %v6658 = vpop.f32.mrb[0].mxu0
        %v6659 = vadd.f32 %v6446, %v6658
        %v6660 = vpop.f32.mrb[0].mxu0
        %6661 = vmatprep.mubr.f32.mxu0 0.0
        %v6662 = vand.u32 %v259, 4294901760
        %6663 = vmatmul.mubr.f32.gmra.mrb[0].mxu0 %v6662
        %v6664 = vpop.f32.mrb[0].mxu0
        %v6665 = vadd.f32 %v6454, %v6664
        %v6666 = vpop.f32.mrb[0].mxu0
        %6667 = vmatprep.mubr.f32.mxu0 0.0
        %v6668 = vand.u32 %v260, 4294901760
        %6669 = vmatmul.mubr.f32.gmra.mrb[0].mxu0 %v6668
        %v6670 = vpop.f32.mrb[0].mxu0
        %v6671 = vadd.f32 %v6462, %v6670
        %v6672 = vpop.f32.mrb[0].mxu0
        %6673 = vdwg.mxu0
        %6674 = vmatprep.subr.mxu0 0.0
        %v6675 = vand.u32 %v5467, 4294901760
        %6676 = vmatpush1.msra.mxu0 %v6675
        %6677 = vmatprep.subr.mxu0 0.0
        %v6678 = vand.u32 %v5473, 4294901760
        %6679 = vmatpush1.msra.mxu0 %v6678
        %6680 = vmatprep.subr.mxu0 0.0
        %v6681 = vand.u32 %v5479, 4294901760
        %6682 = vmatpush1.msra.mxu0 %v6681
        %6683 = vmatprep.subr.mxu0 0.0
        %v6684 = vand.u32 %v5485, 4294901760
        %6685 = vmatpush1.msra.mxu0 %v6684
        %6686 = vmatprep.subr.mxu0 0.0
        %v6687 = vand.u32 %v5491, 4294901760
        %6688 = vmatpush1.msra.mxu0 %v6687
        %6689 = vmatprep.subr.mxu0 0.0
        %v6690 = vand.u32 %v5497, 4294901760
        %6691 = vmatpush1.msra.mxu0 %v6690
        %6692 = vmatprep.subr.mxu0 0.0
        %v6693 = vand.u32 %v5503, 4294901760
        %6694 = vmatpush1.msra.mxu0 %v6693
        %6695 = vmatprep.subr.mxu0 0.0
        %v6696 = vand.u32 %v5509, 4294901760
        %6697 = vmatpush1.msra.mxu0 %v6696
        %6698 = vmatprep.subr.mxu0 0.0
        %v6699 = vand.u32 %v5515, 4294901760
        %6700 = vmatpush1.msra.mxu0 %v6699
        %6701 = vmatprep.subr.mxu0 0.0
        %v6702 = vand.u32 %v5521, 4294901760
        %6703 = vmatpush1.msra.mxu0 %v6702
        %6704 = vmatprep.subr.mxu0 0.0
        %v6705 = vand.u32 %v5527, 4294901760
        %6706 = vmatpush1.msra.mxu0 %v6705
        %6707 = vmatprep.subr.mxu0 0.0
        %v6708 = vand.u32 %v5533, 4294901760
        %6709 = vmatpush1.msra.mxu0 %v6708
        %6710 = vmatprep.subr.mxu0 0.0
        %v6711 = vand.u32 %v5539, 4294901760
        %6712 = vmatpush1.msra.mxu0 %v6711
        %6713 = vmatprep.subr.mxu0 0.0
        %v6714 = vand.u32 %v5545, 4294901760
        %6715 = vmatpush1.msra.mxu0 %v6714
        %6716 = vmatprep.subr.mxu0 0.0
        %v6717 = vand.u32 %v5551, 4294901760
        %6718 = vmatpush1.msra.mxu0 %v6717
        %6719 = vmatprep.subr.mxu0 0.0
        %v6720 = vand.u32 %v5557, 4294901760
        %6721 = vmatpush1.msra.mxu0 %v6720
        %6722 = vmatprep.subr.mxu0 0.0
        %6723 = vmatpush1.msra.mxu0 0.0
        %6724 = vmatprep.subr.mxu0 0.0
        %6725 = vmatpush1.msra.mxu0 0.0
        %6726 = vmatprep.subr.mxu0 0.0
        %6727 = vmatpush1.msra.mxu0 0.0
        %6728 = vmatprep.subr.mxu0 0.0
        %6729 = vmatpush1.msra.mxu0 0.0
        %6730 = vmatprep.subr.mxu0 0.0
        %6731 = vmatpush1.msra.mxu0 0.0
        %6732 = vmatprep.subr.mxu0 0.0
        %6733 = vmatpush1.msra.mxu0 0.0
        %6734 = vmatprep.subr.mxu0 0.0
        %6735 = vmatpush1.msra.mxu0 0.0
        %6736 = vmatprep.subr.mxu0 0.0
        %6737 = vmatpush1.msra.mxu0 0.0
        %6738 = vmatprep.subr.mxu0 0.0
        %6739 = vmatpush1.msra.mxu0 0.0
        %6740 = vmatprep.subr.mxu0 0.0
        %6741 = vmatpush1.msra.mxu0 0.0
        %6742 = vmatprep.subr.mxu0 0.0
        %6743 = vmatpush1.msra.mxu0 0.0
        %6744 = vmatprep.subr.mxu0 0.0
        %6745 = vmatpush1.msra.mxu0 0.0
        %6746 = vmatprep.subr.mxu0 0.0
        %6747 = vmatpush1.msra.mxu0 0.0
        %6748 = vmatprep.subr.mxu0 0.0
        %6749 = vmatpush1.msra.mxu0 0.0
        %6750 = vmatprep.subr.mxu0 0.0
        %6751 = vmatpush1.msra.mxu0 0.0
        %6752 = vmatprep.subr.mxu0 0.0
        %6753 = vmatpush1.msra.mxu0 0.0
        %6754 = vmatprep.mubr.f32.mxu0 0.0
        %v6755 = vand.u32 %v245, 4294901760
        %6756 = vmatmul.mubr.f32.gmra.mrb[0].mxu0 %v6755
        %v6757 = vpop.f32.mrb[0].mxu0
        %v6758 = vadd.f32 %v6581, %v6757
        %v6759 = vpop.f32.mrb[0].mxu0
        %6760 = vmatprep.mubr.f32.mxu0 0.0
        %v6761 = vand.u32 %v246, 4294901760
        %6762 = vmatmul.mubr.f32.gmra.mrb[0].mxu0 %v6761
        %v6763 = vpop.f32.mrb[0].mxu0
        %v6764 = vadd.f32 %v6587, %v6763
        %v6765 = vpop.f32.mrb[0].mxu0
        %6766 = vmatprep.mubr.f32.mxu0 0.0
        %v6767 = vand.u32 %v247, 4294901760
        %6768 = vmatmul.mubr.f32.gmra.mrb[0].mxu0 %v6767
        %v6769 = vpop.f32.mrb[0].mxu0
        %v6770 = vadd.f32 %v6593, %v6769
        %v6771 = vpop.f32.mrb[0].mxu0
        %6772 = vmatprep.mubr.f32.mxu0 0.0
        %v6773 = vand.u32 %v248, 4294901760
        %6774 = vmatmul.mubr.f32.gmra.mrb[0].mxu0 %v6773
        %v6775 = vpop.f32.mrb[0].mxu0
        %v6776 = vadd.f32 %v6599, %v6775
        %v6777 = vpop.f32.mrb[0].mxu0
        %6778 = vmatprep.mubr.f32.mxu0 0.0
        %v6779 = vand.u32 %v249, 4294901760
        %6780 = vmatmul.mubr.f32.gmra.mrb[0].mxu0 %v6779
        %v6781 = vpop.f32.mrb[0].mxu0
        %v6782 = vadd.f32 %v6605, %v6781
        %v6783 = vpop.f32.mrb[0].mxu0
        %6784 = vmatprep.mubr.f32.mxu0 0.0
        %v6785 = vand.u32 %v250, 4294901760
        %6786 = vmatmul.mubr.f32.gmra.mrb[0].mxu0 %v6785
        %v6787 = vpop.f32.mrb[0].mxu0
        %v6788 = vadd.f32 %v6611, %v6787
        %v6789 = vpop.f32.mrb[0].mxu0
        %6790 = vmatprep.mubr.f32.mxu0 0.0
        %v6791 = vand.u32 %v251, 4294901760
        %6792 = vmatmul.mubr.f32.gmra.mrb[0].mxu0 %v6791
        %v6793 = vpop.f32.mrb[0].mxu0
        %v6794 = vadd.f32 %v6617, %v6793
        %v6795 = vpop.f32.mrb[0].mxu0
        %6796 = vmatprep.mubr.f32.mxu0 0.0
        %v6797 = vand.u32 %v252, 4294901760
        %6798 = vmatmul.mubr.f32.gmra.mrb[0].mxu0 %v6797
        %v6799 = vpop.f32.mrb[0].mxu0
        %v6800 = vadd.f32 %v6623, %v6799
        %v6801 = vpop.f32.mrb[0].mxu0
        %6802 = vmatprep.mubr.f32.mxu0 0.0
        %v6803 = vand.u32 %v253, 4294901760
        %6804 = vmatmul.mubr.f32.gmra.mrb[0].mxu0 %v6803
        %v6805 = vpop.f32.mrb[0].mxu0
        %v6806 = vadd.f32 %v6629, %v6805
        %v6807 = vpop.f32.mrb[0].mxu0
        %6808 = vmatprep.mubr.f32.mxu0 0.0
        %v6809 = vand.u32 %v254, 4294901760
        %6810 = vmatmul.mubr.f32.gmra.mrb[0].mxu0 %v6809
        %v6811 = vpop.f32.mrb[0].mxu0
        %v6812 = vadd.f32 %v6635, %v6811
        %v6813 = vpop.f32.mrb[0].mxu0
        %6814 = vmatprep.mubr.f32.mxu0 0.0
        %v6815 = vand.u32 %v255, 4294901760
        %6816 = vmatmul.mubr.f32.gmra.mrb[0].mxu0 %v6815
        %v6817 = vpop.f32.mrb[0].mxu0
        %v6818 = vadd.f32 %v6641, %v6817
        %v6819 = vpop.f32.mrb[0].mxu0
        %6820 = vmatprep.mubr.f32.mxu0 0.0
        %v6821 = vand.u32 %v256, 4294901760
        %6822 = vmatmul.mubr.f32.gmra.mrb[0].mxu0 %v6821
        %v6823 = vpop.f32.mrb[0].mxu0
        %v6824 = vadd.f32 %v6647, %v6823
        %v6825 = vpop.f32.mrb[0].mxu0
        %6826 = vmatprep.mubr.f32.mxu0 0.0
        %v6827 = vand.u32 %v257, 4294901760
        %6828 = vmatmul.mubr.f32.gmra.mrb[0].mxu0 %v6827
        %v6829 = vpop.f32.mrb[0].mxu0
        %v6830 = vadd.f32 %v6653, %v6829
        %v6831 = vpop.f32.mrb[0].mxu0
        %6832 = vmatprep.mubr.f32.mxu0 0.0
        %v6833 = vand.u32 %v258, 4294901760
        %6834 = vmatmul.mubr.f32.gmra.mrb[0].mxu0 %v6833
        %v6835 = vpop.f32.mrb[0].mxu0
        %v6836 = vadd.f32 %v6659, %v6835
        %v6837 = vpop.f32.mrb[0].mxu0
        %6838 = vmatprep.mubr.f32.mxu0 0.0
        %v6839 = vand.u32 %v259, 4294901760
        %6840 = vmatmul.mubr.f32.gmra.mrb[0].mxu0 %v6839
        %v6841 = vpop.f32.mrb[0].mxu0
        %v6842 = vadd.f32 %v6665, %v6841
        %v6843 = vpop.f32.mrb[0].mxu0
        %6844 = vmatprep.mubr.f32.mxu0 0.0
        %v6845 = vand.u32 %v260, 4294901760
        %6846 = vmatmul.mubr.f32.gmra.mrb[0].mxu0 %v6845
        %v6847 = vpop.f32.mrb[0].mxu0
        %v6848 = vadd.f32 %v6671, %v6847
        %v6849 = vpop.f32.mrb[0].mxu0
        %6850 = vdwg.mxu0
        %vm6851 = vcmp.gt.f32.partialorder %v6758, 0.0
        %vm6852 = vcmp.gt.f32.partialorder %v6764, 0.0
        %vm6853 = vcmp.gt.f32.partialorder %v6770, 0.0
        %vm6854 = vcmp.gt.f32.partialorder %v6776, 0.0
        %vm6855 = vcmp.gt.f32.partialorder %v6782, 0.0
        %vm6856 = vcmp.gt.f32.partialorder %v6788, 0.0
        %vm6857 = vcmp.gt.f32.partialorder %v6794, 0.0
        %vm6858 = vcmp.gt.f32.partialorder %v6800, 0.0
        %vm6859 = vcmp.gt.f32.partialorder %v6806, 0.0
        %vm6860 = vcmp.gt.f32.partialorder %v6812, 0.0
        %vm6861 = vcmp.gt.f32.partialorder %v6818, 0.0
        %vm6862 = vcmp.gt.f32.partialorder %v6824, 0.0
        %vm6863 = vcmp.gt.f32.partialorder %v6830, 0.0
        %vm6864 = vcmp.gt.f32.partialorder %v6836, 0.0
        %vm6865 = vcmp.gt.f32.partialorder %v6842, 0.0
        %vm6866 = vcmp.gt.f32.partialorder %v6848, 0.0
        %v6867 = vmul.f32 %v6758, 0.01
        %v6868 = vmul.f32 %v6764, 0.01
        %v6869 = vmul.f32 %v6770, 0.01
        %v6870 = vmul.f32 %v6776, 0.01
        %v6871 = vmul.f32 %v6782, 0.01
        %v6872 = vmul.f32 %v6788, 0.01
        %v6873 = vmul.f32 %v6794, 0.01
        %v6874 = vmul.f32 %v6800, 0.01
        %v6875 = vmul.f32 %v6806, 0.01
        %v6876 = vmul.f32 %v6812, 0.01
        %v6877 = vmul.f32 %v6818, 0.01
        %v6878 = vmul.f32 %v6824, 0.01
        %v6879 = vmul.f32 %v6830, 0.01
        %v6880 = vmul.f32 %v6836, 0.01
        %v6881 = vmul.f32 %v6842, 0.01
        %v6882 = vmul.f32 %v6848, 0.01
        %v6883 = vsel %vm6851, %v6758, %v6867
        %v6884 = vsel %vm6852, %v6764, %v6868
        %v6885 = vsel %vm6853, %v6770, %v6869
        %v6886 = vsel %vm6854, %v6776, %v6870
        %v6887 = vsel %vm6855, %v6782, %v6871
        %v6888 = vsel %vm6856, %v6788, %v6872
        %v6889 = vsel %vm6857, %v6794, %v6873
        %v6890 = vsel %vm6858, %v6800, %v6874
        %v6891 = vsel %vm6859, %v6806, %v6875
        %v6892 = vsel %vm6860, %v6812, %v6876
        %v6893 = vsel %vm6861, %v6818, %v6877
        %v6894 = vsel %vm6862, %v6824, %v6878
        %v6895 = vsel %vm6863, %v6830, %v6879
        %v6896 = vsel %vm6864, %v6836, %v6880
        %v6897 = vsel %vm6865, %v6842, %v6881
        %v6898 = vsel %vm6866, %v6848, %v6882
        %s6899 = scalar_lea.vmem [#allocation7], 256
        %v6900 = vld [vmem:[%s6899] sm:$0xff]
        %v6901 = vld [vmem:[%s6899 + $0x8] sm:$0xff]
        %v6902 = vld [vmem:[%s6899 + $0x10] sm:$0xff]
        %v6903 = vld [vmem:[%s6899 + $0x18] sm:$0xff]
        %v6904 = vld [vmem:[%s6899 + $0x20] sm:$0xff]
        %v6905 = vld [vmem:[%s6899 + $0x28] sm:$0xff]
        %v6906 = vld [vmem:[%s6899 + $0x30] sm:$0xff]
        %v6907 = vld [vmem:[%s6899 + $0x38] sm:$0xff]
        %v6908 = vld [vmem:[%s6899 + $0x40] sm:$0xff]
        %v6909 = vld [vmem:[%s6899 + $0x48] sm:$0xff]
        %v6910 = vld [vmem:[%s6899 + $0x50] sm:$0xff]
        %v6911 = vld [vmem:[%s6899 + $0x58] sm:$0xff]
        %v6912 = vld [vmem:[%s6899 + $0x60] sm:$0xff]
        %v6913 = vld [vmem:[%s6899 + $0x68] sm:$0xff]
        %v6914 = vld [vmem:[%s6899 + $0x70] sm:$0xff]
        %v6915 = vld [vmem:[%s6899 + $0x78] sm:$0xff]
        %6916 = vmatprep.subr.mxu0 0.0
        %v6917 = vand.u32 %v6900, 4294901760
        %6918 = vmatpush1.msra.mxu0 %v6917
        %6919 = vmatprep.subr.mxu0 0.0
        %v6920 = vand.u32 %v6901, 4294901760
        %6921 = vmatpush1.msra.mxu0 %v6920
        %6922 = vmatprep.subr.mxu0 0.0
        %v6923 = vand.u32 %v6902, 4294901760
        %6924 = vmatpush1.msra.mxu0 %v6923
        %6925 = vmatprep.subr.mxu0 0.0
        %v6926 = vand.u32 %v6903, 4294901760
        %6927 = vmatpush1.msra.mxu0 %v6926
        %6928 = vmatprep.subr.mxu0 0.0
        %v6929 = vand.u32 %v6904, 4294901760
        %6930 = vmatpush1.msra.mxu0 %v6929
        %6931 = vmatprep.subr.mxu0 0.0
        %v6932 = vand.u32 %v6905, 4294901760
        %6933 = vmatpush1.msra.mxu0 %v6932
        %6934 = vmatprep.subr.mxu0 0.0
        %v6935 = vand.u32 %v6906, 4294901760
        %6936 = vmatpush1.msra.mxu0 %v6935
        %6937 = vmatprep.subr.mxu0 0.0
        %v6938 = vand.u32 %v6907, 4294901760
        %6939 = vmatpush1.msra.mxu0 %v6938
        %6940 = vmatprep.subr.mxu0 0.0
        %v6941 = vand.u32 %v6908, 4294901760
        %6942 = vmatpush1.msra.mxu0 %v6941
        %6943 = vmatprep.subr.mxu0 0.0
        %v6944 = vand.u32 %v6909, 4294901760
        %6945 = vmatpush1.msra.mxu0 %v6944
        %6946 = vmatprep.subr.mxu0 0.0
        %v6947 = vand.u32 %v6910, 4294901760
        %6948 = vmatpush1.msra.mxu0 %v6947
        %6949 = vmatprep.subr.mxu0 0.0
        %v6950 = vand.u32 %v6911, 4294901760
        %6951 = vmatpush1.msra.mxu0 %v6950
        %6952 = vmatprep.subr.mxu0 0.0
        %v6953 = vand.u32 %v6912, 4294901760
        %6954 = vmatpush1.msra.mxu0 %v6953
        %6955 = vmatprep.subr.mxu0 0.0
        %v6956 = vand.u32 %v6913, 4294901760
        %6957 = vmatpush1.msra.mxu0 %v6956
        %6958 = vmatprep.subr.mxu0 0.0
        %v6959 = vand.u32 %v6914, 4294901760
        %6960 = vmatpush1.msra.mxu0 %v6959
        %6961 = vmatprep.subr.mxu0 0.0
        %v6962 = vand.u32 %v6915, 4294901760
        %6963 = vmatpush1.msra.mxu0 %v6962
        %6964 = vmatprep.subr.mxu0 0.0
        %6965 = vmatpush1.msra.mxu0 0.0
        %6966 = vmatprep.subr.mxu0 0.0
        %6967 = vmatpush1.msra.mxu0 0.0
        %6968 = vmatprep.subr.mxu0 0.0
        %6969 = vmatpush1.msra.mxu0 0.0
        %6970 = vmatprep.subr.mxu0 0.0
        %6971 = vmatpush1.msra.mxu0 0.0
        %6972 = vmatprep.subr.mxu0 0.0
        %6973 = vmatpush1.msra.mxu0 0.0
        %6974 = vmatprep.subr.mxu0 0.0
        %6975 = vmatpush1.msra.mxu0 0.0
        %6976 = vmatprep.subr.mxu0 0.0
        %6977 = vmatpush1.msra.mxu0 0.0
        %6978 = vmatprep.subr.mxu0 0.0
        %6979 = vmatpush1.msra.mxu0 0.0
        %6980 = vmatprep.subr.mxu0 0.0
        %6981 = vmatpush1.msra.mxu0 0.0
        %6982 = vmatprep.subr.mxu0 0.0
        %6983 = vmatpush1.msra.mxu0 0.0
        %6984 = vmatprep.subr.mxu0 0.0
        %6985 = vmatpush1.msra.mxu0 0.0
        %6986 = vmatprep.subr.mxu0 0.0
        %6987 = vmatpush1.msra.mxu0 0.0
        %6988 = vmatprep.subr.mxu0 0.0
        %6989 = vmatpush1.msra.mxu0 0.0
        %6990 = vmatprep.subr.mxu0 0.0
        %6991 = vmatpush1.msra.mxu0 0.0
        %6992 = vmatprep.subr.mxu0 0.0
        %6993 = vmatpush1.msra.mxu0 0.0
        %6994 = vmatprep.subr.mxu0 0.0
        %6995 = vmatpush1.msra.mxu0 0.0
        %6996 = vmatprep.mubr.f32.mxu0 0.0
        %v6997 = vand.u32 %v6883, 4294901760
        %v6998 = vsub.f32 %v6883, %v6997
        %v6999 = vand.u32 %v6998, 4294901760
        %v7000 = vsub.f32 %v6998, %v6999
        %v7001 = vand.u32 %v7000, 4294901760
        %7002 = vmatmul.mubr.f32.gmra.mrb[0].mxu0 %v7001
        %v7003 = vpop.f32.mrb[0].mxu0
        %v7004 = vadd.f32 0.0, %v7003
        %v7005 = vpop.f32.mrb[0].mxu0
        %7006 = vmatprep.mubr.f32.mxu0 0.0
        %v7007 = vand.u32 %v6884, 4294901760
        %v7008 = vsub.f32 %v6884, %v7007
        %v7009 = vand.u32 %v7008, 4294901760
        %v7010 = vsub.f32 %v7008, %v7009
        %v7011 = vand.u32 %v7010, 4294901760
        %7012 = vmatmul.mubr.f32.gmra.mrb[0].mxu0 %v7011
        %v7013 = vpop.f32.mrb[0].mxu0
        %v7014 = vadd.f32 0.0, %v7013
        %v7015 = vpop.f32.mrb[0].mxu0
        %7016 = vmatprep.mubr.f32.mxu0 0.0
        %v7017 = vand.u32 %v6885, 4294901760
        %v7018 = vsub.f32 %v6885, %v7017
        %v7019 = vand.u32 %v7018, 4294901760
        %v7020 = vsub.f32 %v7018, %v7019
        %v7021 = vand.u32 %v7020, 4294901760
        %7022 = vmatmul.mubr.f32.gmra.mrb[0].mxu0 %v7021
        %v7023 = vpop.f32.mrb[0].mxu0
        %v7024 = vadd.f32 0.0, %v7023
        %v7025 = vpop.f32.mrb[0].mxu0
        %7026 = vmatprep.mubr.f32.mxu0 0.0
        %v7027 = vand.u32 %v6886, 4294901760
        %v7028 = vsub.f32 %v6886, %v7027
        %v7029 = vand.u32 %v7028, 4294901760
        %v7030 = vsub.f32 %v7028, %v7029
        %v7031 = vand.u32 %v7030, 4294901760
        %7032 = vmatmul.mubr.f32.gmra.mrb[0].mxu0 %v7031
        %v7033 = vpop.f32.mrb[0].mxu0
        %v7034 = vadd.f32 0.0, %v7033
        %v7035 = vpop.f32.mrb[0].mxu0
        %7036 = vmatprep.mubr.f32.mxu0 0.0
        %v7037 = vand.u32 %v6887, 4294901760
        %v7038 = vsub.f32 %v6887, %v7037
        %v7039 = vand.u32 %v7038, 4294901760
        %v7040 = vsub.f32 %v7038, %v7039
        %v7041 = vand.u32 %v7040, 4294901760
        %7042 = vmatmul.mubr.f32.gmra.mrb[0].mxu0 %v7041
        %v7043 = vpop.f32.mrb[0].mxu0
        %v7044 = vadd.f32 0.0, %v7043
        %v7045 = vpop.f32.mrb[0].mxu0
        %7046 = vmatprep.mubr.f32.mxu0 0.0
        %v7047 = vand.u32 %v6888, 4294901760
        %v7048 = vsub.f32 %v6888, %v7047
        %v7049 = vand.u32 %v7048, 4294901760
        %v7050 = vsub.f32 %v7048, %v7049
        %v7051 = vand.u32 %v7050, 4294901760
        %7052 = vmatmul.mubr.f32.gmra.mrb[0].mxu0 %v7051
        %v7053 = vpop.f32.mrb[0].mxu0
        %v7054 = vadd.f32 0.0, %v7053
        %v7055 = vpop.f32.mrb[0].mxu0
        %7056 = vmatprep.mubr.f32.mxu0 0.0
        %v7057 = vand.u32 %v6889, 4294901760
        %v7058 = vsub.f32 %v6889, %v7057
        %v7059 = vand.u32 %v7058, 4294901760
        %v7060 = vsub.f32 %v7058, %v7059
        %v7061 = vand.u32 %v7060, 4294901760
        %7062 = vmatmul.mubr.f32.gmra.mrb[0].mxu0 %v7061
        %v7063 = vpop.f32.mrb[0].mxu0
        %v7064 = vadd.f32 0.0, %v7063
        %v7065 = vpop.f32.mrb[0].mxu0
        %7066 = vmatprep.mubr.f32.mxu0 0.0
        %v7067 = vand.u32 %v6890, 4294901760
        %v7068 = vsub.f32 %v6890, %v7067
        %v7069 = vand.u32 %v7068, 4294901760
        %v7070 = vsub.f32 %v7068, %v7069
        %v7071 = vand.u32 %v7070, 4294901760
        %7072 = vmatmul.mubr.f32.gmra.mrb[0].mxu0 %v7071
        %v7073 = vpop.f32.mrb[0].mxu0
        %v7074 = vadd.f32 0.0, %v7073
        %v7075 = vpop.f32.mrb[0].mxu0
        %7076 = vmatprep.mubr.f32.mxu0 0.0
        %v7077 = vand.u32 %v6891, 4294901760
        %v7078 = vsub.f32 %v6891, %v7077
        %v7079 = vand.u32 %v7078, 4294901760
        %v7080 = vsub.f32 %v7078, %v7079
        %v7081 = vand.u32 %v7080, 4294901760
        %7082 = vmatmul.mubr.f32.gmra.mrb[0].mxu0 %v7081
        %v7083 = vpop.f32.mrb[0].mxu0
        %v7084 = vadd.f32 0.0, %v7083
        %v7085 = vpop.f32.mrb[0].mxu0
        %7086 = vmatprep.mubr.f32.mxu0 0.0
        %v7087 = vand.u32 %v6892, 4294901760
        %v7088 = vsub.f32 %v6892, %v7087
        %v7089 = vand.u32 %v7088, 4294901760
        %v7090 = vsub.f32 %v7088, %v7089
        %v7091 = vand.u32 %v7090, 4294901760
        %7092 = vmatmul.mubr.f32.gmra.mrb[0].mxu0 %v7091
        %v7093 = vpop.f32.mrb[0].mxu0
        %v7094 = vadd.f32 0.0, %v7093
        %v7095 = vpop.f32.mrb[0].mxu0
        %7096 = vmatprep.mubr.f32.mxu0 0.0
        %v7097 = vand.u32 %v6893, 4294901760
        %v7098 = vsub.f32 %v6893, %v7097
        %v7099 = vand.u32 %v7098, 4294901760
        %v7100 = vsub.f32 %v7098, %v7099
        %v7101 = vand.u32 %v7100, 4294901760
        %7102 = vmatmul.mubr.f32.gmra.mrb[0].mxu0 %v7101
        %v7103 = vpop.f32.mrb[0].mxu0
        %v7104 = vadd.f32 0.0, %v7103
        %v7105 = vpop.f32.mrb[0].mxu0
        %7106 = vmatprep.mubr.f32.mxu0 0.0
        %v7107 = vand.u32 %v6894, 4294901760
        %v7108 = vsub.f32 %v6894, %v7107
        %v7109 = vand.u32 %v7108, 4294901760
        %v7110 = vsub.f32 %v7108, %v7109
        %v7111 = vand.u32 %v7110, 4294901760
        %7112 = vmatmul.mubr.f32.gmra.mrb[0].mxu0 %v7111
        %v7113 = vpop.f32.mrb[0].mxu0
        %v7114 = vadd.f32 0.0, %v7113
        %v7115 = vpop.f32.mrb[0].mxu0
        %7116 = vmatprep.mubr.f32.mxu0 0.0
        %v7117 = vand.u32 %v6895, 4294901760
        %v7118 = vsub.f32 %v6895, %v7117
        %v7119 = vand.u32 %v7118, 4294901760
        %v7120 = vsub.f32 %v7118, %v7119
        %v7121 = vand.u32 %v7120, 4294901760
        %7122 = vmatmul.mubr.f32.gmra.mrb[0].mxu0 %v7121
        %v7123 = vpop.f32.mrb[0].mxu0
        %v7124 = vadd.f32 0.0, %v7123
        %v7125 = vpop.f32.mrb[0].mxu0
        %7126 = vmatprep.mubr.f32.mxu0 0.0
        %v7127 = vand.u32 %v6896, 4294901760
        %v7128 = vsub.f32 %v6896, %v7127
        %v7129 = vand.u32 %v7128, 4294901760
        %v7130 = vsub.f32 %v7128, %v7129
        %v7131 = vand.u32 %v7130, 4294901760
        %7132 = vmatmul.mubr.f32.gmra.mrb[0].mxu0 %v7131
        %v7133 = vpop.f32.mrb[0].mxu0
        %v7134 = vadd.f32 0.0, %v7133
        %v7135 = vpop.f32.mrb[0].mxu0
        %7136 = vmatprep.mubr.f32.mxu0 0.0
        %v7137 = vand.u32 %v6897, 4294901760
        %v7138 = vsub.f32 %v6897, %v7137
        %v7139 = vand.u32 %v7138, 4294901760
        %v7140 = vsub.f32 %v7138, %v7139
        %v7141 = vand.u32 %v7140, 4294901760
        %7142 = vmatmul.mubr.f32.gmra.mrb[0].mxu0 %v7141
        %v7143 = vpop.f32.mrb[0].mxu0
        %v7144 = vadd.f32 0.0, %v7143
        %v7145 = vpop.f32.mrb[0].mxu0
        %7146 = vmatprep.mubr.f32.mxu0 0.0
        %v7147 = vand.u32 %v6898, 4294901760
        %v7148 = vsub.f32 %v6898, %v7147
        %v7149 = vand.u32 %v7148, 4294901760
        %v7150 = vsub.f32 %v7148, %v7149
        %v7151 = vand.u32 %v7150, 4294901760
        %7152 = vmatmul.mubr.f32.gmra.mrb[0].mxu0 %v7151
        %v7153 = vpop.f32.mrb[0].mxu0
        %v7154 = vadd.f32 0.0, %v7153
        %v7155 = vpop.f32.mrb[0].mxu0
        %7156 = vdwg.mxu0
        %7157 = vmatprep.subr.mxu0 0.0
        %v7158 = vand.u32 %v6900, 4294901760
        %v7159 = vsub.f32 %v6900, %v7158
        %v7160 = vand.u32 %v7159, 4294901760
        %v7161 = vsub.f32 %v7159, %v7160
        %v7162 = vand.u32 %v7161, 4294901760
        %7163 = vmatpush1.msra.mxu0 %v7162
        %7164 = vmatprep.subr.mxu0 0.0
        %v7165 = vand.u32 %v6901, 4294901760
        %v7166 = vsub.f32 %v6901, %v7165
        %v7167 = vand.u32 %v7166, 4294901760
        %v7168 = vsub.f32 %v7166, %v7167
        %v7169 = vand.u32 %v7168, 4294901760
        %7170 = vmatpush1.msra.mxu0 %v7169
        %7171 = vmatprep.subr.mxu0 0.0
        %v7172 = vand.u32 %v6902, 4294901760
        %v7173 = vsub.f32 %v6902, %v7172
        %v7174 = vand.u32 %v7173, 4294901760
        %v7175 = vsub.f32 %v7173, %v7174
        %v7176 = vand.u32 %v7175, 4294901760
        %7177 = vmatpush1.msra.mxu0 %v7176
        %7178 = vmatprep.subr.mxu0 0.0
        %v7179 = vand.u32 %v6903, 4294901760
        %v7180 = vsub.f32 %v6903, %v7179
        %v7181 = vand.u32 %v7180, 4294901760
        %v7182 = vsub.f32 %v7180, %v7181
        %v7183 = vand.u32 %v7182, 4294901760
        %7184 = vmatpush1.msra.mxu0 %v7183
        %7185 = vmatprep.subr.mxu0 0.0
        %v7186 = vand.u32 %v6904, 4294901760
        %v7187 = vsub.f32 %v6904, %v7186
        %v7188 = vand.u32 %v7187, 4294901760
        %v7189 = vsub.f32 %v7187, %v7188
        %v7190 = vand.u32 %v7189, 4294901760
        %7191 = vmatpush1.msra.mxu0 %v7190
        %7192 = vmatprep.subr.mxu0 0.0
        %v7193 = vand.u32 %v6905, 4294901760
        %v7194 = vsub.f32 %v6905, %v7193
        %v7195 = vand.u32 %v7194, 4294901760
        %v7196 = vsub.f32 %v7194, %v7195
        %v7197 = vand.u32 %v7196, 4294901760
        %7198 = vmatpush1.msra.mxu0 %v7197
        %7199 = vmatprep.subr.mxu0 0.0
        %v7200 = vand.u32 %v6906, 4294901760
        %v7201 = vsub.f32 %v6906, %v7200
        %v7202 = vand.u32 %v7201, 4294901760
        %v7203 = vsub.f32 %v7201, %v7202
        %v7204 = vand.u32 %v7203, 4294901760
        %7205 = vmatpush1.msra.mxu0 %v7204
        %7206 = vmatprep.subr.mxu0 0.0
        %v7207 = vand.u32 %v6907, 4294901760
        %v7208 = vsub.f32 %v6907, %v7207
        %v7209 = vand.u32 %v7208, 4294901760
        %v7210 = vsub.f32 %v7208, %v7209
        %v7211 = vand.u32 %v7210, 4294901760
        %7212 = vmatpush1.msra.mxu0 %v7211
        %7213 = vmatprep.subr.mxu0 0.0
        %v7214 = vand.u32 %v6908, 4294901760
        %v7215 = vsub.f32 %v6908, %v7214
        %v7216 = vand.u32 %v7215, 4294901760
        %v7217 = vsub.f32 %v7215, %v7216
        %v7218 = vand.u32 %v7217, 4294901760
        %7219 = vmatpush1.msra.mxu0 %v7218
        %7220 = vmatprep.subr.mxu0 0.0
        %v7221 = vand.u32 %v6909, 4294901760
        %v7222 = vsub.f32 %v6909, %v7221
        %v7223 = vand.u32 %v7222, 4294901760
        %v7224 = vsub.f32 %v7222, %v7223
        %v7225 = vand.u32 %v7224, 4294901760
        %7226 = vmatpush1.msra.mxu0 %v7225
        %7227 = vmatprep.subr.mxu0 0.0
        %v7228 = vand.u32 %v6910, 4294901760
        %v7229 = vsub.f32 %v6910, %v7228
        %v7230 = vand.u32 %v7229, 4294901760
        %v7231 = vsub.f32 %v7229, %v7230
        %v7232 = vand.u32 %v7231, 4294901760
        %7233 = vmatpush1.msra.mxu0 %v7232
        %7234 = vmatprep.subr.mxu0 0.0
        %v7235 = vand.u32 %v6911, 4294901760
        %v7236 = vsub.f32 %v6911, %v7235
        %v7237 = vand.u32 %v7236, 4294901760
        %v7238 = vsub.f32 %v7236, %v7237
        %v7239 = vand.u32 %v7238, 4294901760
        %7240 = vmatpush1.msra.mxu0 %v7239
        %7241 = vmatprep.subr.mxu0 0.0
        %v7242 = vand.u32 %v6912, 4294901760
        %v7243 = vsub.f32 %v6912, %v7242
        %v7244 = vand.u32 %v7243, 4294901760
        %v7245 = vsub.f32 %v7243, %v7244
        %v7246 = vand.u32 %v7245, 4294901760
        %7247 = vmatpush1.msra.mxu0 %v7246
        %7248 = vmatprep.subr.mxu0 0.0
        %v7249 = vand.u32 %v6913, 4294901760
        %v7250 = vsub.f32 %v6913, %v7249
        %v7251 = vand.u32 %v7250, 4294901760
        %v7252 = vsub.f32 %v7250, %v7251
        %v7253 = vand.u32 %v7252, 4294901760
        %7254 = vmatpush1.msra.mxu0 %v7253
        %7255 = vmatprep.subr.mxu0 0.0
        %v7256 = vand.u32 %v6914, 4294901760
        %v7257 = vsub.f32 %v6914, %v7256
        %v7258 = vand.u32 %v7257, 4294901760
        %v7259 = vsub.f32 %v7257, %v7258
        %v7260 = vand.u32 %v7259, 4294901760
        %7261 = vmatpush1.msra.mxu0 %v7260
        %7262 = vmatprep.subr.mxu0 0.0
        %v7263 = vand.u32 %v6915, 4294901760
        %v7264 = vsub.f32 %v6915, %v7263
        %v7265 = vand.u32 %v7264, 4294901760
        %v7266 = vsub.f32 %v7264, %v7265
        %v7267 = vand.u32 %v7266, 4294901760
        %7268 = vmatpush1.msra.mxu0 %v7267
        %7269 = vmatprep.subr.mxu0 0.0
        %7270 = vmatpush1.msra.mxu0 0.0
        %7271 = vmatprep.subr.mxu0 0.0
        %7272 = vmatpush1.msra.mxu0 0.0
        %7273 = vmatprep.subr.mxu0 0.0
        %7274 = vmatpush1.msra.mxu0 0.0
        %7275 = vmatprep.subr.mxu0 0.0
        %7276 = vmatpush1.msra.mxu0 0.0
        %7277 = vmatprep.subr.mxu0 0.0
        %7278 = vmatpush1.msra.mxu0 0.0
        %7279 = vmatprep.subr.mxu0 0.0
        %7280 = vmatpush1.msra.mxu0 0.0
        %7281 = vmatprep.subr.mxu0 0.0
        %7282 = vmatpush1.msra.mxu0 0.0
        %7283 = vmatprep.subr.mxu0 0.0
        %7284 = vmatpush1.msra.mxu0 0.0
        %7285 = vmatprep.subr.mxu0 0.0
        %7286 = vmatpush1.msra.mxu0 0.0
        %7287 = vmatprep.subr.mxu0 0.0
        %7288 = vmatpush1.msra.mxu0 0.0
        %7289 = vmatprep.subr.mxu0 0.0
        %7290 = vmatpush1.msra.mxu0 0.0
        %7291 = vmatprep.subr.mxu0 0.0
        %7292 = vmatpush1.msra.mxu0 0.0
        %7293 = vmatprep.subr.mxu0 0.0
        %7294 = vmatpush1.msra.mxu0 0.0
        %7295 = vmatprep.subr.mxu0 0.0
        %7296 = vmatpush1.msra.mxu0 0.0
        %7297 = vmatprep.subr.mxu0 0.0
        %7298 = vmatpush1.msra.mxu0 0.0
        %7299 = vmatprep.subr.mxu0 0.0
        %7300 = vmatpush1.msra.mxu0 0.0
        %7301 = vmatprep.mubr.f32.mxu0 0.0
        %v7302 = vand.u32 %v6883, 4294901760
        %7303 = vmatmul.mubr.f32.gmra.mrb[0].mxu0 %v7302
        %v7304 = vpop.f32.mrb[0].mxu0
        %v7305 = vadd.f32 %v7004, %v7304
        %v7306 = vpop.f32.mrb[0].mxu0
        %7307 = vmatprep.mubr.f32.mxu0 0.0
        %v7308 = vand.u32 %v6884, 4294901760
        %7309 = vmatmul.mubr.f32.gmra.mrb[0].mxu0 %v7308
        %v7310 = vpop.f32.mrb[0].mxu0
        %v7311 = vadd.f32 %v7014, %v7310
        %v7312 = vpop.f32.mrb[0].mxu0
        %7313 = vmatprep.mubr.f32.mxu0 0.0
        %v7314 = vand.u32 %v6885, 4294901760
        %7315 = vmatmul.mubr.f32.gmra.mrb[0].mxu0 %v7314
        %v7316 = vpop.f32.mrb[0].mxu0
        %v7317 = vadd.f32 %v7024, %v7316
        %v7318 = vpop.f32.mrb[0].mxu0
        %7319 = vmatprep.mubr.f32.mxu0 0.0
        %v7320 = vand.u32 %v6886, 4294901760
        %7321 = vmatmul.mubr.f32.gmra.mrb[0].mxu0 %v7320
        %v7322 = vpop.f32.mrb[0].mxu0
        %v7323 = vadd.f32 %v7034, %v7322
        %v7324 = vpop.f32.mrb[0].mxu0
        %7325 = vmatprep.mubr.f32.mxu0 0.0
        %v7326 = vand.u32 %v6887, 4294901760
        %7327 = vmatmul.mubr.f32.gmra.mrb[0].mxu0 %v7326
        %v7328 = vpop.f32.mrb[0].mxu0
        %v7329 = vadd.f32 %v7044, %v7328
        %v7330 = vpop.f32.mrb[0].mxu0
        %7331 = vmatprep.mubr.f32.mxu0 0.0
        %v7332 = vand.u32 %v6888, 4294901760
        %7333 = vmatmul.mubr.f32.gmra.mrb[0].mxu0 %v7332
        %v7334 = vpop.f32.mrb[0].mxu0
        %v7335 = vadd.f32 %v7054, %v7334
        %v7336 = vpop.f32.mrb[0].mxu0
        %7337 = vmatprep.mubr.f32.mxu0 0.0
        %v7338 = vand.u32 %v6889, 4294901760
        %7339 = vmatmul.mubr.f32.gmra.mrb[0].mxu0 %v7338
        %v7340 = vpop.f32.mrb[0].mxu0
        %v7341 = vadd.f32 %v7064, %v7340
        %v7342 = vpop.f32.mrb[0].mxu0
        %7343 = vmatprep.mubr.f32.mxu0 0.0
        %v7344 = vand.u32 %v6890, 4294901760
        %7345 = vmatmul.mubr.f32.gmra.mrb[0].mxu0 %v7344
        %v7346 = vpop.f32.mrb[0].mxu0
        %v7347 = vadd.f32 %v7074, %v7346
        %v7348 = vpop.f32.mrb[0].mxu0
        %7349 = vmatprep.mubr.f32.mxu0 0.0
        %v7350 = vand.u32 %v6891, 4294901760
        %7351 = vmatmul.mubr.f32.gmra.mrb[0].mxu0 %v7350
        %v7352 = vpop.f32.mrb[0].mxu0
        %v7353 = vadd.f32 %v7084, %v7352
        %v7354 = vpop.f32.mrb[0].mxu0
        %7355 = vmatprep.mubr.f32.mxu0 0.0
        %v7356 = vand.u32 %v6892, 4294901760
        %7357 = vmatmul.mubr.f32.gmra.mrb[0].mxu0 %v7356
        %v7358 = vpop.f32.mrb[0].mxu0
        %v7359 = vadd.f32 %v7094, %v7358
        %v7360 = vpop.f32.mrb[0].mxu0
        %7361 = vmatprep.mubr.f32.mxu0 0.0
        %v7362 = vand.u32 %v6893, 4294901760
        %7363 = vmatmul.mubr.f32.gmra.mrb[0].mxu0 %v7362
        %v7364 = vpop.f32.mrb[0].mxu0
        %v7365 = vadd.f32 %v7104, %v7364
        %v7366 = vpop.f32.mrb[0].mxu0
        %7367 = vmatprep.mubr.f32.mxu0 0.0
        %v7368 = vand.u32 %v6894, 4294901760
        %7369 = vmatmul.mubr.f32.gmra.mrb[0].mxu0 %v7368
        %v7370 = vpop.f32.mrb[0].mxu0
        %v7371 = vadd.f32 %v7114, %v7370
        %v7372 = vpop.f32.mrb[0].mxu0
        %7373 = vmatprep.mubr.f32.mxu0 0.0
        %v7374 = vand.u32 %v6895, 4294901760
        %7375 = vmatmul.mubr.f32.gmra.mrb[0].mxu0 %v7374
        %v7376 = vpop.f32.mrb[0].mxu0
        %v7377 = vadd.f32 %v7124, %v7376
        %v7378 = vpop.f32.mrb[0].mxu0
        %7379 = vmatprep.mubr.f32.mxu0 0.0
        %v7380 = vand.u32 %v6896, 4294901760
        %7381 = vmatmul.mubr.f32.gmra.mrb[0].mxu0 %v7380
        %v7382 = vpop.f32.mrb[0].mxu0
        %v7383 = vadd.f32 %v7134, %v7382
        %v7384 = vpop.f32.mrb[0].mxu0
        %7385 = vmatprep.mubr.f32.mxu0 0.0
        %v7386 = vand.u32 %v6897, 4294901760
        %7387 = vmatmul.mubr.f32.gmra.mrb[0].mxu0 %v7386
        %v7388 = vpop.f32.mrb[0].mxu0
        %v7389 = vadd.f32 %v7144, %v7388
        %v7390 = vpop.f32.mrb[0].mxu0
        %7391 = vmatprep.mubr.f32.mxu0 0.0
        %v7392 = vand.u32 %v6898, 4294901760
        %7393 = vmatmul.mubr.f32.gmra.mrb[0].mxu0 %v7392
        %v7394 = vpop.f32.mrb[0].mxu0
        %v7395 = vadd.f32 %v7154, %v7394
        %v7396 = vpop.f32.mrb[0].mxu0
        %7397 = vdwg.mxu0
        %7398 = vmatprep.subr.mxu0 0.0
        %v7399 = vand.u32 %v6900, 4294901760
        %v7400 = vsub.f32 %v6900, %v7399
        %7401 = vmatpush1.msra.mxu0 %v7400
        %7402 = vmatprep.subr.mxu0 0.0
        %v7403 = vand.u32 %v6901, 4294901760
        %v7404 = vsub.f32 %v6901, %v7403
        %7405 = vmatpush1.msra.mxu0 %v7404
        %7406 = vmatprep.subr.mxu0 0.0
        %v7407 = vand.u32 %v6902, 4294901760
        %v7408 = vsub.f32 %v6902, %v7407
        %7409 = vmatpush1.msra.mxu0 %v7408
        %7410 = vmatprep.subr.mxu0 0.0
        %v7411 = vand.u32 %v6903, 4294901760
        %v7412 = vsub.f32 %v6903, %v7411
        %7413 = vmatpush1.msra.mxu0 %v7412
        %7414 = vmatprep.subr.mxu0 0.0
        %v7415 = vand.u32 %v6904, 4294901760
        %v7416 = vsub.f32 %v6904, %v7415
        %7417 = vmatpush1.msra.mxu0 %v7416
        %7418 = vmatprep.subr.mxu0 0.0
        %v7419 = vand.u32 %v6905, 4294901760
        %v7420 = vsub.f32 %v6905, %v7419
        %7421 = vmatpush1.msra.mxu0 %v7420
        %7422 = vmatprep.subr.mxu0 0.0
        %v7423 = vand.u32 %v6906, 4294901760
        %v7424 = vsub.f32 %v6906, %v7423
        %7425 = vmatpush1.msra.mxu0 %v7424
        %7426 = vmatprep.subr.mxu0 0.0
        %v7427 = vand.u32 %v6907, 4294901760
        %v7428 = vsub.f32 %v6907, %v7427
        %7429 = vmatpush1.msra.mxu0 %v7428
        %7430 = vmatprep.subr.mxu0 0.0
        %v7431 = vand.u32 %v6908, 4294901760
        %v7432 = vsub.f32 %v6908, %v7431
        %7433 = vmatpush1.msra.mxu0 %v7432
        %7434 = vmatprep.subr.mxu0 0.0
        %v7435 = vand.u32 %v6909, 4294901760
        %v7436 = vsub.f32 %v6909, %v7435
        %7437 = vmatpush1.msra.mxu0 %v7436
        %7438 = vmatprep.subr.mxu0 0.0
        %v7439 = vand.u32 %v6910, 4294901760
        %v7440 = vsub.f32 %v6910, %v7439
        %7441 = vmatpush1.msra.mxu0 %v7440
        %7442 = vmatprep.subr.mxu0 0.0
        %v7443 = vand.u32 %v6911, 4294901760
        %v7444 = vsub.f32 %v6911, %v7443
        %7445 = vmatpush1.msra.mxu0 %v7444
        %7446 = vmatprep.subr.mxu0 0.0
        %v7447 = vand.u32 %v6912, 4294901760
        %v7448 = vsub.f32 %v6912, %v7447
        %7449 = vmatpush1.msra.mxu0 %v7448
        %7450 = vmatprep.subr.mxu0 0.0
        %v7451 = vand.u32 %v6913, 4294901760
        %v7452 = vsub.f32 %v6913, %v7451
        %7453 = vmatpush1.msra.mxu0 %v7452
        %7454 = vmatprep.subr.mxu0 0.0
        %v7455 = vand.u32 %v6914, 4294901760
        %v7456 = vsub.f32 %v6914, %v7455
        %7457 = vmatpush1.msra.mxu0 %v7456
        %7458 = vmatprep.subr.mxu0 0.0
        %v7459 = vand.u32 %v6915, 4294901760
        %v7460 = vsub.f32 %v6915, %v7459
        %7461 = vmatpush1.msra.mxu0 %v7460
        %7462 = vmatprep.subr.mxu0 0.0
        %7463 = vmatpush1.msra.mxu0 0.0
        %7464 = vmatprep.subr.mxu0 0.0
        %7465 = vmatpush1.msra.mxu0 0.0
        %7466 = vmatprep.subr.mxu0 0.0
        %7467 = vmatpush1.msra.mxu0 0.0
        %7468 = vmatprep.subr.mxu0 0.0
        %7469 = vmatpush1.msra.mxu0 0.0
        %7470 = vmatprep.subr.mxu0 0.0
        %7471 = vmatpush1.msra.mxu0 0.0
        %7472 = vmatprep.subr.mxu0 0.0
        %7473 = vmatpush1.msra.mxu0 0.0
        %7474 = vmatprep.subr.mxu0 0.0
        %7475 = vmatpush1.msra.mxu0 0.0
        %7476 = vmatprep.subr.mxu0 0.0
        %7477 = vmatpush1.msra.mxu0 0.0
        %7478 = vmatprep.subr.mxu0 0.0
        %7479 = vmatpush1.msra.mxu0 0.0
        %7480 = vmatprep.subr.mxu0 0.0
        %7481 = vmatpush1.msra.mxu0 0.0
        %7482 = vmatprep.subr.mxu0 0.0
        %7483 = vmatpush1.msra.mxu0 0.0
        %7484 = vmatprep.subr.mxu0 0.0
        %7485 = vmatpush1.msra.mxu0 0.0
        %7486 = vmatprep.subr.mxu0 0.0
        %7487 = vmatpush1.msra.mxu0 0.0
        %7488 = vmatprep.subr.mxu0 0.0
        %7489 = vmatpush1.msra.mxu0 0.0
        %7490 = vmatprep.subr.mxu0 0.0
        %7491 = vmatpush1.msra.mxu0 0.0
        %7492 = vmatprep.subr.mxu0 0.0
        %7493 = vmatpush1.msra.mxu0 0.0
        %7494 = vmatprep.mubr.f32.mxu0 0.0
        %v7495 = vand.u32 %v6883, 4294901760
        %v7496 = vsub.f32 %v6883, %v7495
        %7497 = vmatmul.mubr.f32.gmra.mrb[0].mxu0 %v7496
        %v7498 = vpop.f32.mrb[0].mxu0
        %v7499 = vadd.f32 %v7305, %v7498
        %v7500 = vpop.f32.mrb[0].mxu0
        %7501 = vmatprep.mubr.f32.mxu0 0.0
        %v7502 = vand.u32 %v6884, 4294901760
        %v7503 = vsub.f32 %v6884, %v7502
        %7504 = vmatmul.mubr.f32.gmra.mrb[0].mxu0 %v7503
        %v7505 = vpop.f32.mrb[0].mxu0
        %v7506 = vadd.f32 %v7311, %v7505
        %v7507 = vpop.f32.mrb[0].mxu0
        %7508 = vmatprep.mubr.f32.mxu0 0.0
        %v7509 = vand.u32 %v6885, 4294901760
        %v7510 = vsub.f32 %v6885, %v7509
        %7511 = vmatmul.mubr.f32.gmra.mrb[0].mxu0 %v7510
        %v7512 = vpop.f32.mrb[0].mxu0
        %v7513 = vadd.f32 %v7317, %v7512
        %v7514 = vpop.f32.mrb[0].mxu0
        %7515 = vmatprep.mubr.f32.mxu0 0.0
        %v7516 = vand.u32 %v6886, 4294901760
        %v7517 = vsub.f32 %v6886, %v7516
        %7518 = vmatmul.mubr.f32.gmra.mrb[0].mxu0 %v7517
        %v7519 = vpop.f32.mrb[0].mxu0
        %v7520 = vadd.f32 %v7323, %v7519
        %v7521 = vpop.f32.mrb[0].mxu0
        %7522 = vmatprep.mubr.f32.mxu0 0.0
        %v7523 = vand.u32 %v6887, 4294901760
        %v7524 = vsub.f32 %v6887, %v7523
        %7525 = vmatmul.mubr.f32.gmra.mrb[0].mxu0 %v7524
        %v7526 = vpop.f32.mrb[0].mxu0
        %v7527 = vadd.f32 %v7329, %v7526
        %v7528 = vpop.f32.mrb[0].mxu0
        %7529 = vmatprep.mubr.f32.mxu0 0.0
        %v7530 = vand.u32 %v6888, 4294901760
        %v7531 = vsub.f32 %v6888, %v7530
        %7532 = vmatmul.mubr.f32.gmra.mrb[0].mxu0 %v7531
        %v7533 = vpop.f32.mrb[0].mxu0
        %v7534 = vadd.f32 %v7335, %v7533
        %v7535 = vpop.f32.mrb[0].mxu0
        %7536 = vmatprep.mubr.f32.mxu0 0.0
        %v7537 = vand.u32 %v6889, 4294901760
        %v7538 = vsub.f32 %v6889, %v7537
        %7539 = vmatmul.mubr.f32.gmra.mrb[0].mxu0 %v7538
        %v7540 = vpop.f32.mrb[0].mxu0
        %v7541 = vadd.f32 %v7341, %v7540
        %v7542 = vpop.f32.mrb[0].mxu0
        %7543 = vmatprep.mubr.f32.mxu0 0.0
        %v7544 = vand.u32 %v6890, 4294901760
        %v7545 = vsub.f32 %v6890, %v7544
        %7546 = vmatmul.mubr.f32.gmra.mrb[0].mxu0 %v7545
        %v7547 = vpop.f32.mrb[0].mxu0
        %v7548 = vadd.f32 %v7347, %v7547
        %v7549 = vpop.f32.mrb[0].mxu0
        %7550 = vmatprep.mubr.f32.mxu0 0.0
        %v7551 = vand.u32 %v6891, 4294901760
        %v7552 = vsub.f32 %v6891, %v7551
        %7553 = vmatmul.mubr.f32.gmra.mrb[0].mxu0 %v7552
        %v7554 = vpop.f32.mrb[0].mxu0
        %v7555 = vadd.f32 %v7353, %v7554
        %v7556 = vpop.f32.mrb[0].mxu0
        %7557 = vmatprep.mubr.f32.mxu0 0.0
        %v7558 = vand.u32 %v6892, 4294901760
        %v7559 = vsub.f32 %v6892, %v7558
        %7560 = vmatmul.mubr.f32.gmra.mrb[0].mxu0 %v7559
        %v7561 = vpop.f32.mrb[0].mxu0
        %v7562 = vadd.f32 %v7359, %v7561
        %v7563 = vpop.f32.mrb[0].mxu0
        %7564 = vmatprep.mubr.f32.mxu0 0.0
        %v7565 = vand.u32 %v6893, 4294901760
        %v7566 = vsub.f32 %v6893, %v7565
        %7567 = vmatmul.mubr.f32.gmra.mrb[0].mxu0 %v7566
        %v7568 = vpop.f32.mrb[0].mxu0
        %v7569 = vadd.f32 %v7365, %v7568
        %v7570 = vpop.f32.mrb[0].mxu0
        %7571 = vmatprep.mubr.f32.mxu0 0.0
        %v7572 = vand.u32 %v6894, 4294901760
        %v7573 = vsub.f32 %v6894, %v7572
        %7574 = vmatmul.mubr.f32.gmra.mrb[0].mxu0 %v7573
        %v7575 = vpop.f32.mrb[0].mxu0
        %v7576 = vadd.f32 %v7371, %v7575
        %v7577 = vpop.f32.mrb[0].mxu0
        %7578 = vmatprep.mubr.f32.mxu0 0.0
        %v7579 = vand.u32 %v6895, 4294901760
        %v7580 = vsub.f32 %v6895, %v7579
        %7581 = vmatmul.mubr.f32.gmra.mrb[0].mxu0 %v7580
        %v7582 = vpop.f32.mrb[0].mxu0
        %v7583 = vadd.f32 %v7377, %v7582
        %v7584 = vpop.f32.mrb[0].mxu0
        %7585 = vmatprep.mubr.f32.mxu0 0.0
        %v7586 = vand.u32 %v6896, 4294901760
        %v7587 = vsub.f32 %v6896, %v7586
        %7588 = vmatmul.mubr.f32.gmra.mrb[0].mxu0 %v7587
        %v7589 = vpop.f32.mrb[0].mxu0
        %v7590 = vadd.f32 %v7383, %v7589
        %v7591 = vpop.f32.mrb[0].mxu0
        %7592 = vmatprep.mubr.f32.mxu0 0.0
        %v7593 = vand.u32 %v6897, 4294901760
        %v7594 = vsub.f32 %v6897, %v7593
        %7595 = vmatmul.mubr.f32.gmra.mrb[0].mxu0 %v7594
        %v7596 = vpop.f32.mrb[0].mxu0
        %v7597 = vadd.f32 %v7389, %v7596
        %v7598 = vpop.f32.mrb[0].mxu0
        %7599 = vmatprep.mubr.f32.mxu0 0.0
        %v7600 = vand.u32 %v6898, 4294901760
        %v7601 = vsub.f32 %v6898, %v7600
        %7602 = vmatmul.mubr.f32.gmra.mrb[0].mxu0 %v7601
        %v7603 = vpop.f32.mrb[0].mxu0
        %v7604 = vadd.f32 %v7395, %v7603
        %v7605 = vpop.f32.mrb[0].mxu0
        %7606 = vdwg.mxu0
        %7607 = vmatprep.subr.mxu0 0.0
        %v7608 = vand.u32 %v6900, 4294901760
        %7609 = vmatpush1.msra.mxu0 %v7608
        %7610 = vmatprep.subr.mxu0 0.0
        %v7611 = vand.u32 %v6901, 4294901760
        %7612 = vmatpush1.msra.mxu0 %v7611
        %7613 = vmatprep.subr.mxu0 0.0
        %v7614 = vand.u32 %v6902, 4294901760
        %7615 = vmatpush1.msra.mxu0 %v7614
        %7616 = vmatprep.subr.mxu0 0.0
        %v7617 = vand.u32 %v6903, 4294901760
        %7618 = vmatpush1.msra.mxu0 %v7617
        %7619 = vmatprep.subr.mxu0 0.0
        %v7620 = vand.u32 %v6904, 4294901760
        %7621 = vmatpush1.msra.mxu0 %v7620
        %7622 = vmatprep.subr.mxu0 0.0
        %v7623 = vand.u32 %v6905, 4294901760
        %7624 = vmatpush1.msra.mxu0 %v7623
        %7625 = vmatprep.subr.mxu0 0.0
        %v7626 = vand.u32 %v6906, 4294901760
        %7627 = vmatpush1.msra.mxu0 %v7626
        %7628 = vmatprep.subr.mxu0 0.0
        %v7629 = vand.u32 %v6907, 4294901760
        %7630 = vmatpush1.msra.mxu0 %v7629
        %7631 = vmatprep.subr.mxu0 0.0
        %v7632 = vand.u32 %v6908, 4294901760
        %7633 = vmatpush1.msra.mxu0 %v7632
        %7634 = vmatprep.subr.mxu0 0.0
        %v7635 = vand.u32 %v6909, 4294901760
        %7636 = vmatpush1.msra.mxu0 %v7635
        %7637 = vmatprep.subr.mxu0 0.0
        %v7638 = vand.u32 %v6910, 4294901760
        %7639 = vmatpush1.msra.mxu0 %v7638
        %7640 = vmatprep.subr.mxu0 0.0
        %v7641 = vand.u32 %v6911, 4294901760
        %7642 = vmatpush1.msra.mxu0 %v7641
        %7643 = vmatprep.subr.mxu0 0.0
        %v7644 = vand.u32 %v6912, 4294901760
        %7645 = vmatpush1.msra.mxu0 %v7644
        %7646 = vmatprep.subr.mxu0 0.0
        %v7647 = vand.u32 %v6913, 4294901760
        %7648 = vmatpush1.msra.mxu0 %v7647
        %7649 = vmatprep.subr.mxu0 0.0
        %v7650 = vand.u32 %v6914, 4294901760
        %7651 = vmatpush1.msra.mxu0 %v7650
        %7652 = vmatprep.subr.mxu0 0.0
        %v7653 = vand.u32 %v6915, 4294901760
        %7654 = vmatpush1.msra.mxu0 %v7653
        %7655 = vmatprep.subr.mxu0 0.0
        %7656 = vmatpush1.msra.mxu0 0.0
        %7657 = vmatprep.subr.mxu0 0.0
        %7658 = vmatpush1.msra.mxu0 0.0
        %7659 = vmatprep.subr.mxu0 0.0
        %7660 = vmatpush1.msra.mxu0 0.0
        %7661 = vmatprep.subr.mxu0 0.0
        %7662 = vmatpush1.msra.mxu0 0.0
        %7663 = vmatprep.subr.mxu0 0.0
        %7664 = vmatpush1.msra.mxu0 0.0
        %7665 = vmatprep.subr.mxu0 0.0
        %7666 = vmatpush1.msra.mxu0 0.0
        %7667 = vmatprep.subr.mxu0 0.0
        %7668 = vmatpush1.msra.mxu0 0.0
        %7669 = vmatprep.subr.mxu0 0.0
        %7670 = vmatpush1.msra.mxu0 0.0
        %7671 = vmatprep.subr.mxu0 0.0
        %7672 = vmatpush1.msra.mxu0 0.0
        %7673 = vmatprep.subr.mxu0 0.0
        %7674 = vmatpush1.msra.mxu0 0.0
        %7675 = vmatprep.subr.mxu0 0.0
        %7676 = vmatpush1.msra.mxu0 0.0
        %7677 = vmatprep.subr.mxu0 0.0
        %7678 = vmatpush1.msra.mxu0 0.0
        %7679 = vmatprep.subr.mxu0 0.0
        %7680 = vmatpush1.msra.mxu0 0.0
        %7681 = vmatprep.subr.mxu0 0.0
        %7682 = vmatpush1.msra.mxu0 0.0
        %7683 = vmatprep.subr.mxu0 0.0
        %7684 = vmatpush1.msra.mxu0 0.0
        %7685 = vmatprep.subr.mxu0 0.0
        %7686 = vmatpush1.msra.mxu0 0.0
        %7687 = vmatprep.mubr.f32.mxu0 0.0
        %v7688 = vand.u32 %v6883, 4294901760
        %v7689 = vsub.f32 %v6883, %v7688
        %v7690 = vand.u32 %v7689, 4294901760
        %7691 = vmatmul.mubr.f32.gmra.mrb[0].mxu0 %v7690
        %v7692 = vpop.f32.mrb[0].mxu0
        %v7693 = vadd.f32 %v7499, %v7692
        %v7694 = vpop.f32.mrb[0].mxu0
        %7695 = vmatprep.mubr.f32.mxu0 0.0
        %v7696 = vand.u32 %v6884, 4294901760
        %v7697 = vsub.f32 %v6884, %v7696
        %v7698 = vand.u32 %v7697, 4294901760
        %7699 = vmatmul.mubr.f32.gmra.mrb[0].mxu0 %v7698
        %v7700 = vpop.f32.mrb[0].mxu0
        %v7701 = vadd.f32 %v7506, %v7700
        %v7702 = vpop.f32.mrb[0].mxu0
        %7703 = vmatprep.mubr.f32.mxu0 0.0
        %v7704 = vand.u32 %v6885, 4294901760
        %v7705 = vsub.f32 %v6885, %v7704
        %v7706 = vand.u32 %v7705, 4294901760
        %7707 = vmatmul.mubr.f32.gmra.mrb[0].mxu0 %v7706
        %v7708 = vpop.f32.mrb[0].mxu0
        %v7709 = vadd.f32 %v7513, %v7708
        %v7710 = vpop.f32.mrb[0].mxu0
        %7711 = vmatprep.mubr.f32.mxu0 0.0
        %v7712 = vand.u32 %v6886, 4294901760
        %v7713 = vsub.f32 %v6886, %v7712
        %v7714 = vand.u32 %v7713, 4294901760
        %7715 = vmatmul.mubr.f32.gmra.mrb[0].mxu0 %v7714
        %v7716 = vpop.f32.mrb[0].mxu0
        %v7717 = vadd.f32 %v7520, %v7716
        %v7718 = vpop.f32.mrb[0].mxu0
        %7719 = vmatprep.mubr.f32.mxu0 0.0
        %v7720 = vand.u32 %v6887, 4294901760
        %v7721 = vsub.f32 %v6887, %v7720
        %v7722 = vand.u32 %v7721, 4294901760
        %7723 = vmatmul.mubr.f32.gmra.mrb[0].mxu0 %v7722
        %v7724 = vpop.f32.mrb[0].mxu0
        %v7725 = vadd.f32 %v7527, %v7724
        %v7726 = vpop.f32.mrb[0].mxu0
        %7727 = vmatprep.mubr.f32.mxu0 0.0
        %v7728 = vand.u32 %v6888, 4294901760
        %v7729 = vsub.f32 %v6888, %v7728
        %v7730 = vand.u32 %v7729, 4294901760
        %7731 = vmatmul.mubr.f32.gmra.mrb[0].mxu0 %v7730
        %v7732 = vpop.f32.mrb[0].mxu0
        %v7733 = vadd.f32 %v7534, %v7732
        %v7734 = vpop.f32.mrb[0].mxu0
        %7735 = vmatprep.mubr.f32.mxu0 0.0
        %v7736 = vand.u32 %v6889, 4294901760
        %v7737 = vsub.f32 %v6889, %v7736
        %v7738 = vand.u32 %v7737, 4294901760
        %7739 = vmatmul.mubr.f32.gmra.mrb[0].mxu0 %v7738
        %v7740 = vpop.f32.mrb[0].mxu0
        %v7741 = vadd.f32 %v7541, %v7740
        %v7742 = vpop.f32.mrb[0].mxu0
        %7743 = vmatprep.mubr.f32.mxu0 0.0
        %v7744 = vand.u32 %v6890, 4294901760
        %v7745 = vsub.f32 %v6890, %v7744
        %v7746 = vand.u32 %v7745, 4294901760
        %7747 = vmatmul.mubr.f32.gmra.mrb[0].mxu0 %v7746
        %v7748 = vpop.f32.mrb[0].mxu0
        %v7749 = vadd.f32 %v7548, %v7748
        %v7750 = vpop.f32.mrb[0].mxu0
        %7751 = vmatprep.mubr.f32.mxu0 0.0
        %v7752 = vand.u32 %v6891, 4294901760
        %v7753 = vsub.f32 %v6891, %v7752
        %v7754 = vand.u32 %v7753, 4294901760
        %7755 = vmatmul.mubr.f32.gmra.mrb[0].mxu0 %v7754
        %v7756 = vpop.f32.mrb[0].mxu0
        %v7757 = vadd.f32 %v7555, %v7756
        %v7758 = vpop.f32.mrb[0].mxu0
        %7759 = vmatprep.mubr.f32.mxu0 0.0
        %v7760 = vand.u32 %v6892, 4294901760
        %v7761 = vsub.f32 %v6892, %v7760
        %v7762 = vand.u32 %v7761, 4294901760
        %7763 = vmatmul.mubr.f32.gmra.mrb[0].mxu0 %v7762
        %v7764 = vpop.f32.mrb[0].mxu0
        %v7765 = vadd.f32 %v7562, %v7764
        %v7766 = vpop.f32.mrb[0].mxu0
        %7767 = vmatprep.mubr.f32.mxu0 0.0
        %v7768 = vand.u32 %v6893, 4294901760
        %v7769 = vsub.f32 %v6893, %v7768
        %v7770 = vand.u32 %v7769, 4294901760
        %7771 = vmatmul.mubr.f32.gmra.mrb[0].mxu0 %v7770
        %v7772 = vpop.f32.mrb[0].mxu0
        %v7773 = vadd.f32 %v7569, %v7772
        %v7774 = vpop.f32.mrb[0].mxu0
        %7775 = vmatprep.mubr.f32.mxu0 0.0
        %v7776 = vand.u32 %v6894, 4294901760
        %v7777 = vsub.f32 %v6894, %v7776
        %v7778 = vand.u32 %v7777, 4294901760
        %7779 = vmatmul.mubr.f32.gmra.mrb[0].mxu0 %v7778
        %v7780 = vpop.f32.mrb[0].mxu0
        %v7781 = vadd.f32 %v7576, %v7780
        %v7782 = vpop.f32.mrb[0].mxu0
        %7783 = vmatprep.mubr.f32.mxu0 0.0
        %v7784 = vand.u32 %v6895, 4294901760
        %v7785 = vsub.f32 %v6895, %v7784
        %v7786 = vand.u32 %v7785, 4294901760
        %7787 = vmatmul.mubr.f32.gmra.mrb[0].mxu0 %v7786
        %v7788 = vpop.f32.mrb[0].mxu0
        %v7789 = vadd.f32 %v7583, %v7788
        %v7790 = vpop.f32.mrb[0].mxu0
        %7791 = vmatprep.mubr.f32.mxu0 0.0
        %v7792 = vand.u32 %v6896, 4294901760
        %v7793 = vsub.f32 %v6896, %v7792
        %v7794 = vand.u32 %v7793, 4294901760
        %7795 = vmatmul.mubr.f32.gmra.mrb[0].mxu0 %v7794
        %v7796 = vpop.f32.mrb[0].mxu0
        %v7797 = vadd.f32 %v7590, %v7796
        %v7798 = vpop.f32.mrb[0].mxu0
        %7799 = vmatprep.mubr.f32.mxu0 0.0
        %v7800 = vand.u32 %v6897, 4294901760
        %v7801 = vsub.f32 %v6897, %v7800
        %v7802 = vand.u32 %v7801, 4294901760
        %7803 = vmatmul.mubr.f32.gmra.mrb[0].mxu0 %v7802
        %v7804 = vpop.f32.mrb[0].mxu0
        %v7805 = vadd.f32 %v7597, %v7804
        %v7806 = vpop.f32.mrb[0].mxu0
        %7807 = vmatprep.mubr.f32.mxu0 0.0
        %v7808 = vand.u32 %v6898, 4294901760
        %v7809 = vsub.f32 %v6898, %v7808
        %v7810 = vand.u32 %v7809, 4294901760
        %7811 = vmatmul.mubr.f32.gmra.mrb[0].mxu0 %v7810
        %v7812 = vpop.f32.mrb[0].mxu0
        %v7813 = vadd.f32 %v7604, %v7812
        %v7814 = vpop.f32.mrb[0].mxu0
        %7815 = vdwg.mxu0
        %7816 = vmatprep.subr.mxu0 0.0
        %v7817 = vand.u32 %v6900, 4294901760
        %v7818 = vsub.f32 %v6900, %v7817
        %v7819 = vand.u32 %v7818, 4294901760
        %7820 = vmatpush1.msra.mxu0 %v7819
        %7821 = vmatprep.subr.mxu0 0.0
        %v7822 = vand.u32 %v6901, 4294901760
        %v7823 = vsub.f32 %v6901, %v7822
        %v7824 = vand.u32 %v7823, 4294901760
        %7825 = vmatpush1.msra.mxu0 %v7824
        %7826 = vmatprep.subr.mxu0 0.0
        %v7827 = vand.u32 %v6902, 4294901760
        %v7828 = vsub.f32 %v6902, %v7827
        %v7829 = vand.u32 %v7828, 4294901760
        %7830 = vmatpush1.msra.mxu0 %v7829
        %7831 = vmatprep.subr.mxu0 0.0
        %v7832 = vand.u32 %v6903, 4294901760
        %v7833 = vsub.f32 %v6903, %v7832
        %v7834 = vand.u32 %v7833, 4294901760
        %7835 = vmatpush1.msra.mxu0 %v7834
        %7836 = vmatprep.subr.mxu0 0.0
        %v7837 = vand.u32 %v6904, 4294901760
        %v7838 = vsub.f32 %v6904, %v7837
        %v7839 = vand.u32 %v7838, 4294901760
        %7840 = vmatpush1.msra.mxu0 %v7839
        %7841 = vmatprep.subr.mxu0 0.0
        %v7842 = vand.u32 %v6905, 4294901760
        %v7843 = vsub.f32 %v6905, %v7842
        %v7844 = vand.u32 %v7843, 4294901760
        %7845 = vmatpush1.msra.mxu0 %v7844
        %7846 = vmatprep.subr.mxu0 0.0
        %v7847 = vand.u32 %v6906, 4294901760
        %v7848 = vsub.f32 %v6906, %v7847
        %v7849 = vand.u32 %v7848, 4294901760
        %7850 = vmatpush1.msra.mxu0 %v7849
        %7851 = vmatprep.subr.mxu0 0.0
        %v7852 = vand.u32 %v6907, 4294901760
        %v7853 = vsub.f32 %v6907, %v7852
        %v7854 = vand.u32 %v7853, 4294901760
        %7855 = vmatpush1.msra.mxu0 %v7854
        %7856 = vmatprep.subr.mxu0 0.0
        %v7857 = vand.u32 %v6908, 4294901760
        %v7858 = vsub.f32 %v6908, %v7857
        %v7859 = vand.u32 %v7858, 4294901760
        %7860 = vmatpush1.msra.mxu0 %v7859
        %7861 = vmatprep.subr.mxu0 0.0
        %v7862 = vand.u32 %v6909, 4294901760
        %v7863 = vsub.f32 %v6909, %v7862
        %v7864 = vand.u32 %v7863, 4294901760
        %7865 = vmatpush1.msra.mxu0 %v7864
        %7866 = vmatprep.subr.mxu0 0.0
        %v7867 = vand.u32 %v6910, 4294901760
        %v7868 = vsub.f32 %v6910, %v7867
        %v7869 = vand.u32 %v7868, 4294901760
        %7870 = vmatpush1.msra.mxu0 %v7869
        %7871 = vmatprep.subr.mxu0 0.0
        %v7872 = vand.u32 %v6911, 4294901760
        %v7873 = vsub.f32 %v6911, %v7872
        %v7874 = vand.u32 %v7873, 4294901760
        %7875 = vmatpush1.msra.mxu0 %v7874
        %7876 = vmatprep.subr.mxu0 0.0
        %v7877 = vand.u32 %v6912, 4294901760
        %v7878 = vsub.f32 %v6912, %v7877
        %v7879 = vand.u32 %v7878, 4294901760
        %7880 = vmatpush1.msra.mxu0 %v7879
        %7881 = vmatprep.subr.mxu0 0.0
        %v7882 = vand.u32 %v6913, 4294901760
        %v7883 = vsub.f32 %v6913, %v7882
        %v7884 = vand.u32 %v7883, 4294901760
        %7885 = vmatpush1.msra.mxu0 %v7884
        %7886 = vmatprep.subr.mxu0 0.0
        %v7887 = vand.u32 %v6914, 4294901760
        %v7888 = vsub.f32 %v6914, %v7887
        %v7889 = vand.u32 %v7888, 4294901760
        %7890 = vmatpush1.msra.mxu0 %v7889
        %7891 = vmatprep.subr.mxu0 0.0
        %v7892 = vand.u32 %v6915, 4294901760
        %v7893 = vsub.f32 %v6915, %v7892
        %v7894 = vand.u32 %v7893, 4294901760
        %7895 = vmatpush1.msra.mxu0 %v7894
        %7896 = vmatprep.subr.mxu0 0.0
        %7897 = vmatpush1.msra.mxu0 0.0
        %7898 = vmatprep.subr.mxu0 0.0
        %7899 = vmatpush1.msra.mxu0 0.0
        %7900 = vmatprep.subr.mxu0 0.0
        %7901 = vmatpush1.msra.mxu0 0.0
        %7902 = vmatprep.subr.mxu0 0.0
        %7903 = vmatpush1.msra.mxu0 0.0
        %7904 = vmatprep.subr.mxu0 0.0
        %7905 = vmatpush1.msra.mxu0 0.0
        %7906 = vmatprep.subr.mxu0 0.0
        %7907 = vmatpush1.msra.mxu0 0.0
        %7908 = vmatprep.subr.mxu0 0.0
        %7909 = vmatpush1.msra.mxu0 0.0
        %7910 = vmatprep.subr.mxu0 0.0
        %7911 = vmatpush1.msra.mxu0 0.0
        %7912 = vmatprep.subr.mxu0 0.0
        %7913 = vmatpush1.msra.mxu0 0.0
        %7914 = vmatprep.subr.mxu0 0.0
        %7915 = vmatpush1.msra.mxu0 0.0
        %7916 = vmatprep.subr.mxu0 0.0
        %7917 = vmatpush1.msra.mxu0 0.0
        %7918 = vmatprep.subr.mxu0 0.0
        %7919 = vmatpush1.msra.mxu0 0.0
        %7920 = vmatprep.subr.mxu0 0.0
        %7921 = vmatpush1.msra.mxu0 0.0
        %7922 = vmatprep.subr.mxu0 0.0
        %7923 = vmatpush1.msra.mxu0 0.0
        %7924 = vmatprep.subr.mxu0 0.0
        %7925 = vmatpush1.msra.mxu0 0.0
        %7926 = vmatprep.subr.mxu0 0.0
        %7927 = vmatpush1.msra.mxu0 0.0
        %7928 = vmatprep.mubr.f32.mxu0 0.0
        %v7929 = vand.u32 %v6883, 4294901760
        %7930 = vmatmul.mubr.f32.gmra.mrb[0].mxu0 %v7929
        %v7931 = vpop.f32.mrb[0].mxu0
        %v7932 = vadd.f32 %v7693, %v7931
        %v7933 = vpop.f32.mrb[0].mxu0
        %7934 = vmatprep.mubr.f32.mxu0 0.0
        %v7935 = vand.u32 %v6884, 4294901760
        %7936 = vmatmul.mubr.f32.gmra.mrb[0].mxu0 %v7935
        %v7937 = vpop.f32.mrb[0].mxu0
        %v7938 = vadd.f32 %v7701, %v7937
        %v7939 = vpop.f32.mrb[0].mxu0
        %7940 = vmatprep.mubr.f32.mxu0 0.0
        %v7941 = vand.u32 %v6885, 4294901760
        %7942 = vmatmul.mubr.f32.gmra.mrb[0].mxu0 %v7941
        %v7943 = vpop.f32.mrb[0].mxu0
        %v7944 = vadd.f32 %v7709, %v7943
        %v7945 = vpop.f32.mrb[0].mxu0
        %7946 = vmatprep.mubr.f32.mxu0 0.0
        %v7947 = vand.u32 %v6886, 4294901760
        %7948 = vmatmul.mubr.f32.gmra.mrb[0].mxu0 %v7947
        %v7949 = vpop.f32.mrb[0].mxu0
        %v7950 = vadd.f32 %v7717, %v7949
        %v7951 = vpop.f32.mrb[0].mxu0
        %7952 = vmatprep.mubr.f32.mxu0 0.0
        %v7953 = vand.u32 %v6887, 4294901760
        %7954 = vmatmul.mubr.f32.gmra.mrb[0].mxu0 %v7953
        %v7955 = vpop.f32.mrb[0].mxu0
        %v7956 = vadd.f32 %v7725, %v7955
        %v7957 = vpop.f32.mrb[0].mxu0
        %7958 = vmatprep.mubr.f32.mxu0 0.0
        %v7959 = vand.u32 %v6888, 4294901760
        %7960 = vmatmul.mubr.f32.gmra.mrb[0].mxu0 %v7959
        %v7961 = vpop.f32.mrb[0].mxu0
        %v7962 = vadd.f32 %v7733, %v7961
        %v7963 = vpop.f32.mrb[0].mxu0
        %7964 = vmatprep.mubr.f32.mxu0 0.0
        %v7965 = vand.u32 %v6889, 4294901760
        %7966 = vmatmul.mubr.f32.gmra.mrb[0].mxu0 %v7965
        %v7967 = vpop.f32.mrb[0].mxu0
        %v7968 = vadd.f32 %v7741, %v7967
        %v7969 = vpop.f32.mrb[0].mxu0
        %7970 = vmatprep.mubr.f32.mxu0 0.0
        %v7971 = vand.u32 %v6890, 4294901760
        %7972 = vmatmul.mubr.f32.gmra.mrb[0].mxu0 %v7971
        %v7973 = vpop.f32.mrb[0].mxu0
        %v7974 = vadd.f32 %v7749, %v7973
        %v7975 = vpop.f32.mrb[0].mxu0
        %7976 = vmatprep.mubr.f32.mxu0 0.0
        %v7977 = vand.u32 %v6891, 4294901760
        %7978 = vmatmul.mubr.f32.gmra.mrb[0].mxu0 %v7977
        %v7979 = vpop.f32.mrb[0].mxu0
        %v7980 = vadd.f32 %v7757, %v7979
        %v7981 = vpop.f32.mrb[0].mxu0
        %7982 = vmatprep.mubr.f32.mxu0 0.0
        %v7983 = vand.u32 %v6892, 4294901760
        %7984 = vmatmul.mubr.f32.gmra.mrb[0].mxu0 %v7983
        %v7985 = vpop.f32.mrb[0].mxu0
        %v7986 = vadd.f32 %v7765, %v7985
        %v7987 = vpop.f32.mrb[0].mxu0
        %7988 = vmatprep.mubr.f32.mxu0 0.0
        %v7989 = vand.u32 %v6893, 4294901760
        %7990 = vmatmul.mubr.f32.gmra.mrb[0].mxu0 %v7989
        %v7991 = vpop.f32.mrb[0].mxu0
        %v7992 = vadd.f32 %v7773, %v7991
        %v7993 = vpop.f32.mrb[0].mxu0
        %7994 = vmatprep.mubr.f32.mxu0 0.0
        %v7995 = vand.u32 %v6894, 4294901760
        %7996 = vmatmul.mubr.f32.gmra.mrb[0].mxu0 %v7995
        %v7997 = vpop.f32.mrb[0].mxu0
        %v7998 = vadd.f32 %v7781, %v7997
        %v7999 = vpop.f32.mrb[0].mxu0
        %8000 = vmatprep.mubr.f32.mxu0 0.0
        %v8001 = vand.u32 %v6895, 4294901760
        %8002 = vmatmul.mubr.f32.gmra.mrb[0].mxu0 %v8001
        %v8003 = vpop.f32.mrb[0].mxu0
        %v8004 = vadd.f32 %v7789, %v8003
        %v8005 = vpop.f32.mrb[0].mxu0
        %8006 = vmatprep.mubr.f32.mxu0 0.0
        %v8007 = vand.u32 %v6896, 4294901760
        %8008 = vmatmul.mubr.f32.gmra.mrb[0].mxu0 %v8007
        %v8009 = vpop.f32.mrb[0].mxu0
        %v8010 = vadd.f32 %v7797, %v8009
        %v8011 = vpop.f32.mrb[0].mxu0
        %8012 = vmatprep.mubr.f32.mxu0 0.0
        %v8013 = vand.u32 %v6897, 4294901760
        %8014 = vmatmul.mubr.f32.gmra.mrb[0].mxu0 %v8013
        %v8015 = vpop.f32.mrb[0].mxu0
        %v8016 = vadd.f32 %v7805, %v8015
        %v8017 = vpop.f32.mrb[0].mxu0
        %8018 = vmatprep.mubr.f32.mxu0 0.0
        %v8019 = vand.u32 %v6898, 4294901760
        %8020 = vmatmul.mubr.f32.gmra.mrb[0].mxu0 %v8019
        %v8021 = vpop.f32.mrb[0].mxu0
        %v8022 = vadd.f32 %v7813, %v8021
        %v8023 = vpop.f32.mrb[0].mxu0
        %8024 = vdwg.mxu0
        %8025 = vmatprep.subr.mxu0 0.0
        %v8026 = vand.u32 %v6900, 4294901760
        %8027 = vmatpush1.msra.mxu0 %v8026
        %8028 = vmatprep.subr.mxu0 0.0
        %v8029 = vand.u32 %v6901, 4294901760
        %8030 = vmatpush1.msra.mxu0 %v8029
        %8031 = vmatprep.subr.mxu0 0.0
        %v8032 = vand.u32 %v6902, 4294901760
        %8033 = vmatpush1.msra.mxu0 %v8032
        %8034 = vmatprep.subr.mxu0 0.0
        %v8035 = vand.u32 %v6903, 4294901760
        %8036 = vmatpush1.msra.mxu0 %v8035
        %8037 = vmatprep.subr.mxu0 0.0
        %v8038 = vand.u32 %v6904, 4294901760
        %8039 = vmatpush1.msra.mxu0 %v8038
        %8040 = vmatprep.subr.mxu0 0.0
        %v8041 = vand.u32 %v6905, 4294901760
        %8042 = vmatpush1.msra.mxu0 %v8041
        %8043 = vmatprep.subr.mxu0 0.0
        %v8044 = vand.u32 %v6906, 4294901760
        %8045 = vmatpush1.msra.mxu0 %v8044
        %8046 = vmatprep.subr.mxu0 0.0
        %v8047 = vand.u32 %v6907, 4294901760
        %8048 = vmatpush1.msra.mxu0 %v8047
        %8049 = vmatprep.subr.mxu0 0.0
        %v8050 = vand.u32 %v6908, 4294901760
        %8051 = vmatpush1.msra.mxu0 %v8050
        %8052 = vmatprep.subr.mxu0 0.0
        %v8053 = vand.u32 %v6909, 4294901760
        %8054 = vmatpush1.msra.mxu0 %v8053
        %8055 = vmatprep.subr.mxu0 0.0
        %v8056 = vand.u32 %v6910, 4294901760
        %8057 = vmatpush1.msra.mxu0 %v8056
        %8058 = vmatprep.subr.mxu0 0.0
        %v8059 = vand.u32 %v6911, 4294901760
        %8060 = vmatpush1.msra.mxu0 %v8059
        %8061 = vmatprep.subr.mxu0 0.0
        %v8062 = vand.u32 %v6912, 4294901760
        %8063 = vmatpush1.msra.mxu0 %v8062
        %8064 = vmatprep.subr.mxu0 0.0
        %v8065 = vand.u32 %v6913, 4294901760
        %8066 = vmatpush1.msra.mxu0 %v8065
        %8067 = vmatprep.subr.mxu0 0.0
        %v8068 = vand.u32 %v6914, 4294901760
        %8069 = vmatpush1.msra.mxu0 %v8068
        %8070 = vmatprep.subr.mxu0 0.0
        %v8071 = vand.u32 %v6915, 4294901760
        %8072 = vmatpush1.msra.mxu0 %v8071
        %8073 = vmatprep.subr.mxu0 0.0
        %8074 = vmatpush1.msra.mxu0 0.0
        %8075 = vmatprep.subr.mxu0 0.0
        %8076 = vmatpush1.msra.mxu0 0.0
        %8077 = vmatprep.subr.mxu0 0.0
        %8078 = vmatpush1.msra.mxu0 0.0
        %8079 = vmatprep.subr.mxu0 0.0
        %8080 = vmatpush1.msra.mxu0 0.0
        %8081 = vmatprep.subr.mxu0 0.0
        %8082 = vmatpush1.msra.mxu0 0.0
        %8083 = vmatprep.subr.mxu0 0.0
        %8084 = vmatpush1.msra.mxu0 0.0
        %8085 = vmatprep.subr.mxu0 0.0
        %8086 = vmatpush1.msra.mxu0 0.0
        %8087 = vmatprep.subr.mxu0 0.0
        %8088 = vmatpush1.msra.mxu0 0.0
        %8089 = vmatprep.subr.mxu0 0.0
        %8090 = vmatpush1.msra.mxu0 0.0
        %8091 = vmatprep.subr.mxu0 0.0
        %8092 = vmatpush1.msra.mxu0 0.0
        %8093 = vmatprep.subr.mxu0 0.0
        %8094 = vmatpush1.msra.mxu0 0.0
        %8095 = vmatprep.subr.mxu0 0.0
        %8096 = vmatpush1.msra.mxu0 0.0
        %8097 = vmatprep.subr.mxu0 0.0
        %8098 = vmatpush1.msra.mxu0 0.0
        %8099 = vmatprep.subr.mxu0 0.0
        %8100 = vmatpush1.msra.mxu0 0.0
        %8101 = vmatprep.subr.mxu0 0.0
        %8102 = vmatpush1.msra.mxu0 0.0
        %8103 = vmatprep.subr.mxu0 0.0
        %8104 = vmatpush1.msra.mxu0 0.0
        %8105 = vmatprep.mubr.f32.mxu0 0.0
        %v8106 = vand.u32 %v6883, 4294901760
        %8107 = vmatmul.mubr.f32.gmra.mrb[0].mxu0 %v8106
        %v8108 = vpop.f32.mrb[0].mxu0
        %v8109 = vadd.f32 %v7932, %v8108
        %v8110 = vpop.f32.mrb[0].mxu0
        %8111 = vmatprep.mubr.f32.mxu0 0.0
        %v8112 = vand.u32 %v6884, 4294901760
        %8113 = vmatmul.mubr.f32.gmra.mrb[0].mxu0 %v8112
        %v8114 = vpop.f32.mrb[0].mxu0
        %v8115 = vadd.f32 %v7938, %v8114
        %v8116 = vpop.f32.mrb[0].mxu0
        %8117 = vmatprep.mubr.f32.mxu0 0.0
        %v8118 = vand.u32 %v6885, 4294901760
        %8119 = vmatmul.mubr.f32.gmra.mrb[0].mxu0 %v8118
        %v8120 = vpop.f32.mrb[0].mxu0
        %v8121 = vadd.f32 %v7944, %v8120
        %v8122 = vpop.f32.mrb[0].mxu0
        %8123 = vmatprep.mubr.f32.mxu0 0.0
        %v8124 = vand.u32 %v6886, 4294901760
        %8125 = vmatmul.mubr.f32.gmra.mrb[0].mxu0 %v8124
        %v8126 = vpop.f32.mrb[0].mxu0
        %v8127 = vadd.f32 %v7950, %v8126
        %v8128 = vpop.f32.mrb[0].mxu0
        %8129 = vmatprep.mubr.f32.mxu0 0.0
        %v8130 = vand.u32 %v6887, 4294901760
        %8131 = vmatmul.mubr.f32.gmra.mrb[0].mxu0 %v8130
        %v8132 = vpop.f32.mrb[0].mxu0
        %v8133 = vadd.f32 %v7956, %v8132
        %v8134 = vpop.f32.mrb[0].mxu0
        %8135 = vmatprep.mubr.f32.mxu0 0.0
        %v8136 = vand.u32 %v6888, 4294901760
        %8137 = vmatmul.mubr.f32.gmra.mrb[0].mxu0 %v8136
        %v8138 = vpop.f32.mrb[0].mxu0
        %v8139 = vadd.f32 %v7962, %v8138
        %v8140 = vpop.f32.mrb[0].mxu0
        %8141 = vmatprep.mubr.f32.mxu0 0.0
        %v8142 = vand.u32 %v6889, 4294901760
        %8143 = vmatmul.mubr.f32.gmra.mrb[0].mxu0 %v8142
        %v8144 = vpop.f32.mrb[0].mxu0
        %v8145 = vadd.f32 %v7968, %v8144
        %v8146 = vpop.f32.mrb[0].mxu0
        %8147 = vmatprep.mubr.f32.mxu0 0.0
        %v8148 = vand.u32 %v6890, 4294901760
        %8149 = vmatmul.mubr.f32.gmra.mrb[0].mxu0 %v8148
        %v8150 = vpop.f32.mrb[0].mxu0
        %v8151 = vadd.f32 %v7974, %v8150
        %v8152 = vpop.f32.mrb[0].mxu0
        %8153 = vmatprep.mubr.f32.mxu0 0.0
        %v8154 = vand.u32 %v6891, 4294901760
        %8155 = vmatmul.mubr.f32.gmra.mrb[0].mxu0 %v8154
        %v8156 = vpop.f32.mrb[0].mxu0
        %v8157 = vadd.f32 %v7980, %v8156
        %v8158 = vpop.f32.mrb[0].mxu0
        %8159 = vmatprep.mubr.f32.mxu0 0.0
        %v8160 = vand.u32 %v6892, 4294901760
        %8161 = vmatmul.mubr.f32.gmra.mrb[0].mxu0 %v8160
        %v8162 = vpop.f32.mrb[0].mxu0
        %v8163 = vadd.f32 %v7986, %v8162
        %v8164 = vpop.f32.mrb[0].mxu0
        %8165 = vmatprep.mubr.f32.mxu0 0.0
        %v8166 = vand.u32 %v6893, 4294901760
        %8167 = vmatmul.mubr.f32.gmra.mrb[0].mxu0 %v8166
        %v8168 = vpop.f32.mrb[0].mxu0
        %v8169 = vadd.f32 %v7992, %v8168
        %v8170 = vpop.f32.mrb[0].mxu0
        %8171 = vmatprep.mubr.f32.mxu0 0.0
        %v8172 = vand.u32 %v6894, 4294901760
        %8173 = vmatmul.mubr.f32.gmra.mrb[0].mxu0 %v8172
        %v8174 = vpop.f32.mrb[0].mxu0
        %v8175 = vadd.f32 %v7998, %v8174
        %v8176 = vpop.f32.mrb[0].mxu0
        %8177 = vmatprep.mubr.f32.mxu0 0.0
        %v8178 = vand.u32 %v6895, 4294901760
        %8179 = vmatmul.mubr.f32.gmra.mrb[0].mxu0 %v8178
        %v8180 = vpop.f32.mrb[0].mxu0
        %v8181 = vadd.f32 %v8004, %v8180
        %v8182 = vpop.f32.mrb[0].mxu0
        %8183 = vmatprep.mubr.f32.mxu0 0.0
        %v8184 = vand.u32 %v6896, 4294901760
        %8185 = vmatmul.mubr.f32.gmra.mrb[0].mxu0 %v8184
        %v8186 = vpop.f32.mrb[0].mxu0
        %v8187 = vadd.f32 %v8010, %v8186
        %v8188 = vpop.f32.mrb[0].mxu0
        %8189 = vmatprep.mubr.f32.mxu0 0.0
        %v8190 = vand.u32 %v6897, 4294901760
        %8191 = vmatmul.mubr.f32.gmra.mrb[0].mxu0 %v8190
        %v8192 = vpop.f32.mrb[0].mxu0
        %v8193 = vadd.f32 %v8016, %v8192
        %v8194 = vpop.f32.mrb[0].mxu0
        %8195 = vmatprep.mubr.f32.mxu0 0.0
        %v8196 = vand.u32 %v6898, 4294901760
        %8197 = vmatmul.mubr.f32.gmra.mrb[0].mxu0 %v8196
        %v8198 = vpop.f32.mrb[0].mxu0
        %v8199 = vadd.f32 %v8022, %v8198
        %v8200 = vpop.f32.mrb[0].mxu0
        %8201 = vdwg.mxu0
        %v8202 = vld [vmem:[%s3 + $0x3] sm:$0x1]
        %v8203 = vlaneseq
        %v8204 = vshrl.u32 %v8203, 7
        %v8205 = vsub.s32 0, %v8204
        %v8206 = vrot.slane %v8202, %v8205
        %8207 = vmatprep.subr.mxu0 0.0
        %v8208 = vand.u32 %v8109, 4294901760
        %8209 = vmatpush1.msra.mxu0 %v8208
        %8210 = vmatprep.subr.mxu0 0.0
        %v8211 = vand.u32 %v8115, 4294901760
        %8212 = vmatpush1.msra.mxu0 %v8211
        %8213 = vmatprep.subr.mxu0 0.0
        %v8214 = vand.u32 %v8121, 4294901760
        %8215 = vmatpush1.msra.mxu0 %v8214
        %8216 = vmatprep.subr.mxu0 0.0
        %v8217 = vand.u32 %v8127, 4294901760
        %8218 = vmatpush1.msra.mxu0 %v8217
        %8219 = vmatprep.subr.mxu0 0.0
        %v8220 = vand.u32 %v8133, 4294901760
        %8221 = vmatpush1.msra.mxu0 %v8220
        %8222 = vmatprep.subr.mxu0 0.0
        %v8223 = vand.u32 %v8139, 4294901760
        %8224 = vmatpush1.msra.mxu0 %v8223
        %8225 = vmatprep.subr.mxu0 0.0
        %v8226 = vand.u32 %v8145, 4294901760
        %8227 = vmatpush1.msra.mxu0 %v8226
        %8228 = vmatprep.subr.mxu0 0.0
        %v8229 = vand.u32 %v8151, 4294901760
        %8230 = vmatpush1.msra.mxu0 %v8229
        %8231 = vmatprep.subr.mxu0 0.0
        %v8232 = vand.u32 %v8157, 4294901760
        %8233 = vmatpush1.msra.mxu0 %v8232
        %8234 = vmatprep.subr.mxu0 0.0
        %v8235 = vand.u32 %v8163, 4294901760
        %8236 = vmatpush1.msra.mxu0 %v8235
        %8237 = vmatprep.subr.mxu0 0.0
        %v8238 = vand.u32 %v8169, 4294901760
        %8239 = vmatpush1.msra.mxu0 %v8238
        %8240 = vmatprep.subr.mxu0 0.0
        %v8241 = vand.u32 %v8175, 4294901760
        %8242 = vmatpush1.msra.mxu0 %v8241
        %8243 = vmatprep.subr.mxu0 0.0
        %v8244 = vand.u32 %v8181, 4294901760
        %8245 = vmatpush1.msra.mxu0 %v8244
        %8246 = vmatprep.subr.mxu0 0.0
        %v8247 = vand.u32 %v8187, 4294901760
        %8248 = vmatpush1.msra.mxu0 %v8247
        %8249 = vmatprep.subr.mxu0 0.0
        %v8250 = vand.u32 %v8193, 4294901760
        %8251 = vmatpush1.msra.mxu0 %v8250
        %8252 = vmatprep.subr.mxu0 0.0
        %v8253 = vand.u32 %v8199, 4294901760
        %8254 = vmatpush1.msra.mxu0 %v8253
        %8255 = vmatprep.subr.mxu0 0.0
        %8256 = vmatpush1.msra.mxu0 0.0
        %8257 = vmatprep.subr.mxu0 0.0
        %8258 = vmatpush1.msra.mxu0 0.0
        %8259 = vmatprep.subr.mxu0 0.0
        %8260 = vmatpush1.msra.mxu0 0.0
        %8261 = vmatprep.subr.mxu0 0.0
        %8262 = vmatpush1.msra.mxu0 0.0
        %8263 = vmatprep.subr.mxu0 0.0
        %8264 = vmatpush1.msra.mxu0 0.0
        %8265 = vmatprep.subr.mxu0 0.0
        %8266 = vmatpush1.msra.mxu0 0.0
        %8267 = vmatprep.subr.mxu0 0.0
        %8268 = vmatpush1.msra.mxu0 0.0
        %8269 = vmatprep.subr.mxu0 0.0
        %8270 = vmatpush1.msra.mxu0 0.0
        %8271 = vmatprep.subr.mxu0 0.0
        %8272 = vmatpush1.msra.mxu0 0.0
        %8273 = vmatprep.subr.mxu0 0.0
        %8274 = vmatpush1.msra.mxu0 0.0
        %8275 = vmatprep.subr.mxu0 0.0
        %8276 = vmatpush1.msra.mxu0 0.0
        %8277 = vmatprep.subr.mxu0 0.0
        %8278 = vmatpush1.msra.mxu0 0.0
        %8279 = vmatprep.subr.mxu0 0.0
        %8280 = vmatpush1.msra.mxu0 0.0
        %8281 = vmatprep.subr.mxu0 0.0
        %8282 = vmatpush1.msra.mxu0 0.0
        %8283 = vmatprep.subr.mxu0 0.0
        %8284 = vmatpush1.msra.mxu0 0.0
        %8285 = vmatprep.subr.mxu0 0.0
        %8286 = vmatpush1.msra.mxu0 0.0
        %8287 = vmatprep.mubr.f32.mxu0 0.0
        %v8288 = vand.u32 %v245, 4294901760
        %v8289 = vsub.f32 %v245, %v8288
        %v8290 = vand.u32 %v8289, 4294901760
        %v8291 = vsub.f32 %v8289, %v8290
        %v8292 = vand.u32 %v8291, 4294901760
        %8293 = vmatmul.mubr.f32.gmra.mrb[0].mxu0 %v8292
        %v8294 = vpop.f32.mrb[0].mxu0
        %v8295 = vadd.f32 %v8206, %v8294
        %v8296 = vpop.f32.mrb[0].mxu0
        %8297 = vmatprep.mubr.f32.mxu0 0.0
        %v8298 = vand.u32 %v246, 4294901760
        %v8299 = vsub.f32 %v246, %v8298
        %v8300 = vand.u32 %v8299, 4294901760
        %v8301 = vsub.f32 %v8299, %v8300
        %v8302 = vand.u32 %v8301, 4294901760
        %8303 = vmatmul.mubr.f32.gmra.mrb[0].mxu0 %v8302
        %v8304 = vpop.f32.mrb[0].mxu0
        %v8305 = vadd.f32 %v8206, %v8304
        %v8306 = vpop.f32.mrb[0].mxu0
        %8307 = vmatprep.mubr.f32.mxu0 0.0
        %v8308 = vand.u32 %v247, 4294901760
        %v8309 = vsub.f32 %v247, %v8308
        %v8310 = vand.u32 %v8309, 4294901760
        %v8311 = vsub.f32 %v8309, %v8310
        %v8312 = vand.u32 %v8311, 4294901760
        %8313 = vmatmul.mubr.f32.gmra.mrb[0].mxu0 %v8312
        %v8314 = vpop.f32.mrb[0].mxu0
        %v8315 = vadd.f32 %v8206, %v8314
        %v8316 = vpop.f32.mrb[0].mxu0
        %8317 = vmatprep.mubr.f32.mxu0 0.0
        %v8318 = vand.u32 %v248, 4294901760
        %v8319 = vsub.f32 %v248, %v8318
        %v8320 = vand.u32 %v8319, 4294901760
        %v8321 = vsub.f32 %v8319, %v8320
        %v8322 = vand.u32 %v8321, 4294901760
        %8323 = vmatmul.mubr.f32.gmra.mrb[0].mxu0 %v8322
        %v8324 = vpop.f32.mrb[0].mxu0
        %v8325 = vadd.f32 %v8206, %v8324
        %v8326 = vpop.f32.mrb[0].mxu0
        %8327 = vmatprep.mubr.f32.mxu0 0.0
        %v8328 = vand.u32 %v249, 4294901760
        %v8329 = vsub.f32 %v249, %v8328
        %v8330 = vand.u32 %v8329, 4294901760
        %v8331 = vsub.f32 %v8329, %v8330
        %v8332 = vand.u32 %v8331, 4294901760
        %8333 = vmatmul.mubr.f32.gmra.mrb[0].mxu0 %v8332
        %v8334 = vpop.f32.mrb[0].mxu0
        %v8335 = vadd.f32 %v8206, %v8334
        %v8336 = vpop.f32.mrb[0].mxu0
        %8337 = vmatprep.mubr.f32.mxu0 0.0
        %v8338 = vand.u32 %v250, 4294901760
        %v8339 = vsub.f32 %v250, %v8338
        %v8340 = vand.u32 %v8339, 4294901760
        %v8341 = vsub.f32 %v8339, %v8340
        %v8342 = vand.u32 %v8341, 4294901760
        %8343 = vmatmul.mubr.f32.gmra.mrb[0].mxu0 %v8342
        %v8344 = vpop.f32.mrb[0].mxu0
        %v8345 = vadd.f32 %v8206, %v8344
        %v8346 = vpop.f32.mrb[0].mxu0
        %8347 = vmatprep.mubr.f32.mxu0 0.0
        %v8348 = vand.u32 %v251, 4294901760
        %v8349 = vsub.f32 %v251, %v8348
        %v8350 = vand.u32 %v8349, 4294901760
        %v8351 = vsub.f32 %v8349, %v8350
        %v8352 = vand.u32 %v8351, 4294901760
        %8353 = vmatmul.mubr.f32.gmra.mrb[0].mxu0 %v8352
        %v8354 = vpop.f32.mrb[0].mxu0
        %v8355 = vadd.f32 %v8206, %v8354
        %v8356 = vpop.f32.mrb[0].mxu0
        %8357 = vmatprep.mubr.f32.mxu0 0.0
        %v8358 = vand.u32 %v252, 4294901760
        %v8359 = vsub.f32 %v252, %v8358
        %v8360 = vand.u32 %v8359, 4294901760
        %v8361 = vsub.f32 %v8359, %v8360
        %v8362 = vand.u32 %v8361, 4294901760
        %8363 = vmatmul.mubr.f32.gmra.mrb[0].mxu0 %v8362
        %v8364 = vpop.f32.mrb[0].mxu0
        %v8365 = vadd.f32 %v8206, %v8364
        %v8366 = vpop.f32.mrb[0].mxu0
        %8367 = vmatprep.mubr.f32.mxu0 0.0
        %v8368 = vand.u32 %v253, 4294901760
        %v8369 = vsub.f32 %v253, %v8368
        %v8370 = vand.u32 %v8369, 4294901760
        %v8371 = vsub.f32 %v8369, %v8370
        %v8372 = vand.u32 %v8371, 4294901760
        %8373 = vmatmul.mubr.f32.gmra.mrb[0].mxu0 %v8372
        %v8374 = vpop.f32.mrb[0].mxu0
        %v8375 = vadd.f32 %v8206, %v8374
        %v8376 = vpop.f32.mrb[0].mxu0
        %8377 = vmatprep.mubr.f32.mxu0 0.0
        %v8378 = vand.u32 %v254, 4294901760
        %v8379 = vsub.f32 %v254, %v8378
        %v8380 = vand.u32 %v8379, 4294901760
        %v8381 = vsub.f32 %v8379, %v8380
        %v8382 = vand.u32 %v8381, 4294901760
        %8383 = vmatmul.mubr.f32.gmra.mrb[0].mxu0 %v8382
        %v8384 = vpop.f32.mrb[0].mxu0
        %v8385 = vadd.f32 %v8206, %v8384
        %v8386 = vpop.f32.mrb[0].mxu0
        %8387 = vmatprep.mubr.f32.mxu0 0.0
        %v8388 = vand.u32 %v255, 4294901760
        %v8389 = vsub.f32 %v255, %v8388
        %v8390 = vand.u32 %v8389, 4294901760
        %v8391 = vsub.f32 %v8389, %v8390
        %v8392 = vand.u32 %v8391, 4294901760
        %8393 = vmatmul.mubr.f32.gmra.mrb[0].mxu0 %v8392
        %v8394 = vpop.f32.mrb[0].mxu0
        %v8395 = vadd.f32 %v8206, %v8394
        %v8396 = vpop.f32.mrb[0].mxu0
        %8397 = vmatprep.mubr.f32.mxu0 0.0
        %v8398 = vand.u32 %v256, 4294901760
        %v8399 = vsub.f32 %v256, %v8398
        %v8400 = vand.u32 %v8399, 4294901760
        %v8401 = vsub.f32 %v8399, %v8400
        %v8402 = vand.u32 %v8401, 4294901760
        %8403 = vmatmul.mubr.f32.gmra.mrb[0].mxu0 %v8402
        %v8404 = vpop.f32.mrb[0].mxu0
        %v8405 = vadd.f32 %v8206, %v8404
        %v8406 = vpop.f32.mrb[0].mxu0
        %8407 = vmatprep.mubr.f32.mxu0 0.0
        %v8408 = vand.u32 %v257, 4294901760
        %v8409 = vsub.f32 %v257, %v8408
        %v8410 = vand.u32 %v8409, 4294901760
        %v8411 = vsub.f32 %v8409, %v8410
        %v8412 = vand.u32 %v8411, 4294901760
        %8413 = vmatmul.mubr.f32.gmra.mrb[0].mxu0 %v8412
        %v8414 = vpop.f32.mrb[0].mxu0
        %v8415 = vadd.f32 %v8206, %v8414
        %v8416 = vpop.f32.mrb[0].mxu0
        %8417 = vmatprep.mubr.f32.mxu0 0.0
        %v8418 = vand.u32 %v258, 4294901760
        %v8419 = vsub.f32 %v258, %v8418
        %v8420 = vand.u32 %v8419, 4294901760
        %v8421 = vsub.f32 %v8419, %v8420
        %v8422 = vand.u32 %v8421, 4294901760
        %8423 = vmatmul.mubr.f32.gmra.mrb[0].mxu0 %v8422
        %v8424 = vpop.f32.mrb[0].mxu0
        %v8425 = vadd.f32 %v8206, %v8424
        %v8426 = vpop.f32.mrb[0].mxu0
        %8427 = vmatprep.mubr.f32.mxu0 0.0
        %v8428 = vand.u32 %v259, 4294901760
        %v8429 = vsub.f32 %v259, %v8428
        %v8430 = vand.u32 %v8429, 4294901760
        %v8431 = vsub.f32 %v8429, %v8430
        %v8432 = vand.u32 %v8431, 4294901760
        %8433 = vmatmul.mubr.f32.gmra.mrb[0].mxu0 %v8432
        %v8434 = vpop.f32.mrb[0].mxu0
        %v8435 = vadd.f32 %v8206, %v8434
        %v8436 = vpop.f32.mrb[0].mxu0
        %8437 = vmatprep.mubr.f32.mxu0 0.0
        %v8438 = vand.u32 %v260, 4294901760
        %v8439 = vsub.f32 %v260, %v8438
        %v8440 = vand.u32 %v8439, 4294901760
        %v8441 = vsub.f32 %v8439, %v8440
        %v8442 = vand.u32 %v8441, 4294901760
        %8443 = vmatmul.mubr.f32.gmra.mrb[0].mxu0 %v8442
        %v8444 = vpop.f32.mrb[0].mxu0
        %v8445 = vadd.f32 %v8206, %v8444
        %v8446 = vpop.f32.mrb[0].mxu0
        %8447 = vdwg.mxu0
        %8448 = vmatprep.subr.mxu0 0.0
        %v8449 = vand.u32 %v8109, 4294901760
        %v8450 = vsub.f32 %v8109, %v8449
        %v8451 = vand.u32 %v8450, 4294901760
        %v8452 = vsub.f32 %v8450, %v8451
        %v8453 = vand.u32 %v8452, 4294901760
        %8454 = vmatpush1.msra.mxu0 %v8453
        %8455 = vmatprep.subr.mxu0 0.0
        %v8456 = vand.u32 %v8115, 4294901760
        %v8457 = vsub.f32 %v8115, %v8456
        %v8458 = vand.u32 %v8457, 4294901760
        %v8459 = vsub.f32 %v8457, %v8458
        %v8460 = vand.u32 %v8459, 4294901760
        %8461 = vmatpush1.msra.mxu0 %v8460
        %8462 = vmatprep.subr.mxu0 0.0
        %v8463 = vand.u32 %v8121, 4294901760
        %v8464 = vsub.f32 %v8121, %v8463
        %v8465 = vand.u32 %v8464, 4294901760
        %v8466 = vsub.f32 %v8464, %v8465
        %v8467 = vand.u32 %v8466, 4294901760
        %8468 = vmatpush1.msra.mxu0 %v8467
        %8469 = vmatprep.subr.mxu0 0.0
        %v8470 = vand.u32 %v8127, 4294901760
        %v8471 = vsub.f32 %v8127, %v8470
        %v8472 = vand.u32 %v8471, 4294901760
        %v8473 = vsub.f32 %v8471, %v8472
        %v8474 = vand.u32 %v8473, 4294901760
        %8475 = vmatpush1.msra.mxu0 %v8474
        %8476 = vmatprep.subr.mxu0 0.0
        %v8477 = vand.u32 %v8133, 4294901760
        %v8478 = vsub.f32 %v8133, %v8477
        %v8479 = vand.u32 %v8478, 4294901760
        %v8480 = vsub.f32 %v8478, %v8479
        %v8481 = vand.u32 %v8480, 4294901760
        %8482 = vmatpush1.msra.mxu0 %v8481
        %8483 = vmatprep.subr.mxu0 0.0
        %v8484 = vand.u32 %v8139, 4294901760
        %v8485 = vsub.f32 %v8139, %v8484
        %v8486 = vand.u32 %v8485, 4294901760
        %v8487 = vsub.f32 %v8485, %v8486
        %v8488 = vand.u32 %v8487, 4294901760
        %8489 = vmatpush1.msra.mxu0 %v8488
        %8490 = vmatprep.subr.mxu0 0.0
        %v8491 = vand.u32 %v8145, 4294901760
        %v8492 = vsub.f32 %v8145, %v8491
        %v8493 = vand.u32 %v8492, 4294901760
        %v8494 = vsub.f32 %v8492, %v8493
        %v8495 = vand.u32 %v8494, 4294901760
        %8496 = vmatpush1.msra.mxu0 %v8495
        %8497 = vmatprep.subr.mxu0 0.0
        %v8498 = vand.u32 %v8151, 4294901760
        %v8499 = vsub.f32 %v8151, %v8498
        %v8500 = vand.u32 %v8499, 4294901760
        %v8501 = vsub.f32 %v8499, %v8500
        %v8502 = vand.u32 %v8501, 4294901760
        %8503 = vmatpush1.msra.mxu0 %v8502
        %8504 = vmatprep.subr.mxu0 0.0
        %v8505 = vand.u32 %v8157, 4294901760
        %v8506 = vsub.f32 %v8157, %v8505
        %v8507 = vand.u32 %v8506, 4294901760
        %v8508 = vsub.f32 %v8506, %v8507
        %v8509 = vand.u32 %v8508, 4294901760
        %8510 = vmatpush1.msra.mxu0 %v8509
        %8511 = vmatprep.subr.mxu0 0.0
        %v8512 = vand.u32 %v8163, 4294901760
        %v8513 = vsub.f32 %v8163, %v8512
        %v8514 = vand.u32 %v8513, 4294901760
        %v8515 = vsub.f32 %v8513, %v8514
        %v8516 = vand.u32 %v8515, 4294901760
        %8517 = vmatpush1.msra.mxu0 %v8516
        %8518 = vmatprep.subr.mxu0 0.0
        %v8519 = vand.u32 %v8169, 4294901760
        %v8520 = vsub.f32 %v8169, %v8519
        %v8521 = vand.u32 %v8520, 4294901760
        %v8522 = vsub.f32 %v8520, %v8521
        %v8523 = vand.u32 %v8522, 4294901760
        %8524 = vmatpush1.msra.mxu0 %v8523
        %8525 = vmatprep.subr.mxu0 0.0
        %v8526 = vand.u32 %v8175, 4294901760
        %v8527 = vsub.f32 %v8175, %v8526
        %v8528 = vand.u32 %v8527, 4294901760
        %v8529 = vsub.f32 %v8527, %v8528
        %v8530 = vand.u32 %v8529, 4294901760
        %8531 = vmatpush1.msra.mxu0 %v8530
        %8532 = vmatprep.subr.mxu0 0.0
        %v8533 = vand.u32 %v8181, 4294901760
        %v8534 = vsub.f32 %v8181, %v8533
        %v8535 = vand.u32 %v8534, 4294901760
        %v8536 = vsub.f32 %v8534, %v8535
        %v8537 = vand.u32 %v8536, 4294901760
        %8538 = vmatpush1.msra.mxu0 %v8537
        %8539 = vmatprep.subr.mxu0 0.0
        %v8540 = vand.u32 %v8187, 4294901760
        %v8541 = vsub.f32 %v8187, %v8540
        %v8542 = vand.u32 %v8541, 4294901760
        %v8543 = vsub.f32 %v8541, %v8542
        %v8544 = vand.u32 %v8543, 4294901760
        %8545 = vmatpush1.msra.mxu0 %v8544
        %8546 = vmatprep.subr.mxu0 0.0
        %v8547 = vand.u32 %v8193, 4294901760
        %v8548 = vsub.f32 %v8193, %v8547
        %v8549 = vand.u32 %v8548, 4294901760
        %v8550 = vsub.f32 %v8548, %v8549
        %v8551 = vand.u32 %v8550, 4294901760
        %8552 = vmatpush1.msra.mxu0 %v8551
        %8553 = vmatprep.subr.mxu0 0.0
        %v8554 = vand.u32 %v8199, 4294901760
        %v8555 = vsub.f32 %v8199, %v8554
        %v8556 = vand.u32 %v8555, 4294901760
        %v8557 = vsub.f32 %v8555, %v8556
        %v8558 = vand.u32 %v8557, 4294901760
        %8559 = vmatpush1.msra.mxu0 %v8558
        %8560 = vmatprep.subr.mxu0 0.0
        %8561 = vmatpush1.msra.mxu0 0.0
        %8562 = vmatprep.subr.mxu0 0.0
        %8563 = vmatpush1.msra.mxu0 0.0
        %8564 = vmatprep.subr.mxu0 0.0
        %8565 = vmatpush1.msra.mxu0 0.0
        %8566 = vmatprep.subr.mxu0 0.0
        %8567 = vmatpush1.msra.mxu0 0.0
        %8568 = vmatprep.subr.mxu0 0.0
        %8569 = vmatpush1.msra.mxu0 0.0
        %8570 = vmatprep.subr.mxu0 0.0
        %8571 = vmatpush1.msra.mxu0 0.0
        %8572 = vmatprep.subr.mxu0 0.0
        %8573 = vmatpush1.msra.mxu0 0.0
        %8574 = vmatprep.subr.mxu0 0.0
        %8575 = vmatpush1.msra.mxu0 0.0
        %8576 = vmatprep.subr.mxu0 0.0
        %8577 = vmatpush1.msra.mxu0 0.0
        %8578 = vmatprep.subr.mxu0 0.0
        %8579 = vmatpush1.msra.mxu0 0.0
        %8580 = vmatprep.subr.mxu0 0.0
        %8581 = vmatpush1.msra.mxu0 0.0
        %8582 = vmatprep.subr.mxu0 0.0
        %8583 = vmatpush1.msra.mxu0 0.0
        %8584 = vmatprep.subr.mxu0 0.0
        %8585 = vmatpush1.msra.mxu0 0.0
        %8586 = vmatprep.subr.mxu0 0.0
        %8587 = vmatpush1.msra.mxu0 0.0
        %8588 = vmatprep.subr.mxu0 0.0
        %8589 = vmatpush1.msra.mxu0 0.0
        %8590 = vmatprep.subr.mxu0 0.0
        %8591 = vmatpush1.msra.mxu0 0.0
        %8592 = vmatprep.mubr.f32.mxu0 0.0
        %v8593 = vand.u32 %v245, 4294901760
        %8594 = vmatmul.mubr.f32.gmra.mrb[0].mxu0 %v8593
        %v8595 = vpop.f32.mrb[0].mxu0
        %v8596 = vadd.f32 %v8295, %v8595
        %v8597 = vpop.f32.mrb[0].mxu0
        %8598 = vmatprep.mubr.f32.mxu0 0.0
        %v8599 = vand.u32 %v246, 4294901760
        %8600 = vmatmul.mubr.f32.gmra.mrb[0].mxu0 %v8599
        %v8601 = vpop.f32.mrb[0].mxu0
        %v8602 = vadd.f32 %v8305, %v8601
        %v8603 = vpop.f32.mrb[0].mxu0
        %8604 = vmatprep.mubr.f32.mxu0 0.0
        %v8605 = vand.u32 %v247, 4294901760
        %8606 = vmatmul.mubr.f32.gmra.mrb[0].mxu0 %v8605
        %v8607 = vpop.f32.mrb[0].mxu0
        %v8608 = vadd.f32 %v8315, %v8607
        %v8609 = vpop.f32.mrb[0].mxu0
        %8610 = vmatprep.mubr.f32.mxu0 0.0
        %v8611 = vand.u32 %v248, 4294901760
        %8612 = vmatmul.mubr.f32.gmra.mrb[0].mxu0 %v8611
        %v8613 = vpop.f32.mrb[0].mxu0
        %v8614 = vadd.f32 %v8325, %v8613
        %v8615 = vpop.f32.mrb[0].mxu0
        %8616 = vmatprep.mubr.f32.mxu0 0.0
        %v8617 = vand.u32 %v249, 4294901760
        %8618 = vmatmul.mubr.f32.gmra.mrb[0].mxu0 %v8617
        %v8619 = vpop.f32.mrb[0].mxu0
        %v8620 = vadd.f32 %v8335, %v8619
        %v8621 = vpop.f32.mrb[0].mxu0
        %8622 = vmatprep.mubr.f32.mxu0 0.0
        %v8623 = vand.u32 %v250, 4294901760
        %8624 = vmatmul.mubr.f32.gmra.mrb[0].mxu0 %v8623
        %v8625 = vpop.f32.mrb[0].mxu0
        %v8626 = vadd.f32 %v8345, %v8625
        %v8627 = vpop.f32.mrb[0].mxu0
        %8628 = vmatprep.mubr.f32.mxu0 0.0
        %v8629 = vand.u32 %v251, 4294901760
        %8630 = vmatmul.mubr.f32.gmra.mrb[0].mxu0 %v8629
        %v8631 = vpop.f32.mrb[0].mxu0
        %v8632 = vadd.f32 %v8355, %v8631
        %v8633 = vpop.f32.mrb[0].mxu0
        %8634 = vmatprep.mubr.f32.mxu0 0.0
        %v8635 = vand.u32 %v252, 4294901760
        %8636 = vmatmul.mubr.f32.gmra.mrb[0].mxu0 %v8635
        %v8637 = vpop.f32.mrb[0].mxu0
        %v8638 = vadd.f32 %v8365, %v8637
        %v8639 = vpop.f32.mrb[0].mxu0
        %8640 = vmatprep.mubr.f32.mxu0 0.0
        %v8641 = vand.u32 %v253, 4294901760
        %8642 = vmatmul.mubr.f32.gmra.mrb[0].mxu0 %v8641
        %v8643 = vpop.f32.mrb[0].mxu0
        %v8644 = vadd.f32 %v8375, %v8643
        %v8645 = vpop.f32.mrb[0].mxu0
        %8646 = vmatprep.mubr.f32.mxu0 0.0
        %v8647 = vand.u32 %v254, 4294901760
        %8648 = vmatmul.mubr.f32.gmra.mrb[0].mxu0 %v8647
        %v8649 = vpop.f32.mrb[0].mxu0
        %v8650 = vadd.f32 %v8385, %v8649
        %v8651 = vpop.f32.mrb[0].mxu0
        %8652 = vmatprep.mubr.f32.mxu0 0.0
        %v8653 = vand.u32 %v255, 4294901760
        %8654 = vmatmul.mubr.f32.gmra.mrb[0].mxu0 %v8653
        %v8655 = vpop.f32.mrb[0].mxu0
        %v8656 = vadd.f32 %v8395, %v8655
        %v8657 = vpop.f32.mrb[0].mxu0
        %8658 = vmatprep.mubr.f32.mxu0 0.0
        %v8659 = vand.u32 %v256, 4294901760
        %8660 = vmatmul.mubr.f32.gmra.mrb[0].mxu0 %v8659
        %v8661 = vpop.f32.mrb[0].mxu0
        %v8662 = vadd.f32 %v8405, %v8661
        %v8663 = vpop.f32.mrb[0].mxu0
        %8664 = vmatprep.mubr.f32.mxu0 0.0
        %v8665 = vand.u32 %v257, 4294901760
        %8666 = vmatmul.mubr.f32.gmra.mrb[0].mxu0 %v8665
        %v8667 = vpop.f32.mrb[0].mxu0
        %v8668 = vadd.f32 %v8415, %v8667
        %v8669 = vpop.f32.mrb[0].mxu0
        %8670 = vmatprep.mubr.f32.mxu0 0.0
        %v8671 = vand.u32 %v258, 4294901760
        %8672 = vmatmul.mubr.f32.gmra.mrb[0].mxu0 %v8671
        %v8673 = vpop.f32.mrb[0].mxu0
        %v8674 = vadd.f32 %v8425, %v8673
        %v8675 = vpop.f32.mrb[0].mxu0
        %8676 = vmatprep.mubr.f32.mxu0 0.0
        %v8677 = vand.u32 %v259, 4294901760
        %8678 = vmatmul.mubr.f32.gmra.mrb[0].mxu0 %v8677
        %v8679 = vpop.f32.mrb[0].mxu0
        %v8680 = vadd.f32 %v8435, %v8679
        %v8681 = vpop.f32.mrb[0].mxu0
        %8682 = vmatprep.mubr.f32.mxu0 0.0
        %v8683 = vand.u32 %v260, 4294901760
        %8684 = vmatmul.mubr.f32.gmra.mrb[0].mxu0 %v8683
        %v8685 = vpop.f32.mrb[0].mxu0
        %v8686 = vadd.f32 %v8445, %v8685
        %v8687 = vpop.f32.mrb[0].mxu0
        %8688 = vdwg.mxu0
        %8689 = vmatprep.subr.mxu0 0.0
        %v8690 = vand.u32 %v8109, 4294901760
        %v8691 = vsub.f32 %v8109, %v8690
        %8692 = vmatpush1.msra.mxu0 %v8691
        %8693 = vmatprep.subr.mxu0 0.0
        %v8694 = vand.u32 %v8115, 4294901760
        %v8695 = vsub.f32 %v8115, %v8694
        %8696 = vmatpush1.msra.mxu0 %v8695
        %8697 = vmatprep.subr.mxu0 0.0
        %v8698 = vand.u32 %v8121, 4294901760
        %v8699 = vsub.f32 %v8121, %v8698
        %8700 = vmatpush1.msra.mxu0 %v8699
        %8701 = vmatprep.subr.mxu0 0.0
        %v8702 = vand.u32 %v8127, 4294901760
        %v8703 = vsub.f32 %v8127, %v8702
        %8704 = vmatpush1.msra.mxu0 %v8703
        %8705 = vmatprep.subr.mxu0 0.0
        %v8706 = vand.u32 %v8133, 4294901760
        %v8707 = vsub.f32 %v8133, %v8706
        %8708 = vmatpush1.msra.mxu0 %v8707
        %8709 = vmatprep.subr.mxu0 0.0
        %v8710 = vand.u32 %v8139, 4294901760
        %v8711 = vsub.f32 %v8139, %v8710
        %8712 = vmatpush1.msra.mxu0 %v8711
        %8713 = vmatprep.subr.mxu0 0.0
        %v8714 = vand.u32 %v8145, 4294901760
        %v8715 = vsub.f32 %v8145, %v8714
        %8716 = vmatpush1.msra.mxu0 %v8715
        %8717 = vmatprep.subr.mxu0 0.0
        %v8718 = vand.u32 %v8151, 4294901760
        %v8719 = vsub.f32 %v8151, %v8718
        %8720 = vmatpush1.msra.mxu0 %v8719
        %8721 = vmatprep.subr.mxu0 0.0
        %v8722 = vand.u32 %v8157, 4294901760
        %v8723 = vsub.f32 %v8157, %v8722
        %8724 = vmatpush1.msra.mxu0 %v8723
        %8725 = vmatprep.subr.mxu0 0.0
        %v8726 = vand.u32 %v8163, 4294901760
        %v8727 = vsub.f32 %v8163, %v8726
        %8728 = vmatpush1.msra.mxu0 %v8727
        %8729 = vmatprep.subr.mxu0 0.0
        %v8730 = vand.u32 %v8169, 4294901760
        %v8731 = vsub.f32 %v8169, %v8730
        %8732 = vmatpush1.msra.mxu0 %v8731
        %8733 = vmatprep.subr.mxu0 0.0
        %v8734 = vand.u32 %v8175, 4294901760
        %v8735 = vsub.f32 %v8175, %v8734
        %8736 = vmatpush1.msra.mxu0 %v8735
        %8737 = vmatprep.subr.mxu0 0.0
        %v8738 = vand.u32 %v8181, 4294901760
        %v8739 = vsub.f32 %v8181, %v8738
        %8740 = vmatpush1.msra.mxu0 %v8739
        %8741 = vmatprep.subr.mxu0 0.0
        %v8742 = vand.u32 %v8187, 4294901760
        %v8743 = vsub.f32 %v8187, %v8742
        %8744 = vmatpush1.msra.mxu0 %v8743
        %8745 = vmatprep.subr.mxu0 0.0
        %v8746 = vand.u32 %v8193, 4294901760
        %v8747 = vsub.f32 %v8193, %v8746
        %8748 = vmatpush1.msra.mxu0 %v8747
        %8749 = vmatprep.subr.mxu0 0.0
        %v8750 = vand.u32 %v8199, 4294901760
        %v8751 = vsub.f32 %v8199, %v8750
        %8752 = vmatpush1.msra.mxu0 %v8751
        %8753 = vmatprep.subr.mxu0 0.0
        %8754 = vmatpush1.msra.mxu0 0.0
        %8755 = vmatprep.subr.mxu0 0.0
        %8756 = vmatpush1.msra.mxu0 0.0
        %8757 = vmatprep.subr.mxu0 0.0
        %8758 = vmatpush1.msra.mxu0 0.0
        %8759 = vmatprep.subr.mxu0 0.0
        %8760 = vmatpush1.msra.mxu0 0.0
        %8761 = vmatprep.subr.mxu0 0.0
        %8762 = vmatpush1.msra.mxu0 0.0
        %8763 = vmatprep.subr.mxu0 0.0
        %8764 = vmatpush1.msra.mxu0 0.0
        %8765 = vmatprep.subr.mxu0 0.0
        %8766 = vmatpush1.msra.mxu0 0.0
        %8767 = vmatprep.subr.mxu0 0.0
        %8768 = vmatpush1.msra.mxu0 0.0
        %8769 = vmatprep.subr.mxu0 0.0
        %8770 = vmatpush1.msra.mxu0 0.0
        %8771 = vmatprep.subr.mxu0 0.0
        %8772 = vmatpush1.msra.mxu0 0.0
        %8773 = vmatprep.subr.mxu0 0.0
        %8774 = vmatpush1.msra.mxu0 0.0
        %8775 = vmatprep.subr.mxu0 0.0
        %8776 = vmatpush1.msra.mxu0 0.0
        %8777 = vmatprep.subr.mxu0 0.0
        %8778 = vmatpush1.msra.mxu0 0.0
        %8779 = vmatprep.subr.mxu0 0.0
        %8780 = vmatpush1.msra.mxu0 0.0
        %8781 = vmatprep.subr.mxu0 0.0
        %8782 = vmatpush1.msra.mxu0 0.0
        %8783 = vmatprep.subr.mxu0 0.0
        %8784 = vmatpush1.msra.mxu0 0.0
        %8785 = vmatprep.mubr.f32.mxu0 0.0
        %v8786 = vand.u32 %v245, 4294901760
        %v8787 = vsub.f32 %v245, %v8786
        %8788 = vmatmul.mubr.f32.gmra.mrb[0].mxu0 %v8787
        %v8789 = vpop.f32.mrb[0].mxu0
        %v8790 = vadd.f32 %v8596, %v8789
        %v8791 = vpop.f32.mrb[0].mxu0
        %8792 = vmatprep.mubr.f32.mxu0 0.0
        %v8793 = vand.u32 %v246, 4294901760
        %v8794 = vsub.f32 %v246, %v8793
        %8795 = vmatmul.mubr.f32.gmra.mrb[0].mxu0 %v8794
        %v8796 = vpop.f32.mrb[0].mxu0
        %v8797 = vadd.f32 %v8602, %v8796
        %v8798 = vpop.f32.mrb[0].mxu0
        %8799 = vmatprep.mubr.f32.mxu0 0.0
        %v8800 = vand.u32 %v247, 4294901760
        %v8801 = vsub.f32 %v247, %v8800
        %8802 = vmatmul.mubr.f32.gmra.mrb[0].mxu0 %v8801
        %v8803 = vpop.f32.mrb[0].mxu0
        %v8804 = vadd.f32 %v8608, %v8803
        %v8805 = vpop.f32.mrb[0].mxu0
        %8806 = vmatprep.mubr.f32.mxu0 0.0
        %v8807 = vand.u32 %v248, 4294901760
        %v8808 = vsub.f32 %v248, %v8807
        %8809 = vmatmul.mubr.f32.gmra.mrb[0].mxu0 %v8808
        %v8810 = vpop.f32.mrb[0].mxu0
        %v8811 = vadd.f32 %v8614, %v8810
        %v8812 = vpop.f32.mrb[0].mxu0
        %8813 = vmatprep.mubr.f32.mxu0 0.0
        %v8814 = vand.u32 %v249, 4294901760
        %v8815 = vsub.f32 %v249, %v8814
        %8816 = vmatmul.mubr.f32.gmra.mrb[0].mxu0 %v8815
        %v8817 = vpop.f32.mrb[0].mxu0
        %v8818 = vadd.f32 %v8620, %v8817
        %v8819 = vpop.f32.mrb[0].mxu0
        %8820 = vmatprep.mubr.f32.mxu0 0.0
        %v8821 = vand.u32 %v250, 4294901760
        %v8822 = vsub.f32 %v250, %v8821
        %8823 = vmatmul.mubr.f32.gmra.mrb[0].mxu0 %v8822
        %v8824 = vpop.f32.mrb[0].mxu0
        %v8825 = vadd.f32 %v8626, %v8824
        %v8826 = vpop.f32.mrb[0].mxu0
        %8827 = vmatprep.mubr.f32.mxu0 0.0
        %v8828 = vand.u32 %v251, 4294901760
        %v8829 = vsub.f32 %v251, %v8828
        %8830 = vmatmul.mubr.f32.gmra.mrb[0].mxu0 %v8829
        %v8831 = vpop.f32.mrb[0].mxu0
        %v8832 = vadd.f32 %v8632, %v8831
        %v8833 = vpop.f32.mrb[0].mxu0
        %8834 = vmatprep.mubr.f32.mxu0 0.0
        %v8835 = vand.u32 %v252, 4294901760
        %v8836 = vsub.f32 %v252, %v8835
        %8837 = vmatmul.mubr.f32.gmra.mrb[0].mxu0 %v8836
        %v8838 = vpop.f32.mrb[0].mxu0
        %v8839 = vadd.f32 %v8638, %v8838
        %v8840 = vpop.f32.mrb[0].mxu0
        %8841 = vmatprep.mubr.f32.mxu0 0.0
        %v8842 = vand.u32 %v253, 4294901760
        %v8843 = vsub.f32 %v253, %v8842
        %8844 = vmatmul.mubr.f32.gmra.mrb[0].mxu0 %v8843
        %v8845 = vpop.f32.mrb[0].mxu0
        %v8846 = vadd.f32 %v8644, %v8845
        %v8847 = vpop.f32.mrb[0].mxu0
        %8848 = vmatprep.mubr.f32.mxu0 0.0
        %v8849 = vand.u32 %v254, 4294901760
        %v8850 = vsub.f32 %v254, %v8849
        %8851 = vmatmul.mubr.f32.gmra.mrb[0].mxu0 %v8850
        %v8852 = vpop.f32.mrb[0].mxu0
        %v8853 = vadd.f32 %v8650, %v8852
        %v8854 = vpop.f32.mrb[0].mxu0
        %8855 = vmatprep.mubr.f32.mxu0 0.0
        %v8856 = vand.u32 %v255, 4294901760
        %v8857 = vsub.f32 %v255, %v8856
        %8858 = vmatmul.mubr.f32.gmra.mrb[0].mxu0 %v8857
        %v8859 = vpop.f32.mrb[0].mxu0
        %v8860 = vadd.f32 %v8656, %v8859
        %v8861 = vpop.f32.mrb[0].mxu0
        %8862 = vmatprep.mubr.f32.mxu0 0.0
        %v8863 = vand.u32 %v256, 4294901760
        %v8864 = vsub.f32 %v256, %v8863
        %8865 = vmatmul.mubr.f32.gmra.mrb[0].mxu0 %v8864
        %v8866 = vpop.f32.mrb[0].mxu0
        %v8867 = vadd.f32 %v8662, %v8866
        %v8868 = vpop.f32.mrb[0].mxu0
        %8869 = vmatprep.mubr.f32.mxu0 0.0
        %v8870 = vand.u32 %v257, 4294901760
        %v8871 = vsub.f32 %v257, %v8870
        %8872 = vmatmul.mubr.f32.gmra.mrb[0].mxu0 %v8871
        %v8873 = vpop.f32.mrb[0].mxu0
        %v8874 = vadd.f32 %v8668, %v8873
        %v8875 = vpop.f32.mrb[0].mxu0
        %8876 = vmatprep.mubr.f32.mxu0 0.0
        %v8877 = vand.u32 %v258, 4294901760
        %v8878 = vsub.f32 %v258, %v8877
        %8879 = vmatmul.mubr.f32.gmra.mrb[0].mxu0 %v8878
        %v8880 = vpop.f32.mrb[0].mxu0
        %v8881 = vadd.f32 %v8674, %v8880
        %v8882 = vpop.f32.mrb[0].mxu0
        %8883 = vmatprep.mubr.f32.mxu0 0.0
        %v8884 = vand.u32 %v259, 4294901760
        %v8885 = vsub.f32 %v259, %v8884
        %8886 = vmatmul.mubr.f32.gmra.mrb[0].mxu0 %v8885
        %v8887 = vpop.f32.mrb[0].mxu0
        %v8888 = vadd.f32 %v8680, %v8887
        %v8889 = vpop.f32.mrb[0].mxu0
        %8890 = vmatprep.mubr.f32.mxu0 0.0
        %v8891 = vand.u32 %v260, 4294901760
        %v8892 = vsub.f32 %v260, %v8891
        %8893 = vmatmul.mubr.f32.gmra.mrb[0].mxu0 %v8892
        %v8894 = vpop.f32.mrb[0].mxu0
        %v8895 = vadd.f32 %v8686, %v8894
        %v8896 = vpop.f32.mrb[0].mxu0
        %8897 = vdwg.mxu0
        %8898 = vmatprep.subr.mxu0 0.0
        %v8899 = vand.u32 %v8109, 4294901760
        %8900 = vmatpush1.msra.mxu0 %v8899
        %8901 = vmatprep.subr.mxu0 0.0
        %v8902 = vand.u32 %v8115, 4294901760
        %8903 = vmatpush1.msra.mxu0 %v8902
        %8904 = vmatprep.subr.mxu0 0.0
        %v8905 = vand.u32 %v8121, 4294901760
        %8906 = vmatpush1.msra.mxu0 %v8905
        %8907 = vmatprep.subr.mxu0 0.0
        %v8908 = vand.u32 %v8127, 4294901760
        %8909 = vmatpush1.msra.mxu0 %v8908
        %8910 = vmatprep.subr.mxu0 0.0
        %v8911 = vand.u32 %v8133, 4294901760
        %8912 = vmatpush1.msra.mxu0 %v8911
        %8913 = vmatprep.subr.mxu0 0.0
        %v8914 = vand.u32 %v8139, 4294901760
        %8915 = vmatpush1.msra.mxu0 %v8914
        %8916 = vmatprep.subr.mxu0 0.0
        %v8917 = vand.u32 %v8145, 4294901760
        %8918 = vmatpush1.msra.mxu0 %v8917
        %8919 = vmatprep.subr.mxu0 0.0
        %v8920 = vand.u32 %v8151, 4294901760
        %8921 = vmatpush1.msra.mxu0 %v8920
        %8922 = vmatprep.subr.mxu0 0.0
        %v8923 = vand.u32 %v8157, 4294901760
        %8924 = vmatpush1.msra.mxu0 %v8923
        %8925 = vmatprep.subr.mxu0 0.0
        %v8926 = vand.u32 %v8163, 4294901760
        %8927 = vmatpush1.msra.mxu0 %v8926
        %8928 = vmatprep.subr.mxu0 0.0
        %v8929 = vand.u32 %v8169, 4294901760
        %8930 = vmatpush1.msra.mxu0 %v8929
        %8931 = vmatprep.subr.mxu0 0.0
        %v8932 = vand.u32 %v8175, 4294901760
        %8933 = vmatpush1.msra.mxu0 %v8932
        %8934 = vmatprep.subr.mxu0 0.0
        %v8935 = vand.u32 %v8181, 4294901760
        %8936 = vmatpush1.msra.mxu0 %v8935
        %8937 = vmatprep.subr.mxu0 0.0
        %v8938 = vand.u32 %v8187, 4294901760
        %8939 = vmatpush1.msra.mxu0 %v8938
        %8940 = vmatprep.subr.mxu0 0.0
        %v8941 = vand.u32 %v8193, 4294901760
        %8942 = vmatpush1.msra.mxu0 %v8941
        %8943 = vmatprep.subr.mxu0 0.0
        %v8944 = vand.u32 %v8199, 4294901760
        %8945 = vmatpush1.msra.mxu0 %v8944
        %8946 = vmatprep.subr.mxu0 0.0
        %8947 = vmatpush1.msra.mxu0 0.0
        %8948 = vmatprep.subr.mxu0 0.0
        %8949 = vmatpush1.msra.mxu0 0.0
        %8950 = vmatprep.subr.mxu0 0.0
        %8951 = vmatpush1.msra.mxu0 0.0
        %8952 = vmatprep.subr.mxu0 0.0
        %8953 = vmatpush1.msra.mxu0 0.0
        %8954 = vmatprep.subr.mxu0 0.0
        %8955 = vmatpush1.msra.mxu0 0.0
        %8956 = vmatprep.subr.mxu0 0.0
        %8957 = vmatpush1.msra.mxu0 0.0
        %8958 = vmatprep.subr.mxu0 0.0
        %8959 = vmatpush1.msra.mxu0 0.0
        %8960 = vmatprep.subr.mxu0 0.0
        %8961 = vmatpush1.msra.mxu0 0.0
        %8962 = vmatprep.subr.mxu0 0.0
        %8963 = vmatpush1.msra.mxu0 0.0
        %8964 = vmatprep.subr.mxu0 0.0
        %8965 = vmatpush1.msra.mxu0 0.0
        %8966 = vmatprep.subr.mxu0 0.0
        %8967 = vmatpush1.msra.mxu0 0.0
        %8968 = vmatprep.subr.mxu0 0.0
        %8969 = vmatpush1.msra.mxu0 0.0
        %8970 = vmatprep.subr.mxu0 0.0
        %8971 = vmatpush1.msra.mxu0 0.0
        %8972 = vmatprep.subr.mxu0 0.0
        %8973 = vmatpush1.msra.mxu0 0.0
        %8974 = vmatprep.subr.mxu0 0.0
        %8975 = vmatpush1.msra.mxu0 0.0
        %8976 = vmatprep.subr.mxu0 0.0
        %8977 = vmatpush1.msra.mxu0 0.0
        %8978 = vmatprep.mubr.f32.mxu0 0.0
        %v8979 = vand.u32 %v245, 4294901760
        %v8980 = vsub.f32 %v245, %v8979
        %v8981 = vand.u32 %v8980, 4294901760
        %8982 = vmatmul.mubr.f32.gmra.mrb[0].mxu0 %v8981
        %v8983 = vpop.f32.mrb[0].mxu0
        %v8984 = vadd.f32 %v8790, %v8983
        %v8985 = vpop.f32.mrb[0].mxu0
        %8986 = vmatprep.mubr.f32.mxu0 0.0
        %v8987 = vand.u32 %v246, 4294901760
        %v8988 = vsub.f32 %v246, %v8987
        %v8989 = vand.u32 %v8988, 4294901760
        %8990 = vmatmul.mubr.f32.gmra.mrb[0].mxu0 %v8989
        %v8991 = vpop.f32.mrb[0].mxu0
        %v8992 = vadd.f32 %v8797, %v8991
        %v8993 = vpop.f32.mrb[0].mxu0
        %8994 = vmatprep.mubr.f32.mxu0 0.0
        %v8995 = vand.u32 %v247, 4294901760
        %v8996 = vsub.f32 %v247, %v8995
        %v8997 = vand.u32 %v8996, 4294901760
        %8998 = vmatmul.mubr.f32.gmra.mrb[0].mxu0 %v8997
        %v8999 = vpop.f32.mrb[0].mxu0
        %v9000 = vadd.f32 %v8804, %v8999
        %v9001 = vpop.f32.mrb[0].mxu0
        %9002 = vmatprep.mubr.f32.mxu0 0.0
        %v9003 = vand.u32 %v248, 4294901760
        %v9004 = vsub.f32 %v248, %v9003
        %v9005 = vand.u32 %v9004, 4294901760
        %9006 = vmatmul.mubr.f32.gmra.mrb[0].mxu0 %v9005
        %v9007 = vpop.f32.mrb[0].mxu0
        %v9008 = vadd.f32 %v8811, %v9007
        %v9009 = vpop.f32.mrb[0].mxu0
        %9010 = vmatprep.mubr.f32.mxu0 0.0
        %v9011 = vand.u32 %v249, 4294901760
        %v9012 = vsub.f32 %v249, %v9011
        %v9013 = vand.u32 %v9012, 4294901760
        %9014 = vmatmul.mubr.f32.gmra.mrb[0].mxu0 %v9013
        %v9015 = vpop.f32.mrb[0].mxu0
        %v9016 = vadd.f32 %v8818, %v9015
        %v9017 = vpop.f32.mrb[0].mxu0
        %9018 = vmatprep.mubr.f32.mxu0 0.0
        %v9019 = vand.u32 %v250, 4294901760
        %v9020 = vsub.f32 %v250, %v9019
        %v9021 = vand.u32 %v9020, 4294901760
        %9022 = vmatmul.mubr.f32.gmra.mrb[0].mxu0 %v9021
        %v9023 = vpop.f32.mrb[0].mxu0
        %v9024 = vadd.f32 %v8825, %v9023
        %v9025 = vpop.f32.mrb[0].mxu0
        %9026 = vmatprep.mubr.f32.mxu0 0.0
        %v9027 = vand.u32 %v251, 4294901760
        %v9028 = vsub.f32 %v251, %v9027
        %v9029 = vand.u32 %v9028, 4294901760
        %9030 = vmatmul.mubr.f32.gmra.mrb[0].mxu0 %v9029
        %v9031 = vpop.f32.mrb[0].mxu0
        %v9032 = vadd.f32 %v8832, %v9031
        %v9033 = vpop.f32.mrb[0].mxu0
        %9034 = vmatprep.mubr.f32.mxu0 0.0
        %v9035 = vand.u32 %v252, 4294901760
        %v9036 = vsub.f32 %v252, %v9035
        %v9037 = vand.u32 %v9036, 4294901760
        %9038 = vmatmul.mubr.f32.gmra.mrb[0].mxu0 %v9037
        %v9039 = vpop.f32.mrb[0].mxu0
        %v9040 = vadd.f32 %v8839, %v9039
        %v9041 = vpop.f32.mrb[0].mxu0
        %9042 = vmatprep.mubr.f32.mxu0 0.0
        %v9043 = vand.u32 %v253, 4294901760
        %v9044 = vsub.f32 %v253, %v9043
        %v9045 = vand.u32 %v9044, 4294901760
        %9046 = vmatmul.mubr.f32.gmra.mrb[0].mxu0 %v9045
        %v9047 = vpop.f32.mrb[0].mxu0
        %v9048 = vadd.f32 %v8846, %v9047
        %v9049 = vpop.f32.mrb[0].mxu0
        %9050 = vmatprep.mubr.f32.mxu0 0.0
        %v9051 = vand.u32 %v254, 4294901760
        %v9052 = vsub.f32 %v254, %v9051
        %v9053 = vand.u32 %v9052, 4294901760
        %9054 = vmatmul.mubr.f32.gmra.mrb[0].mxu0 %v9053
        %v9055 = vpop.f32.mrb[0].mxu0
        %v9056 = vadd.f32 %v8853, %v9055
        %v9057 = vpop.f32.mrb[0].mxu0
        %9058 = vmatprep.mubr.f32.mxu0 0.0
        %v9059 = vand.u32 %v255, 4294901760
        %v9060 = vsub.f32 %v255, %v9059
        %v9061 = vand.u32 %v9060, 4294901760
        %9062 = vmatmul.mubr.f32.gmra.mrb[0].mxu0 %v9061
        %v9063 = vpop.f32.mrb[0].mxu0
        %v9064 = vadd.f32 %v8860, %v9063
        %v9065 = vpop.f32.mrb[0].mxu0
        %9066 = vmatprep.mubr.f32.mxu0 0.0
        %v9067 = vand.u32 %v256, 4294901760
        %v9068 = vsub.f32 %v256, %v9067
        %v9069 = vand.u32 %v9068, 4294901760
        %9070 = vmatmul.mubr.f32.gmra.mrb[0].mxu0 %v9069
        %v9071 = vpop.f32.mrb[0].mxu0
        %v9072 = vadd.f32 %v8867, %v9071
        %v9073 = vpop.f32.mrb[0].mxu0
        %9074 = vmatprep.mubr.f32.mxu0 0.0
        %v9075 = vand.u32 %v257, 4294901760
        %v9076 = vsub.f32 %v257, %v9075
        %v9077 = vand.u32 %v9076, 4294901760
        %9078 = vmatmul.mubr.f32.gmra.mrb[0].mxu0 %v9077
        %v9079 = vpop.f32.mrb[0].mxu0
        %v9080 = vadd.f32 %v8874, %v9079
        %v9081 = vpop.f32.mrb[0].mxu0
        %9082 = vmatprep.mubr.f32.mxu0 0.0
        %v9083 = vand.u32 %v258, 4294901760
        %v9084 = vsub.f32 %v258, %v9083
        %v9085 = vand.u32 %v9084, 4294901760
        %9086 = vmatmul.mubr.f32.gmra.mrb[0].mxu0 %v9085
        %v9087 = vpop.f32.mrb[0].mxu0
        %v9088 = vadd.f32 %v8881, %v9087
        %v9089 = vpop.f32.mrb[0].mxu0
        %9090 = vmatprep.mubr.f32.mxu0 0.0
        %v9091 = vand.u32 %v259, 4294901760
        %v9092 = vsub.f32 %v259, %v9091
        %v9093 = vand.u32 %v9092, 4294901760
        %9094 = vmatmul.mubr.f32.gmra.mrb[0].mxu0 %v9093
        %v9095 = vpop.f32.mrb[0].mxu0
        %v9096 = vadd.f32 %v8888, %v9095
        %v9097 = vpop.f32.mrb[0].mxu0
        %9098 = vmatprep.mubr.f32.mxu0 0.0
        %v9099 = vand.u32 %v260, 4294901760
        %v9100 = vsub.f32 %v260, %v9099
        %v9101 = vand.u32 %v9100, 4294901760
        %9102 = vmatmul.mubr.f32.gmra.mrb[0].mxu0 %v9101
        %v9103 = vpop.f32.mrb[0].mxu0
        %v9104 = vadd.f32 %v8895, %v9103
        %v9105 = vpop.f32.mrb[0].mxu0
        %9106 = vdwg.mxu0
        %9107 = vmatprep.subr.mxu0 0.0
        %v9108 = vand.u32 %v8109, 4294901760
        %v9109 = vsub.f32 %v8109, %v9108
        %v9110 = vand.u32 %v9109, 4294901760
        %9111 = vmatpush1.msra.mxu0 %v9110
        %9112 = vmatprep.subr.mxu0 0.0
        %v9113 = vand.u32 %v8115, 4294901760
        %v9114 = vsub.f32 %v8115, %v9113
        %v9115 = vand.u32 %v9114, 4294901760
        %9116 = vmatpush1.msra.mxu0 %v9115
        %9117 = vmatprep.subr.mxu0 0.0
        %v9118 = vand.u32 %v8121, 4294901760
        %v9119 = vsub.f32 %v8121, %v9118
        %v9120 = vand.u32 %v9119, 4294901760
        %9121 = vmatpush1.msra.mxu0 %v9120
        %9122 = vmatprep.subr.mxu0 0.0
        %v9123 = vand.u32 %v8127, 4294901760
        %v9124 = vsub.f32 %v8127, %v9123
        %v9125 = vand.u32 %v9124, 4294901760
        %9126 = vmatpush1.msra.mxu0 %v9125
        %9127 = vmatprep.subr.mxu0 0.0
        %v9128 = vand.u32 %v8133, 4294901760
        %v9129 = vsub.f32 %v8133, %v9128
        %v9130 = vand.u32 %v9129, 4294901760
        %9131 = vmatpush1.msra.mxu0 %v9130
        %9132 = vmatprep.subr.mxu0 0.0
        %v9133 = vand.u32 %v8139, 4294901760
        %v9134 = vsub.f32 %v8139, %v9133
        %v9135 = vand.u32 %v9134, 4294901760
        %9136 = vmatpush1.msra.mxu0 %v9135
        %9137 = vmatprep.subr.mxu0 0.0
        %v9138 = vand.u32 %v8145, 4294901760
        %v9139 = vsub.f32 %v8145, %v9138
        %v9140 = vand.u32 %v9139, 4294901760
        %9141 = vmatpush1.msra.mxu0 %v9140
        %9142 = vmatprep.subr.mxu0 0.0
        %v9143 = vand.u32 %v8151, 4294901760
        %v9144 = vsub.f32 %v8151, %v9143
        %v9145 = vand.u32 %v9144, 4294901760
        %9146 = vmatpush1.msra.mxu0 %v9145
        %9147 = vmatprep.subr.mxu0 0.0
        %v9148 = vand.u32 %v8157, 4294901760
        %v9149 = vsub.f32 %v8157, %v9148
        %v9150 = vand.u32 %v9149, 4294901760
        %9151 = vmatpush1.msra.mxu0 %v9150
        %9152 = vmatprep.subr.mxu0 0.0
        %v9153 = vand.u32 %v8163, 4294901760
        %v9154 = vsub.f32 %v8163, %v9153
        %v9155 = vand.u32 %v9154, 4294901760
        %9156 = vmatpush1.msra.mxu0 %v9155
        %9157 = vmatprep.subr.mxu0 0.0
        %v9158 = vand.u32 %v8169, 4294901760
        %v9159 = vsub.f32 %v8169, %v9158
        %v9160 = vand.u32 %v9159, 4294901760
        %9161 = vmatpush1.msra.mxu0 %v9160
        %9162 = vmatprep.subr.mxu0 0.0
        %v9163 = vand.u32 %v8175, 4294901760
        %v9164 = vsub.f32 %v8175, %v9163
        %v9165 = vand.u32 %v9164, 4294901760
        %9166 = vmatpush1.msra.mxu0 %v9165
        %9167 = vmatprep.subr.mxu0 0.0
        %v9168 = vand.u32 %v8181, 4294901760
        %v9169 = vsub.f32 %v8181, %v9168
        %v9170 = vand.u32 %v9169, 4294901760
        %9171 = vmatpush1.msra.mxu0 %v9170
        %9172 = vmatprep.subr.mxu0 0.0
        %v9173 = vand.u32 %v8187, 4294901760
        %v9174 = vsub.f32 %v8187, %v9173
        %v9175 = vand.u32 %v9174, 4294901760
        %9176 = vmatpush1.msra.mxu0 %v9175
        %9177 = vmatprep.subr.mxu0 0.0
        %v9178 = vand.u32 %v8193, 4294901760
        %v9179 = vsub.f32 %v8193, %v9178
        %v9180 = vand.u32 %v9179, 4294901760
        %9181 = vmatpush1.msra.mxu0 %v9180
        %9182 = vmatprep.subr.mxu0 0.0
        %v9183 = vand.u32 %v8199, 4294901760
        %v9184 = vsub.f32 %v8199, %v9183
        %v9185 = vand.u32 %v9184, 4294901760
        %9186 = vmatpush1.msra.mxu0 %v9185
        %9187 = vmatprep.subr.mxu0 0.0
        %9188 = vmatpush1.msra.mxu0 0.0
        %9189 = vmatprep.subr.mxu0 0.0
        %9190 = vmatpush1.msra.mxu0 0.0
        %9191 = vmatprep.subr.mxu0 0.0
        %9192 = vmatpush1.msra.mxu0 0.0
        %9193 = vmatprep.subr.mxu0 0.0
        %9194 = vmatpush1.msra.mxu0 0.0
        %9195 = vmatprep.subr.mxu0 0.0
        %9196 = vmatpush1.msra.mxu0 0.0
        %9197 = vmatprep.subr.mxu0 0.0
        %9198 = vmatpush1.msra.mxu0 0.0
        %9199 = vmatprep.subr.mxu0 0.0
        %9200 = vmatpush1.msra.mxu0 0.0
        %9201 = vmatprep.subr.mxu0 0.0
        %9202 = vmatpush1.msra.mxu0 0.0
        %9203 = vmatprep.subr.mxu0 0.0
        %9204 = vmatpush1.msra.mxu0 0.0
        %9205 = vmatprep.subr.mxu0 0.0
        %9206 = vmatpush1.msra.mxu0 0.0
        %9207 = vmatprep.subr.mxu0 0.0
        %9208 = vmatpush1.msra.mxu0 0.0
        %9209 = vmatprep.subr.mxu0 0.0
        %9210 = vmatpush1.msra.mxu0 0.0
        %9211 = vmatprep.subr.mxu0 0.0
        %9212 = vmatpush1.msra.mxu0 0.0
        %9213 = vmatprep.subr.mxu0 0.0
        %9214 = vmatpush1.msra.mxu0 0.0
        %9215 = vmatprep.subr.mxu0 0.0
        %9216 = vmatpush1.msra.mxu0 0.0
        %9217 = vmatprep.subr.mxu0 0.0
        %9218 = vmatpush1.msra.mxu0 0.0
        %9219 = vmatprep.mubr.f32.mxu0 0.0
        %v9220 = vand.u32 %v245, 4294901760
        %9221 = vmatmul.mubr.f32.gmra.mrb[0].mxu0 %v9220
        %v9222 = vpop.f32.mrb[0].mxu0
        %v9223 = vadd.f32 %v8984, %v9222
        %v9224 = vpop.f32.mrb[0].mxu0
        %9225 = vmatprep.mubr.f32.mxu0 0.0
        %v9226 = vand.u32 %v246, 4294901760
        %9227 = vmatmul.mubr.f32.gmra.mrb[0].mxu0 %v9226
        %v9228 = vpop.f32.mrb[0].mxu0
        %v9229 = vadd.f32 %v8992, %v9228
        %v9230 = vpop.f32.mrb[0].mxu0
        %9231 = vmatprep.mubr.f32.mxu0 0.0
        %v9232 = vand.u32 %v247, 4294901760
        %9233 = vmatmul.mubr.f32.gmra.mrb[0].mxu0 %v9232
        %v9234 = vpop.f32.mrb[0].mxu0
        %v9235 = vadd.f32 %v9000, %v9234
        %v9236 = vpop.f32.mrb[0].mxu0
        %9237 = vmatprep.mubr.f32.mxu0 0.0
        %v9238 = vand.u32 %v248, 4294901760
        %9239 = vmatmul.mubr.f32.gmra.mrb[0].mxu0 %v9238
        %v9240 = vpop.f32.mrb[0].mxu0
        %v9241 = vadd.f32 %v9008, %v9240
        %v9242 = vpop.f32.mrb[0].mxu0
        %9243 = vmatprep.mubr.f32.mxu0 0.0
        %v9244 = vand.u32 %v249, 4294901760
        %9245 = vmatmul.mubr.f32.gmra.mrb[0].mxu0 %v9244
        %v9246 = vpop.f32.mrb[0].mxu0
        %v9247 = vadd.f32 %v9016, %v9246
        %v9248 = vpop.f32.mrb[0].mxu0
        %9249 = vmatprep.mubr.f32.mxu0 0.0
        %v9250 = vand.u32 %v250, 4294901760
        %9251 = vmatmul.mubr.f32.gmra.mrb[0].mxu0 %v9250
        %v9252 = vpop.f32.mrb[0].mxu0
        %v9253 = vadd.f32 %v9024, %v9252
        %v9254 = vpop.f32.mrb[0].mxu0
        %9255 = vmatprep.mubr.f32.mxu0 0.0
        %v9256 = vand.u32 %v251, 4294901760
        %9257 = vmatmul.mubr.f32.gmra.mrb[0].mxu0 %v9256
        %v9258 = vpop.f32.mrb[0].mxu0
        %v9259 = vadd.f32 %v9032, %v9258
        %v9260 = vpop.f32.mrb[0].mxu0
        %9261 = vmatprep.mubr.f32.mxu0 0.0
        %v9262 = vand.u32 %v252, 4294901760
        %9263 = vmatmul.mubr.f32.gmra.mrb[0].mxu0 %v9262
        %v9264 = vpop.f32.mrb[0].mxu0
        %v9265 = vadd.f32 %v9040, %v9264
        %v9266 = vpop.f32.mrb[0].mxu0
        %9267 = vmatprep.mubr.f32.mxu0 0.0
        %v9268 = vand.u32 %v253, 4294901760
        %9269 = vmatmul.mubr.f32.gmra.mrb[0].mxu0 %v9268
        %v9270 = vpop.f32.mrb[0].mxu0
        %v9271 = vadd.f32 %v9048, %v9270
        %v9272 = vpop.f32.mrb[0].mxu0
        %9273 = vmatprep.mubr.f32.mxu0 0.0
        %v9274 = vand.u32 %v254, 4294901760
        %9275 = vmatmul.mubr.f32.gmra.mrb[0].mxu0 %v9274
        %v9276 = vpop.f32.mrb[0].mxu0
        %v9277 = vadd.f32 %v9056, %v9276
        %v9278 = vpop.f32.mrb[0].mxu0
        %9279 = vmatprep.mubr.f32.mxu0 0.0
        %v9280 = vand.u32 %v255, 4294901760
        %9281 = vmatmul.mubr.f32.gmra.mrb[0].mxu0 %v9280
        %v9282 = vpop.f32.mrb[0].mxu0
        %v9283 = vadd.f32 %v9064, %v9282
        %v9284 = vpop.f32.mrb[0].mxu0
        %9285 = vmatprep.mubr.f32.mxu0 0.0
        %v9286 = vand.u32 %v256, 4294901760
        %9287 = vmatmul.mubr.f32.gmra.mrb[0].mxu0 %v9286
        %v9288 = vpop.f32.mrb[0].mxu0
        %v9289 = vadd.f32 %v9072, %v9288
        %v9290 = vpop.f32.mrb[0].mxu0
        %9291 = vmatprep.mubr.f32.mxu0 0.0
        %v9292 = vand.u32 %v257, 4294901760
        %9293 = vmatmul.mubr.f32.gmra.mrb[0].mxu0 %v9292
        %v9294 = vpop.f32.mrb[0].mxu0
        %v9295 = vadd.f32 %v9080, %v9294
        %v9296 = vpop.f32.mrb[0].mxu0
        %9297 = vmatprep.mubr.f32.mxu0 0.0
        %v9298 = vand.u32 %v258, 4294901760
        %9299 = vmatmul.mubr.f32.gmra.mrb[0].mxu0 %v9298
        %v9300 = vpop.f32.mrb[0].mxu0
        %v9301 = vadd.f32 %v9088, %v9300
        %v9302 = vpop.f32.mrb[0].mxu0
        %9303 = vmatprep.mubr.f32.mxu0 0.0
        %v9304 = vand.u32 %v259, 4294901760
        %9305 = vmatmul.mubr.f32.gmra.mrb[0].mxu0 %v9304
        %v9306 = vpop.f32.mrb[0].mxu0
        %v9307 = vadd.f32 %v9096, %v9306
        %v9308 = vpop.f32.mrb[0].mxu0
        %9309 = vmatprep.mubr.f32.mxu0 0.0
        %v9310 = vand.u32 %v260, 4294901760
        %9311 = vmatmul.mubr.f32.gmra.mrb[0].mxu0 %v9310
        %v9312 = vpop.f32.mrb[0].mxu0
        %v9313 = vadd.f32 %v9104, %v9312
        %v9314 = vpop.f32.mrb[0].mxu0
        %9315 = vdwg.mxu0
        %9316 = vmatprep.subr.mxu0 0.0
        %v9317 = vand.u32 %v8109, 4294901760
        %9318 = vmatpush1.msra.mxu0 %v9317
        %9319 = vmatprep.subr.mxu0 0.0
        %v9320 = vand.u32 %v8115, 4294901760
        %9321 = vmatpush1.msra.mxu0 %v9320
        %9322 = vmatprep.subr.mxu0 0.0
        %v9323 = vand.u32 %v8121, 4294901760
        %9324 = vmatpush1.msra.mxu0 %v9323
        %9325 = vmatprep.subr.mxu0 0.0
        %v9326 = vand.u32 %v8127, 4294901760
        %9327 = vmatpush1.msra.mxu0 %v9326
        %9328 = vmatprep.subr.mxu0 0.0
        %v9329 = vand.u32 %v8133, 4294901760
        %9330 = vmatpush1.msra.mxu0 %v9329
        %9331 = vmatprep.subr.mxu0 0.0
        %v9332 = vand.u32 %v8139, 4294901760
        %9333 = vmatpush1.msra.mxu0 %v9332
        %9334 = vmatprep.subr.mxu0 0.0
        %v9335 = vand.u32 %v8145, 4294901760
        %9336 = vmatpush1.msra.mxu0 %v9335
        %9337 = vmatprep.subr.mxu0 0.0
        %v9338 = vand.u32 %v8151, 4294901760
        %9339 = vmatpush1.msra.mxu0 %v9338
        %9340 = vmatprep.subr.mxu0 0.0
        %v9341 = vand.u32 %v8157, 4294901760
        %9342 = vmatpush1.msra.mxu0 %v9341
        %9343 = vmatprep.subr.mxu0 0.0
        %v9344 = vand.u32 %v8163, 4294901760
        %9345 = vmatpush1.msra.mxu0 %v9344
        %9346 = vmatprep.subr.mxu0 0.0
        %v9347 = vand.u32 %v8169, 4294901760
        %9348 = vmatpush1.msra.mxu0 %v9347
        %9349 = vmatprep.subr.mxu0 0.0
        %v9350 = vand.u32 %v8175, 4294901760
        %9351 = vmatpush1.msra.mxu0 %v9350
        %9352 = vmatprep.subr.mxu0 0.0
        %v9353 = vand.u32 %v8181, 4294901760
        %9354 = vmatpush1.msra.mxu0 %v9353
        %9355 = vmatprep.subr.mxu0 0.0
        %v9356 = vand.u32 %v8187, 4294901760
        %9357 = vmatpush1.msra.mxu0 %v9356
        %9358 = vmatprep.subr.mxu0 0.0
        %v9359 = vand.u32 %v8193, 4294901760
        %9360 = vmatpush1.msra.mxu0 %v9359
        %9361 = vmatprep.subr.mxu0 0.0
        %v9362 = vand.u32 %v8199, 4294901760
        %9363 = vmatpush1.msra.mxu0 %v9362
        %9364 = vmatprep.subr.mxu0 0.0
        %9365 = vmatpush1.msra.mxu0 0.0
        %9366 = vmatprep.subr.mxu0 0.0
        %9367 = vmatpush1.msra.mxu0 0.0
        %9368 = vmatprep.subr.mxu0 0.0
        %9369 = vmatpush1.msra.mxu0 0.0
        %9370 = vmatprep.subr.mxu0 0.0
        %9371 = vmatpush1.msra.mxu0 0.0
        %9372 = vmatprep.subr.mxu0 0.0
        %9373 = vmatpush1.msra.mxu0 0.0
        %9374 = vmatprep.subr.mxu0 0.0
        %9375 = vmatpush1.msra.mxu0 0.0
        %9376 = vmatprep.subr.mxu0 0.0
        %9377 = vmatpush1.msra.mxu0 0.0
        %9378 = vmatprep.subr.mxu0 0.0
        %9379 = vmatpush1.msra.mxu0 0.0
        %9380 = vmatprep.subr.mxu0 0.0
        %9381 = vmatpush1.msra.mxu0 0.0
        %9382 = vmatprep.subr.mxu0 0.0
        %9383 = vmatpush1.msra.mxu0 0.0
        %9384 = vmatprep.subr.mxu0 0.0
        %9385 = vmatpush1.msra.mxu0 0.0
        %9386 = vmatprep.subr.mxu0 0.0
        %9387 = vmatpush1.msra.mxu0 0.0
        %9388 = vmatprep.subr.mxu0 0.0
        %9389 = vmatpush1.msra.mxu0 0.0
        %9390 = vmatprep.subr.mxu0 0.0
        %9391 = vmatpush1.msra.mxu0 0.0
        %9392 = vmatprep.subr.mxu0 0.0
        %9393 = vmatpush1.msra.mxu0 0.0
        %9394 = vmatprep.subr.mxu0 0.0
        %9395 = vmatpush1.msra.mxu0 0.0
        %9396 = vmatprep.mubr.f32.mxu0 0.0
        %v9397 = vand.u32 %v245, 4294901760
        %9398 = vmatmul.mubr.f32.gmra.mrb[0].mxu0 %v9397
        %v9399 = vpop.f32.mrb[0].mxu0
        %v9400 = vadd.f32 %v9223, %v9399
        %v9401 = vpop.f32.mrb[0].mxu0
        %9402 = vmatprep.mubr.f32.mxu0 0.0
        %v9403 = vand.u32 %v246, 4294901760
        %9404 = vmatmul.mubr.f32.gmra.mrb[0].mxu0 %v9403
        %v9405 = vpop.f32.mrb[0].mxu0
        %v9406 = vadd.f32 %v9229, %v9405
        %v9407 = vpop.f32.mrb[0].mxu0
        %9408 = vmatprep.mubr.f32.mxu0 0.0
        %v9409 = vand.u32 %v247, 4294901760
        %9410 = vmatmul.mubr.f32.gmra.mrb[0].mxu0 %v9409
        %v9411 = vpop.f32.mrb[0].mxu0
        %v9412 = vadd.f32 %v9235, %v9411
        %v9413 = vpop.f32.mrb[0].mxu0
        %9414 = vmatprep.mubr.f32.mxu0 0.0
        %v9415 = vand.u32 %v248, 4294901760
        %9416 = vmatmul.mubr.f32.gmra.mrb[0].mxu0 %v9415
        %v9417 = vpop.f32.mrb[0].mxu0
        %v9418 = vadd.f32 %v9241, %v9417
        %v9419 = vpop.f32.mrb[0].mxu0
        %9420 = vmatprep.mubr.f32.mxu0 0.0
        %v9421 = vand.u32 %v249, 4294901760
        %9422 = vmatmul.mubr.f32.gmra.mrb[0].mxu0 %v9421
        %v9423 = vpop.f32.mrb[0].mxu0
        %v9424 = vadd.f32 %v9247, %v9423
        %v9425 = vpop.f32.mrb[0].mxu0
        %9426 = vmatprep.mubr.f32.mxu0 0.0
        %v9427 = vand.u32 %v250, 4294901760
        %9428 = vmatmul.mubr.f32.gmra.mrb[0].mxu0 %v9427
        %v9429 = vpop.f32.mrb[0].mxu0
        %v9430 = vadd.f32 %v9253, %v9429
        %v9431 = vpop.f32.mrb[0].mxu0
        %9432 = vmatprep.mubr.f32.mxu0 0.0
        %v9433 = vand.u32 %v251, 4294901760
        %9434 = vmatmul.mubr.f32.gmra.mrb[0].mxu0 %v9433
        %v9435 = vpop.f32.mrb[0].mxu0
        %v9436 = vadd.f32 %v9259, %v9435
        %v9437 = vpop.f32.mrb[0].mxu0
        %9438 = vmatprep.mubr.f32.mxu0 0.0
        %v9439 = vand.u32 %v252, 4294901760
        %9440 = vmatmul.mubr.f32.gmra.mrb[0].mxu0 %v9439
        %v9441 = vpop.f32.mrb[0].mxu0
        %v9442 = vadd.f32 %v9265, %v9441
        %v9443 = vpop.f32.mrb[0].mxu0
        %9444 = vmatprep.mubr.f32.mxu0 0.0
        %v9445 = vand.u32 %v253, 4294901760
        %9446 = vmatmul.mubr.f32.gmra.mrb[0].mxu0 %v9445
        %v9447 = vpop.f32.mrb[0].mxu0
        %v9448 = vadd.f32 %v9271, %v9447
        %v9449 = vpop.f32.mrb[0].mxu0
        %9450 = vmatprep.mubr.f32.mxu0 0.0
        %v9451 = vand.u32 %v254, 4294901760
        %9452 = vmatmul.mubr.f32.gmra.mrb[0].mxu0 %v9451
        %v9453 = vpop.f32.mrb[0].mxu0
        %v9454 = vadd.f32 %v9277, %v9453
        %v9455 = vpop.f32.mrb[0].mxu0
        %9456 = vmatprep.mubr.f32.mxu0 0.0
        %v9457 = vand.u32 %v255, 4294901760
        %9458 = vmatmul.mubr.f32.gmra.mrb[0].mxu0 %v9457
        %v9459 = vpop.f32.mrb[0].mxu0
        %v9460 = vadd.f32 %v9283, %v9459
        %v9461 = vpop.f32.mrb[0].mxu0
        %9462 = vmatprep.mubr.f32.mxu0 0.0
        %v9463 = vand.u32 %v256, 4294901760
        %9464 = vmatmul.mubr.f32.gmra.mrb[0].mxu0 %v9463
        %v9465 = vpop.f32.mrb[0].mxu0
        %v9466 = vadd.f32 %v9289, %v9465
        %v9467 = vpop.f32.mrb[0].mxu0
        %9468 = vmatprep.mubr.f32.mxu0 0.0
        %v9469 = vand.u32 %v257, 4294901760
        %9470 = vmatmul.mubr.f32.gmra.mrb[0].mxu0 %v9469
        %v9471 = vpop.f32.mrb[0].mxu0
        %v9472 = vadd.f32 %v9295, %v9471
        %v9473 = vpop.f32.mrb[0].mxu0
        %9474 = vmatprep.mubr.f32.mxu0 0.0
        %v9475 = vand.u32 %v258, 4294901760
        %9476 = vmatmul.mubr.f32.gmra.mrb[0].mxu0 %v9475
        %v9477 = vpop.f32.mrb[0].mxu0
        %v9478 = vadd.f32 %v9301, %v9477
        %v9479 = vpop.f32.mrb[0].mxu0
        %9480 = vmatprep.mubr.f32.mxu0 0.0
        %v9481 = vand.u32 %v259, 4294901760
        %9482 = vmatmul.mubr.f32.gmra.mrb[0].mxu0 %v9481
        %v9483 = vpop.f32.mrb[0].mxu0
        %v9484 = vadd.f32 %v9307, %v9483
        %v9485 = vpop.f32.mrb[0].mxu0
        %9486 = vmatprep.mubr.f32.mxu0 0.0
        %v9487 = vand.u32 %v260, 4294901760
        %9488 = vmatmul.mubr.f32.gmra.mrb[0].mxu0 %v9487
        %v9489 = vpop.f32.mrb[0].mxu0
        %v9490 = vadd.f32 %v9313, %v9489
        %v9491 = vpop.f32.mrb[0].mxu0
        %9492 = vdwg.mxu0
        %9493 = vmax.xlane.f32.xlu0 %v9400
        %v9494 = vpop.xlane.xlu0 %9493
        %9495 = vmax.xlane.f32.xlu0 %v9406
        %v9496 = vpop.xlane.xlu0 %9495
        %9497 = vmax.xlane.f32.xlu0 %v9412
        %v9498 = vpop.xlane.xlu0 %9497
        %9499 = vmax.xlane.f32.xlu0 %v9418
        %v9500 = vpop.xlane.xlu0 %9499
        %9501 = vmax.xlane.f32.xlu0 %v9424
        %v9502 = vpop.xlane.xlu0 %9501
        %9503 = vmax.xlane.f32.xlu0 %v9430
        %v9504 = vpop.xlane.xlu0 %9503
        %9505 = vmax.xlane.f32.xlu0 %v9436
        %v9506 = vpop.xlane.xlu0 %9505
        %9507 = vmax.xlane.f32.xlu0 %v9442
        %v9508 = vpop.xlane.xlu0 %9507
        %9509 = vmax.xlane.f32.xlu0 %v9448
        %v9510 = vpop.xlane.xlu0 %9509
        %9511 = vmax.xlane.f32.xlu0 %v9454
        %v9512 = vpop.xlane.xlu0 %9511
        %9513 = vmax.xlane.f32.xlu0 %v9460
        %v9514 = vpop.xlane.xlu0 %9513
        %9515 = vmax.xlane.f32.xlu0 %v9466
        %v9516 = vpop.xlane.xlu0 %9515
        %9517 = vmax.xlane.f32.xlu0 %v9472
        %v9518 = vpop.xlane.xlu0 %9517
        %9519 = vmax.xlane.f32.xlu0 %v9478
        %v9520 = vpop.xlane.xlu0 %9519
        %9521 = vmax.xlane.f32.xlu0 %v9484
        %v9522 = vpop.xlane.xlu0 %9521
        %9523 = vmax.xlane.f32.xlu0 %v9490
        %v9524 = vpop.xlane.xlu0 %9523
        %v9525 = vsub.f32 %v9400, %v9494
        %v9526 = vsub.f32 %v9406, %v9496
        %v9527 = vsub.f32 %v9412, %v9498
        %v9528 = vsub.f32 %v9418, %v9500
        %v9529 = vsub.f32 %v9424, %v9502
        %v9530 = vsub.f32 %v9430, %v9504
        %v9531 = vsub.f32 %v9436, %v9506
        %v9532 = vsub.f32 %v9442, %v9508
        %v9533 = vsub.f32 %v9448, %v9510
        %v9534 = vsub.f32 %v9454, %v9512
        %v9535 = vsub.f32 %v9460, %v9514
        %v9536 = vsub.f32 %v9466, %v9516
        %v9537 = vsub.f32 %v9472, %v9518
        %v9538 = vsub.f32 %v9478, %v9520
        %v9539 = vsub.f32 %v9484, %v9522
        %v9540 = vsub.f32 %v9490, %v9524
        %v9541 = vmul.f32 %v9525, 1.442695
        %v9542 = vpow.pop %v9541
        %v9543 = vmul.f32 %v9526, 1.442695
        %v9544 = vpow.pop %v9543
        %v9545 = vmul.f32 %v9527, 1.442695
        %v9546 = vpow.pop %v9545
        %v9547 = vmul.f32 %v9528, 1.442695
        %v9548 = vpow.pop %v9547
        %v9549 = vmul.f32 %v9529, 1.442695
        %v9550 = vpow.pop %v9549
        %v9551 = vmul.f32 %v9530, 1.442695
        %v9552 = vpow.pop %v9551
        %v9553 = vmul.f32 %v9531, 1.442695
        %v9554 = vpow.pop %v9553
        %v9555 = vmul.f32 %v9532, 1.442695
        %v9556 = vpow.pop %v9555
        %v9557 = vmul.f32 %v9533, 1.442695
        %v9558 = vpow.pop %v9557
        %v9559 = vmul.f32 %v9534, 1.442695
        %v9560 = vpow.pop %v9559
        %v9561 = vmul.f32 %v9535, 1.442695
        %v9562 = vpow.pop %v9561
        %v9563 = vmul.f32 %v9536, 1.442695
        %v9564 = vpow.pop %v9563
        %v9565 = vmul.f32 %v9537, 1.442695
        %v9566 = vpow.pop %v9565
        %v9567 = vmul.f32 %v9538, 1.442695
        %v9568 = vpow.pop %v9567
        %v9569 = vmul.f32 %v9539, 1.442695
        %v9570 = vpow.pop %v9569
        %v9571 = vmul.f32 %v9540, 1.442695
        %v9572 = vpow.pop %v9571
        %9573 = vadd.xlane.f32.xlu0 %v9542
        %v9574 = vpop.xlane.xlu0 %9573
        %9575 = vadd.xlane.f32.xlu0 %v9544
        %v9576 = vpop.xlane.xlu0 %9575
        %9577 = vadd.xlane.f32.xlu0 %v9546
        %v9578 = vpop.xlane.xlu0 %9577
        %9579 = vadd.xlane.f32.xlu0 %v9548
        %v9580 = vpop.xlane.xlu0 %9579
        %9581 = vadd.xlane.f32.xlu0 %v9550
        %v9582 = vpop.xlane.xlu0 %9581
        %9583 = vadd.xlane.f32.xlu0 %v9552
        %v9584 = vpop.xlane.xlu0 %9583
        %9585 = vadd.xlane.f32.xlu0 %v9554
        %v9586 = vpop.xlane.xlu0 %9585
        %9587 = vadd.xlane.f32.xlu0 %v9556
        %v9588 = vpop.xlane.xlu0 %9587
        %9589 = vadd.xlane.f32.xlu0 %v9558
        %v9590 = vpop.xlane.xlu0 %9589
        %9591 = vadd.xlane.f32.xlu0 %v9560
        %v9592 = vpop.xlane.xlu0 %9591
        %9593 = vadd.xlane.f32.xlu0 %v9562
        %v9594 = vpop.xlane.xlu0 %9593
        %9595 = vadd.xlane.f32.xlu0 %v9564
        %v9596 = vpop.xlane.xlu0 %9595
        %9597 = vadd.xlane.f32.xlu0 %v9566
        %v9598 = vpop.xlane.xlu0 %9597
        %9599 = vadd.xlane.f32.xlu0 %v9568
        %v9600 = vpop.xlane.xlu0 %9599
        %9601 = vadd.xlane.f32.xlu0 %v9570
        %v9602 = vpop.xlane.xlu0 %9601
        %9603 = vadd.xlane.f32.xlu0 %v9572
        %v9604 = vpop.xlane.xlu0 %9603
        %v9605 = vrcp.pop %v9574
        %v9606 = vmul.f32 %v9542, %v9605
        %v9607 = vrcp.pop %v9576
        %v9608 = vmul.f32 %v9544, %v9607
        %v9609 = vrcp.pop %v9578
        %v9610 = vmul.f32 %v9546, %v9609
        %v9611 = vrcp.pop %v9580
        %v9612 = vmul.f32 %v9548, %v9611
        %v9613 = vrcp.pop %v9582
        %v9614 = vmul.f32 %v9550, %v9613
        %v9615 = vrcp.pop %v9584
        %v9616 = vmul.f32 %v9552, %v9615
        %v9617 = vrcp.pop %v9586
        %v9618 = vmul.f32 %v9554, %v9617
        %v9619 = vrcp.pop %v9588
        %v9620 = vmul.f32 %v9556, %v9619
        %v9621 = vrcp.pop %v9590
        %v9622 = vmul.f32 %v9558, %v9621
        %v9623 = vrcp.pop %v9592
        %v9624 = vmul.f32 %v9560, %v9623
        %v9625 = vrcp.pop %v9594
        %v9626 = vmul.f32 %v9562, %v9625
        %v9627 = vrcp.pop %v9596
        %v9628 = vmul.f32 %v9564, %v9627
        %v9629 = vrcp.pop %v9598
        %v9630 = vmul.f32 %v9566, %v9629
        %v9631 = vrcp.pop %v9600
        %v9632 = vmul.f32 %v9568, %v9631
        %v9633 = vrcp.pop %v9602
        %v9634 = vmul.f32 %v9570, %v9633
        %v9635 = vrcp.pop %v9604
        %v9636 = vmul.f32 %v9572, %v9635
        %9637 = vst [vmem:[%s244] sm:$0xff] %v9606
        %9638 = vst [vmem:[%s244 + $0x8] sm:$0xff] %v9608
        %9639 = vst [vmem:[%s244 + $0x10] sm:$0xff] %v9610
        %9640 = vst [vmem:[%s244 + $0x18] sm:$0xff] %v9612
        %9641 = vst [vmem:[%s244 + $0x20] sm:$0xff] %v9614
        %9642 = vst [vmem:[%s244 + $0x28] sm:$0xff] %v9616
        %9643 = vst [vmem:[%s244 + $0x30] sm:$0xff] %v9618
        %9644 = vst [vmem:[%s244 + $0x38] sm:$0xff] %v9620
        %9645 = vst [vmem:[%s244 + $0x40] sm:$0xff] %v9622
        %9646 = vst [vmem:[%s244 + $0x48] sm:$0xff] %v9624
        %9647 = vst [vmem:[%s244 + $0x50] sm:$0xff] %v9626
        %9648 = vst [vmem:[%s244 + $0x58] sm:$0xff] %v9628
        %9649 = vst [vmem:[%s244 + $0x60] sm:$0xff] %v9630
        %9650 = vst [vmem:[%s244 + $0x68] sm:$0xff] %v9632
        %9651 = vst [vmem:[%s244 + $0x70] sm:$0xff] %v9634
        %9652 = vst [vmem:[%s244 + $0x78] sm:$0xff] %v9636
        %s9653 = sand.u32 %s119, 1
        %s9654 = scalar_lea.sflag [#allocation4], %s9653
        %s9655 = sand.u32 %s119, 1
        %s9656 = smul.addr %s9655, 128
        %s9657 = scalar_lea.vmem [#allocation8], %s9656
        // Predicated region
        $region49: #{tpu_custom_call.1} parent=35 // pred_check
          %p9658 = pneg %p129
        $region50: #{tpu_custom_call.1} parent=35 // pred_check_branch
          %9660 = sbr.rel (%p9658) target = $region52
        $region51: #{tpu_custom_call.1} parent=35 // pred_region
          %s9662 = ssub.s32 2048, 2048
          %9663 = vsyncadd %s9654, %s9662
          %s9664 = smul.addr %s22, 16
          %s9665 = smul.addr %s9664, 128
          %s9666 = scalar_lea.hbm %s4, %s9665
          %s9667 = sshll.u32 %s9657, 4
          %s9668 = int_to_ptr.vmem [resolvable:$true] %s9667
          %9673 = dma.vmem_to_hbm [thread:$0]  %s9668, 2048, %s9666, %s9654, 128, 128, 8
        $region52: #{tpu_custom_call.1} parent=35 // pred_fallthru
          _
      $region36: #{tpu_custom_call.1} parent=5 // pred_fallthru
        _
      %p9674 = scmp.le.s32.totalorder 2, %s17
      // Predicated region
      $region53: #{tpu_custom_call.1} parent=5 // pred_check
        %p9675 = pneg %p9674
      $region54: #{tpu_custom_call.1} parent=5 // pred_check_branch
        %9677 = sbr.rel (%p9675) target = $region56
      $region55: #{tpu_custom_call.1} parent=5 // pred_region
        %s9678 = ssub.s32 %s17, 2
        // Predicated region
        $region57: #{tpu_custom_call.1} parent=55 // pred_check
          %p9679 = pneg %p135
        $region58: #{tpu_custom_call.1} parent=55 // pred_check_branch
          %9681 = sbr.rel (%p9679) target = $region60
        $region59: #{tpu_custom_call.1} parent=55 // pred_region
          %s9682 = sand.u32 %s120, 1
          %s9683 = scalar_lea.sflag [#allocation4], %s9682
          %s9684 = sand.u32 %s120, 1
          %s9685 = smul.addr %s9684, 128
          %s9686 = scalar_lea.vmem [#allocation8], %s9685
          %9687 = dma.done %s9683, 2048
        $region60: #{tpu_custom_call.1} parent=55 // pred_fallthru
          _
      $region56: #{tpu_custom_call.1} parent=5 // pred_fallthru
        _
    $region6: #{tpu_custom_call.1} parent=1 // loop_footer
      %s21 = sadd.s32 1, %s17
    $region7: #{tpu_custom_call.1} parent=1 // loop_footer_branch
      %16 = sbr.rel target = $region3
    $region8: #{tpu_custom_call.1} parent=1 // loop_exit
      _
    %9688 = vsyncpa [#allocation3], 1
    %s9689 = scalar_lea.sflag [#allocation3], 1
    %9690 = vsyncpa %s9689, 1
    %9691 = vsyncpa [#allocation6], 1
    %9692 = vsyncpa [#allocation4], 1
    %s9693 = scalar_lea.sflag [#allocation4], 1
    %9694 = vsyncpa %s9693, 1

</llo_original>
